<compile_context>
chip_gen: v7x
topology: tpu7x:2x2x1
jax: 0.10.0
libtpu: 0.0.40
codegen_flags: <defaults>
</compile_context>

<pallas_src>
import jax
import jax.numpy as jnp
from jax.experimental import pallas as pl
from jax.experimental.pallas import tpu as pltpu

EMBED_DIM = 32            # synthetic GloVe dim
LATENT = 64               # out_channels of each Conv1d
KERNEL_SIZES = (5, 7)
SEQ_LEN = 100             # floor(96/5) + floor(94/7) = 19 + 13 = 32 pooled positions
VOCAB = 1000
POOL_LENS = tuple((SEQ_LEN - k + 1) // k for k in KERNEL_SIZES)   # (19, 13)
NUM_FEATURES = LATENT * sum(POOL_LENS)                            # 64 * 32 = 2048

L_PAD = 104               # per-batch token rows, padded to a multiple of 8
N_TAPS = KERNEL_SIZES[1]  # 7 tap blocks in the fused table
TAP_WIDTH = 2 * LATENT    # 128 lanes per tap block: [branch-5 ch | branch-7 ch]
ACT_ROWS = 96             # conv rows kept per batch element (>= 95 used, mult of 8)


def _glove_cnn_kernel(tok_ref, table_ref, bconv_ref, wlin5_ref, wlin7_ref,
                      blin_ref, o_ref):
    # tok_ref:   (B*L_PAD, 1) int32 token ids (padding rows never reach outputs)
    # table_ref: (VOCAB, 7*128) bf16 fused emb@W table, tap-blocked along lanes
    # bconv_ref: (1, 128) f32 fused conv bias [b5 | b7]
    # wlin5_ref: (91, 64) f32 Linear weight, nonzero only at rows 5*p
    # wlin7_ref: (85, 64) f32 Linear weight, nonzero only at rows 7*p
    # blin_ref:  (1, 1) f32
    # o_ref:     (B, 1) f32
    BLp = tok_ref.shape[0]
    B = o_ref.shape[0]
    L_pad = BLp // B
    vocab = table_ref.shape[0]
    k5, k7 = KERNEL_SIZES
    C = LATENT
    M5 = wlin5_ref.shape[0]                     # 91 = 5*(19-1)+1
    M7 = wlin7_ref.shape[0]                     # 85 = 7*(13-1)+1

    # ---- fused embedding+conv-tap lookup: one-hot (bf16, exact) @ table ----
    ids = jax.lax.broadcasted_iota(jnp.int32, (BLp, vocab), 1)
    onehot = (ids == tok_ref[...]).astype(jnp.bfloat16)
    y = jnp.dot(onehot, table_ref[...],
                preferred_element_type=jnp.float32)        # (B*L_PAD, 896) f32

    # ---- both Conv1d branches: 7 shifted tap-block adds over ALL batches ----
    # Row r = b*L_PAD + t; within-batch conv position t only needs taps up to
    # row t+6 <= 101 < L_PAD, so no cross-batch leakage into any used row.
    R = (B - 1) * L_pad + ACT_ROWS                          # 200 for B=2
    acc = y[0:R, 0:TAP_WIDTH]
    for dk in range(1, k7):
        acc = acc + y[dk:dk + R, dk * TAP_WIDTH:(dk + 1) * TAP_WIDTH]
    act = jnp.maximum(acc + bconv_ref[...], 0.0)            # (R, 128)

    # ---- weights/bias loaded once (hoisted out of the batch loop) ----
    wlin5 = wlin5_ref[...]
    wlin7 = wlin7_ref[...]
    blin = blin_ref[...]

    # ---- per-batch MaxPool (shifted-slice max tree) + Linear + Sigmoid ----
    logits = []
    for b in range(B):                                      # B small & static
        a = act[b * L_pad:b * L_pad + ACT_ROWS]             # sublane-aligned slice
        a5 = a[:, :C]                                       # (96, 64) branch-5 conv
        a7 = a[:, C:]                                       # (96, 64) branch-7 conv
        m5 = a5[0:M5]
        for j in range(1, k5):
            m5 = jnp.maximum(m5, a5[j:j + M5])              # m5[r] = max(a5[r..r+4])
        m7 = a7[0:M7]
        for j in range(1, k7):
            m7 = jnp.maximum(m7, a7[j:j + M7])              # m7[r] = max(a7[r..r+6])
        # Pool selection (rows k*p) is folded into wlin5/wlin7, so the Linear
        # layer is an elementwise multiply + full reduce.  Dropout = identity.
        c5 = jnp.sum(jnp.sum(m5 * wlin5, axis=1, keepdims=True), axis=0, keepdims=True)
        c7 = jnp.sum(jnp.sum(m7 * wlin7, axis=1, keepdims=True), axis=0, keepdims=True)
        logits.append(c5 + c7 + blin)                       # (1, 1)
    logit = jnp.concatenate(logits, axis=0)                 # (B, 1)
    o_ref[...] = 1.0 / (1.0 + jnp.exp(-logit))              # Sigmoid, single store


def glove_cnn_forward(x_tokens, params):
    B, L = x_tokens.shape
    V, E = params["embedding"].shape
    k5, k7 = KERNEL_SIZES
    hp = jax.lax.Precision.HIGHEST

    # Tokens padded per batch to L_PAD rows (pad id 0; padded rows only feed
    # conv positions that are never selected by the pooled Linear weights).
    tok = jnp.concatenate(
        [x_tokens.astype(jnp.int32),
         jnp.zeros((B, L_PAD - L), jnp.int32)], axis=1).reshape(B * L_PAD, 1)

    emb = params["embedding"].astype(jnp.float32)                        # (V, E)

    # Fused emb@W table (V, 7*128): tap block dk = [fused5[:,dk,:] | fused7[:,dk,:]],
    # branch-5 half zero for dk >= 5.  E-reduction done here in f32 HIGHEST; the
    # only kernel-side precision loss is the bf16 cast of this table.
    fused5 = jnp.einsum('ve,cek->vkc', emb, params["w5"], precision=hp)  # (V,5,64)
    fused7 = jnp.einsum('ve,cek->vkc', emb, params["w7"], precision=hp)  # (V,7,64)
    table = jnp.zeros((V, k7, TAP_WIDTH), jnp.float32)
    table = table.at[:, :k5, :LATENT].set(fused5)
    table = table.at[:, :, LATENT:].set(fused7)
    table = table.reshape(V, k7 * TAP_WIDTH).astype(jnp.bfloat16)        # (V, 896)

    b_conv = jnp.concatenate([params["b5"], params["b7"]]
                             ).reshape(1, TAP_WIDTH).astype(jnp.float32)

    # Linear weight (1, 2048); PyTorch flatten order is (channel, position).
    # Permute to (position, channel), split per branch, expand so that row k*p
    # carries pooled position p's weight (pool selection folded in).
    pool_total = sum(POOL_LENS)
    wlin_pc = params["w_lin"].reshape(LATENT, pool_total).T              # (32, 64)
    wlin5 = wlin_pc[:POOL_LENS[0]]                                       # (19, 64)
    wlin7 = wlin_pc[POOL_LENS[0]:]                                       # (13, 64)
    m5_rows = (POOL_LENS[0] - 1) * k5 + 1                                # 91
    m7_rows = (POOL_LENS[1] - 1) * k7 + 1                                # 85
    wlin5_exp = jnp.zeros((m5_rows, LATENT), jnp.float32).at[::k5].set(wlin5)
    wlin7_exp = jnp.zeros((m7_rows, LATENT), jnp.float32).at[::k7].set(wlin7)
    b_lin = params["b_lin"].reshape(1, 1).astype(jnp.float32)

    # No grid: everything fits comfortably in VMEM at this size, so a degenerate
    # grid would only add pipeline bookkeeping / double buffers.
    return pl.pallas_call(
        _glove_cnn_kernel,
        out_shape=jax.ShapeDtypeStruct((B, 1), jnp.float32),
    )(tok, table, b_conv, wlin5_exp, wlin7_exp, b_lin)


def reference_forward(x_tokens, params):
    """Pure-JAX re-implementation of the PyTorch forward (eval mode)."""
    emb = params["embedding"][x_tokens].astype(jnp.float32)             # (B, L, E)
    x = jnp.transpose(emb, (0, 2, 1))                                   # (B, E, L)
    outs = []
    for k, w, b in ((5, params["w5"], params["b5"]),
                    (7, params["w7"], params["b7"])):
        conv = jax.lax.conv_general_dilated(
            x, w, window_strides=(1,), padding="VALID",
            dimension_numbers=("NCH", "OIH", "NCH"),
            precision=jax.lax.Precision.HIGHEST)                        # (B, 64, Lout)
        conv = jnp.maximum(conv + b[None, :, None], 0.0)
        lout = conv.shape[-1]
        plen = lout // k
        pooled = conv[:, :, :plen * k].reshape(conv.shape[0], LATENT, plen, k).max(-1)
        outs.append(pooled)
    y = jnp.concatenate(outs, axis=2)                                   # (B, 64, 32)
    y = y.reshape(y.shape[0], -1)                                       # (B, 2048)
    # Dropout(p=0.4) -> identity in eval mode.
    logit = jnp.dot(y, params["w_lin"].T,
                    precision=jax.lax.Precision.HIGHEST) + params["b_lin"]
    return jax.nn.sigmoid(logit)


if __name__ == "__main__":
    key = jax.random.PRNGKey(0)
    ks = jax.random.split(key, 8)
    B = 2
    params = {
        "embedding": jax.random.normal(ks[0], (VOCAB, EMBED_DIM), jnp.float32) * 0.5,
        "w5": jax.random.normal(ks[1], (LATENT, EMBED_DIM, 5), jnp.float32) * 0.08,
        "b5": jax.random.normal(ks[2], (LATENT,), jnp.float32) * 0.05,
        "w7": jax.random.normal(ks[3], (LATENT, EMBED_DIM, 7), jnp.float32) * 0.08,
        "b7": jax.random.normal(ks[4], (LATENT,), jnp.float32) * 0.05,
        "w_lin": jax.random.normal(ks[5], (1, NUM_FEATURES), jnp.float32) * 0.02,
        "b_lin": jax.random.normal(ks[6], (1,), jnp.float32) * 0.02,
    }
    x_tokens = jax.random.randint(ks[7], (B, SEQ_LEN), 0, VOCAB, dtype=jnp.int32)

    out = jax.block_until_ready(glove_cnn_forward(x_tokens, params))
    ref = jax.block_until_ready(reference_forward(x_tokens, params))

    assert out.shape == (B, 1), out.shape
    # bf16 rounding of the folded emb@W table contributes ~1e-3 worst case at the
    # logit and ~2-5e-4 after the sigmoid; 3e-3 on a (0,1) output is still tight.
    if not jnp.allclose(out, ref, atol=3e-3, rtol=3e-3):
        raise AssertionError(f"kernel vs reference mismatch:\n{out}\n{ref}")
    print("KERNEL_OK")
</pallas_src>

<mosaic_0001>
module attributes {stable_mosaic.version = 11 : i64} {
  func.func @_glove_cnn_kernel(%arg0: memref<208x1xi32, #tpu.memory_space<vmem>>, %arg1: memref<1000x896xbf16, #tpu.memory_space<vmem>>, %arg2: memref<1x128xf32, #tpu.memory_space<vmem>>, %arg3: memref<91x64xf32, #tpu.memory_space<vmem>>, %arg4: memref<85x64xf32, #tpu.memory_space<vmem>>, %arg5: memref<1x1xf32, #tpu.memory_space<vmem>>, %arg6: memref<2x1xf32, #tpu.memory_space<vmem>>) attributes {dimension_semantics = [], scalar_prefetch = 0 : i64, scratch_operands = 0 : i64, tpu.core_type = #tpu.core_type<tc>} {
    %0 = tpu.iota {dimensions = array<i32: 1>} : vector<208x1000xi32>
    %c0 = arith.constant 0 : index
    %c0_0 = arith.constant 0 : index
    %1 = vector.load %arg0[%c0, %c0_0] : memref<208x1xi32, #tpu.memory_space<vmem>>, vector<208x1xi32>
    %2 = vector.broadcast %1 : vector<208x1xi32> to vector<208x1000xi32>
    %3 = arith.cmpi eq, %0, %2 : vector<208x1000xi32>
    %4 = arith.extui %3 : vector<208x1000xi1> to vector<208x1000xi32>
    %5 = arith.sitofp %4 : vector<208x1000xi32> to vector<208x1000xf32>
    %6 = arith.truncf %5 : vector<208x1000xf32> to vector<208x1000xbf16>
    %c0_1 = arith.constant 0 : index
    %c0_2 = arith.constant 0 : index
    %7 = vector.load %arg1[%c0_1, %c0_2] : memref<1000x896xbf16, #tpu.memory_space<vmem>>, vector<1000x896xbf16>
    %cst = arith.constant dense<0.000000e+00> : vector<208x896xf32>
    %8 = tpu.matmul %6, %7, %cst {dimension_numbers = #tpu.dot_dimension_numbers<[1], [0], [0], [1], [0, 0, 1, 1], [], []>} : vector<208x1000xbf16>, vector<1000x896xbf16>, vector<208x896xf32> -> vector<208x896xf32>
    %9 = vector.extract_strided_slice %8 {offsets = [0, 0], sizes = [200, 128], strides = [1, 1]} : vector<208x896xf32> to vector<200x128xf32>
    %10 = vector.extract_strided_slice %8 {offsets = [1, 128], sizes = [200, 128], strides = [1, 1]} : vector<208x896xf32> to vector<200x128xf32>
    %11 = arith.addf %9, %10 : vector<200x128xf32>
    %12 = vector.extract_strided_slice %8 {offsets = [2, 256], sizes = [200, 128], strides = [1, 1]} : vector<208x896xf32> to vector<200x128xf32>
    %13 = arith.addf %11, %12 : vector<200x128xf32>
    %14 = vector.extract_strided_slice %8 {offsets = [3, 384], sizes = [200, 128], strides = [1, 1]} : vector<208x896xf32> to vector<200x128xf32>
    %15 = arith.addf %13, %14 : vector<200x128xf32>
    %16 = vector.extract_strided_slice %8 {offsets = [4, 512], sizes = [200, 128], strides = [1, 1]} : vector<208x896xf32> to vector<200x128xf32>
    %17 = arith.addf %15, %16 : vector<200x128xf32>
    %18 = vector.extract_strided_slice %8 {offsets = [5, 640], sizes = [200, 128], strides = [1, 1]} : vector<208x896xf32> to vector<200x128xf32>
    %19 = arith.addf %17, %18 : vector<200x128xf32>
    %20 = vector.extract_strided_slice %8 {offsets = [6, 768], sizes = [200, 128], strides = [1, 1]} : vector<208x896xf32> to vector<200x128xf32>
    %21 = arith.addf %19, %20 : vector<200x128xf32>
    %c0_3 = arith.constant 0 : index
    %c0_4 = arith.constant 0 : index
    %22 = vector.load %arg2[%c0_3, %c0_4] : memref<1x128xf32, #tpu.memory_space<vmem>>, vector<1x128xf32>
    %23 = vector.broadcast %22 : vector<1x128xf32> to vector<200x128xf32>
    %24 = arith.addf %21, %23 : vector<200x128xf32>
    %cst_5 = arith.constant 0.000000e+00 : f32
    %25 = vector.broadcast %cst_5 : f32 to vector<200x128xf32>
    %26 = arith.maximumf %24, %25 : vector<200x128xf32>
    %c0_6 = arith.constant 0 : index
    %c0_7 = arith.constant 0 : index
    %27 = vector.load %arg3[%c0_6, %c0_7] : memref<91x64xf32, #tpu.memory_space<vmem>>, vector<91x64xf32>
    %c0_8 = arith.constant 0 : index
    %c0_9 = arith.constant 0 : index
    %28 = vector.load %arg4[%c0_8, %c0_9] : memref<85x64xf32, #tpu.memory_space<vmem>>, vector<85x64xf32>
    %c0_10 = arith.constant 0 : index
    %c0_11 = arith.constant 0 : index
    %29 = vector.load %arg5[%c0_10, %c0_11] : memref<1x1xf32, #tpu.memory_space<vmem>>, vector<1x1xf32>
    %30 = vector.extract_strided_slice %26 {offsets = [0, 0], sizes = [96, 128], strides = [1, 1]} : vector<200x128xf32> to vector<96x128xf32>
    %31 = vector.extract_strided_slice %30 {offsets = [0, 0], sizes = [96, 64], strides = [1, 1]} : vector<96x128xf32> to vector<96x64xf32>
    %32 = vector.extract_strided_slice %30 {offsets = [0, 64], sizes = [96, 64], strides = [1, 1]} : vector<96x128xf32> to vector<96x64xf32>
    %33 = vector.extract_strided_slice %31 {offsets = [0, 0], sizes = [91, 64], strides = [1, 1]} : vector<96x64xf32> to vector<91x64xf32>
    %34 = vector.extract_strided_slice %31 {offsets = [1, 0], sizes = [91, 64], strides = [1, 1]} : vector<96x64xf32> to vector<91x64xf32>
    %35 = arith.maximumf %33, %34 : vector<91x64xf32>
    %36 = vector.extract_strided_slice %31 {offsets = [2, 0], sizes = [91, 64], strides = [1, 1]} : vector<96x64xf32> to vector<91x64xf32>
    %37 = arith.maximumf %35, %36 : vector<91x64xf32>
    %38 = vector.extract_strided_slice %31 {offsets = [3, 0], sizes = [91, 64], strides = [1, 1]} : vector<96x64xf32> to vector<91x64xf32>
    %39 = arith.maximumf %37, %38 : vector<91x64xf32>
    %40 = vector.extract_strided_slice %31 {offsets = [4, 0], sizes = [91, 64], strides = [1, 1]} : vector<96x64xf32> to vector<91x64xf32>
    %41 = arith.maximumf %39, %40 : vector<91x64xf32>
    %42 = vector.extract_strided_slice %32 {offsets = [0, 0], sizes = [85, 64], strides = [1, 1]} : vector<96x64xf32> to vector<85x64xf32>
    %43 = vector.extract_strided_slice %32 {offsets = [1, 0], sizes = [85, 64], strides = [1, 1]} : vector<96x64xf32> to vector<85x64xf32>
    %44 = arith.maximumf %42, %43 : vector<85x64xf32>
    %45 = vector.extract_strided_slice %32 {offsets = [2, 0], sizes = [85, 64], strides = [1, 1]} : vector<96x64xf32> to vector<85x64xf32>
    %46 = arith.maximumf %44, %45 : vector<85x64xf32>
    %47 = vector.extract_strided_slice %32 {offsets = [3, 0], sizes = [85, 64], strides = [1, 1]} : vector<96x64xf32> to vector<85x64xf32>
    %48 = arith.maximumf %46, %47 : vector<85x64xf32>
    %49 = vector.extract_strided_slice %32 {offsets = [4, 0], sizes = [85, 64], strides = [1, 1]} : vector<96x64xf32> to vector<85x64xf32>
    %50 = arith.maximumf %48, %49 : vector<85x64xf32>
    %51 = vector.extract_strided_slice %32 {offsets = [5, 0], sizes = [85, 64], strides = [1, 1]} : vector<96x64xf32> to vector<85x64xf32>
    %52 = arith.maximumf %50, %51 : vector<85x64xf32>
    %53 = vector.extract_strided_slice %32 {offsets = [6, 0], sizes = [85, 64], strides = [1, 1]} : vector<96x64xf32> to vector<85x64xf32>
    %54 = arith.maximumf %52, %53 : vector<85x64xf32>
    %55 = arith.mulf %41, %27 : vector<91x64xf32>
    %cst_12 = arith.constant dense<0.000000e+00> : vector<91xf32>
    %56 = vector.multi_reduction <add>, %55, %cst_12 [1] : vector<91x64xf32> to vector<91xf32>
    %57 = vector.shape_cast %56 : vector<91xf32> to vector<91x1xf32>
    %cst_13 = arith.constant dense<0.000000e+00> : vector<1xf32>
    %58 = vector.multi_reduction <add>, %57, %cst_13 [0] : vector<91x1xf32> to vector<1xf32>
    %59 = vector.shape_cast %58 : vector<1xf32> to vector<1x1xf32>
    %60 = arith.mulf %54, %28 : vector<85x64xf32>
    %cst_14 = arith.constant dense<0.000000e+00> : vector<85xf32>
    %61 = vector.multi_reduction <add>, %60, %cst_14 [1] : vector<85x64xf32> to vector<85xf32>
    %62 = vector.shape_cast %61 : vector<85xf32> to vector<85x1xf32>
    %cst_15 = arith.constant dense<0.000000e+00> : vector<1xf32>
    %63 = vector.multi_reduction <add>, %62, %cst_15 [0] : vector<85x1xf32> to vector<1xf32>
    %64 = vector.shape_cast %63 : vector<1xf32> to vector<1x1xf32>
    %65 = arith.addf %59, %64 : vector<1x1xf32>
    %66 = arith.addf %65, %29 : vector<1x1xf32>
    %67 = vector.extract_strided_slice %26 {offsets = [104, 0], sizes = [96, 128], strides = [1, 1]} : vector<200x128xf32> to vector<96x128xf32>
    %68 = vector.extract_strided_slice %67 {offsets = [0, 0], sizes = [96, 64], strides = [1, 1]} : vector<96x128xf32> to vector<96x64xf32>
    %69 = vector.extract_strided_slice %67 {offsets = [0, 64], sizes = [96, 64], strides = [1, 1]} : vector<96x128xf32> to vector<96x64xf32>
    %70 = vector.extract_strided_slice %68 {offsets = [0, 0], sizes = [91, 64], strides = [1, 1]} : vector<96x64xf32> to vector<91x64xf32>
    %71 = vector.extract_strided_slice %68 {offsets = [1, 0], sizes = [91, 64], strides = [1, 1]} : vector<96x64xf32> to vector<91x64xf32>
    %72 = arith.maximumf %70, %71 : vector<91x64xf32>
    %73 = vector.extract_strided_slice %68 {offsets = [2, 0], sizes = [91, 64], strides = [1, 1]} : vector<96x64xf32> to vector<91x64xf32>
    %74 = arith.maximumf %72, %73 : vector<91x64xf32>
    %75 = vector.extract_strided_slice %68 {offsets = [3, 0], sizes = [91, 64], strides = [1, 1]} : vector<96x64xf32> to vector<91x64xf32>
    %76 = arith.maximumf %74, %75 : vector<91x64xf32>
    %77 = vector.extract_strided_slice %68 {offsets = [4, 0], sizes = [91, 64], strides = [1, 1]} : vector<96x64xf32> to vector<91x64xf32>
    %78 = arith.maximumf %76, %77 : vector<91x64xf32>
    %79 = vector.extract_strided_slice %69 {offsets = [0, 0], sizes = [85, 64], strides = [1, 1]} : vector<96x64xf32> to vector<85x64xf32>
    %80 = vector.extract_strided_slice %69 {offsets = [1, 0], sizes = [85, 64], strides = [1, 1]} : vector<96x64xf32> to vector<85x64xf32>
    %81 = arith.maximumf %79, %80 : vector<85x64xf32>
    %82 = vector.extract_strided_slice %69 {offsets = [2, 0], sizes = [85, 64], strides = [1, 1]} : vector<96x64xf32> to vector<85x64xf32>
    %83 = arith.maximumf %81, %82 : vector<85x64xf32>
    %84 = vector.extract_strided_slice %69 {offsets = [3, 0], sizes = [85, 64], strides = [1, 1]} : vector<96x64xf32> to vector<85x64xf32>
    %85 = arith.maximumf %83, %84 : vector<85x64xf32>
    %86 = vector.extract_strided_slice %69 {offsets = [4, 0], sizes = [85, 64], strides = [1, 1]} : vector<96x64xf32> to vector<85x64xf32>
    %87 = arith.maximumf %85, %86 : vector<85x64xf32>
    %88 = vector.extract_strided_slice %69 {offsets = [5, 0], sizes = [85, 64], strides = [1, 1]} : vector<96x64xf32> to vector<85x64xf32>
    %89 = arith.maximumf %87, %88 : vector<85x64xf32>
    %90 = vector.extract_strided_slice %69 {offsets = [6, 0], sizes = [85, 64], strides = [1, 1]} : vector<96x64xf32> to vector<85x64xf32>
    %91 = arith.maximumf %89, %90 : vector<85x64xf32>
    %92 = arith.mulf %78, %27 : vector<91x64xf32>
    %cst_16 = arith.constant dense<0.000000e+00> : vector<91xf32>
    %93 = vector.multi_reduction <add>, %92, %cst_16 [1] : vector<91x64xf32> to vector<91xf32>
    %94 = vector.shape_cast %93 : vector<91xf32> to vector<91x1xf32>
    %cst_17 = arith.constant dense<0.000000e+00> : vector<1xf32>
    %95 = vector.multi_reduction <add>, %94, %cst_17 [0] : vector<91x1xf32> to vector<1xf32>
    %96 = vector.shape_cast %95 : vector<1xf32> to vector<1x1xf32>
    %97 = arith.mulf %91, %28 : vector<85x64xf32>
    %cst_18 = arith.constant dense<0.000000e+00> : vector<85xf32>
    %98 = vector.multi_reduction <add>, %97, %cst_18 [1] : vector<85x64xf32> to vector<85xf32>
    %99 = vector.shape_cast %98 : vector<85xf32> to vector<85x1xf32>
    %cst_19 = arith.constant dense<0.000000e+00> : vector<1xf32>
    %100 = vector.multi_reduction <add>, %99, %cst_19 [0] : vector<85x1xf32> to vector<1xf32>
    %101 = vector.shape_cast %100 : vector<1xf32> to vector<1x1xf32>
    %102 = arith.addf %96, %101 : vector<1x1xf32>
    %103 = arith.addf %102, %29 : vector<1x1xf32>
    %104 = tpu.concatenate %66, %103 in 0 : vector<1x1xf32>, vector<1x1xf32> -> vector<2x1xf32>
    %cst_20 = arith.constant 0.000000e+00 : f32
    %105 = vector.broadcast %cst_20 : f32 to vector<2x1xf32>
    %106 = arith.subf %105, %104 : vector<2x1xf32>
    %107 = math.exp %106 : vector<2x1xf32>
    %cst_21 = arith.constant 1.000000e+00 : f32
    %108 = vector.broadcast %cst_21 : f32 to vector<2x1xf32>
    %109 = arith.addf %108, %107 : vector<2x1xf32>
    %cst_22 = arith.constant 1.000000e+00 : f32
    %110 = vector.broadcast %cst_22 : f32 to vector<2x1xf32>
    %111 = arith.divf %110, %109 : vector<2x1xf32>
    %c0_23 = arith.constant 0 : index
    %c0_24 = arith.constant 0 : index
    %112 = vector.load %arg6[%c0_23, %c0_24] : memref<2x1xf32, #tpu.memory_space<vmem>>, vector<2x1xf32>
    tpu.vector_store %arg6[%c0_23, %c0_24], %111 {strides = array<i32>} : memref<2x1xf32, #tpu.memory_space<vmem>>, vector<2x1xf32>,
    return
  }
}

</mosaic_0001>

<llo_original>
// kernel: tpu_custom_call.1
$region0: #{tpu_custom_call.1}
  #allocation0 [shape = 'u32[]', space=smem, size = 0x4, offset = 0x4, fixed_abs, tag = 'smem constant byte address 0x4 - core index']
  #allocation1 [shape = 'u32[144,128]{1,0:T(1,128)}', space=vmem, size = 0x12000, scoped, tag = 'internal scratch']
  #allocation2 [shape = 'f32[1,1]{1,0:T(1,128)S(1)}', space=vmem, size = 0x200, scoped, tag = 'scoped memory for tpu_custom_call.1']
  %s0 = inlined_call_operand.vmem [shape: s32[208,1], index: 0, kind: input, shape index: {}]
  %s1 = inlined_call_operand.hbm [shape: bf16[1000,896], index: 1, kind: input, shape index: {}]
  %s2 = inlined_call_operand.hbm [shape: f32[1,128], index: 2, kind: input, shape index: {}]
  %s3 = inlined_call_operand.vmem [shape: f32[91,64], index: 3, kind: input, shape index: {}]
  %s4 = inlined_call_operand.vmem [shape: f32[85,64], index: 4, kind: input, shape index: {}]
  %s5 = inlined_call_operand.<no memory space> [shape: f32[1,1], index: 5, kind: input, shape index: {}]
  %s6 = inlined_call_operand.vmem [shape: f32[2,1], index: 6, kind: output, shape index: {}]
  %s7 = sld [smem:[#allocation0]]
  $region42: #{tpu_custom_call.1} parent=0
    _
  %s9 = ssub.s32 1, %s7
  %s10 = scalar_select 0, %s9, %s7
  %v11 = vstv %s5
  %12 = vst [vmem:[#allocation2] sm:$0x1] %v11
  $region1: #{tpu_custom_call.1} parent=0
    #allocation3 [shape = 'u8[1792000]{0}', space=vmem, size = 0x1b5800, scoped, tag = 'input window, operand 1, single buffered']
    #allocation4 [shape = 's32[1]{0}', space=sflag, size = 0x4, scoped, tag = 'scoped memory for tpu_custom_call.1']
    #allocation5 [shape = 'u8[512]{0}', space=vmem, size = 0x400, scoped, tag = 'input window, operand 2, single buffered']
    #allocation6 [shape = 's32[1]{0}', space=sflag, size = 0x4, scoped, tag = 'scoped memory for tpu_custom_call.1']
    %13 = vsyncpa [#allocation4], 0
    %14 = vsyncpa [#allocation6], 0
    // Predicated region
    $region2: #{tpu_custom_call.1} parent=1 // pred_check
      _
    $region3: #{tpu_custom_call.1} parent=1 // pred_check_branch
      %16 = sbr.rel (0) target = $region5
    $region4: #{tpu_custom_call.1} parent=1 // pred_region
      _
    $region5: #{tpu_custom_call.1} parent=1 // pred_fallthru
      _
    // Predicated region
    $region6: #{tpu_custom_call.1} parent=1 // pred_check
      _
    $region7: #{tpu_custom_call.1} parent=1 // pred_check_branch
      %18 = sbr.rel (0) target = $region9
    $region8: #{tpu_custom_call.1} parent=1 // pred_region
      %s20 = ssub.s32 56000, 56000
      %21 = vsyncadd [#allocation4], %s20
      %s22 = sshll.u32 [#allocation3], 4
      %s23 = int_to_ptr.vmem [resolvable:$true] %s22
      %28 = dma.hbm_to_vmem [thread:$0]  %s1, 56000, %s23, [#allocation4], 448, 448, 28
    $region9: #{tpu_custom_call.1} parent=1 // pred_fallthru
      _
    // Predicated region
    $region10: #{tpu_custom_call.1} parent=1 // pred_check
      _
    $region11: #{tpu_custom_call.1} parent=1 // pred_check_branch
      %30 = sbr.rel (0) target = $region13
    $region12: #{tpu_custom_call.1} parent=1 // pred_region
      %s32 = ssub.s32 16, 16
      %33 = vsyncadd [#allocation6], %s32
      %s35 = sshll.u32 [#allocation5], 4
      %s36 = int_to_ptr.vmem [resolvable:$true] %s35
      %38 = dma.hbm_to_vmem [thread:$0]  %s2, 16, %s36, [#allocation6]
    $region13: #{tpu_custom_call.1} parent=1 // pred_fallthru
      _
    // Predicated region
    $region14: #{tpu_custom_call.1} parent=1 // pred_check
      _
    $region15: #{tpu_custom_call.1} parent=1 // pred_check_branch
      %40 = sbr.rel (0) target = $region17
    $region16: #{tpu_custom_call.1} parent=1 // pred_region
      _
    $region17: #{tpu_custom_call.1} parent=1 // pred_fallthru
      _
    // Predicated region
    $region18: #{tpu_custom_call.1} parent=1 // pred_check
      _
    $region19: #{tpu_custom_call.1} parent=1 // pred_check_branch
      %42 = sbr.rel (0) target = $region21
    $region20: #{tpu_custom_call.1} parent=1 // pred_region
      _
    $region21: #{tpu_custom_call.1} parent=1 // pred_fallthru
      _
    // Predicated region
    $region22: #{tpu_custom_call.1} parent=1 // pred_check
      _
    $region23: #{tpu_custom_call.1} parent=1 // pred_check_branch
      %44 = sbr.rel (0) target = $region25
    $region24: #{tpu_custom_call.1} parent=1 // pred_region
      _
    $region25: #{tpu_custom_call.1} parent=1 // pred_fallthru
      _
    // Predicated region
    $region26: #{tpu_custom_call.1} parent=1 // pred_check
      _
    $region27: #{tpu_custom_call.1} parent=1 // pred_check_branch
      %46 = sbr.rel (0) target = $region29
    $region28: #{tpu_custom_call.1} parent=1 // pred_region
      %47 = dma.done [#allocation4], 56000
    $region29: #{tpu_custom_call.1} parent=1 // pred_fallthru
      _
    // Predicated region
    $region30: #{tpu_custom_call.1} parent=1 // pred_check
      _
    $region31: #{tpu_custom_call.1} parent=1 // pred_check_branch
      %49 = sbr.rel (0) target = $region33
    $region32: #{tpu_custom_call.1} parent=1 // pred_region
      %50 = dma.done [#allocation6], 16
    $region33: #{tpu_custom_call.1} parent=1 // pred_fallthru
      _
    %v52 = vlaneseq
    %v53 = vand.u32 %v52, 127
    %v54 = vadd.s32 %v53, 128
    %v55 = vadd.s32 %v53, 256
    %v56 = vadd.s32 %v53, 384
    %v57 = vadd.s32 %v53, 512
    %v58 = vadd.s32 %v53, 640
    %v59 = vadd.s32 %v53, 768
    %v60 = vadd.s32 %v53, 896
    %v61 = vld [vmem:[%s0] sm:$0xff]
    %v62 = vld [vmem:[%s0 + $0x8] sm:$0xff]
    %v63 = vld [vmem:[%s0 + $0x10] sm:$0xff]
    %v64 = vld [vmem:[%s0 + $0x18] sm:$0xff]
    %v65 = vld [vmem:[%s0 + $0x20] sm:$0xff]
    %v66 = vld [vmem:[%s0 + $0x28] sm:$0xff]
    %v67 = vld [vmem:[%s0 + $0x30] sm:$0xff]
    %v68 = vld [vmem:[%s0 + $0x38] sm:$0xff]
    %v69 = vld [vmem:[%s0 + $0x40] sm:$0xff]
    %v70 = vld [vmem:[%s0 + $0x48] sm:$0xff]
    %v71 = vld [vmem:[%s0 + $0x50] sm:$0xff]
    %v72 = vld [vmem:[%s0 + $0x58] sm:$0xff]
    %v73 = vld [vmem:[%s0 + $0x60] sm:$0xff]
    %v74 = vld [vmem:[%s0 + $0x68] sm:$0xff]
    %v75 = vld [vmem:[%s0 + $0x70] sm:$0xff]
    %v76 = vld [vmem:[%s0 + $0x78] sm:$0xff]
    %v77 = vld [vmem:[%s0 + $0x80] sm:$0xff]
    %v78 = vld [vmem:[%s0 + $0x88] sm:$0xff]
    %v79 = vld [vmem:[%s0 + $0x90] sm:$0xff]
    %v80 = vld [vmem:[%s0 + $0x98] sm:$0xff]
    %v81 = vld [vmem:[%s0 + $0xa0] sm:$0xff]
    %v82 = vld [vmem:[%s0 + $0xa8] sm:$0xff]
    %v83 = vld [vmem:[%s0 + $0xb0] sm:$0xff]
    %v84 = vld [vmem:[%s0 + $0xb8] sm:$0xff]
    %v85 = vld [vmem:[%s0 + $0xc0] sm:$0xff]
    %v86 = vld [vmem:[%s0 + $0xc8] sm:$0xff]
    %87 = vset.pattern.permute.xlu0 0
    %88 = vperm.xlu0 %87, %v61
    %v89 = vpop.permute.xlu0 %88
    %90 = vset.pattern.permute.xlu0 0
    %91 = vperm.xlu0 %90, %v62
    %v92 = vpop.permute.xlu0 %91
    %93 = vset.pattern.permute.xlu0 0
    %94 = vperm.xlu0 %93, %v63
    %v95 = vpop.permute.xlu0 %94
    %96 = vset.pattern.permute.xlu0 0
    %97 = vperm.xlu0 %96, %v64
    %v98 = vpop.permute.xlu0 %97
    %99 = vset.pattern.permute.xlu0 0
    %100 = vperm.xlu0 %99, %v65
    %v101 = vpop.permute.xlu0 %100
    %102 = vset.pattern.permute.xlu0 0
    %103 = vperm.xlu0 %102, %v66
    %v104 = vpop.permute.xlu0 %103
    %105 = vset.pattern.permute.xlu0 0
    %106 = vperm.xlu0 %105, %v67
    %v107 = vpop.permute.xlu0 %106
    %108 = vset.pattern.permute.xlu0 0
    %109 = vperm.xlu0 %108, %v68
    %v110 = vpop.permute.xlu0 %109
    %111 = vset.pattern.permute.xlu0 0
    %112 = vperm.xlu0 %111, %v69
    %v113 = vpop.permute.xlu0 %112
    %114 = vset.pattern.permute.xlu0 0
    %115 = vperm.xlu0 %114, %v70
    %v116 = vpop.permute.xlu0 %115
    %117 = vset.pattern.permute.xlu0 0
    %118 = vperm.xlu0 %117, %v71
    %v119 = vpop.permute.xlu0 %118
    %120 = vset.pattern.permute.xlu0 0
    %121 = vperm.xlu0 %120, %v72
    %v122 = vpop.permute.xlu0 %121
    %123 = vset.pattern.permute.xlu0 0
    %124 = vperm.xlu0 %123, %v73
    %v125 = vpop.permute.xlu0 %124
    %126 = vset.pattern.permute.xlu0 0
    %127 = vperm.xlu0 %126, %v74
    %v128 = vpop.permute.xlu0 %127
    %129 = vset.pattern.permute.xlu0 0
    %130 = vperm.xlu0 %129, %v75
    %v131 = vpop.permute.xlu0 %130
    %132 = vset.pattern.permute.xlu0 0
    %133 = vperm.xlu0 %132, %v76
    %v134 = vpop.permute.xlu0 %133
    %135 = vset.pattern.permute.xlu0 0
    %136 = vperm.xlu0 %135, %v77
    %v137 = vpop.permute.xlu0 %136
    %138 = vset.pattern.permute.xlu0 0
    %139 = vperm.xlu0 %138, %v78
    %v140 = vpop.permute.xlu0 %139
    %141 = vset.pattern.permute.xlu0 0
    %142 = vperm.xlu0 %141, %v79
    %v143 = vpop.permute.xlu0 %142
    %144 = vset.pattern.permute.xlu0 0
    %145 = vperm.xlu0 %144, %v80
    %v146 = vpop.permute.xlu0 %145
    %147 = vset.pattern.permute.xlu0 0
    %148 = vperm.xlu0 %147, %v81
    %v149 = vpop.permute.xlu0 %148
    %150 = vset.pattern.permute.xlu0 0
    %151 = vperm.xlu0 %150, %v82
    %v152 = vpop.permute.xlu0 %151
    %153 = vset.pattern.permute.xlu0 0
    %154 = vperm.xlu0 %153, %v83
    %v155 = vpop.permute.xlu0 %154
    %156 = vset.pattern.permute.xlu0 0
    %157 = vperm.xlu0 %156, %v84
    %v158 = vpop.permute.xlu0 %157
    %159 = vset.pattern.permute.xlu0 0
    %160 = vperm.xlu0 %159, %v85
    %v161 = vpop.permute.xlu0 %160
    %162 = vset.pattern.permute.xlu0 0
    %163 = vperm.xlu0 %162, %v86
    %v164 = vpop.permute.xlu0 %163
    %vm165 = vcmp.eq.s32.totalorder %v53, %v89
    %vm166 = vcmp.eq.s32.totalorder %v54, %v89
    %vm167 = vcmp.eq.s32.totalorder %v55, %v89
    %vm168 = vcmp.eq.s32.totalorder %v56, %v89
    %vm169 = vcmp.eq.s32.totalorder %v57, %v89
    %vm170 = vcmp.eq.s32.totalorder %v58, %v89
    %vm171 = vcmp.eq.s32.totalorder %v59, %v89
    %vm172 = vcmp.eq.s32.totalorder %v60, %v89
    %vm173 = vcmp.eq.s32.totalorder %v53, %v92
    %vm174 = vcmp.eq.s32.totalorder %v54, %v92
    %vm175 = vcmp.eq.s32.totalorder %v55, %v92
    %vm176 = vcmp.eq.s32.totalorder %v56, %v92
    %vm177 = vcmp.eq.s32.totalorder %v57, %v92
    %vm178 = vcmp.eq.s32.totalorder %v58, %v92
    %vm179 = vcmp.eq.s32.totalorder %v59, %v92
    %vm180 = vcmp.eq.s32.totalorder %v60, %v92
    %vm181 = vcmp.eq.s32.totalorder %v53, %v95
    %vm182 = vcmp.eq.s32.totalorder %v54, %v95
    %vm183 = vcmp.eq.s32.totalorder %v55, %v95
    %vm184 = vcmp.eq.s32.totalorder %v56, %v95
    %vm185 = vcmp.eq.s32.totalorder %v57, %v95
    %vm186 = vcmp.eq.s32.totalorder %v58, %v95
    %vm187 = vcmp.eq.s32.totalorder %v59, %v95
    %vm188 = vcmp.eq.s32.totalorder %v60, %v95
    %vm189 = vcmp.eq.s32.totalorder %v53, %v98
    %vm190 = vcmp.eq.s32.totalorder %v54, %v98
    %vm191 = vcmp.eq.s32.totalorder %v55, %v98
    %vm192 = vcmp.eq.s32.totalorder %v56, %v98
    %vm193 = vcmp.eq.s32.totalorder %v57, %v98
    %vm194 = vcmp.eq.s32.totalorder %v58, %v98
    %vm195 = vcmp.eq.s32.totalorder %v59, %v98
    %vm196 = vcmp.eq.s32.totalorder %v60, %v98
    %vm197 = vcmp.eq.s32.totalorder %v53, %v101
    %vm198 = vcmp.eq.s32.totalorder %v54, %v101
    %vm199 = vcmp.eq.s32.totalorder %v55, %v101
    %vm200 = vcmp.eq.s32.totalorder %v56, %v101
    %vm201 = vcmp.eq.s32.totalorder %v57, %v101
    %vm202 = vcmp.eq.s32.totalorder %v58, %v101
    %vm203 = vcmp.eq.s32.totalorder %v59, %v101
    %vm204 = vcmp.eq.s32.totalorder %v60, %v101
    %vm205 = vcmp.eq.s32.totalorder %v53, %v104
    %vm206 = vcmp.eq.s32.totalorder %v54, %v104
    %vm207 = vcmp.eq.s32.totalorder %v55, %v104
    %vm208 = vcmp.eq.s32.totalorder %v56, %v104
    %vm209 = vcmp.eq.s32.totalorder %v57, %v104
    %vm210 = vcmp.eq.s32.totalorder %v58, %v104
    %vm211 = vcmp.eq.s32.totalorder %v59, %v104
    %vm212 = vcmp.eq.s32.totalorder %v60, %v104
    %vm213 = vcmp.eq.s32.totalorder %v53, %v107
    %vm214 = vcmp.eq.s32.totalorder %v54, %v107
    %vm215 = vcmp.eq.s32.totalorder %v55, %v107
    %vm216 = vcmp.eq.s32.totalorder %v56, %v107
    %vm217 = vcmp.eq.s32.totalorder %v57, %v107
    %vm218 = vcmp.eq.s32.totalorder %v58, %v107
    %vm219 = vcmp.eq.s32.totalorder %v59, %v107
    %vm220 = vcmp.eq.s32.totalorder %v60, %v107
    %vm221 = vcmp.eq.s32.totalorder %v53, %v110
    %vm222 = vcmp.eq.s32.totalorder %v54, %v110
    %vm223 = vcmp.eq.s32.totalorder %v55, %v110
    %vm224 = vcmp.eq.s32.totalorder %v56, %v110
    %vm225 = vcmp.eq.s32.totalorder %v57, %v110
    %vm226 = vcmp.eq.s32.totalorder %v58, %v110
    %vm227 = vcmp.eq.s32.totalorder %v59, %v110
    %vm228 = vcmp.eq.s32.totalorder %v60, %v110
    %vm229 = vcmp.eq.s32.totalorder %v53, %v113
    %vm230 = vcmp.eq.s32.totalorder %v54, %v113
    %vm231 = vcmp.eq.s32.totalorder %v55, %v113
    %vm232 = vcmp.eq.s32.totalorder %v56, %v113
    %vm233 = vcmp.eq.s32.totalorder %v57, %v113
    %vm234 = vcmp.eq.s32.totalorder %v58, %v113
    %vm235 = vcmp.eq.s32.totalorder %v59, %v113
    %vm236 = vcmp.eq.s32.totalorder %v60, %v113
    %vm237 = vcmp.eq.s32.totalorder %v53, %v116
    %vm238 = vcmp.eq.s32.totalorder %v54, %v116
    %vm239 = vcmp.eq.s32.totalorder %v55, %v116
    %vm240 = vcmp.eq.s32.totalorder %v56, %v116
    %vm241 = vcmp.eq.s32.totalorder %v57, %v116
    %vm242 = vcmp.eq.s32.totalorder %v58, %v116
    %vm243 = vcmp.eq.s32.totalorder %v59, %v116
    %vm244 = vcmp.eq.s32.totalorder %v60, %v116
    %vm245 = vcmp.eq.s32.totalorder %v53, %v119
    %vm246 = vcmp.eq.s32.totalorder %v54, %v119
    %vm247 = vcmp.eq.s32.totalorder %v55, %v119
    %vm248 = vcmp.eq.s32.totalorder %v56, %v119
    %vm249 = vcmp.eq.s32.totalorder %v57, %v119
    %vm250 = vcmp.eq.s32.totalorder %v58, %v119
    %vm251 = vcmp.eq.s32.totalorder %v59, %v119
    %vm252 = vcmp.eq.s32.totalorder %v60, %v119
    %vm253 = vcmp.eq.s32.totalorder %v53, %v122
    %vm254 = vcmp.eq.s32.totalorder %v54, %v122
    %vm255 = vcmp.eq.s32.totalorder %v55, %v122
    %vm256 = vcmp.eq.s32.totalorder %v56, %v122
    %vm257 = vcmp.eq.s32.totalorder %v57, %v122
    %vm258 = vcmp.eq.s32.totalorder %v58, %v122
    %vm259 = vcmp.eq.s32.totalorder %v59, %v122
    %vm260 = vcmp.eq.s32.totalorder %v60, %v122
    %vm261 = vcmp.eq.s32.totalorder %v53, %v125
    %vm262 = vcmp.eq.s32.totalorder %v54, %v125
    %vm263 = vcmp.eq.s32.totalorder %v55, %v125
    %vm264 = vcmp.eq.s32.totalorder %v56, %v125
    %vm265 = vcmp.eq.s32.totalorder %v57, %v125
    %vm266 = vcmp.eq.s32.totalorder %v58, %v125
    %vm267 = vcmp.eq.s32.totalorder %v59, %v125
    %vm268 = vcmp.eq.s32.totalorder %v60, %v125
    %vm269 = vcmp.eq.s32.totalorder %v53, %v128
    %vm270 = vcmp.eq.s32.totalorder %v54, %v128
    %vm271 = vcmp.eq.s32.totalorder %v55, %v128
    %vm272 = vcmp.eq.s32.totalorder %v56, %v128
    %vm273 = vcmp.eq.s32.totalorder %v57, %v128
    %vm274 = vcmp.eq.s32.totalorder %v58, %v128
    %vm275 = vcmp.eq.s32.totalorder %v59, %v128
    %vm276 = vcmp.eq.s32.totalorder %v60, %v128
    %vm277 = vcmp.eq.s32.totalorder %v53, %v131
    %vm278 = vcmp.eq.s32.totalorder %v54, %v131
    %vm279 = vcmp.eq.s32.totalorder %v55, %v131
    %vm280 = vcmp.eq.s32.totalorder %v56, %v131
    %vm281 = vcmp.eq.s32.totalorder %v57, %v131
    %vm282 = vcmp.eq.s32.totalorder %v58, %v131
    %vm283 = vcmp.eq.s32.totalorder %v59, %v131
    %vm284 = vcmp.eq.s32.totalorder %v60, %v131
    %vm285 = vcmp.eq.s32.totalorder %v53, %v134
    %vm286 = vcmp.eq.s32.totalorder %v54, %v134
    %vm287 = vcmp.eq.s32.totalorder %v55, %v134
    %vm288 = vcmp.eq.s32.totalorder %v56, %v134
    %vm289 = vcmp.eq.s32.totalorder %v57, %v134
    %vm290 = vcmp.eq.s32.totalorder %v58, %v134
    %vm291 = vcmp.eq.s32.totalorder %v59, %v134
    %vm292 = vcmp.eq.s32.totalorder %v60, %v134
    %vm293 = vcmp.eq.s32.totalorder %v53, %v137
    %vm294 = vcmp.eq.s32.totalorder %v54, %v137
    %vm295 = vcmp.eq.s32.totalorder %v55, %v137
    %vm296 = vcmp.eq.s32.totalorder %v56, %v137
    %vm297 = vcmp.eq.s32.totalorder %v57, %v137
    %vm298 = vcmp.eq.s32.totalorder %v58, %v137
    %vm299 = vcmp.eq.s32.totalorder %v59, %v137
    %vm300 = vcmp.eq.s32.totalorder %v60, %v137
    %vm301 = vcmp.eq.s32.totalorder %v53, %v140
    %vm302 = vcmp.eq.s32.totalorder %v54, %v140
    %vm303 = vcmp.eq.s32.totalorder %v55, %v140
    %vm304 = vcmp.eq.s32.totalorder %v56, %v140
    %vm305 = vcmp.eq.s32.totalorder %v57, %v140
    %vm306 = vcmp.eq.s32.totalorder %v58, %v140
    %vm307 = vcmp.eq.s32.totalorder %v59, %v140
    %vm308 = vcmp.eq.s32.totalorder %v60, %v140
    %vm309 = vcmp.eq.s32.totalorder %v53, %v143
    %vm310 = vcmp.eq.s32.totalorder %v54, %v143
    %vm311 = vcmp.eq.s32.totalorder %v55, %v143
    %vm312 = vcmp.eq.s32.totalorder %v56, %v143
    %vm313 = vcmp.eq.s32.totalorder %v57, %v143
    %vm314 = vcmp.eq.s32.totalorder %v58, %v143
    %vm315 = vcmp.eq.s32.totalorder %v59, %v143
    %vm316 = vcmp.eq.s32.totalorder %v60, %v143
    %vm317 = vcmp.eq.s32.totalorder %v53, %v146
    %vm318 = vcmp.eq.s32.totalorder %v54, %v146
    %vm319 = vcmp.eq.s32.totalorder %v55, %v146
    %vm320 = vcmp.eq.s32.totalorder %v56, %v146
    %vm321 = vcmp.eq.s32.totalorder %v57, %v146
    %vm322 = vcmp.eq.s32.totalorder %v58, %v146
    %vm323 = vcmp.eq.s32.totalorder %v59, %v146
    %vm324 = vcmp.eq.s32.totalorder %v60, %v146
    %vm325 = vcmp.eq.s32.totalorder %v53, %v149
    %vm326 = vcmp.eq.s32.totalorder %v54, %v149
    %vm327 = vcmp.eq.s32.totalorder %v55, %v149
    %vm328 = vcmp.eq.s32.totalorder %v56, %v149
    %vm329 = vcmp.eq.s32.totalorder %v57, %v149
    %vm330 = vcmp.eq.s32.totalorder %v58, %v149
    %vm331 = vcmp.eq.s32.totalorder %v59, %v149
    %vm332 = vcmp.eq.s32.totalorder %v60, %v149
    %vm333 = vcmp.eq.s32.totalorder %v53, %v152
    %vm334 = vcmp.eq.s32.totalorder %v54, %v152
    %vm335 = vcmp.eq.s32.totalorder %v55, %v152
    %vm336 = vcmp.eq.s32.totalorder %v56, %v152
    %vm337 = vcmp.eq.s32.totalorder %v57, %v152
    %vm338 = vcmp.eq.s32.totalorder %v58, %v152
    %vm339 = vcmp.eq.s32.totalorder %v59, %v152
    %vm340 = vcmp.eq.s32.totalorder %v60, %v152
    %vm341 = vcmp.eq.s32.totalorder %v53, %v155
    %vm342 = vcmp.eq.s32.totalorder %v54, %v155
    %vm343 = vcmp.eq.s32.totalorder %v55, %v155
    %vm344 = vcmp.eq.s32.totalorder %v56, %v155
    %vm345 = vcmp.eq.s32.totalorder %v57, %v155
    %vm346 = vcmp.eq.s32.totalorder %v58, %v155
    %vm347 = vcmp.eq.s32.totalorder %v59, %v155
    %vm348 = vcmp.eq.s32.totalorder %v60, %v155
    %vm349 = vcmp.eq.s32.totalorder %v53, %v158
    %vm350 = vcmp.eq.s32.totalorder %v54, %v158
    %vm351 = vcmp.eq.s32.totalorder %v55, %v158
    %vm352 = vcmp.eq.s32.totalorder %v56, %v158
    %vm353 = vcmp.eq.s32.totalorder %v57, %v158
    %vm354 = vcmp.eq.s32.totalorder %v58, %v158
    %vm355 = vcmp.eq.s32.totalorder %v59, %v158
    %vm356 = vcmp.eq.s32.totalorder %v60, %v158
    %vm357 = vcmp.eq.s32.totalorder %v53, %v161
    %vm358 = vcmp.eq.s32.totalorder %v54, %v161
    %vm359 = vcmp.eq.s32.totalorder %v55, %v161
    %vm360 = vcmp.eq.s32.totalorder %v56, %v161
    %vm361 = vcmp.eq.s32.totalorder %v57, %v161
    %vm362 = vcmp.eq.s32.totalorder %v58, %v161
    %vm363 = vcmp.eq.s32.totalorder %v59, %v161
    %vm364 = vcmp.eq.s32.totalorder %v60, %v161
    %vm365 = vcmp.eq.s32.totalorder %v53, %v164
    %vm366 = vcmp.eq.s32.totalorder %v54, %v164
    %vm367 = vcmp.eq.s32.totalorder %v55, %v164
    %vm368 = vcmp.eq.s32.totalorder %v56, %v164
    %vm369 = vcmp.eq.s32.totalorder %v57, %v164
    %vm370 = vcmp.eq.s32.totalorder %v58, %v164
    %vm371 = vcmp.eq.s32.totalorder %v59, %v164
    %vm372 = vcmp.eq.s32.totalorder %v60, %v164
    %v373 = vsel %vm165, 1, 0
    %v374 = vsel %vm166, 1, 0
    %v375 = vsel %vm167, 1, 0
    %v376 = vsel %vm168, 1, 0
    %v377 = vsel %vm169, 1, 0
    %v378 = vsel %vm170, 1, 0
    %v379 = vsel %vm171, 1, 0
    %v380 = vsel %vm172, 1, 0
    %v381 = vsel %vm173, 1, 0
    %v382 = vsel %vm174, 1, 0
    %v383 = vsel %vm175, 1, 0
    %v384 = vsel %vm176, 1, 0
    %v385 = vsel %vm177, 1, 0
    %v386 = vsel %vm178, 1, 0
    %v387 = vsel %vm179, 1, 0
    %v388 = vsel %vm180, 1, 0
    %v389 = vsel %vm181, 1, 0
    %v390 = vsel %vm182, 1, 0
    %v391 = vsel %vm183, 1, 0
    %v392 = vsel %vm184, 1, 0
    %v393 = vsel %vm185, 1, 0
    %v394 = vsel %vm186, 1, 0
    %v395 = vsel %vm187, 1, 0
    %v396 = vsel %vm188, 1, 0
    %v397 = vsel %vm189, 1, 0
    %v398 = vsel %vm190, 1, 0
    %v399 = vsel %vm191, 1, 0
    %v400 = vsel %vm192, 1, 0
    %v401 = vsel %vm193, 1, 0
    %v402 = vsel %vm194, 1, 0
    %v403 = vsel %vm195, 1, 0
    %v404 = vsel %vm196, 1, 0
    %v405 = vsel %vm197, 1, 0
    %v406 = vsel %vm198, 1, 0
    %v407 = vsel %vm199, 1, 0
    %v408 = vsel %vm200, 1, 0
    %v409 = vsel %vm201, 1, 0
    %v410 = vsel %vm202, 1, 0
    %v411 = vsel %vm203, 1, 0
    %v412 = vsel %vm204, 1, 0
    %v413 = vsel %vm205, 1, 0
    %v414 = vsel %vm206, 1, 0
    %v415 = vsel %vm207, 1, 0
    %v416 = vsel %vm208, 1, 0
    %v417 = vsel %vm209, 1, 0
    %v418 = vsel %vm210, 1, 0
    %v419 = vsel %vm211, 1, 0
    %v420 = vsel %vm212, 1, 0
    %v421 = vsel %vm213, 1, 0
    %v422 = vsel %vm214, 1, 0
    %v423 = vsel %vm215, 1, 0
    %v424 = vsel %vm216, 1, 0
    %v425 = vsel %vm217, 1, 0
    %v426 = vsel %vm218, 1, 0
    %v427 = vsel %vm219, 1, 0
    %v428 = vsel %vm220, 1, 0
    %v429 = vsel %vm221, 1, 0
    %v430 = vsel %vm222, 1, 0
    %v431 = vsel %vm223, 1, 0
    %v432 = vsel %vm224, 1, 0
    %v433 = vsel %vm225, 1, 0
    %v434 = vsel %vm226, 1, 0
    %v435 = vsel %vm227, 1, 0
    %v436 = vsel %vm228, 1, 0
    %v437 = vsel %vm229, 1, 0
    %v438 = vsel %vm230, 1, 0
    %v439 = vsel %vm231, 1, 0
    %v440 = vsel %vm232, 1, 0
    %v441 = vsel %vm233, 1, 0
    %v442 = vsel %vm234, 1, 0
    %v443 = vsel %vm235, 1, 0
    %v444 = vsel %vm236, 1, 0
    %v445 = vsel %vm237, 1, 0
    %v446 = vsel %vm238, 1, 0
    %v447 = vsel %vm239, 1, 0
    %v448 = vsel %vm240, 1, 0
    %v449 = vsel %vm241, 1, 0
    %v450 = vsel %vm242, 1, 0
    %v451 = vsel %vm243, 1, 0
    %v452 = vsel %vm244, 1, 0
    %v453 = vsel %vm245, 1, 0
    %v454 = vsel %vm246, 1, 0
    %v455 = vsel %vm247, 1, 0
    %v456 = vsel %vm248, 1, 0
    %v457 = vsel %vm249, 1, 0
    %v458 = vsel %vm250, 1, 0
    %v459 = vsel %vm251, 1, 0
    %v460 = vsel %vm252, 1, 0
    %v461 = vsel %vm253, 1, 0
    %v462 = vsel %vm254, 1, 0
    %v463 = vsel %vm255, 1, 0
    %v464 = vsel %vm256, 1, 0
    %v465 = vsel %vm257, 1, 0
    %v466 = vsel %vm258, 1, 0
    %v467 = vsel %vm259, 1, 0
    %v468 = vsel %vm260, 1, 0
    %v469 = vsel %vm261, 1, 0
    %v470 = vsel %vm262, 1, 0
    %v471 = vsel %vm263, 1, 0
    %v472 = vsel %vm264, 1, 0
    %v473 = vsel %vm265, 1, 0
    %v474 = vsel %vm266, 1, 0
    %v475 = vsel %vm267, 1, 0
    %v476 = vsel %vm268, 1, 0
    %v477 = vsel %vm269, 1, 0
    %v478 = vsel %vm270, 1, 0
    %v479 = vsel %vm271, 1, 0
    %v480 = vsel %vm272, 1, 0
    %v481 = vsel %vm273, 1, 0
    %v482 = vsel %vm274, 1, 0
    %v483 = vsel %vm275, 1, 0
    %v484 = vsel %vm276, 1, 0
    %v485 = vsel %vm277, 1, 0
    %v486 = vsel %vm278, 1, 0
    %v487 = vsel %vm279, 1, 0
    %v488 = vsel %vm280, 1, 0
    %v489 = vsel %vm281, 1, 0
    %v490 = vsel %vm282, 1, 0
    %v491 = vsel %vm283, 1, 0
    %v492 = vsel %vm284, 1, 0
    %v493 = vsel %vm285, 1, 0
    %v494 = vsel %vm286, 1, 0
    %v495 = vsel %vm287, 1, 0
    %v496 = vsel %vm288, 1, 0
    %v497 = vsel %vm289, 1, 0
    %v498 = vsel %vm290, 1, 0
    %v499 = vsel %vm291, 1, 0
    %v500 = vsel %vm292, 1, 0
    %v501 = vsel %vm293, 1, 0
    %v502 = vsel %vm294, 1, 0
    %v503 = vsel %vm295, 1, 0
    %v504 = vsel %vm296, 1, 0
    %v505 = vsel %vm297, 1, 0
    %v506 = vsel %vm298, 1, 0
    %v507 = vsel %vm299, 1, 0
    %v508 = vsel %vm300, 1, 0
    %v509 = vsel %vm301, 1, 0
    %v510 = vsel %vm302, 1, 0
    %v511 = vsel %vm303, 1, 0
    %v512 = vsel %vm304, 1, 0
    %v513 = vsel %vm305, 1, 0
    %v514 = vsel %vm306, 1, 0
    %v515 = vsel %vm307, 1, 0
    %v516 = vsel %vm308, 1, 0
    %v517 = vsel %vm309, 1, 0
    %v518 = vsel %vm310, 1, 0
    %v519 = vsel %vm311, 1, 0
    %v520 = vsel %vm312, 1, 0
    %v521 = vsel %vm313, 1, 0
    %v522 = vsel %vm314, 1, 0
    %v523 = vsel %vm315, 1, 0
    %v524 = vsel %vm316, 1, 0
    %v525 = vsel %vm317, 1, 0
    %v526 = vsel %vm318, 1, 0
    %v527 = vsel %vm319, 1, 0
    %v528 = vsel %vm320, 1, 0
    %v529 = vsel %vm321, 1, 0
    %v530 = vsel %vm322, 1, 0
    %v531 = vsel %vm323, 1, 0
    %v532 = vsel %vm324, 1, 0
    %v533 = vsel %vm325, 1, 0
    %v534 = vsel %vm326, 1, 0
    %v535 = vsel %vm327, 1, 0
    %v536 = vsel %vm328, 1, 0
    %v537 = vsel %vm329, 1, 0
    %v538 = vsel %vm330, 1, 0
    %v539 = vsel %vm331, 1, 0
    %v540 = vsel %vm332, 1, 0
    %v541 = vsel %vm333, 1, 0
    %v542 = vsel %vm334, 1, 0
    %v543 = vsel %vm335, 1, 0
    %v544 = vsel %vm336, 1, 0
    %v545 = vsel %vm337, 1, 0
    %v546 = vsel %vm338, 1, 0
    %v547 = vsel %vm339, 1, 0
    %v548 = vsel %vm340, 1, 0
    %v549 = vsel %vm341, 1, 0
    %v550 = vsel %vm342, 1, 0
    %v551 = vsel %vm343, 1, 0
    %v552 = vsel %vm344, 1, 0
    %v553 = vsel %vm345, 1, 0
    %v554 = vsel %vm346, 1, 0
    %v555 = vsel %vm347, 1, 0
    %v556 = vsel %vm348, 1, 0
    %v557 = vsel %vm349, 1, 0
    %v558 = vsel %vm350, 1, 0
    %v559 = vsel %vm351, 1, 0
    %v560 = vsel %vm352, 1, 0
    %v561 = vsel %vm353, 1, 0
    %v562 = vsel %vm354, 1, 0
    %v563 = vsel %vm355, 1, 0
    %v564 = vsel %vm356, 1, 0
    %v565 = vsel %vm357, 1, 0
    %v566 = vsel %vm358, 1, 0
    %v567 = vsel %vm359, 1, 0
    %v568 = vsel %vm360, 1, 0
    %v569 = vsel %vm361, 1, 0
    %v570 = vsel %vm362, 1, 0
    %v571 = vsel %vm363, 1, 0
    %v572 = vsel %vm364, 1, 0
    %v573 = vsel %vm365, 1, 0
    %v574 = vsel %vm366, 1, 0
    %v575 = vsel %vm367, 1, 0
    %v576 = vsel %vm368, 1, 0
    %v577 = vsel %vm369, 1, 0
    %v578 = vsel %vm370, 1, 0
    %v579 = vsel %vm371, 1, 0
    %v580 = vsel %vm372, 1, 0
    %v581 = vcvt.s32.f32 %v373
    %v582 = vcvt.s32.f32 %v374
    %v583 = vcvt.s32.f32 %v375
    %v584 = vcvt.s32.f32 %v376
    %v585 = vcvt.s32.f32 %v377
    %v586 = vcvt.s32.f32 %v378
    %v587 = vcvt.s32.f32 %v379
    %v588 = vcvt.s32.f32 %v380
    %v589 = vcvt.s32.f32 %v381
    %v590 = vcvt.s32.f32 %v382
    %v591 = vcvt.s32.f32 %v383
    %v592 = vcvt.s32.f32 %v384
    %v593 = vcvt.s32.f32 %v385
    %v594 = vcvt.s32.f32 %v386
    %v595 = vcvt.s32.f32 %v387
    %v596 = vcvt.s32.f32 %v388
    %v597 = vcvt.s32.f32 %v389
    %v598 = vcvt.s32.f32 %v390
    %v599 = vcvt.s32.f32 %v391
    %v600 = vcvt.s32.f32 %v392
    %v601 = vcvt.s32.f32 %v393
    %v602 = vcvt.s32.f32 %v394
    %v603 = vcvt.s32.f32 %v395
    %v604 = vcvt.s32.f32 %v396
    %v605 = vcvt.s32.f32 %v397
    %v606 = vcvt.s32.f32 %v398
    %v607 = vcvt.s32.f32 %v399
    %v608 = vcvt.s32.f32 %v400
    %v609 = vcvt.s32.f32 %v401
    %v610 = vcvt.s32.f32 %v402
    %v611 = vcvt.s32.f32 %v403
    %v612 = vcvt.s32.f32 %v404
    %v613 = vcvt.s32.f32 %v405
    %v614 = vcvt.s32.f32 %v406
    %v615 = vcvt.s32.f32 %v407
    %v616 = vcvt.s32.f32 %v408
    %v617 = vcvt.s32.f32 %v409
    %v618 = vcvt.s32.f32 %v410
    %v619 = vcvt.s32.f32 %v411
    %v620 = vcvt.s32.f32 %v412
    %v621 = vcvt.s32.f32 %v413
    %v622 = vcvt.s32.f32 %v414
    %v623 = vcvt.s32.f32 %v415
    %v624 = vcvt.s32.f32 %v416
    %v625 = vcvt.s32.f32 %v417
    %v626 = vcvt.s32.f32 %v418
    %v627 = vcvt.s32.f32 %v419
    %v628 = vcvt.s32.f32 %v420
    %v629 = vcvt.s32.f32 %v421
    %v630 = vcvt.s32.f32 %v422
    %v631 = vcvt.s32.f32 %v423
    %v632 = vcvt.s32.f32 %v424
    %v633 = vcvt.s32.f32 %v425
    %v634 = vcvt.s32.f32 %v426
    %v635 = vcvt.s32.f32 %v427
    %v636 = vcvt.s32.f32 %v428
    %v637 = vcvt.s32.f32 %v429
    %v638 = vcvt.s32.f32 %v430
    %v639 = vcvt.s32.f32 %v431
    %v640 = vcvt.s32.f32 %v432
    %v641 = vcvt.s32.f32 %v433
    %v642 = vcvt.s32.f32 %v434
    %v643 = vcvt.s32.f32 %v435
    %v644 = vcvt.s32.f32 %v436
    %v645 = vcvt.s32.f32 %v437
    %v646 = vcvt.s32.f32 %v438
    %v647 = vcvt.s32.f32 %v439
    %v648 = vcvt.s32.f32 %v440
    %v649 = vcvt.s32.f32 %v441
    %v650 = vcvt.s32.f32 %v442
    %v651 = vcvt.s32.f32 %v443
    %v652 = vcvt.s32.f32 %v444
    %v653 = vcvt.s32.f32 %v445
    %v654 = vcvt.s32.f32 %v446
    %v655 = vcvt.s32.f32 %v447
    %v656 = vcvt.s32.f32 %v448
    %v657 = vcvt.s32.f32 %v449
    %v658 = vcvt.s32.f32 %v450
    %v659 = vcvt.s32.f32 %v451
    %v660 = vcvt.s32.f32 %v452
    %v661 = vcvt.s32.f32 %v453
    %v662 = vcvt.s32.f32 %v454
    %v663 = vcvt.s32.f32 %v455
    %v664 = vcvt.s32.f32 %v456
    %v665 = vcvt.s32.f32 %v457
    %v666 = vcvt.s32.f32 %v458
    %v667 = vcvt.s32.f32 %v459
    %v668 = vcvt.s32.f32 %v460
    %v669 = vcvt.s32.f32 %v461
    %v670 = vcvt.s32.f32 %v462
    %v671 = vcvt.s32.f32 %v463
    %v672 = vcvt.s32.f32 %v464
    %v673 = vcvt.s32.f32 %v465
    %v674 = vcvt.s32.f32 %v466
    %v675 = vcvt.s32.f32 %v467
    %v676 = vcvt.s32.f32 %v468
    %v677 = vcvt.s32.f32 %v469
    %v678 = vcvt.s32.f32 %v470
    %v679 = vcvt.s32.f32 %v471
    %v680 = vcvt.s32.f32 %v472
    %v681 = vcvt.s32.f32 %v473
    %v682 = vcvt.s32.f32 %v474
    %v683 = vcvt.s32.f32 %v475
    %v684 = vcvt.s32.f32 %v476
    %v685 = vcvt.s32.f32 %v477
    %v686 = vcvt.s32.f32 %v478
    %v687 = vcvt.s32.f32 %v479
    %v688 = vcvt.s32.f32 %v480
    %v689 = vcvt.s32.f32 %v481
    %v690 = vcvt.s32.f32 %v482
    %v691 = vcvt.s32.f32 %v483
    %v692 = vcvt.s32.f32 %v484
    %v693 = vcvt.s32.f32 %v485
    %v694 = vcvt.s32.f32 %v486
    %v695 = vcvt.s32.f32 %v487
    %v696 = vcvt.s32.f32 %v488
    %v697 = vcvt.s32.f32 %v489
    %v698 = vcvt.s32.f32 %v490
    %v699 = vcvt.s32.f32 %v491
    %v700 = vcvt.s32.f32 %v492
    %v701 = vcvt.s32.f32 %v493
    %v702 = vcvt.s32.f32 %v494
    %v703 = vcvt.s32.f32 %v495
    %v704 = vcvt.s32.f32 %v496
    %v705 = vcvt.s32.f32 %v497
    %v706 = vcvt.s32.f32 %v498
    %v707 = vcvt.s32.f32 %v499
    %v708 = vcvt.s32.f32 %v500
    %v709 = vcvt.s32.f32 %v501
    %v710 = vcvt.s32.f32 %v502
    %v711 = vcvt.s32.f32 %v503
    %v712 = vcvt.s32.f32 %v504
    %v713 = vcvt.s32.f32 %v505
    %v714 = vcvt.s32.f32 %v506
    %v715 = vcvt.s32.f32 %v507
    %v716 = vcvt.s32.f32 %v508
    %v717 = vcvt.s32.f32 %v509
    %v718 = vcvt.s32.f32 %v510
    %v719 = vcvt.s32.f32 %v511
    %v720 = vcvt.s32.f32 %v512
    %v721 = vcvt.s32.f32 %v513
    %v722 = vcvt.s32.f32 %v514
    %v723 = vcvt.s32.f32 %v515
    %v724 = vcvt.s32.f32 %v516
    %v725 = vcvt.s32.f32 %v517
    %v726 = vcvt.s32.f32 %v518
    %v727 = vcvt.s32.f32 %v519
    %v728 = vcvt.s32.f32 %v520
    %v729 = vcvt.s32.f32 %v521
    %v730 = vcvt.s32.f32 %v522
    %v731 = vcvt.s32.f32 %v523
    %v732 = vcvt.s32.f32 %v524
    %v733 = vcvt.s32.f32 %v525
    %v734 = vcvt.s32.f32 %v526
    %v735 = vcvt.s32.f32 %v527
    %v736 = vcvt.s32.f32 %v528
    %v737 = vcvt.s32.f32 %v529
    %v738 = vcvt.s32.f32 %v530
    %v739 = vcvt.s32.f32 %v531
    %v740 = vcvt.s32.f32 %v532
    %v741 = vcvt.s32.f32 %v533
    %v742 = vcvt.s32.f32 %v534
    %v743 = vcvt.s32.f32 %v535
    %v744 = vcvt.s32.f32 %v536
    %v745 = vcvt.s32.f32 %v537
    %v746 = vcvt.s32.f32 %v538
    %v747 = vcvt.s32.f32 %v539
    %v748 = vcvt.s32.f32 %v540
    %v749 = vcvt.s32.f32 %v541
    %v750 = vcvt.s32.f32 %v542
    %v751 = vcvt.s32.f32 %v543
    %v752 = vcvt.s32.f32 %v544
    %v753 = vcvt.s32.f32 %v545
    %v754 = vcvt.s32.f32 %v546
    %v755 = vcvt.s32.f32 %v547
    %v756 = vcvt.s32.f32 %v548
    %v757 = vcvt.s32.f32 %v549
    %v758 = vcvt.s32.f32 %v550
    %v759 = vcvt.s32.f32 %v551
    %v760 = vcvt.s32.f32 %v552
    %v761 = vcvt.s32.f32 %v553
    %v762 = vcvt.s32.f32 %v554
    %v763 = vcvt.s32.f32 %v555
    %v764 = vcvt.s32.f32 %v556
    %v765 = vcvt.s32.f32 %v557
    %v766 = vcvt.s32.f32 %v558
    %v767 = vcvt.s32.f32 %v559
    %v768 = vcvt.s32.f32 %v560
    %v769 = vcvt.s32.f32 %v561
    %v770 = vcvt.s32.f32 %v562
    %v771 = vcvt.s32.f32 %v563
    %v772 = vcvt.s32.f32 %v564
    %v773 = vcvt.s32.f32 %v565
    %v774 = vcvt.s32.f32 %v566
    %v775 = vcvt.s32.f32 %v567
    %v776 = vcvt.s32.f32 %v568
    %v777 = vcvt.s32.f32 %v569
    %v778 = vcvt.s32.f32 %v570
    %v779 = vcvt.s32.f32 %v571
    %v780 = vcvt.s32.f32 %v572
    %v781 = vcvt.s32.f32 %v573
    %v782 = vcvt.s32.f32 %v574
    %v783 = vcvt.s32.f32 %v575
    %v784 = vcvt.s32.f32 %v576
    %v785 = vcvt.s32.f32 %v577
    %v786 = vcvt.s32.f32 %v578
    %v787 = vcvt.s32.f32 %v579
    %v788 = vcvt.s32.f32 %v580
    %v789 = vpack.c.bf16 %v589, %v581
    %v790 = vpack.c.bf16 %v590, %v582
    %v791 = vpack.c.bf16 %v591, %v583
    %v792 = vpack.c.bf16 %v592, %v584
    %v793 = vpack.c.bf16 %v593, %v585
    %v794 = vpack.c.bf16 %v594, %v586
    %v795 = vpack.c.bf16 %v595, %v587
    %v796 = vpack.c.bf16 %v596, %v588
    %v797 = vpack.c.bf16 %v605, %v597
    %v798 = vpack.c.bf16 %v606, %v598
    %v799 = vpack.c.bf16 %v607, %v599
    %v800 = vpack.c.bf16 %v608, %v600
    %v801 = vpack.c.bf16 %v609, %v601
    %v802 = vpack.c.bf16 %v610, %v602
    %v803 = vpack.c.bf16 %v611, %v603
    %v804 = vpack.c.bf16 %v612, %v604
    %v805 = vpack.c.bf16 %v621, %v613
    %v806 = vpack.c.bf16 %v622, %v614
    %v807 = vpack.c.bf16 %v623, %v615
    %v808 = vpack.c.bf16 %v624, %v616
    %v809 = vpack.c.bf16 %v625, %v617
    %v810 = vpack.c.bf16 %v626, %v618
    %v811 = vpack.c.bf16 %v627, %v619
    %v812 = vpack.c.bf16 %v628, %v620
    %v813 = vpack.c.bf16 %v637, %v629
    %v814 = vpack.c.bf16 %v638, %v630
    %v815 = vpack.c.bf16 %v639, %v631
    %v816 = vpack.c.bf16 %v640, %v632
    %v817 = vpack.c.bf16 %v641, %v633
    %v818 = vpack.c.bf16 %v642, %v634
    %v819 = vpack.c.bf16 %v643, %v635
    %v820 = vpack.c.bf16 %v644, %v636
    %v821 = vpack.c.bf16 %v653, %v645
    %v822 = vpack.c.bf16 %v654, %v646
    %v823 = vpack.c.bf16 %v655, %v647
    %v824 = vpack.c.bf16 %v656, %v648
    %v825 = vpack.c.bf16 %v657, %v649
    %v826 = vpack.c.bf16 %v658, %v650
    %v827 = vpack.c.bf16 %v659, %v651
    %v828 = vpack.c.bf16 %v660, %v652
    %v829 = vpack.c.bf16 %v669, %v661
    %v830 = vpack.c.bf16 %v670, %v662
    %v831 = vpack.c.bf16 %v671, %v663
    %v832 = vpack.c.bf16 %v672, %v664
    %v833 = vpack.c.bf16 %v673, %v665
    %v834 = vpack.c.bf16 %v674, %v666
    %v835 = vpack.c.bf16 %v675, %v667
    %v836 = vpack.c.bf16 %v676, %v668
    %v837 = vpack.c.bf16 %v685, %v677
    %v838 = vpack.c.bf16 %v686, %v678
    %v839 = vpack.c.bf16 %v687, %v679
    %v840 = vpack.c.bf16 %v688, %v680
    %v841 = vpack.c.bf16 %v689, %v681
    %v842 = vpack.c.bf16 %v690, %v682
    %v843 = vpack.c.bf16 %v691, %v683
    %v844 = vpack.c.bf16 %v692, %v684
    %v845 = vpack.c.bf16 %v701, %v693
    %v846 = vpack.c.bf16 %v702, %v694
    %v847 = vpack.c.bf16 %v703, %v695
    %v848 = vpack.c.bf16 %v704, %v696
    %v849 = vpack.c.bf16 %v705, %v697
    %v850 = vpack.c.bf16 %v706, %v698
    %v851 = vpack.c.bf16 %v707, %v699
    %v852 = vpack.c.bf16 %v708, %v700
    %v853 = vpack.c.bf16 %v717, %v709
    %v854 = vpack.c.bf16 %v718, %v710
    %v855 = vpack.c.bf16 %v719, %v711
    %v856 = vpack.c.bf16 %v720, %v712
    %v857 = vpack.c.bf16 %v721, %v713
    %v858 = vpack.c.bf16 %v722, %v714
    %v859 = vpack.c.bf16 %v723, %v715
    %v860 = vpack.c.bf16 %v724, %v716
    %v861 = vpack.c.bf16 %v733, %v725
    %v862 = vpack.c.bf16 %v734, %v726
    %v863 = vpack.c.bf16 %v735, %v727
    %v864 = vpack.c.bf16 %v736, %v728
    %v865 = vpack.c.bf16 %v737, %v729
    %v866 = vpack.c.bf16 %v738, %v730
    %v867 = vpack.c.bf16 %v739, %v731
    %v868 = vpack.c.bf16 %v740, %v732
    %v869 = vpack.c.bf16 %v749, %v741
    %v870 = vpack.c.bf16 %v750, %v742
    %v871 = vpack.c.bf16 %v751, %v743
    %v872 = vpack.c.bf16 %v752, %v744
    %v873 = vpack.c.bf16 %v753, %v745
    %v874 = vpack.c.bf16 %v754, %v746
    %v875 = vpack.c.bf16 %v755, %v747
    %v876 = vpack.c.bf16 %v756, %v748
    %v877 = vpack.c.bf16 %v765, %v757
    %v878 = vpack.c.bf16 %v766, %v758
    %v879 = vpack.c.bf16 %v767, %v759
    %v880 = vpack.c.bf16 %v768, %v760
    %v881 = vpack.c.bf16 %v769, %v761
    %v882 = vpack.c.bf16 %v770, %v762
    %v883 = vpack.c.bf16 %v771, %v763
    %v884 = vpack.c.bf16 %v772, %v764
    %v885 = vpack.c.bf16 %v781, %v773
    %v886 = vpack.c.bf16 %v782, %v774
    %v887 = vpack.c.bf16 %v783, %v775
    %v888 = vpack.c.bf16 %v784, %v776
    %v889 = vpack.c.bf16 %v785, %v777
    %v890 = vpack.c.bf16 %v786, %v778
    %v891 = vpack.c.bf16 %v787, %v779
    %v892 = vpack.c.bf16 %v788, %v780
    %v893 = vld [vmem:[#allocation3] sm:$0xff]
    %v894 = vld [vmem:[#allocation3 + $0x8] sm:$0xff]
    %v895 = vld [vmem:[#allocation3 + $0x10] sm:$0xff]
    %v896 = vld [vmem:[#allocation3 + $0x18] sm:$0xf]
    %v897 = vld [vmem:[#allocation3 + $0x1c] sm:$0xff]
    %v898 = vld [vmem:[#allocation3 + $0x24] sm:$0xff]
    %v899 = vld [vmem:[#allocation3 + $0x2c] sm:$0xff]
    %v900 = vld [vmem:[#allocation3 + $0x34] sm:$0xf]
    %v901 = vld [vmem:[#allocation3 + $0x38] sm:$0xff]
    %v902 = vld [vmem:[#allocation3 + $0x40] sm:$0xff]
    %v903 = vld [vmem:[#allocation3 + $0x48] sm:$0xff]
    %v904 = vld [vmem:[#allocation3 + $0x50] sm:$0xf]
    %v905 = vld [vmem:[#allocation3 + $0x54] sm:$0xff]
    %v906 = vld [vmem:[#allocation3 + $0x5c] sm:$0xff]
    %v907 = vld [vmem:[#allocation3 + $0x64] sm:$0xff]
    %v908 = vld [vmem:[#allocation3 + $0x6c] sm:$0xf]
    %v909 = vld [vmem:[#allocation3 + $0x70] sm:$0xff]
    %v910 = vld [vmem:[#allocation3 + $0x78] sm:$0xff]
    %v911 = vld [vmem:[#allocation3 + $0x80] sm:$0xff]
    %v912 = vld [vmem:[#allocation3 + $0x88] sm:$0xf]
    %v913 = vld [vmem:[#allocation3 + $0x8c] sm:$0xff]
    %v914 = vld [vmem:[#allocation3 + $0x94] sm:$0xff]
    %v915 = vld [vmem:[#allocation3 + $0x9c] sm:$0xff]
    %v916 = vld [vmem:[#allocation3 + $0xa4] sm:$0xf]
    %v917 = vld [vmem:[#allocation3 + $0xa8] sm:$0xff]
    %v918 = vld [vmem:[#allocation3 + $0xb0] sm:$0xff]
    %v919 = vld [vmem:[#allocation3 + $0xb8] sm:$0xff]
    %v920 = vld [vmem:[#allocation3 + $0xc0] sm:$0xf]
    %v921 = vld [vmem:[#allocation3 + $0xc4] sm:$0xff]
    %v922 = vld [vmem:[#allocation3 + $0xcc] sm:$0xff]
    %v923 = vld [vmem:[#allocation3 + $0xd4] sm:$0xff]
    %v924 = vld [vmem:[#allocation3 + $0xdc] sm:$0xf]
    %v925 = vld [vmem:[#allocation3 + $0xe0] sm:$0xff]
    %v926 = vld [vmem:[#allocation3 + $0xe8] sm:$0xff]
    %v927 = vld [vmem:[#allocation3 + $0xf0] sm:$0xff]
    %v928 = vld [vmem:[#allocation3 + $0xf8] sm:$0xf]
    %v929 = vld [vmem:[#allocation3 + $0xfc] sm:$0xff]
    %v930 = vld [vmem:[#allocation3 + $0x104] sm:$0xff]
    %v931 = vld [vmem:[#allocation3 + $0x10c] sm:$0xff]
    %v932 = vld [vmem:[#allocation3 + $0x114] sm:$0xf]
    %v933 = vld [vmem:[#allocation3 + $0x118] sm:$0xff]
    %v934 = vld [vmem:[#allocation3 + $0x120] sm:$0xff]
    %v935 = vld [vmem:[#allocation3 + $0x128] sm:$0xff]
    %v936 = vld [vmem:[#allocation3 + $0x130] sm:$0xf]
    %v937 = vld [vmem:[#allocation3 + $0x134] sm:$0xff]
    %v938 = vld [vmem:[#allocation3 + $0x13c] sm:$0xff]
    %v939 = vld [vmem:[#allocation3 + $0x144] sm:$0xff]
    %v940 = vld [vmem:[#allocation3 + $0x14c] sm:$0xf]
    %v941 = vld [vmem:[#allocation3 + $0x150] sm:$0xff]
    %v942 = vld [vmem:[#allocation3 + $0x158] sm:$0xff]
    %v943 = vld [vmem:[#allocation3 + $0x160] sm:$0xff]
    %v944 = vld [vmem:[#allocation3 + $0x168] sm:$0xf]
    %v945 = vld [vmem:[#allocation3 + $0x16c] sm:$0xff]
    %v946 = vld [vmem:[#allocation3 + $0x174] sm:$0xff]
    %v947 = vld [vmem:[#allocation3 + $0x17c] sm:$0xff]
    %v948 = vld [vmem:[#allocation3 + $0x184] sm:$0xf]
    %v949 = vld [vmem:[#allocation3 + $0x188] sm:$0xff]
    %v950 = vld [vmem:[#allocation3 + $0x190] sm:$0xff]
    %v951 = vld [vmem:[#allocation3 + $0x198] sm:$0xff]
    %v952 = vld [vmem:[#allocation3 + $0x1a0] sm:$0xf]
    %v953 = vld [vmem:[#allocation3 + $0x1a4] sm:$0xff]
    %v954 = vld [vmem:[#allocation3 + $0x1ac] sm:$0xff]
    %v955 = vld [vmem:[#allocation3 + $0x1b4] sm:$0xff]
    %v956 = vld [vmem:[#allocation3 + $0x1bc] sm:$0xf]
    %v957 = vld [vmem:[#allocation3 + $0x1c0] sm:$0xff]
    %v958 = vld [vmem:[#allocation3 + $0x1c8] sm:$0xff]
    %v959 = vld [vmem:[#allocation3 + $0x1d0] sm:$0xff]
    %v960 = vld [vmem:[#allocation3 + $0x1d8] sm:$0xf]
    %v961 = vld [vmem:[#allocation3 + $0x1dc] sm:$0xff]
    %v962 = vld [vmem:[#allocation3 + $0x1e4] sm:$0xff]
    %v963 = vld [vmem:[#allocation3 + $0x1ec] sm:$0xff]
    %v964 = vld [vmem:[#allocation3 + $0x1f4] sm:$0xf]
    %v965 = vld [vmem:[#allocation3 + $0x1f8] sm:$0xff]
    %v966 = vld [vmem:[#allocation3 + $0x200] sm:$0xff]
    %v967 = vld [vmem:[#allocation3 + $0x208] sm:$0xff]
    %v968 = vld [vmem:[#allocation3 + $0x210] sm:$0xf]
    %v969 = vld [vmem:[#allocation3 + $0x214] sm:$0xff]
    %v970 = vld [vmem:[#allocation3 + $0x21c] sm:$0xff]
    %v971 = vld [vmem:[#allocation3 + $0x224] sm:$0xff]
    %v972 = vld [vmem:[#allocation3 + $0x22c] sm:$0xf]
    %v973 = vld [vmem:[#allocation3 + $0x230] sm:$0xff]
    %v974 = vld [vmem:[#allocation3 + $0x238] sm:$0xff]
    %v975 = vld [vmem:[#allocation3 + $0x240] sm:$0xff]
    %v976 = vld [vmem:[#allocation3 + $0x248] sm:$0xf]
    %v977 = vld [vmem:[#allocation3 + $0x24c] sm:$0xff]
    %v978 = vld [vmem:[#allocation3 + $0x254] sm:$0xff]
    %v979 = vld [vmem:[#allocation3 + $0x25c] sm:$0xff]
    %v980 = vld [vmem:[#allocation3 + $0x264] sm:$0xf]
    %v981 = vld [vmem:[#allocation3 + $0x268] sm:$0xff]
    %v982 = vld [vmem:[#allocation3 + $0x270] sm:$0xff]
    %v983 = vld [vmem:[#allocation3 + $0x278] sm:$0xff]
    %v984 = vld [vmem:[#allocation3 + $0x280] sm:$0xf]
    %v985 = vld [vmem:[#allocation3 + $0x284] sm:$0xff]
    %v986 = vld [vmem:[#allocation3 + $0x28c] sm:$0xff]
    %v987 = vld [vmem:[#allocation3 + $0x294] sm:$0xff]
    %v988 = vld [vmem:[#allocation3 + $0x29c] sm:$0xf]
    %v989 = vld [vmem:[#allocation3 + $0x2a0] sm:$0xff]
    %v990 = vld [vmem:[#allocation3 + $0x2a8] sm:$0xff]
    %v991 = vld [vmem:[#allocation3 + $0x2b0] sm:$0xff]
    %v992 = vld [vmem:[#allocation3 + $0x2b8] sm:$0xf]
    %v993 = vld [vmem:[#allocation3 + $0x2bc] sm:$0xff]
    %v994 = vld [vmem:[#allocation3 + $0x2c4] sm:$0xff]
    %v995 = vld [vmem:[#allocation3 + $0x2cc] sm:$0xff]
    %v996 = vld [vmem:[#allocation3 + $0x2d4] sm:$0xf]
    %v997 = vld [vmem:[#allocation3 + $0x2d8] sm:$0xff]
    %v998 = vld [vmem:[#allocation3 + $0x2e0] sm:$0xff]
    %v999 = vld [vmem:[#allocation3 + $0x2e8] sm:$0xff]
    %v1000 = vld [vmem:[#allocation3 + $0x2f0] sm:$0xf]
    %v1001 = vld [vmem:[#allocation3 + $0x2f4] sm:$0xff]
    %v1002 = vld [vmem:[#allocation3 + $0x2fc] sm:$0xff]
    %v1003 = vld [vmem:[#allocation3 + $0x304] sm:$0xff]
    %v1004 = vld [vmem:[#allocation3 + $0x30c] sm:$0xf]
    %v1005 = vld [vmem:[#allocation3 + $0x310] sm:$0xff]
    %v1006 = vld [vmem:[#allocation3 + $0x318] sm:$0xff]
    %v1007 = vld [vmem:[#allocation3 + $0x320] sm:$0xff]
    %v1008 = vld [vmem:[#allocation3 + $0x328] sm:$0xf]
    %v1009 = vld [vmem:[#allocation3 + $0x32c] sm:$0xff]
    %v1010 = vld [vmem:[#allocation3 + $0x334] sm:$0xff]
    %v1011 = vld [vmem:[#allocation3 + $0x33c] sm:$0xff]
    %v1012 = vld [vmem:[#allocation3 + $0x344] sm:$0xf]
    %v1013 = vld [vmem:[#allocation3 + $0x348] sm:$0xff]
    %v1014 = vld [vmem:[#allocation3 + $0x350] sm:$0xff]
    %v1015 = vld [vmem:[#allocation3 + $0x358] sm:$0xff]
    %v1016 = vld [vmem:[#allocation3 + $0x360] sm:$0xf]
    %v1017 = vld [vmem:[#allocation3 + $0x364] sm:$0xff]
    %v1018 = vld [vmem:[#allocation3 + $0x36c] sm:$0xff]
    %v1019 = vld [vmem:[#allocation3 + $0x374] sm:$0xff]
    %v1020 = vld [vmem:[#allocation3 + $0x37c] sm:$0xf]
    %v1021 = vld [vmem:[#allocation3 + $0x380] sm:$0xff]
    %v1022 = vld [vmem:[#allocation3 + $0x388] sm:$0xff]
    %v1023 = vld [vmem:[#allocation3 + $0x390] sm:$0xff]
    %v1024 = vld [vmem:[#allocation3 + $0x398] sm:$0xf]
    %v1025 = vld [vmem:[#allocation3 + $0x39c] sm:$0xff]
    %v1026 = vld [vmem:[#allocation3 + $0x3a4] sm:$0xff]
    %v1027 = vld [vmem:[#allocation3 + $0x3ac] sm:$0xff]
    %v1028 = vld [vmem:[#allocation3 + $0x3b4] sm:$0xf]
    %v1029 = vld [vmem:[#allocation3 + $0x3b8] sm:$0xff]
    %v1030 = vld [vmem:[#allocation3 + $0x3c0] sm:$0xff]
    %v1031 = vld [vmem:[#allocation3 + $0x3c8] sm:$0xff]
    %v1032 = vld [vmem:[#allocation3 + $0x3d0] sm:$0xf]
    %v1033 = vld [vmem:[#allocation3 + $0x3d4] sm:$0xff]
    %v1034 = vld [vmem:[#allocation3 + $0x3dc] sm:$0xff]
    %v1035 = vld [vmem:[#allocation3 + $0x3e4] sm:$0xff]
    %v1036 = vld [vmem:[#allocation3 + $0x3ec] sm:$0xf]
    %v1037 = vld [vmem:[#allocation3 + $0x3f0] sm:$0xff]
    %v1038 = vld [vmem:[#allocation3 + $0x3f8] sm:$0xff]
    %v1039 = vld [vmem:[#allocation3 + $0x400] sm:$0xff]
    %v1040 = vld [vmem:[#allocation3 + $0x408] sm:$0xf]
    %v1041 = vld [vmem:[#allocation3 + $0x40c] sm:$0xff]
    %v1042 = vld [vmem:[#allocation3 + $0x414] sm:$0xff]
    %v1043 = vld [vmem:[#allocation3 + $0x41c] sm:$0xff]
    %v1044 = vld [vmem:[#allocation3 + $0x424] sm:$0xf]
    %v1045 = vld [vmem:[#allocation3 + $0x428] sm:$0xff]
    %v1046 = vld [vmem:[#allocation3 + $0x430] sm:$0xff]
    %v1047 = vld [vmem:[#allocation3 + $0x438] sm:$0xff]
    %v1048 = vld [vmem:[#allocation3 + $0x440] sm:$0xf]
    %v1049 = vld [vmem:[#allocation3 + $0x444] sm:$0xff]
    %v1050 = vld [vmem:[#allocation3 + $0x44c] sm:$0xff]
    %v1051 = vld [vmem:[#allocation3 + $0x454] sm:$0xff]
    %v1052 = vld [vmem:[#allocation3 + $0x45c] sm:$0xf]
    %v1053 = vld [vmem:[#allocation3 + $0x460] sm:$0xff]
    %v1054 = vld [vmem:[#allocation3 + $0x468] sm:$0xff]
    %v1055 = vld [vmem:[#allocation3 + $0x470] sm:$0xff]
    %v1056 = vld [vmem:[#allocation3 + $0x478] sm:$0xf]
    %v1057 = vld [vmem:[#allocation3 + $0x47c] sm:$0xff]
    %v1058 = vld [vmem:[#allocation3 + $0x484] sm:$0xff]
    %v1059 = vld [vmem:[#allocation3 + $0x48c] sm:$0xff]
    %v1060 = vld [vmem:[#allocation3 + $0x494] sm:$0xf]
    %v1061 = vld [vmem:[#allocation3 + $0x498] sm:$0xff]
    %v1062 = vld [vmem:[#allocation3 + $0x4a0] sm:$0xff]
    %v1063 = vld [vmem:[#allocation3 + $0x4a8] sm:$0xff]
    %v1064 = vld [vmem:[#allocation3 + $0x4b0] sm:$0xf]
    %v1065 = vld [vmem:[#allocation3 + $0x4b4] sm:$0xff]
    %v1066 = vld [vmem:[#allocation3 + $0x4bc] sm:$0xff]
    %v1067 = vld [vmem:[#allocation3 + $0x4c4] sm:$0xff]
    %v1068 = vld [vmem:[#allocation3 + $0x4cc] sm:$0xf]
    %v1069 = vld [vmem:[#allocation3 + $0x4d0] sm:$0xff]
    %v1070 = vld [vmem:[#allocation3 + $0x4d8] sm:$0xff]
    %v1071 = vld [vmem:[#allocation3 + $0x4e0] sm:$0xff]
    %v1072 = vld [vmem:[#allocation3 + $0x4e8] sm:$0xf]
    %v1073 = vld [vmem:[#allocation3 + $0x4ec] sm:$0xff]
    %v1074 = vld [vmem:[#allocation3 + $0x4f4] sm:$0xff]
    %v1075 = vld [vmem:[#allocation3 + $0x4fc] sm:$0xff]
    %v1076 = vld [vmem:[#allocation3 + $0x504] sm:$0xf]
    %v1077 = vld [vmem:[#allocation3 + $0x508] sm:$0xff]
    %v1078 = vld [vmem:[#allocation3 + $0x510] sm:$0xff]
    %v1079 = vld [vmem:[#allocation3 + $0x518] sm:$0xff]
    %v1080 = vld [vmem:[#allocation3 + $0x520] sm:$0xf]
    %v1081 = vld [vmem:[#allocation3 + $0x524] sm:$0xff]
    %v1082 = vld [vmem:[#allocation3 + $0x52c] sm:$0xff]
    %v1083 = vld [vmem:[#allocation3 + $0x534] sm:$0xff]
    %v1084 = vld [vmem:[#allocation3 + $0x53c] sm:$0xf]
    %v1085 = vld [vmem:[#allocation3 + $0x540] sm:$0xff]
    %v1086 = vld [vmem:[#allocation3 + $0x548] sm:$0xff]
    %v1087 = vld [vmem:[#allocation3 + $0x550] sm:$0xff]
    %v1088 = vld [vmem:[#allocation3 + $0x558] sm:$0xf]
    %v1089 = vld [vmem:[#allocation3 + $0x55c] sm:$0xff]
    %v1090 = vld [vmem:[#allocation3 + $0x564] sm:$0xff]
    %v1091 = vld [vmem:[#allocation3 + $0x56c] sm:$0xff]
    %v1092 = vld [vmem:[#allocation3 + $0x574] sm:$0xf]
    %v1093 = vld [vmem:[#allocation3 + $0x578] sm:$0xff]
    %v1094 = vld [vmem:[#allocation3 + $0x580] sm:$0xff]
    %v1095 = vld [vmem:[#allocation3 + $0x588] sm:$0xff]
    %v1096 = vld [vmem:[#allocation3 + $0x590] sm:$0xf]
    %v1097 = vld [vmem:[#allocation3 + $0x594] sm:$0xff]
    %v1098 = vld [vmem:[#allocation3 + $0x59c] sm:$0xff]
    %v1099 = vld [vmem:[#allocation3 + $0x5a4] sm:$0xff]
    %v1100 = vld [vmem:[#allocation3 + $0x5ac] sm:$0xf]
    %v1101 = vld [vmem:[#allocation3 + $0x5b0] sm:$0xff]
    %v1102 = vld [vmem:[#allocation3 + $0x5b8] sm:$0xff]
    %v1103 = vld [vmem:[#allocation3 + $0x5c0] sm:$0xff]
    %v1104 = vld [vmem:[#allocation3 + $0x5c8] sm:$0xf]
    %v1105 = vld [vmem:[#allocation3 + $0x5cc] sm:$0xff]
    %v1106 = vld [vmem:[#allocation3 + $0x5d4] sm:$0xff]
    %v1107 = vld [vmem:[#allocation3 + $0x5dc] sm:$0xff]
    %v1108 = vld [vmem:[#allocation3 + $0x5e4] sm:$0xf]
    %v1109 = vld [vmem:[#allocation3 + $0x5e8] sm:$0xff]
    %v1110 = vld [vmem:[#allocation3 + $0x5f0] sm:$0xff]
    %v1111 = vld [vmem:[#allocation3 + $0x5f8] sm:$0xff]
    %v1112 = vld [vmem:[#allocation3 + $0x600] sm:$0xf]
    %v1113 = vld [vmem:[#allocation3 + $0x604] sm:$0xff]
    %v1114 = vld [vmem:[#allocation3 + $0x60c] sm:$0xff]
    %v1115 = vld [vmem:[#allocation3 + $0x614] sm:$0xff]
    %v1116 = vld [vmem:[#allocation3 + $0x61c] sm:$0xf]
    %v1117 = vld [vmem:[#allocation3 + $0x620] sm:$0xff]
    %v1118 = vld [vmem:[#allocation3 + $0x628] sm:$0xff]
    %v1119 = vld [vmem:[#allocation3 + $0x630] sm:$0xff]
    %v1120 = vld [vmem:[#allocation3 + $0x638] sm:$0xf]
    %v1121 = vld [vmem:[#allocation3 + $0x63c] sm:$0xff]
    %v1122 = vld [vmem:[#allocation3 + $0x644] sm:$0xff]
    %v1123 = vld [vmem:[#allocation3 + $0x64c] sm:$0xff]
    %v1124 = vld [vmem:[#allocation3 + $0x654] sm:$0xf]
    %v1125 = vld [vmem:[#allocation3 + $0x658] sm:$0xff]
    %v1126 = vld [vmem:[#allocation3 + $0x660] sm:$0xff]
    %v1127 = vld [vmem:[#allocation3 + $0x668] sm:$0xff]
    %v1128 = vld [vmem:[#allocation3 + $0x670] sm:$0xf]
    %v1129 = vld [vmem:[#allocation3 + $0x674] sm:$0xff]
    %v1130 = vld [vmem:[#allocation3 + $0x67c] sm:$0xff]
    %v1131 = vld [vmem:[#allocation3 + $0x684] sm:$0xff]
    %v1132 = vld [vmem:[#allocation3 + $0x68c] sm:$0xf]
    %v1133 = vld [vmem:[#allocation3 + $0x690] sm:$0xff]
    %v1134 = vld [vmem:[#allocation3 + $0x698] sm:$0xff]
    %v1135 = vld [vmem:[#allocation3 + $0x6a0] sm:$0xff]
    %v1136 = vld [vmem:[#allocation3 + $0x6a8] sm:$0xf]
    %v1137 = vld [vmem:[#allocation3 + $0x6ac] sm:$0xff]
    %v1138 = vld [vmem:[#allocation3 + $0x6b4] sm:$0xff]
    %v1139 = vld [vmem:[#allocation3 + $0x6bc] sm:$0xff]
    %v1140 = vld [vmem:[#allocation3 + $0x6c4] sm:$0xf]
    %v1141 = vld [vmem:[#allocation3 + $0x6c8] sm:$0xff]
    %v1142 = vld [vmem:[#allocation3 + $0x6d0] sm:$0xff]
    %v1143 = vld [vmem:[#allocation3 + $0x6d8] sm:$0xff]
    %v1144 = vld [vmem:[#allocation3 + $0x6e0] sm:$0xf]
    %v1145 = vld [vmem:[#allocation3 + $0x6e4] sm:$0xff]
    %v1146 = vld [vmem:[#allocation3 + $0x6ec] sm:$0xff]
    %v1147 = vld [vmem:[#allocation3 + $0x6f4] sm:$0xff]
    %v1148 = vld [vmem:[#allocation3 + $0x6fc] sm:$0xf]
    %v1149 = vld [vmem:[#allocation3 + $0x700] sm:$0xff]
    %v1150 = vld [vmem:[#allocation3 + $0x708] sm:$0xff]
    %v1151 = vld [vmem:[#allocation3 + $0x710] sm:$0xff]
    %v1152 = vld [vmem:[#allocation3 + $0x718] sm:$0xf]
    %v1153 = vld [vmem:[#allocation3 + $0x71c] sm:$0xff]
    %v1154 = vld [vmem:[#allocation3 + $0x724] sm:$0xff]
    %v1155 = vld [vmem:[#allocation3 + $0x72c] sm:$0xff]
    %v1156 = vld [vmem:[#allocation3 + $0x734] sm:$0xf]
    %v1157 = vld [vmem:[#allocation3 + $0x738] sm:$0xff]
    %v1158 = vld [vmem:[#allocation3 + $0x740] sm:$0xff]
    %v1159 = vld [vmem:[#allocation3 + $0x748] sm:$0xff]
    %v1160 = vld [vmem:[#allocation3 + $0x750] sm:$0xf]
    %v1161 = vld [vmem:[#allocation3 + $0x754] sm:$0xff]
    %v1162 = vld [vmem:[#allocation3 + $0x75c] sm:$0xff]
    %v1163 = vld [vmem:[#allocation3 + $0x764] sm:$0xff]
    %v1164 = vld [vmem:[#allocation3 + $0x76c] sm:$0xf]
    %v1165 = vld [vmem:[#allocation3 + $0x770] sm:$0xff]
    %v1166 = vld [vmem:[#allocation3 + $0x778] sm:$0xff]
    %v1167 = vld [vmem:[#allocation3 + $0x780] sm:$0xff]
    %v1168 = vld [vmem:[#allocation3 + $0x788] sm:$0xf]
    %v1169 = vld [vmem:[#allocation3 + $0x78c] sm:$0xff]
    %v1170 = vld [vmem:[#allocation3 + $0x794] sm:$0xff]
    %v1171 = vld [vmem:[#allocation3 + $0x79c] sm:$0xff]
    %v1172 = vld [vmem:[#allocation3 + $0x7a4] sm:$0xf]
    %v1173 = vld [vmem:[#allocation3 + $0x7a8] sm:$0xff]
    %v1174 = vld [vmem:[#allocation3 + $0x7b0] sm:$0xff]
    %v1175 = vld [vmem:[#allocation3 + $0x7b8] sm:$0xff]
    %v1176 = vld [vmem:[#allocation3 + $0x7c0] sm:$0xf]
    %v1177 = vld [vmem:[#allocation3 + $0x7c4] sm:$0xff]
    %v1178 = vld [vmem:[#allocation3 + $0x7cc] sm:$0xff]
    %v1179 = vld [vmem:[#allocation3 + $0x7d4] sm:$0xff]
    %v1180 = vld [vmem:[#allocation3 + $0x7dc] sm:$0xf]
    %v1181 = vld [vmem:[#allocation3 + $0x7e0] sm:$0xff]
    %v1182 = vld [vmem:[#allocation3 + $0x7e8] sm:$0xff]
    %v1183 = vld [vmem:[#allocation3 + $0x7f0] sm:$0xff]
    %v1184 = vld [vmem:[#allocation3 + $0x7f8] sm:$0xf]
    %v1185 = vld [vmem:[#allocation3 + $0x7fc] sm:$0xff]
    %v1186 = vld [vmem:[#allocation3 + $0x804] sm:$0xff]
    %v1187 = vld [vmem:[#allocation3 + $0x80c] sm:$0xff]
    %v1188 = vld [vmem:[#allocation3 + $0x814] sm:$0xf]
    %v1189 = vld [vmem:[#allocation3 + $0x818] sm:$0xff]
    %v1190 = vld [vmem:[#allocation3 + $0x820] sm:$0xff]
    %v1191 = vld [vmem:[#allocation3 + $0x828] sm:$0xff]
    %v1192 = vld [vmem:[#allocation3 + $0x830] sm:$0xf]
    %v1193 = vld [vmem:[#allocation3 + $0x834] sm:$0xff]
    %v1194 = vld [vmem:[#allocation3 + $0x83c] sm:$0xff]
    %v1195 = vld [vmem:[#allocation3 + $0x844] sm:$0xff]
    %v1196 = vld [vmem:[#allocation3 + $0x84c] sm:$0xf]
    %v1197 = vld [vmem:[#allocation3 + $0x850] sm:$0xff]
    %v1198 = vld [vmem:[#allocation3 + $0x858] sm:$0xff]
    %v1199 = vld [vmem:[#allocation3 + $0x860] sm:$0xff]
    %v1200 = vld [vmem:[#allocation3 + $0x868] sm:$0xf]
    %v1201 = vld [vmem:[#allocation3 + $0x86c] sm:$0xff]
    %v1202 = vld [vmem:[#allocation3 + $0x874] sm:$0xff]
    %v1203 = vld [vmem:[#allocation3 + $0x87c] sm:$0xff]
    %v1204 = vld [vmem:[#allocation3 + $0x884] sm:$0xf]
    %v1205 = vld [vmem:[#allocation3 + $0x888] sm:$0xff]
    %v1206 = vld [vmem:[#allocation3 + $0x890] sm:$0xff]
    %v1207 = vld [vmem:[#allocation3 + $0x898] sm:$0xff]
    %v1208 = vld [vmem:[#allocation3 + $0x8a0] sm:$0xf]
    %v1209 = vld [vmem:[#allocation3 + $0x8a4] sm:$0xff]
    %v1210 = vld [vmem:[#allocation3 + $0x8ac] sm:$0xff]
    %v1211 = vld [vmem:[#allocation3 + $0x8b4] sm:$0xff]
    %v1212 = vld [vmem:[#allocation3 + $0x8bc] sm:$0xf]
    %v1213 = vld [vmem:[#allocation3 + $0x8c0] sm:$0xff]
    %v1214 = vld [vmem:[#allocation3 + $0x8c8] sm:$0xff]
    %v1215 = vld [vmem:[#allocation3 + $0x8d0] sm:$0xff]
    %v1216 = vld [vmem:[#allocation3 + $0x8d8] sm:$0xf]
    %v1217 = vld [vmem:[#allocation3 + $0x8dc] sm:$0xff]
    %v1218 = vld [vmem:[#allocation3 + $0x8e4] sm:$0xff]
    %v1219 = vld [vmem:[#allocation3 + $0x8ec] sm:$0xff]
    %v1220 = vld [vmem:[#allocation3 + $0x8f4] sm:$0xf]
    %v1221 = vld [vmem:[#allocation3 + $0x8f8] sm:$0xff]
    %v1222 = vld [vmem:[#allocation3 + $0x900] sm:$0xff]
    %v1223 = vld [vmem:[#allocation3 + $0x908] sm:$0xff]
    %v1224 = vld [vmem:[#allocation3 + $0x910] sm:$0xf]
    %v1225 = vld [vmem:[#allocation3 + $0x914] sm:$0xff]
    %v1226 = vld [vmem:[#allocation3 + $0x91c] sm:$0xff]
    %v1227 = vld [vmem:[#allocation3 + $0x924] sm:$0xff]
    %v1228 = vld [vmem:[#allocation3 + $0x92c] sm:$0xf]
    %v1229 = vld [vmem:[#allocation3 + $0x930] sm:$0xff]
    %v1230 = vld [vmem:[#allocation3 + $0x938] sm:$0xff]
    %v1231 = vld [vmem:[#allocation3 + $0x940] sm:$0xff]
    %v1232 = vld [vmem:[#allocation3 + $0x948] sm:$0xf]
    %v1233 = vld [vmem:[#allocation3 + $0x94c] sm:$0xff]
    %v1234 = vld [vmem:[#allocation3 + $0x954] sm:$0xff]
    %v1235 = vld [vmem:[#allocation3 + $0x95c] sm:$0xff]
    %v1236 = vld [vmem:[#allocation3 + $0x964] sm:$0xf]
    %v1237 = vld [vmem:[#allocation3 + $0x968] sm:$0xff]
    %v1238 = vld [vmem:[#allocation3 + $0x970] sm:$0xff]
    %v1239 = vld [vmem:[#allocation3 + $0x978] sm:$0xff]
    %v1240 = vld [vmem:[#allocation3 + $0x980] sm:$0xf]
    %v1241 = vld [vmem:[#allocation3 + $0x984] sm:$0xff]
    %v1242 = vld [vmem:[#allocation3 + $0x98c] sm:$0xff]
    %v1243 = vld [vmem:[#allocation3 + $0x994] sm:$0xff]
    %v1244 = vld [vmem:[#allocation3 + $0x99c] sm:$0xf]
    %v1245 = vld [vmem:[#allocation3 + $0x9a0] sm:$0xff]
    %v1246 = vld [vmem:[#allocation3 + $0x9a8] sm:$0xff]
    %v1247 = vld [vmem:[#allocation3 + $0x9b0] sm:$0xff]
    %v1248 = vld [vmem:[#allocation3 + $0x9b8] sm:$0xf]
    %v1249 = vld [vmem:[#allocation3 + $0x9bc] sm:$0xff]
    %v1250 = vld [vmem:[#allocation3 + $0x9c4] sm:$0xff]
    %v1251 = vld [vmem:[#allocation3 + $0x9cc] sm:$0xff]
    %v1252 = vld [vmem:[#allocation3 + $0x9d4] sm:$0xf]
    %v1253 = vld [vmem:[#allocation3 + $0x9d8] sm:$0xff]
    %v1254 = vld [vmem:[#allocation3 + $0x9e0] sm:$0xff]
    %v1255 = vld [vmem:[#allocation3 + $0x9e8] sm:$0xff]
    %v1256 = vld [vmem:[#allocation3 + $0x9f0] sm:$0xf]
    %v1257 = vld [vmem:[#allocation3 + $0x9f4] sm:$0xff]
    %v1258 = vld [vmem:[#allocation3 + $0x9fc] sm:$0xff]
    %v1259 = vld [vmem:[#allocation3 + $0xa04] sm:$0xff]
    %v1260 = vld [vmem:[#allocation3 + $0xa0c] sm:$0xf]
    %v1261 = vld [vmem:[#allocation3 + $0xa10] sm:$0xff]
    %v1262 = vld [vmem:[#allocation3 + $0xa18] sm:$0xff]
    %v1263 = vld [vmem:[#allocation3 + $0xa20] sm:$0xff]
    %v1264 = vld [vmem:[#allocation3 + $0xa28] sm:$0xf]
    %v1265 = vld [vmem:[#allocation3 + $0xa2c] sm:$0xff]
    %v1266 = vld [vmem:[#allocation3 + $0xa34] sm:$0xff]
    %v1267 = vld [vmem:[#allocation3 + $0xa3c] sm:$0xff]
    %v1268 = vld [vmem:[#allocation3 + $0xa44] sm:$0xf]
    %v1269 = vld [vmem:[#allocation3 + $0xa48] sm:$0xff]
    %v1270 = vld [vmem:[#allocation3 + $0xa50] sm:$0xff]
    %v1271 = vld [vmem:[#allocation3 + $0xa58] sm:$0xff]
    %v1272 = vld [vmem:[#allocation3 + $0xa60] sm:$0xf]
    %v1273 = vld [vmem:[#allocation3 + $0xa64] sm:$0xff]
    %v1274 = vld [vmem:[#allocation3 + $0xa6c] sm:$0xff]
    %v1275 = vld [vmem:[#allocation3 + $0xa74] sm:$0xff]
    %v1276 = vld [vmem:[#allocation3 + $0xa7c] sm:$0xf]
    %v1277 = vld [vmem:[#allocation3 + $0xa80] sm:$0xff]
    %v1278 = vld [vmem:[#allocation3 + $0xa88] sm:$0xff]
    %v1279 = vld [vmem:[#allocation3 + $0xa90] sm:$0xff]
    %v1280 = vld [vmem:[#allocation3 + $0xa98] sm:$0xf]
    %v1281 = vld [vmem:[#allocation3 + $0xa9c] sm:$0xff]
    %v1282 = vld [vmem:[#allocation3 + $0xaa4] sm:$0xff]
    %v1283 = vld [vmem:[#allocation3 + $0xaac] sm:$0xff]
    %v1284 = vld [vmem:[#allocation3 + $0xab4] sm:$0xf]
    %v1285 = vld [vmem:[#allocation3 + $0xab8] sm:$0xff]
    %v1286 = vld [vmem:[#allocation3 + $0xac0] sm:$0xff]
    %v1287 = vld [vmem:[#allocation3 + $0xac8] sm:$0xff]
    %v1288 = vld [vmem:[#allocation3 + $0xad0] sm:$0xf]
    %v1289 = vld [vmem:[#allocation3 + $0xad4] sm:$0xff]
    %v1290 = vld [vmem:[#allocation3 + $0xadc] sm:$0xff]
    %v1291 = vld [vmem:[#allocation3 + $0xae4] sm:$0xff]
    %v1292 = vld [vmem:[#allocation3 + $0xaec] sm:$0xf]
    %v1293 = vld [vmem:[#allocation3 + $0xaf0] sm:$0xff]
    %v1294 = vld [vmem:[#allocation3 + $0xaf8] sm:$0xff]
    %v1295 = vld [vmem:[#allocation3 + $0xb00] sm:$0xff]
    %v1296 = vld [vmem:[#allocation3 + $0xb08] sm:$0xf]
    %v1297 = vld [vmem:[#allocation3 + $0xb0c] sm:$0xff]
    %v1298 = vld [vmem:[#allocation3 + $0xb14] sm:$0xff]
    %v1299 = vld [vmem:[#allocation3 + $0xb1c] sm:$0xff]
    %v1300 = vld [vmem:[#allocation3 + $0xb24] sm:$0xf]
    %v1301 = vld [vmem:[#allocation3 + $0xb28] sm:$0xff]
    %v1302 = vld [vmem:[#allocation3 + $0xb30] sm:$0xff]
    %v1303 = vld [vmem:[#allocation3 + $0xb38] sm:$0xff]
    %v1304 = vld [vmem:[#allocation3 + $0xb40] sm:$0xf]
    %v1305 = vld [vmem:[#allocation3 + $0xb44] sm:$0xff]
    %v1306 = vld [vmem:[#allocation3 + $0xb4c] sm:$0xff]
    %v1307 = vld [vmem:[#allocation3 + $0xb54] sm:$0xff]
    %v1308 = vld [vmem:[#allocation3 + $0xb5c] sm:$0xf]
    %v1309 = vld [vmem:[#allocation3 + $0xb60] sm:$0xff]
    %v1310 = vld [vmem:[#allocation3 + $0xb68] sm:$0xff]
    %v1311 = vld [vmem:[#allocation3 + $0xb70] sm:$0xff]
    %v1312 = vld [vmem:[#allocation3 + $0xb78] sm:$0xf]
    %v1313 = vld [vmem:[#allocation3 + $0xb7c] sm:$0xff]
    %v1314 = vld [vmem:[#allocation3 + $0xb84] sm:$0xff]
    %v1315 = vld [vmem:[#allocation3 + $0xb8c] sm:$0xff]
    %v1316 = vld [vmem:[#allocation3 + $0xb94] sm:$0xf]
    %v1317 = vld [vmem:[#allocation3 + $0xb98] sm:$0xff]
    %v1318 = vld [vmem:[#allocation3 + $0xba0] sm:$0xff]
    %v1319 = vld [vmem:[#allocation3 + $0xba8] sm:$0xff]
    %v1320 = vld [vmem:[#allocation3 + $0xbb0] sm:$0xf]
    %v1321 = vld [vmem:[#allocation3 + $0xbb4] sm:$0xff]
    %v1322 = vld [vmem:[#allocation3 + $0xbbc] sm:$0xff]
    %v1323 = vld [vmem:[#allocation3 + $0xbc4] sm:$0xff]
    %v1324 = vld [vmem:[#allocation3 + $0xbcc] sm:$0xf]
    %v1325 = vld [vmem:[#allocation3 + $0xbd0] sm:$0xff]
    %v1326 = vld [vmem:[#allocation3 + $0xbd8] sm:$0xff]
    %v1327 = vld [vmem:[#allocation3 + $0xbe0] sm:$0xff]
    %v1328 = vld [vmem:[#allocation3 + $0xbe8] sm:$0xf]
    %v1329 = vld [vmem:[#allocation3 + $0xbec] sm:$0xff]
    %v1330 = vld [vmem:[#allocation3 + $0xbf4] sm:$0xff]
    %v1331 = vld [vmem:[#allocation3 + $0xbfc] sm:$0xff]
    %v1332 = vld [vmem:[#allocation3 + $0xc04] sm:$0xf]
    %v1333 = vld [vmem:[#allocation3 + $0xc08] sm:$0xff]
    %v1334 = vld [vmem:[#allocation3 + $0xc10] sm:$0xff]
    %v1335 = vld [vmem:[#allocation3 + $0xc18] sm:$0xff]
    %v1336 = vld [vmem:[#allocation3 + $0xc20] sm:$0xf]
    %v1337 = vld [vmem:[#allocation3 + $0xc24] sm:$0xff]
    %v1338 = vld [vmem:[#allocation3 + $0xc2c] sm:$0xff]
    %v1339 = vld [vmem:[#allocation3 + $0xc34] sm:$0xff]
    %v1340 = vld [vmem:[#allocation3 + $0xc3c] sm:$0xf]
    %v1341 = vld [vmem:[#allocation3 + $0xc40] sm:$0xff]
    %v1342 = vld [vmem:[#allocation3 + $0xc48] sm:$0xff]
    %v1343 = vld [vmem:[#allocation3 + $0xc50] sm:$0xff]
    %v1344 = vld [vmem:[#allocation3 + $0xc58] sm:$0xf]
    %v1345 = vld [vmem:[#allocation3 + $0xc5c] sm:$0xff]
    %v1346 = vld [vmem:[#allocation3 + $0xc64] sm:$0xff]
    %v1347 = vld [vmem:[#allocation3 + $0xc6c] sm:$0xff]
    %v1348 = vld [vmem:[#allocation3 + $0xc74] sm:$0xf]
    %v1349 = vld [vmem:[#allocation3 + $0xc78] sm:$0xff]
    %v1350 = vld [vmem:[#allocation3 + $0xc80] sm:$0xff]
    %v1351 = vld [vmem:[#allocation3 + $0xc88] sm:$0xff]
    %v1352 = vld [vmem:[#allocation3 + $0xc90] sm:$0xf]
    %v1353 = vld [vmem:[#allocation3 + $0xc94] sm:$0xff]
    %v1354 = vld [vmem:[#allocation3 + $0xc9c] sm:$0xff]
    %v1355 = vld [vmem:[#allocation3 + $0xca4] sm:$0xff]
    %v1356 = vld [vmem:[#allocation3 + $0xcac] sm:$0xf]
    %v1357 = vld [vmem:[#allocation3 + $0xcb0] sm:$0xff]
    %v1358 = vld [vmem:[#allocation3 + $0xcb8] sm:$0xff]
    %v1359 = vld [vmem:[#allocation3 + $0xcc0] sm:$0xff]
    %v1360 = vld [vmem:[#allocation3 + $0xcc8] sm:$0xf]
    %v1361 = vld [vmem:[#allocation3 + $0xccc] sm:$0xff]
    %v1362 = vld [vmem:[#allocation3 + $0xcd4] sm:$0xff]
    %v1363 = vld [vmem:[#allocation3 + $0xcdc] sm:$0xff]
    %v1364 = vld [vmem:[#allocation3 + $0xce4] sm:$0xf]
    %v1365 = vld [vmem:[#allocation3 + $0xce8] sm:$0xff]
    %v1366 = vld [vmem:[#allocation3 + $0xcf0] sm:$0xff]
    %v1367 = vld [vmem:[#allocation3 + $0xcf8] sm:$0xff]
    %v1368 = vld [vmem:[#allocation3 + $0xd00] sm:$0xf]
    %v1369 = vld [vmem:[#allocation3 + $0xd04] sm:$0xff]
    %v1370 = vld [vmem:[#allocation3 + $0xd0c] sm:$0xff]
    %v1371 = vld [vmem:[#allocation3 + $0xd14] sm:$0xff]
    %v1372 = vld [vmem:[#allocation3 + $0xd1c] sm:$0xf]
    %v1373 = vld [vmem:[#allocation3 + $0xd20] sm:$0xff]
    %v1374 = vld [vmem:[#allocation3 + $0xd28] sm:$0xff]
    %v1375 = vld [vmem:[#allocation3 + $0xd30] sm:$0xff]
    %v1376 = vld [vmem:[#allocation3 + $0xd38] sm:$0xf]
    %v1377 = vld [vmem:[#allocation3 + $0xd3c] sm:$0xff]
    %v1378 = vld [vmem:[#allocation3 + $0xd44] sm:$0xff]
    %v1379 = vld [vmem:[#allocation3 + $0xd4c] sm:$0xff]
    %v1380 = vld [vmem:[#allocation3 + $0xd54] sm:$0xf]
    %v1381 = vld [vmem:[#allocation3 + $0xd58] sm:$0xff]
    %v1382 = vld [vmem:[#allocation3 + $0xd60] sm:$0xff]
    %v1383 = vld [vmem:[#allocation3 + $0xd68] sm:$0xff]
    %v1384 = vld [vmem:[#allocation3 + $0xd70] sm:$0xf]
    %v1385 = vld [vmem:[#allocation3 + $0xd74] sm:$0xff]
    %v1386 = vld [vmem:[#allocation3 + $0xd7c] sm:$0xff]
    %v1387 = vld [vmem:[#allocation3 + $0xd84] sm:$0xff]
    %v1388 = vld [vmem:[#allocation3 + $0xd8c] sm:$0xf]
    %v1389 = vld [vmem:[#allocation3 + $0xd90] sm:$0xff]
    %v1390 = vld [vmem:[#allocation3 + $0xd98] sm:$0xff]
    %v1391 = vld [vmem:[#allocation3 + $0xda0] sm:$0xff]
    %v1392 = vld [vmem:[#allocation3 + $0xda8] sm:$0xf]
    %v1893 = vunpack.c.l.b16 %v893
    %v1894 = vunpack.c.h.b16 %v893
    %v1895 = vunpack.c.l.b16 %v894
    %v1896 = vunpack.c.h.b16 %v894
    %v1897 = vunpack.c.l.b16 %v895
    %v1898 = vunpack.c.h.b16 %v895
    %v1899 = vunpack.c.l.b16 %v896
    %v1900 = vunpack.c.l.b16 %v897
    %v1901 = vunpack.c.h.b16 %v897
    %v1902 = vunpack.c.l.b16 %v898
    %v1903 = vunpack.c.h.b16 %v898
    %v1904 = vunpack.c.l.b16 %v899
    %v1905 = vunpack.c.h.b16 %v899
    %v1906 = vunpack.c.l.b16 %v900
    %v1907 = vunpack.c.l.b16 %v901
    %v1908 = vunpack.c.h.b16 %v901
    %v1909 = vunpack.c.l.b16 %v902
    %v1910 = vunpack.c.h.b16 %v902
    %v1911 = vunpack.c.l.b16 %v903
    %v1912 = vunpack.c.h.b16 %v903
    %v1913 = vunpack.c.l.b16 %v904
    %v1914 = vunpack.c.l.b16 %v905
    %v1915 = vunpack.c.h.b16 %v905
    %v1916 = vunpack.c.l.b16 %v906
    %v1917 = vunpack.c.h.b16 %v906
    %v1918 = vunpack.c.l.b16 %v907
    %v1919 = vunpack.c.h.b16 %v907
    %v1920 = vunpack.c.l.b16 %v908
    %v1921 = vunpack.c.l.b16 %v909
    %v1922 = vunpack.c.h.b16 %v909
    %v1923 = vunpack.c.l.b16 %v910
    %v1924 = vunpack.c.h.b16 %v910
    %v1925 = vunpack.c.l.b16 %v911
    %v1926 = vunpack.c.h.b16 %v911
    %v1927 = vunpack.c.l.b16 %v912
    %v1928 = vunpack.c.l.b16 %v913
    %v1929 = vunpack.c.h.b16 %v913
    %v1930 = vunpack.c.l.b16 %v914
    %v1931 = vunpack.c.h.b16 %v914
    %v1932 = vunpack.c.l.b16 %v915
    %v1933 = vunpack.c.h.b16 %v915
    %v1934 = vunpack.c.l.b16 %v916
    %v1935 = vunpack.c.l.b16 %v917
    %v1936 = vunpack.c.h.b16 %v917
    %v1937 = vunpack.c.l.b16 %v918
    %v1938 = vunpack.c.h.b16 %v918
    %v1939 = vunpack.c.l.b16 %v919
    %v1940 = vunpack.c.h.b16 %v919
    %v1941 = vunpack.c.l.b16 %v920
    %v1942 = vunpack.c.l.b16 %v921
    %v1943 = vunpack.c.h.b16 %v921
    %v1944 = vunpack.c.l.b16 %v922
    %v1945 = vunpack.c.h.b16 %v922
    %v1946 = vunpack.c.l.b16 %v923
    %v1947 = vunpack.c.h.b16 %v923
    %v1948 = vunpack.c.l.b16 %v924
    %v1949 = vunpack.c.l.b16 %v925
    %v1950 = vunpack.c.h.b16 %v925
    %v1951 = vunpack.c.l.b16 %v926
    %v1952 = vunpack.c.h.b16 %v926
    %v1953 = vunpack.c.l.b16 %v927
    %v1954 = vunpack.c.h.b16 %v927
    %v1955 = vunpack.c.l.b16 %v928
    %v1956 = vunpack.c.l.b16 %v929
    %v1957 = vunpack.c.h.b16 %v929
    %v1958 = vunpack.c.l.b16 %v930
    %v1959 = vunpack.c.h.b16 %v930
    %v1960 = vunpack.c.l.b16 %v931
    %v1961 = vunpack.c.h.b16 %v931
    %v1962 = vunpack.c.l.b16 %v932
    %v1963 = vunpack.c.l.b16 %v933
    %v1964 = vunpack.c.h.b16 %v933
    %v1965 = vunpack.c.l.b16 %v934
    %v1966 = vunpack.c.h.b16 %v934
    %v1967 = vunpack.c.l.b16 %v935
    %v1968 = vunpack.c.h.b16 %v935
    %v1969 = vunpack.c.l.b16 %v936
    %v1970 = vunpack.c.l.b16 %v937
    %v1971 = vunpack.c.h.b16 %v937
    %v1972 = vunpack.c.l.b16 %v938
    %v1973 = vunpack.c.h.b16 %v938
    %v1974 = vunpack.c.l.b16 %v939
    %v1975 = vunpack.c.h.b16 %v939
    %v1976 = vunpack.c.l.b16 %v940
    %v1977 = vunpack.c.l.b16 %v941
    %v1978 = vunpack.c.h.b16 %v941
    %v1979 = vunpack.c.l.b16 %v942
    %v1980 = vunpack.c.h.b16 %v942
    %v1981 = vunpack.c.l.b16 %v943
    %v1982 = vunpack.c.h.b16 %v943
    %v1983 = vunpack.c.l.b16 %v944
    %v1984 = vunpack.c.l.b16 %v945
    %v1985 = vunpack.c.h.b16 %v945
    %v1986 = vunpack.c.l.b16 %v946
    %v1987 = vunpack.c.h.b16 %v946
    %v1988 = vunpack.c.l.b16 %v947
    %v1989 = vunpack.c.h.b16 %v947
    %v1990 = vunpack.c.l.b16 %v948
    %v1991 = vunpack.c.l.b16 %v949
    %v1992 = vunpack.c.h.b16 %v949
    %v1993 = vunpack.c.l.b16 %v950
    %v1994 = vunpack.c.h.b16 %v950
    %v1995 = vunpack.c.l.b16 %v951
    %v1996 = vunpack.c.h.b16 %v951
    %v1997 = vunpack.c.l.b16 %v952
    %v1998 = vunpack.c.l.b16 %v953
    %v1999 = vunpack.c.h.b16 %v953
    %v2000 = vunpack.c.l.b16 %v954
    %v2001 = vunpack.c.h.b16 %v954
    %v2002 = vunpack.c.l.b16 %v955
    %v2003 = vunpack.c.h.b16 %v955
    %v2004 = vunpack.c.l.b16 %v956
    %v2005 = vunpack.c.l.b16 %v957
    %v2006 = vunpack.c.h.b16 %v957
    %v2007 = vunpack.c.l.b16 %v958
    %v2008 = vunpack.c.h.b16 %v958
    %v2009 = vunpack.c.l.b16 %v959
    %v2010 = vunpack.c.h.b16 %v959
    %v2011 = vunpack.c.l.b16 %v960
    %v2012 = vunpack.c.l.b16 %v961
    %v2013 = vunpack.c.h.b16 %v961
    %v2014 = vunpack.c.l.b16 %v962
    %v2015 = vunpack.c.h.b16 %v962
    %v2016 = vunpack.c.l.b16 %v963
    %v2017 = vunpack.c.h.b16 %v963
    %v2018 = vunpack.c.l.b16 %v964
    %v2019 = vunpack.c.l.b16 %v965
    %v2020 = vunpack.c.h.b16 %v965
    %v2021 = vunpack.c.l.b16 %v966
    %v2022 = vunpack.c.h.b16 %v966
    %v2023 = vunpack.c.l.b16 %v967
    %v2024 = vunpack.c.h.b16 %v967
    %v2025 = vunpack.c.l.b16 %v968
    %v2026 = vunpack.c.l.b16 %v969
    %v2027 = vunpack.c.h.b16 %v969
    %v2028 = vunpack.c.l.b16 %v970
    %v2029 = vunpack.c.h.b16 %v970
    %v2030 = vunpack.c.l.b16 %v971
    %v2031 = vunpack.c.h.b16 %v971
    %v2032 = vunpack.c.l.b16 %v972
    %v2033 = vunpack.c.l.b16 %v973
    %v2034 = vunpack.c.h.b16 %v973
    %v2035 = vunpack.c.l.b16 %v974
    %v2036 = vunpack.c.h.b16 %v974
    %v2037 = vunpack.c.l.b16 %v975
    %v2038 = vunpack.c.h.b16 %v975
    %v2039 = vunpack.c.l.b16 %v976
    %v2040 = vunpack.c.l.b16 %v977
    %v2041 = vunpack.c.h.b16 %v977
    %v2042 = vunpack.c.l.b16 %v978
    %v2043 = vunpack.c.h.b16 %v978
    %v2044 = vunpack.c.l.b16 %v979
    %v2045 = vunpack.c.h.b16 %v979
    %v2046 = vunpack.c.l.b16 %v980
    %v2047 = vunpack.c.l.b16 %v981
    %v2048 = vunpack.c.h.b16 %v981
    %v2049 = vunpack.c.l.b16 %v982
    %v2050 = vunpack.c.h.b16 %v982
    %v2051 = vunpack.c.l.b16 %v983
    %v2052 = vunpack.c.h.b16 %v983
    %v2053 = vunpack.c.l.b16 %v984
    %v2054 = vunpack.c.l.b16 %v985
    %v2055 = vunpack.c.h.b16 %v985
    %v2056 = vunpack.c.l.b16 %v986
    %v2057 = vunpack.c.h.b16 %v986
    %v2058 = vunpack.c.l.b16 %v987
    %v2059 = vunpack.c.h.b16 %v987
    %v2060 = vunpack.c.l.b16 %v988
    %v2061 = vunpack.c.l.b16 %v989
    %v2062 = vunpack.c.h.b16 %v989
    %v2063 = vunpack.c.l.b16 %v990
    %v2064 = vunpack.c.h.b16 %v990
    %v2065 = vunpack.c.l.b16 %v991
    %v2066 = vunpack.c.h.b16 %v991
    %v2067 = vunpack.c.l.b16 %v992
    %v2068 = vunpack.c.l.b16 %v993
    %v2069 = vunpack.c.h.b16 %v993
    %v2070 = vunpack.c.l.b16 %v994
    %v2071 = vunpack.c.h.b16 %v994
    %v2072 = vunpack.c.l.b16 %v995
    %v2073 = vunpack.c.h.b16 %v995
    %v2074 = vunpack.c.l.b16 %v996
    %v2075 = vunpack.c.l.b16 %v997
    %v2076 = vunpack.c.h.b16 %v997
    %v2077 = vunpack.c.l.b16 %v998
    %v2078 = vunpack.c.h.b16 %v998
    %v2079 = vunpack.c.l.b16 %v999
    %v2080 = vunpack.c.h.b16 %v999
    %v2081 = vunpack.c.l.b16 %v1000
    %v2082 = vunpack.c.l.b16 %v1001
    %v2083 = vunpack.c.h.b16 %v1001
    %v2084 = vunpack.c.l.b16 %v1002
    %v2085 = vunpack.c.h.b16 %v1002
    %v2086 = vunpack.c.l.b16 %v1003
    %v2087 = vunpack.c.h.b16 %v1003
    %v2088 = vunpack.c.l.b16 %v1004
    %v2089 = vunpack.c.l.b16 %v1005
    %v2090 = vunpack.c.h.b16 %v1005
    %v2091 = vunpack.c.l.b16 %v1006
    %v2092 = vunpack.c.h.b16 %v1006
    %v2093 = vunpack.c.l.b16 %v1007
    %v2094 = vunpack.c.h.b16 %v1007
    %v2095 = vunpack.c.l.b16 %v1008
    %v2096 = vunpack.c.l.b16 %v1009
    %v2097 = vunpack.c.h.b16 %v1009
    %v2098 = vunpack.c.l.b16 %v1010
    %v2099 = vunpack.c.h.b16 %v1010
    %v2100 = vunpack.c.l.b16 %v1011
    %v2101 = vunpack.c.h.b16 %v1011
    %v2102 = vunpack.c.l.b16 %v1012
    %v2103 = vunpack.c.l.b16 %v1013
    %v2104 = vunpack.c.h.b16 %v1013
    %v2105 = vunpack.c.l.b16 %v1014
    %v2106 = vunpack.c.h.b16 %v1014
    %v2107 = vunpack.c.l.b16 %v1015
    %v2108 = vunpack.c.h.b16 %v1015
    %v2109 = vunpack.c.l.b16 %v1016
    %v2110 = vunpack.c.l.b16 %v1017
    %v2111 = vunpack.c.h.b16 %v1017
    %v2112 = vunpack.c.l.b16 %v1018
    %v2113 = vunpack.c.h.b16 %v1018
    %v2114 = vunpack.c.l.b16 %v1019
    %v2115 = vunpack.c.h.b16 %v1019
    %v2116 = vunpack.c.l.b16 %v1020
    %v2117 = vunpack.c.l.b16 %v1021
    %v2118 = vunpack.c.h.b16 %v1021
    %v2119 = vunpack.c.l.b16 %v1022
    %v2120 = vunpack.c.h.b16 %v1022
    %v2121 = vunpack.c.l.b16 %v1023
    %v2122 = vunpack.c.h.b16 %v1023
    %v2123 = vunpack.c.l.b16 %v1024
    %v2124 = vunpack.c.l.b16 %v1025
    %v2125 = vunpack.c.h.b16 %v1025
    %v2126 = vunpack.c.l.b16 %v1026
    %v2127 = vunpack.c.h.b16 %v1026
    %v2128 = vunpack.c.l.b16 %v1027
    %v2129 = vunpack.c.h.b16 %v1027
    %v2130 = vunpack.c.l.b16 %v1028
    %v2131 = vunpack.c.l.b16 %v1029
    %v2132 = vunpack.c.h.b16 %v1029
    %v2133 = vunpack.c.l.b16 %v1030
    %v2134 = vunpack.c.h.b16 %v1030
    %v2135 = vunpack.c.l.b16 %v1031
    %v2136 = vunpack.c.h.b16 %v1031
    %v2137 = vunpack.c.l.b16 %v1032
    %v2138 = vunpack.c.l.b16 %v1033
    %v2139 = vunpack.c.h.b16 %v1033
    %v2140 = vunpack.c.l.b16 %v1034
    %v2141 = vunpack.c.h.b16 %v1034
    %v2142 = vunpack.c.l.b16 %v1035
    %v2143 = vunpack.c.h.b16 %v1035
    %v2144 = vunpack.c.l.b16 %v1036
    %v2145 = vunpack.c.l.b16 %v1037
    %v2146 = vunpack.c.h.b16 %v1037
    %v2147 = vunpack.c.l.b16 %v1038
    %v2148 = vunpack.c.h.b16 %v1038
    %v2149 = vunpack.c.l.b16 %v1039
    %v2150 = vunpack.c.h.b16 %v1039
    %v2151 = vunpack.c.l.b16 %v1040
    %v2152 = vunpack.c.l.b16 %v1041
    %v2153 = vunpack.c.h.b16 %v1041
    %v2154 = vunpack.c.l.b16 %v1042
    %v2155 = vunpack.c.h.b16 %v1042
    %v2156 = vunpack.c.l.b16 %v1043
    %v2157 = vunpack.c.h.b16 %v1043
    %v2158 = vunpack.c.l.b16 %v1044
    %v2159 = vunpack.c.l.b16 %v1045
    %v2160 = vunpack.c.h.b16 %v1045
    %v2161 = vunpack.c.l.b16 %v1046
    %v2162 = vunpack.c.h.b16 %v1046
    %v2163 = vunpack.c.l.b16 %v1047
    %v2164 = vunpack.c.h.b16 %v1047
    %v2165 = vunpack.c.l.b16 %v1048
    %v2166 = vunpack.c.l.b16 %v1049
    %v2167 = vunpack.c.h.b16 %v1049
    %v2168 = vunpack.c.l.b16 %v1050
    %v2169 = vunpack.c.h.b16 %v1050
    %v2170 = vunpack.c.l.b16 %v1051
    %v2171 = vunpack.c.h.b16 %v1051
    %v2172 = vunpack.c.l.b16 %v1052
    %v2173 = vunpack.c.l.b16 %v1053
    %v2174 = vunpack.c.h.b16 %v1053
    %v2175 = vunpack.c.l.b16 %v1054
    %v2176 = vunpack.c.h.b16 %v1054
    %v2177 = vunpack.c.l.b16 %v1055
    %v2178 = vunpack.c.h.b16 %v1055
    %v2179 = vunpack.c.l.b16 %v1056
    %v2180 = vunpack.c.l.b16 %v1057
    %v2181 = vunpack.c.h.b16 %v1057
    %v2182 = vunpack.c.l.b16 %v1058
    %v2183 = vunpack.c.h.b16 %v1058
    %v2184 = vunpack.c.l.b16 %v1059
    %v2185 = vunpack.c.h.b16 %v1059
    %v2186 = vunpack.c.l.b16 %v1060
    %v2187 = vunpack.c.l.b16 %v1061
    %v2188 = vunpack.c.h.b16 %v1061
    %v2189 = vunpack.c.l.b16 %v1062
    %v2190 = vunpack.c.h.b16 %v1062
    %v2191 = vunpack.c.l.b16 %v1063
    %v2192 = vunpack.c.h.b16 %v1063
    %v2193 = vunpack.c.l.b16 %v1064
    %v2194 = vunpack.c.l.b16 %v1065
    %v2195 = vunpack.c.h.b16 %v1065
    %v2196 = vunpack.c.l.b16 %v1066
    %v2197 = vunpack.c.h.b16 %v1066
    %v2198 = vunpack.c.l.b16 %v1067
    %v2199 = vunpack.c.h.b16 %v1067
    %v2200 = vunpack.c.l.b16 %v1068
    %v2201 = vunpack.c.l.b16 %v1069
    %v2202 = vunpack.c.h.b16 %v1069
    %v2203 = vunpack.c.l.b16 %v1070
    %v2204 = vunpack.c.h.b16 %v1070
    %v2205 = vunpack.c.l.b16 %v1071
    %v2206 = vunpack.c.h.b16 %v1071
    %v2207 = vunpack.c.l.b16 %v1072
    %v2208 = vunpack.c.l.b16 %v1073
    %v2209 = vunpack.c.h.b16 %v1073
    %v2210 = vunpack.c.l.b16 %v1074
    %v2211 = vunpack.c.h.b16 %v1074
    %v2212 = vunpack.c.l.b16 %v1075
    %v2213 = vunpack.c.h.b16 %v1075
    %v2214 = vunpack.c.l.b16 %v1076
    %v2215 = vunpack.c.l.b16 %v1077
    %v2216 = vunpack.c.h.b16 %v1077
    %v2217 = vunpack.c.l.b16 %v1078
    %v2218 = vunpack.c.h.b16 %v1078
    %v2219 = vunpack.c.l.b16 %v1079
    %v2220 = vunpack.c.h.b16 %v1079
    %v2221 = vunpack.c.l.b16 %v1080
    %v2222 = vunpack.c.l.b16 %v1081
    %v2223 = vunpack.c.h.b16 %v1081
    %v2224 = vunpack.c.l.b16 %v1082
    %v2225 = vunpack.c.h.b16 %v1082
    %v2226 = vunpack.c.l.b16 %v1083
    %v2227 = vunpack.c.h.b16 %v1083
    %v2228 = vunpack.c.l.b16 %v1084
    %v2229 = vunpack.c.l.b16 %v1085
    %v2230 = vunpack.c.h.b16 %v1085
    %v2231 = vunpack.c.l.b16 %v1086
    %v2232 = vunpack.c.h.b16 %v1086
    %v2233 = vunpack.c.l.b16 %v1087
    %v2234 = vunpack.c.h.b16 %v1087
    %v2235 = vunpack.c.l.b16 %v1088
    %v2236 = vunpack.c.l.b16 %v1089
    %v2237 = vunpack.c.h.b16 %v1089
    %v2238 = vunpack.c.l.b16 %v1090
    %v2239 = vunpack.c.h.b16 %v1090
    %v2240 = vunpack.c.l.b16 %v1091
    %v2241 = vunpack.c.h.b16 %v1091
    %v2242 = vunpack.c.l.b16 %v1092
    %v2243 = vunpack.c.l.b16 %v1093
    %v2244 = vunpack.c.h.b16 %v1093
    %v2245 = vunpack.c.l.b16 %v1094
    %v2246 = vunpack.c.h.b16 %v1094
    %v2247 = vunpack.c.l.b16 %v1095
    %v2248 = vunpack.c.h.b16 %v1095
    %v2249 = vunpack.c.l.b16 %v1096
    %v2250 = vunpack.c.l.b16 %v1097
    %v2251 = vunpack.c.h.b16 %v1097
    %v2252 = vunpack.c.l.b16 %v1098
    %v2253 = vunpack.c.h.b16 %v1098
    %v2254 = vunpack.c.l.b16 %v1099
    %v2255 = vunpack.c.h.b16 %v1099
    %v2256 = vunpack.c.l.b16 %v1100
    %v2257 = vunpack.c.l.b16 %v1101
    %v2258 = vunpack.c.h.b16 %v1101
    %v2259 = vunpack.c.l.b16 %v1102
    %v2260 = vunpack.c.h.b16 %v1102
    %v2261 = vunpack.c.l.b16 %v1103
    %v2262 = vunpack.c.h.b16 %v1103
    %v2263 = vunpack.c.l.b16 %v1104
    %v2264 = vunpack.c.l.b16 %v1105
    %v2265 = vunpack.c.h.b16 %v1105
    %v2266 = vunpack.c.l.b16 %v1106
    %v2267 = vunpack.c.h.b16 %v1106
    %v2268 = vunpack.c.l.b16 %v1107
    %v2269 = vunpack.c.h.b16 %v1107
    %v2270 = vunpack.c.l.b16 %v1108
    %v2271 = vunpack.c.l.b16 %v1109
    %v2272 = vunpack.c.h.b16 %v1109
    %v2273 = vunpack.c.l.b16 %v1110
    %v2274 = vunpack.c.h.b16 %v1110
    %v2275 = vunpack.c.l.b16 %v1111
    %v2276 = vunpack.c.h.b16 %v1111
    %v2277 = vunpack.c.l.b16 %v1112
    %v2278 = vunpack.c.l.b16 %v1113
    %v2279 = vunpack.c.h.b16 %v1113
    %v2280 = vunpack.c.l.b16 %v1114
    %v2281 = vunpack.c.h.b16 %v1114
    %v2282 = vunpack.c.l.b16 %v1115
    %v2283 = vunpack.c.h.b16 %v1115
    %v2284 = vunpack.c.l.b16 %v1116
    %v2285 = vunpack.c.l.b16 %v1117
    %v2286 = vunpack.c.h.b16 %v1117
    %v2287 = vunpack.c.l.b16 %v1118
    %v2288 = vunpack.c.h.b16 %v1118
    %v2289 = vunpack.c.l.b16 %v1119
    %v2290 = vunpack.c.h.b16 %v1119
    %v2291 = vunpack.c.l.b16 %v1120
    %v2292 = vunpack.c.l.b16 %v1121
    %v2293 = vunpack.c.h.b16 %v1121
    %v2294 = vunpack.c.l.b16 %v1122
    %v2295 = vunpack.c.h.b16 %v1122
    %v2296 = vunpack.c.l.b16 %v1123
    %v2297 = vunpack.c.h.b16 %v1123
    %v2298 = vunpack.c.l.b16 %v1124
    %v2299 = vunpack.c.l.b16 %v1125
    %v2300 = vunpack.c.h.b16 %v1125
    %v2301 = vunpack.c.l.b16 %v1126
    %v2302 = vunpack.c.h.b16 %v1126
    %v2303 = vunpack.c.l.b16 %v1127
    %v2304 = vunpack.c.h.b16 %v1127
    %v2305 = vunpack.c.l.b16 %v1128
    %v2306 = vunpack.c.l.b16 %v1129
    %v2307 = vunpack.c.h.b16 %v1129
    %v2308 = vunpack.c.l.b16 %v1130
    %v2309 = vunpack.c.h.b16 %v1130
    %v2310 = vunpack.c.l.b16 %v1131
    %v2311 = vunpack.c.h.b16 %v1131
    %v2312 = vunpack.c.l.b16 %v1132
    %v2313 = vunpack.c.l.b16 %v1133
    %v2314 = vunpack.c.h.b16 %v1133
    %v2315 = vunpack.c.l.b16 %v1134
    %v2316 = vunpack.c.h.b16 %v1134
    %v2317 = vunpack.c.l.b16 %v1135
    %v2318 = vunpack.c.h.b16 %v1135
    %v2319 = vunpack.c.l.b16 %v1136
    %v2320 = vunpack.c.l.b16 %v1137
    %v2321 = vunpack.c.h.b16 %v1137
    %v2322 = vunpack.c.l.b16 %v1138
    %v2323 = vunpack.c.h.b16 %v1138
    %v2324 = vunpack.c.l.b16 %v1139
    %v2325 = vunpack.c.h.b16 %v1139
    %v2326 = vunpack.c.l.b16 %v1140
    %v2327 = vunpack.c.l.b16 %v1141
    %v2328 = vunpack.c.h.b16 %v1141
    %v2329 = vunpack.c.l.b16 %v1142
    %v2330 = vunpack.c.h.b16 %v1142
    %v2331 = vunpack.c.l.b16 %v1143
    %v2332 = vunpack.c.h.b16 %v1143
    %v2333 = vunpack.c.l.b16 %v1144
    %v2334 = vunpack.c.l.b16 %v1145
    %v2335 = vunpack.c.h.b16 %v1145
    %v2336 = vunpack.c.l.b16 %v1146
    %v2337 = vunpack.c.h.b16 %v1146
    %v2338 = vunpack.c.l.b16 %v1147
    %v2339 = vunpack.c.h.b16 %v1147
    %v2340 = vunpack.c.l.b16 %v1148
    %v2341 = vunpack.c.l.b16 %v1149
    %v2342 = vunpack.c.h.b16 %v1149
    %v2343 = vunpack.c.l.b16 %v1150
    %v2344 = vunpack.c.h.b16 %v1150
    %v2345 = vunpack.c.l.b16 %v1151
    %v2346 = vunpack.c.h.b16 %v1151
    %v2347 = vunpack.c.l.b16 %v1152
    %v2348 = vunpack.c.l.b16 %v1153
    %v2349 = vunpack.c.h.b16 %v1153
    %v2350 = vunpack.c.l.b16 %v1154
    %v2351 = vunpack.c.h.b16 %v1154
    %v2352 = vunpack.c.l.b16 %v1155
    %v2353 = vunpack.c.h.b16 %v1155
    %v2354 = vunpack.c.l.b16 %v1156
    %v2355 = vunpack.c.l.b16 %v1157
    %v2356 = vunpack.c.h.b16 %v1157
    %v2357 = vunpack.c.l.b16 %v1158
    %v2358 = vunpack.c.h.b16 %v1158
    %v2359 = vunpack.c.l.b16 %v1159
    %v2360 = vunpack.c.h.b16 %v1159
    %v2361 = vunpack.c.l.b16 %v1160
    %v2362 = vunpack.c.l.b16 %v1161
    %v2363 = vunpack.c.h.b16 %v1161
    %v2364 = vunpack.c.l.b16 %v1162
    %v2365 = vunpack.c.h.b16 %v1162
    %v2366 = vunpack.c.l.b16 %v1163
    %v2367 = vunpack.c.h.b16 %v1163
    %v2368 = vunpack.c.l.b16 %v1164
    %v2369 = vunpack.c.l.b16 %v1165
    %v2370 = vunpack.c.h.b16 %v1165
    %v2371 = vunpack.c.l.b16 %v1166
    %v2372 = vunpack.c.h.b16 %v1166
    %v2373 = vunpack.c.l.b16 %v1167
    %v2374 = vunpack.c.h.b16 %v1167
    %v2375 = vunpack.c.l.b16 %v1168
    %v2376 = vunpack.c.l.b16 %v1169
    %v2377 = vunpack.c.h.b16 %v1169
    %v2378 = vunpack.c.l.b16 %v1170
    %v2379 = vunpack.c.h.b16 %v1170
    %v2380 = vunpack.c.l.b16 %v1171
    %v2381 = vunpack.c.h.b16 %v1171
    %v2382 = vunpack.c.l.b16 %v1172
    %v2383 = vunpack.c.l.b16 %v1173
    %v2384 = vunpack.c.h.b16 %v1173
    %v2385 = vunpack.c.l.b16 %v1174
    %v2386 = vunpack.c.h.b16 %v1174
    %v2387 = vunpack.c.l.b16 %v1175
    %v2388 = vunpack.c.h.b16 %v1175
    %v2389 = vunpack.c.l.b16 %v1176
    %v2390 = vunpack.c.l.b16 %v1177
    %v2391 = vunpack.c.h.b16 %v1177
    %v2392 = vunpack.c.l.b16 %v1178
    %v2393 = vunpack.c.h.b16 %v1178
    %v2394 = vunpack.c.l.b16 %v1179
    %v2395 = vunpack.c.h.b16 %v1179
    %v2396 = vunpack.c.l.b16 %v1180
    %v2397 = vunpack.c.l.b16 %v1181
    %v2398 = vunpack.c.h.b16 %v1181
    %v2399 = vunpack.c.l.b16 %v1182
    %v2400 = vunpack.c.h.b16 %v1182
    %v2401 = vunpack.c.l.b16 %v1183
    %v2402 = vunpack.c.h.b16 %v1183
    %v2403 = vunpack.c.l.b16 %v1184
    %v2404 = vunpack.c.l.b16 %v1185
    %v2405 = vunpack.c.h.b16 %v1185
    %v2406 = vunpack.c.l.b16 %v1186
    %v2407 = vunpack.c.h.b16 %v1186
    %v2408 = vunpack.c.l.b16 %v1187
    %v2409 = vunpack.c.h.b16 %v1187
    %v2410 = vunpack.c.l.b16 %v1188
    %v2411 = vunpack.c.l.b16 %v1189
    %v2412 = vunpack.c.h.b16 %v1189
    %v2413 = vunpack.c.l.b16 %v1190
    %v2414 = vunpack.c.h.b16 %v1190
    %v2415 = vunpack.c.l.b16 %v1191
    %v2416 = vunpack.c.h.b16 %v1191
    %v2417 = vunpack.c.l.b16 %v1192
    %v2418 = vunpack.c.l.b16 %v1193
    %v2419 = vunpack.c.h.b16 %v1193
    %v2420 = vunpack.c.l.b16 %v1194
    %v2421 = vunpack.c.h.b16 %v1194
    %v2422 = vunpack.c.l.b16 %v1195
    %v2423 = vunpack.c.h.b16 %v1195
    %v2424 = vunpack.c.l.b16 %v1196
    %v2425 = vunpack.c.l.b16 %v1197
    %v2426 = vunpack.c.h.b16 %v1197
    %v2427 = vunpack.c.l.b16 %v1198
    %v2428 = vunpack.c.h.b16 %v1198
    %v2429 = vunpack.c.l.b16 %v1199
    %v2430 = vunpack.c.h.b16 %v1199
    %v2431 = vunpack.c.l.b16 %v1200
    %v2432 = vunpack.c.l.b16 %v1201
    %v2433 = vunpack.c.h.b16 %v1201
    %v2434 = vunpack.c.l.b16 %v1202
    %v2435 = vunpack.c.h.b16 %v1202
    %v2436 = vunpack.c.l.b16 %v1203
    %v2437 = vunpack.c.h.b16 %v1203
    %v2438 = vunpack.c.l.b16 %v1204
    %v2439 = vunpack.c.l.b16 %v1205
    %v2440 = vunpack.c.h.b16 %v1205
    %v2441 = vunpack.c.l.b16 %v1206
    %v2442 = vunpack.c.h.b16 %v1206
    %v2443 = vunpack.c.l.b16 %v1207
    %v2444 = vunpack.c.h.b16 %v1207
    %v2445 = vunpack.c.l.b16 %v1208
    %v2446 = vunpack.c.l.b16 %v1209
    %v2447 = vunpack.c.h.b16 %v1209
    %v2448 = vunpack.c.l.b16 %v1210
    %v2449 = vunpack.c.h.b16 %v1210
    %v2450 = vunpack.c.l.b16 %v1211
    %v2451 = vunpack.c.h.b16 %v1211
    %v2452 = vunpack.c.l.b16 %v1212
    %v2453 = vunpack.c.l.b16 %v1213
    %v2454 = vunpack.c.h.b16 %v1213
    %v2455 = vunpack.c.l.b16 %v1214
    %v2456 = vunpack.c.h.b16 %v1214
    %v2457 = vunpack.c.l.b16 %v1215
    %v2458 = vunpack.c.h.b16 %v1215
    %v2459 = vunpack.c.l.b16 %v1216
    %v2460 = vunpack.c.l.b16 %v1217
    %v2461 = vunpack.c.h.b16 %v1217
    %v2462 = vunpack.c.l.b16 %v1218
    %v2463 = vunpack.c.h.b16 %v1218
    %v2464 = vunpack.c.l.b16 %v1219
    %v2465 = vunpack.c.h.b16 %v1219
    %v2466 = vunpack.c.l.b16 %v1220
    %v2467 = vunpack.c.l.b16 %v1221
    %v2468 = vunpack.c.h.b16 %v1221
    %v2469 = vunpack.c.l.b16 %v1222
    %v2470 = vunpack.c.h.b16 %v1222
    %v2471 = vunpack.c.l.b16 %v1223
    %v2472 = vunpack.c.h.b16 %v1223
    %v2473 = vunpack.c.l.b16 %v1224
    %v2474 = vunpack.c.l.b16 %v1225
    %v2475 = vunpack.c.h.b16 %v1225
    %v2476 = vunpack.c.l.b16 %v1226
    %v2477 = vunpack.c.h.b16 %v1226
    %v2478 = vunpack.c.l.b16 %v1227
    %v2479 = vunpack.c.h.b16 %v1227
    %v2480 = vunpack.c.l.b16 %v1228
    %v2481 = vunpack.c.l.b16 %v1229
    %v2482 = vunpack.c.h.b16 %v1229
    %v2483 = vunpack.c.l.b16 %v1230
    %v2484 = vunpack.c.h.b16 %v1230
    %v2485 = vunpack.c.l.b16 %v1231
    %v2486 = vunpack.c.h.b16 %v1231
    %v2487 = vunpack.c.l.b16 %v1232
    %v2488 = vunpack.c.l.b16 %v1233
    %v2489 = vunpack.c.h.b16 %v1233
    %v2490 = vunpack.c.l.b16 %v1234
    %v2491 = vunpack.c.h.b16 %v1234
    %v2492 = vunpack.c.l.b16 %v1235
    %v2493 = vunpack.c.h.b16 %v1235
    %v2494 = vunpack.c.l.b16 %v1236
    %v2495 = vunpack.c.l.b16 %v1237
    %v2496 = vunpack.c.h.b16 %v1237
    %v2497 = vunpack.c.l.b16 %v1238
    %v2498 = vunpack.c.h.b16 %v1238
    %v2499 = vunpack.c.l.b16 %v1239
    %v2500 = vunpack.c.h.b16 %v1239
    %v2501 = vunpack.c.l.b16 %v1240
    %v2502 = vunpack.c.l.b16 %v1241
    %v2503 = vunpack.c.h.b16 %v1241
    %v2504 = vunpack.c.l.b16 %v1242
    %v2505 = vunpack.c.h.b16 %v1242
    %v2506 = vunpack.c.l.b16 %v1243
    %v2507 = vunpack.c.h.b16 %v1243
    %v2508 = vunpack.c.l.b16 %v1244
    %v2509 = vunpack.c.l.b16 %v1245
    %v2510 = vunpack.c.h.b16 %v1245
    %v2511 = vunpack.c.l.b16 %v1246
    %v2512 = vunpack.c.h.b16 %v1246
    %v2513 = vunpack.c.l.b16 %v1247
    %v2514 = vunpack.c.h.b16 %v1247
    %v2515 = vunpack.c.l.b16 %v1248
    %v2516 = vunpack.c.l.b16 %v1249
    %v2517 = vunpack.c.h.b16 %v1249
    %v2518 = vunpack.c.l.b16 %v1250
    %v2519 = vunpack.c.h.b16 %v1250
    %v2520 = vunpack.c.l.b16 %v1251
    %v2521 = vunpack.c.h.b16 %v1251
    %v2522 = vunpack.c.l.b16 %v1252
    %v2523 = vunpack.c.l.b16 %v1253
    %v2524 = vunpack.c.h.b16 %v1253
    %v2525 = vunpack.c.l.b16 %v1254
    %v2526 = vunpack.c.h.b16 %v1254
    %v2527 = vunpack.c.l.b16 %v1255
    %v2528 = vunpack.c.h.b16 %v1255
    %v2529 = vunpack.c.l.b16 %v1256
    %v2530 = vunpack.c.l.b16 %v1257
    %v2531 = vunpack.c.h.b16 %v1257
    %v2532 = vunpack.c.l.b16 %v1258
    %v2533 = vunpack.c.h.b16 %v1258
    %v2534 = vunpack.c.l.b16 %v1259
    %v2535 = vunpack.c.h.b16 %v1259
    %v2536 = vunpack.c.l.b16 %v1260
    %v2537 = vunpack.c.l.b16 %v1261
    %v2538 = vunpack.c.h.b16 %v1261
    %v2539 = vunpack.c.l.b16 %v1262
    %v2540 = vunpack.c.h.b16 %v1262
    %v2541 = vunpack.c.l.b16 %v1263
    %v2542 = vunpack.c.h.b16 %v1263
    %v2543 = vunpack.c.l.b16 %v1264
    %v2544 = vunpack.c.l.b16 %v1265
    %v2545 = vunpack.c.h.b16 %v1265
    %v2546 = vunpack.c.l.b16 %v1266
    %v2547 = vunpack.c.h.b16 %v1266
    %v2548 = vunpack.c.l.b16 %v1267
    %v2549 = vunpack.c.h.b16 %v1267
    %v2550 = vunpack.c.l.b16 %v1268
    %v2551 = vunpack.c.l.b16 %v1269
    %v2552 = vunpack.c.h.b16 %v1269
    %v2553 = vunpack.c.l.b16 %v1270
    %v2554 = vunpack.c.h.b16 %v1270
    %v2555 = vunpack.c.l.b16 %v1271
    %v2556 = vunpack.c.h.b16 %v1271
    %v2557 = vunpack.c.l.b16 %v1272
    %v2558 = vunpack.c.l.b16 %v1273
    %v2559 = vunpack.c.h.b16 %v1273
    %v2560 = vunpack.c.l.b16 %v1274
    %v2561 = vunpack.c.h.b16 %v1274
    %v2562 = vunpack.c.l.b16 %v1275
    %v2563 = vunpack.c.h.b16 %v1275
    %v2564 = vunpack.c.l.b16 %v1276
    %v2565 = vunpack.c.l.b16 %v1277
    %v2566 = vunpack.c.h.b16 %v1277
    %v2567 = vunpack.c.l.b16 %v1278
    %v2568 = vunpack.c.h.b16 %v1278
    %v2569 = vunpack.c.l.b16 %v1279
    %v2570 = vunpack.c.h.b16 %v1279
    %v2571 = vunpack.c.l.b16 %v1280
    %v2572 = vunpack.c.l.b16 %v1281
    %v2573 = vunpack.c.h.b16 %v1281
    %v2574 = vunpack.c.l.b16 %v1282
    %v2575 = vunpack.c.h.b16 %v1282
    %v2576 = vunpack.c.l.b16 %v1283
    %v2577 = vunpack.c.h.b16 %v1283
    %v2578 = vunpack.c.l.b16 %v1284
    %v2579 = vunpack.c.l.b16 %v1285
    %v2580 = vunpack.c.h.b16 %v1285
    %v2581 = vunpack.c.l.b16 %v1286
    %v2582 = vunpack.c.h.b16 %v1286
    %v2583 = vunpack.c.l.b16 %v1287
    %v2584 = vunpack.c.h.b16 %v1287
    %v2585 = vunpack.c.l.b16 %v1288
    %v2586 = vunpack.c.l.b16 %v1289
    %v2587 = vunpack.c.h.b16 %v1289
    %v2588 = vunpack.c.l.b16 %v1290
    %v2589 = vunpack.c.h.b16 %v1290
    %v2590 = vunpack.c.l.b16 %v1291
    %v2591 = vunpack.c.h.b16 %v1291
    %v2592 = vunpack.c.l.b16 %v1292
    %v2593 = vunpack.c.l.b16 %v1293
    %v2594 = vunpack.c.h.b16 %v1293
    %v2595 = vunpack.c.l.b16 %v1294
    %v2596 = vunpack.c.h.b16 %v1294
    %v2597 = vunpack.c.l.b16 %v1295
    %v2598 = vunpack.c.h.b16 %v1295
    %v2599 = vunpack.c.l.b16 %v1296
    %v2600 = vunpack.c.l.b16 %v1297
    %v2601 = vunpack.c.h.b16 %v1297
    %v2602 = vunpack.c.l.b16 %v1298
    %v2603 = vunpack.c.h.b16 %v1298
    %v2604 = vunpack.c.l.b16 %v1299
    %v2605 = vunpack.c.h.b16 %v1299
    %v2606 = vunpack.c.l.b16 %v1300
    %v2607 = vunpack.c.l.b16 %v1301
    %v2608 = vunpack.c.h.b16 %v1301
    %v2609 = vunpack.c.l.b16 %v1302
    %v2610 = vunpack.c.h.b16 %v1302
    %v2611 = vunpack.c.l.b16 %v1303
    %v2612 = vunpack.c.h.b16 %v1303
    %v2613 = vunpack.c.l.b16 %v1304
    %v2614 = vunpack.c.l.b16 %v1305
    %v2615 = vunpack.c.h.b16 %v1305
    %v2616 = vunpack.c.l.b16 %v1306
    %v2617 = vunpack.c.h.b16 %v1306
    %v2618 = vunpack.c.l.b16 %v1307
    %v2619 = vunpack.c.h.b16 %v1307
    %v2620 = vunpack.c.l.b16 %v1308
    %v2621 = vunpack.c.l.b16 %v1309
    %v2622 = vunpack.c.h.b16 %v1309
    %v2623 = vunpack.c.l.b16 %v1310
    %v2624 = vunpack.c.h.b16 %v1310
    %v2625 = vunpack.c.l.b16 %v1311
    %v2626 = vunpack.c.h.b16 %v1311
    %v2627 = vunpack.c.l.b16 %v1312
    %v2628 = vunpack.c.l.b16 %v1313
    %v2629 = vunpack.c.h.b16 %v1313
    %v2630 = vunpack.c.l.b16 %v1314
    %v2631 = vunpack.c.h.b16 %v1314
    %v2632 = vunpack.c.l.b16 %v1315
    %v2633 = vunpack.c.h.b16 %v1315
    %v2634 = vunpack.c.l.b16 %v1316
    %v2635 = vunpack.c.l.b16 %v1317
    %v2636 = vunpack.c.h.b16 %v1317
    %v2637 = vunpack.c.l.b16 %v1318
    %v2638 = vunpack.c.h.b16 %v1318
    %v2639 = vunpack.c.l.b16 %v1319
    %v2640 = vunpack.c.h.b16 %v1319
    %v2641 = vunpack.c.l.b16 %v1320
    %v2642 = vunpack.c.l.b16 %v1321
    %v2643 = vunpack.c.h.b16 %v1321
    %v2644 = vunpack.c.l.b16 %v1322
    %v2645 = vunpack.c.h.b16 %v1322
    %v2646 = vunpack.c.l.b16 %v1323
    %v2647 = vunpack.c.h.b16 %v1323
    %v2648 = vunpack.c.l.b16 %v1324
    %v2649 = vunpack.c.l.b16 %v1325
    %v2650 = vunpack.c.h.b16 %v1325
    %v2651 = vunpack.c.l.b16 %v1326
    %v2652 = vunpack.c.h.b16 %v1326
    %v2653 = vunpack.c.l.b16 %v1327
    %v2654 = vunpack.c.h.b16 %v1327
    %v2655 = vunpack.c.l.b16 %v1328
    %v2656 = vunpack.c.l.b16 %v1329
    %v2657 = vunpack.c.h.b16 %v1329
    %v2658 = vunpack.c.l.b16 %v1330
    %v2659 = vunpack.c.h.b16 %v1330
    %v2660 = vunpack.c.l.b16 %v1331
    %v2661 = vunpack.c.h.b16 %v1331
    %v2662 = vunpack.c.l.b16 %v1332
    %v2663 = vunpack.c.l.b16 %v1333
    %v2664 = vunpack.c.h.b16 %v1333
    %v2665 = vunpack.c.l.b16 %v1334
    %v2666 = vunpack.c.h.b16 %v1334
    %v2667 = vunpack.c.l.b16 %v1335
    %v2668 = vunpack.c.h.b16 %v1335
    %v2669 = vunpack.c.l.b16 %v1336
    %v2670 = vunpack.c.l.b16 %v1337
    %v2671 = vunpack.c.h.b16 %v1337
    %v2672 = vunpack.c.l.b16 %v1338
    %v2673 = vunpack.c.h.b16 %v1338
    %v2674 = vunpack.c.l.b16 %v1339
    %v2675 = vunpack.c.h.b16 %v1339
    %v2676 = vunpack.c.l.b16 %v1340
    %v2677 = vunpack.c.l.b16 %v1341
    %v2678 = vunpack.c.h.b16 %v1341
    %v2679 = vunpack.c.l.b16 %v1342
    %v2680 = vunpack.c.h.b16 %v1342
    %v2681 = vunpack.c.l.b16 %v1343
    %v2682 = vunpack.c.h.b16 %v1343
    %v2683 = vunpack.c.l.b16 %v1344
    %v2684 = vunpack.c.l.b16 %v1345
    %v2685 = vunpack.c.h.b16 %v1345
    %v2686 = vunpack.c.l.b16 %v1346
    %v2687 = vunpack.c.h.b16 %v1346
    %v2688 = vunpack.c.l.b16 %v1347
    %v2689 = vunpack.c.h.b16 %v1347
    %v2690 = vunpack.c.l.b16 %v1348
    %v2691 = vunpack.c.l.b16 %v1349
    %v2692 = vunpack.c.h.b16 %v1349
    %v2693 = vunpack.c.l.b16 %v1350
    %v2694 = vunpack.c.h.b16 %v1350
    %v2695 = vunpack.c.l.b16 %v1351
    %v2696 = vunpack.c.h.b16 %v1351
    %v2697 = vunpack.c.l.b16 %v1352
    %v2698 = vunpack.c.l.b16 %v1353
    %v2699 = vunpack.c.h.b16 %v1353
    %v2700 = vunpack.c.l.b16 %v1354
    %v2701 = vunpack.c.h.b16 %v1354
    %v2702 = vunpack.c.l.b16 %v1355
    %v2703 = vunpack.c.h.b16 %v1355
    %v2704 = vunpack.c.l.b16 %v1356
    %v2705 = vunpack.c.l.b16 %v1357
    %v2706 = vunpack.c.h.b16 %v1357
    %v2707 = vunpack.c.l.b16 %v1358
    %v2708 = vunpack.c.h.b16 %v1358
    %v2709 = vunpack.c.l.b16 %v1359
    %v2710 = vunpack.c.h.b16 %v1359
    %v2711 = vunpack.c.l.b16 %v1360
    %v2712 = vunpack.c.l.b16 %v1361
    %v2713 = vunpack.c.h.b16 %v1361
    %v2714 = vunpack.c.l.b16 %v1362
    %v2715 = vunpack.c.h.b16 %v1362
    %v2716 = vunpack.c.l.b16 %v1363
    %v2717 = vunpack.c.h.b16 %v1363
    %v2718 = vunpack.c.l.b16 %v1364
    %v2719 = vunpack.c.l.b16 %v1365
    %v2720 = vunpack.c.h.b16 %v1365
    %v2721 = vunpack.c.l.b16 %v1366
    %v2722 = vunpack.c.h.b16 %v1366
    %v2723 = vunpack.c.l.b16 %v1367
    %v2724 = vunpack.c.h.b16 %v1367
    %v2725 = vunpack.c.l.b16 %v1368
    %v2726 = vunpack.c.l.b16 %v1369
    %v2727 = vunpack.c.h.b16 %v1369
    %v2728 = vunpack.c.l.b16 %v1370
    %v2729 = vunpack.c.h.b16 %v1370
    %v2730 = vunpack.c.l.b16 %v1371
    %v2731 = vunpack.c.h.b16 %v1371
    %v2732 = vunpack.c.l.b16 %v1372
    %v2733 = vunpack.c.l.b16 %v1373
    %v2734 = vunpack.c.h.b16 %v1373
    %v2735 = vunpack.c.l.b16 %v1374
    %v2736 = vunpack.c.h.b16 %v1374
    %v2737 = vunpack.c.l.b16 %v1375
    %v2738 = vunpack.c.h.b16 %v1375
    %v2739 = vunpack.c.l.b16 %v1376
    %v2740 = vunpack.c.l.b16 %v1377
    %v2741 = vunpack.c.h.b16 %v1377
    %v2742 = vunpack.c.l.b16 %v1378
    %v2743 = vunpack.c.h.b16 %v1378
    %v2744 = vunpack.c.l.b16 %v1379
    %v2745 = vunpack.c.h.b16 %v1379
    %v2746 = vunpack.c.l.b16 %v1380
    %v2747 = vunpack.c.l.b16 %v1381
    %v2748 = vunpack.c.h.b16 %v1381
    %v2749 = vunpack.c.l.b16 %v1382
    %v2750 = vunpack.c.h.b16 %v1382
    %v2751 = vunpack.c.l.b16 %v1383
    %v2752 = vunpack.c.h.b16 %v1383
    %v2753 = vunpack.c.l.b16 %v1384
    %v2754 = vunpack.c.l.b16 %v1385
    %v2755 = vunpack.c.h.b16 %v1385
    %v2756 = vunpack.c.l.b16 %v1386
    %v2757 = vunpack.c.h.b16 %v1386
    %v2758 = vunpack.c.l.b16 %v1387
    %v2759 = vunpack.c.h.b16 %v1387
    %v2760 = vunpack.c.l.b16 %v1388
    %v2761 = vunpack.c.l.b16 %v1389
    %v2762 = vunpack.c.h.b16 %v1389
    %v2763 = vunpack.c.l.b16 %v1390
    %v2764 = vunpack.c.h.b16 %v1390
    %v2765 = vunpack.c.l.b16 %v1391
    %v2766 = vunpack.c.h.b16 %v1391
    %v2767 = vunpack.c.l.b16 %v1392
    %v2768 = vpack.c.b16 %v1900, %v1893
    %v2769 = vpack.c.b16 %v1901, %v1894
    %v2770 = vpack.c.b16 %v1902, %v1895
    %v2771 = vpack.c.b16 %v1903, %v1896
    %v2772 = vpack.c.b16 %v1904, %v1897
    %v2773 = vpack.c.b16 %v1905, %v1898
    %v2774 = vpack.c.b16 %v1906, %v1899
    %v2775 = vpack.c.b16 %v1914, %v1907
    %v2776 = vpack.c.b16 %v1915, %v1908
    %v2777 = vpack.c.b16 %v1916, %v1909
    %v2778 = vpack.c.b16 %v1917, %v1910
    %v2779 = vpack.c.b16 %v1918, %v1911
    %v2780 = vpack.c.b16 %v1919, %v1912
    %v2781 = vpack.c.b16 %v1920, %v1913
    %v2782 = vpack.c.b16 %v1928, %v1921
    %v2783 = vpack.c.b16 %v1929, %v1922
    %v2784 = vpack.c.b16 %v1930, %v1923
    %v2785 = vpack.c.b16 %v1931, %v1924
    %v2786 = vpack.c.b16 %v1932, %v1925
    %v2787 = vpack.c.b16 %v1933, %v1926
    %v2788 = vpack.c.b16 %v1934, %v1927
    %v2789 = vpack.c.b16 %v1942, %v1935
    %v2790 = vpack.c.b16 %v1943, %v1936
    %v2791 = vpack.c.b16 %v1944, %v1937
    %v2792 = vpack.c.b16 %v1945, %v1938
    %v2793 = vpack.c.b16 %v1946, %v1939
    %v2794 = vpack.c.b16 %v1947, %v1940
    %v2795 = vpack.c.b16 %v1948, %v1941
    %v2796 = vpack.c.b16 %v1956, %v1949
    %v2797 = vpack.c.b16 %v1957, %v1950
    %v2798 = vpack.c.b16 %v1958, %v1951
    %v2799 = vpack.c.b16 %v1959, %v1952
    %v2800 = vpack.c.b16 %v1960, %v1953
    %v2801 = vpack.c.b16 %v1961, %v1954
    %v2802 = vpack.c.b16 %v1962, %v1955
    %v2803 = vpack.c.b16 %v1970, %v1963
    %v2804 = vpack.c.b16 %v1971, %v1964
    %v2805 = vpack.c.b16 %v1972, %v1965
    %v2806 = vpack.c.b16 %v1973, %v1966
    %v2807 = vpack.c.b16 %v1974, %v1967
    %v2808 = vpack.c.b16 %v1975, %v1968
    %v2809 = vpack.c.b16 %v1976, %v1969
    %v2810 = vpack.c.b16 %v1984, %v1977
    %v2811 = vpack.c.b16 %v1985, %v1978
    %v2812 = vpack.c.b16 %v1986, %v1979
    %v2813 = vpack.c.b16 %v1987, %v1980
    %v2814 = vpack.c.b16 %v1988, %v1981
    %v2815 = vpack.c.b16 %v1989, %v1982
    %v2816 = vpack.c.b16 %v1990, %v1983
    %v2817 = vpack.c.b16 %v1998, %v1991
    %v2818 = vpack.c.b16 %v1999, %v1992
    %v2819 = vpack.c.b16 %v2000, %v1993
    %v2820 = vpack.c.b16 %v2001, %v1994
    %v2821 = vpack.c.b16 %v2002, %v1995
    %v2822 = vpack.c.b16 %v2003, %v1996
    %v2823 = vpack.c.b16 %v2004, %v1997
    %v2824 = vpack.c.b16 %v2012, %v2005
    %v2825 = vpack.c.b16 %v2013, %v2006
    %v2826 = vpack.c.b16 %v2014, %v2007
    %v2827 = vpack.c.b16 %v2015, %v2008
    %v2828 = vpack.c.b16 %v2016, %v2009
    %v2829 = vpack.c.b16 %v2017, %v2010
    %v2830 = vpack.c.b16 %v2018, %v2011
    %v2831 = vpack.c.b16 %v2026, %v2019
    %v2832 = vpack.c.b16 %v2027, %v2020
    %v2833 = vpack.c.b16 %v2028, %v2021
    %v2834 = vpack.c.b16 %v2029, %v2022
    %v2835 = vpack.c.b16 %v2030, %v2023
    %v2836 = vpack.c.b16 %v2031, %v2024
    %v2837 = vpack.c.b16 %v2032, %v2025
    %v2838 = vpack.c.b16 %v2040, %v2033
    %v2839 = vpack.c.b16 %v2041, %v2034
    %v2840 = vpack.c.b16 %v2042, %v2035
    %v2841 = vpack.c.b16 %v2043, %v2036
    %v2842 = vpack.c.b16 %v2044, %v2037
    %v2843 = vpack.c.b16 %v2045, %v2038
    %v2844 = vpack.c.b16 %v2046, %v2039
    %v2845 = vpack.c.b16 %v2054, %v2047
    %v2846 = vpack.c.b16 %v2055, %v2048
    %v2847 = vpack.c.b16 %v2056, %v2049
    %v2848 = vpack.c.b16 %v2057, %v2050
    %v2849 = vpack.c.b16 %v2058, %v2051
    %v2850 = vpack.c.b16 %v2059, %v2052
    %v2851 = vpack.c.b16 %v2060, %v2053
    %v2852 = vpack.c.b16 %v2068, %v2061
    %v2853 = vpack.c.b16 %v2069, %v2062
    %v2854 = vpack.c.b16 %v2070, %v2063
    %v2855 = vpack.c.b16 %v2071, %v2064
    %v2856 = vpack.c.b16 %v2072, %v2065
    %v2857 = vpack.c.b16 %v2073, %v2066
    %v2858 = vpack.c.b16 %v2074, %v2067
    %v2859 = vpack.c.b16 %v2082, %v2075
    %v2860 = vpack.c.b16 %v2083, %v2076
    %v2861 = vpack.c.b16 %v2084, %v2077
    %v2862 = vpack.c.b16 %v2085, %v2078
    %v2863 = vpack.c.b16 %v2086, %v2079
    %v2864 = vpack.c.b16 %v2087, %v2080
    %v2865 = vpack.c.b16 %v2088, %v2081
    %v2866 = vpack.c.b16 %v2096, %v2089
    %v2867 = vpack.c.b16 %v2097, %v2090
    %v2868 = vpack.c.b16 %v2098, %v2091
    %v2869 = vpack.c.b16 %v2099, %v2092
    %v2870 = vpack.c.b16 %v2100, %v2093
    %v2871 = vpack.c.b16 %v2101, %v2094
    %v2872 = vpack.c.b16 %v2102, %v2095
    %v2873 = vpack.c.b16 %v2110, %v2103
    %v2874 = vpack.c.b16 %v2111, %v2104
    %v2875 = vpack.c.b16 %v2112, %v2105
    %v2876 = vpack.c.b16 %v2113, %v2106
    %v2877 = vpack.c.b16 %v2114, %v2107
    %v2878 = vpack.c.b16 %v2115, %v2108
    %v2879 = vpack.c.b16 %v2116, %v2109
    %v2880 = vpack.c.b16 %v2124, %v2117
    %v2881 = vpack.c.b16 %v2125, %v2118
    %v2882 = vpack.c.b16 %v2126, %v2119
    %v2883 = vpack.c.b16 %v2127, %v2120
    %v2884 = vpack.c.b16 %v2128, %v2121
    %v2885 = vpack.c.b16 %v2129, %v2122
    %v2886 = vpack.c.b16 %v2130, %v2123
    %v2887 = vpack.c.b16 %v2138, %v2131
    %v2888 = vpack.c.b16 %v2139, %v2132
    %v2889 = vpack.c.b16 %v2140, %v2133
    %v2890 = vpack.c.b16 %v2141, %v2134
    %v2891 = vpack.c.b16 %v2142, %v2135
    %v2892 = vpack.c.b16 %v2143, %v2136
    %v2893 = vpack.c.b16 %v2144, %v2137
    %v2894 = vpack.c.b16 %v2152, %v2145
    %v2895 = vpack.c.b16 %v2153, %v2146
    %v2896 = vpack.c.b16 %v2154, %v2147
    %v2897 = vpack.c.b16 %v2155, %v2148
    %v2898 = vpack.c.b16 %v2156, %v2149
    %v2899 = vpack.c.b16 %v2157, %v2150
    %v2900 = vpack.c.b16 %v2158, %v2151
    %v2901 = vpack.c.b16 %v2166, %v2159
    %v2902 = vpack.c.b16 %v2167, %v2160
    %v2903 = vpack.c.b16 %v2168, %v2161
    %v2904 = vpack.c.b16 %v2169, %v2162
    %v2905 = vpack.c.b16 %v2170, %v2163
    %v2906 = vpack.c.b16 %v2171, %v2164
    %v2907 = vpack.c.b16 %v2172, %v2165
    %v2908 = vpack.c.b16 %v2180, %v2173
    %v2909 = vpack.c.b16 %v2181, %v2174
    %v2910 = vpack.c.b16 %v2182, %v2175
    %v2911 = vpack.c.b16 %v2183, %v2176
    %v2912 = vpack.c.b16 %v2184, %v2177
    %v2913 = vpack.c.b16 %v2185, %v2178
    %v2914 = vpack.c.b16 %v2186, %v2179
    %v2915 = vpack.c.b16 %v2194, %v2187
    %v2916 = vpack.c.b16 %v2195, %v2188
    %v2917 = vpack.c.b16 %v2196, %v2189
    %v2918 = vpack.c.b16 %v2197, %v2190
    %v2919 = vpack.c.b16 %v2198, %v2191
    %v2920 = vpack.c.b16 %v2199, %v2192
    %v2921 = vpack.c.b16 %v2200, %v2193
    %v2922 = vpack.c.b16 %v2208, %v2201
    %v2923 = vpack.c.b16 %v2209, %v2202
    %v2924 = vpack.c.b16 %v2210, %v2203
    %v2925 = vpack.c.b16 %v2211, %v2204
    %v2926 = vpack.c.b16 %v2212, %v2205
    %v2927 = vpack.c.b16 %v2213, %v2206
    %v2928 = vpack.c.b16 %v2214, %v2207
    %v2929 = vpack.c.b16 %v2222, %v2215
    %v2930 = vpack.c.b16 %v2223, %v2216
    %v2931 = vpack.c.b16 %v2224, %v2217
    %v2932 = vpack.c.b16 %v2225, %v2218
    %v2933 = vpack.c.b16 %v2226, %v2219
    %v2934 = vpack.c.b16 %v2227, %v2220
    %v2935 = vpack.c.b16 %v2228, %v2221
    %v2936 = vpack.c.b16 %v2236, %v2229
    %v2937 = vpack.c.b16 %v2237, %v2230
    %v2938 = vpack.c.b16 %v2238, %v2231
    %v2939 = vpack.c.b16 %v2239, %v2232
    %v2940 = vpack.c.b16 %v2240, %v2233
    %v2941 = vpack.c.b16 %v2241, %v2234
    %v2942 = vpack.c.b16 %v2242, %v2235
    %v2943 = vpack.c.b16 %v2250, %v2243
    %v2944 = vpack.c.b16 %v2251, %v2244
    %v2945 = vpack.c.b16 %v2252, %v2245
    %v2946 = vpack.c.b16 %v2253, %v2246
    %v2947 = vpack.c.b16 %v2254, %v2247
    %v2948 = vpack.c.b16 %v2255, %v2248
    %v2949 = vpack.c.b16 %v2256, %v2249
    %v2950 = vpack.c.b16 %v2264, %v2257
    %v2951 = vpack.c.b16 %v2265, %v2258
    %v2952 = vpack.c.b16 %v2266, %v2259
    %v2953 = vpack.c.b16 %v2267, %v2260
    %v2954 = vpack.c.b16 %v2268, %v2261
    %v2955 = vpack.c.b16 %v2269, %v2262
    %v2956 = vpack.c.b16 %v2270, %v2263
    %v2957 = vpack.c.b16 %v2278, %v2271
    %v2958 = vpack.c.b16 %v2279, %v2272
    %v2959 = vpack.c.b16 %v2280, %v2273
    %v2960 = vpack.c.b16 %v2281, %v2274
    %v2961 = vpack.c.b16 %v2282, %v2275
    %v2962 = vpack.c.b16 %v2283, %v2276
    %v2963 = vpack.c.b16 %v2284, %v2277
    %v2964 = vpack.c.b16 %v2292, %v2285
    %v2965 = vpack.c.b16 %v2293, %v2286
    %v2966 = vpack.c.b16 %v2294, %v2287
    %v2967 = vpack.c.b16 %v2295, %v2288
    %v2968 = vpack.c.b16 %v2296, %v2289
    %v2969 = vpack.c.b16 %v2297, %v2290
    %v2970 = vpack.c.b16 %v2298, %v2291
    %v2971 = vpack.c.b16 %v2306, %v2299
    %v2972 = vpack.c.b16 %v2307, %v2300
    %v2973 = vpack.c.b16 %v2308, %v2301
    %v2974 = vpack.c.b16 %v2309, %v2302
    %v2975 = vpack.c.b16 %v2310, %v2303
    %v2976 = vpack.c.b16 %v2311, %v2304
    %v2977 = vpack.c.b16 %v2312, %v2305
    %v2978 = vpack.c.b16 %v2320, %v2313
    %v2979 = vpack.c.b16 %v2321, %v2314
    %v2980 = vpack.c.b16 %v2322, %v2315
    %v2981 = vpack.c.b16 %v2323, %v2316
    %v2982 = vpack.c.b16 %v2324, %v2317
    %v2983 = vpack.c.b16 %v2325, %v2318
    %v2984 = vpack.c.b16 %v2326, %v2319
    %v2985 = vpack.c.b16 %v2334, %v2327
    %v2986 = vpack.c.b16 %v2335, %v2328
    %v2987 = vpack.c.b16 %v2336, %v2329
    %v2988 = vpack.c.b16 %v2337, %v2330
    %v2989 = vpack.c.b16 %v2338, %v2331
    %v2990 = vpack.c.b16 %v2339, %v2332
    %v2991 = vpack.c.b16 %v2340, %v2333
    %v2992 = vpack.c.b16 %v2348, %v2341
    %v2993 = vpack.c.b16 %v2349, %v2342
    %v2994 = vpack.c.b16 %v2350, %v2343
    %v2995 = vpack.c.b16 %v2351, %v2344
    %v2996 = vpack.c.b16 %v2352, %v2345
    %v2997 = vpack.c.b16 %v2353, %v2346
    %v2998 = vpack.c.b16 %v2354, %v2347
    %v2999 = vpack.c.b16 %v2362, %v2355
    %v3000 = vpack.c.b16 %v2363, %v2356
    %v3001 = vpack.c.b16 %v2364, %v2357
    %v3002 = vpack.c.b16 %v2365, %v2358
    %v3003 = vpack.c.b16 %v2366, %v2359
    %v3004 = vpack.c.b16 %v2367, %v2360
    %v3005 = vpack.c.b16 %v2368, %v2361
    %v3006 = vpack.c.b16 %v2376, %v2369
    %v3007 = vpack.c.b16 %v2377, %v2370
    %v3008 = vpack.c.b16 %v2378, %v2371
    %v3009 = vpack.c.b16 %v2379, %v2372
    %v3010 = vpack.c.b16 %v2380, %v2373
    %v3011 = vpack.c.b16 %v2381, %v2374
    %v3012 = vpack.c.b16 %v2382, %v2375
    %v3013 = vpack.c.b16 %v2390, %v2383
    %v3014 = vpack.c.b16 %v2391, %v2384
    %v3015 = vpack.c.b16 %v2392, %v2385
    %v3016 = vpack.c.b16 %v2393, %v2386
    %v3017 = vpack.c.b16 %v2394, %v2387
    %v3018 = vpack.c.b16 %v2395, %v2388
    %v3019 = vpack.c.b16 %v2396, %v2389
    %v3020 = vpack.c.b16 %v2404, %v2397
    %v3021 = vpack.c.b16 %v2405, %v2398
    %v3022 = vpack.c.b16 %v2406, %v2399
    %v3023 = vpack.c.b16 %v2407, %v2400
    %v3024 = vpack.c.b16 %v2408, %v2401
    %v3025 = vpack.c.b16 %v2409, %v2402
    %v3026 = vpack.c.b16 %v2410, %v2403
    %v3027 = vpack.c.b16 %v2418, %v2411
    %v3028 = vpack.c.b16 %v2419, %v2412
    %v3029 = vpack.c.b16 %v2420, %v2413
    %v3030 = vpack.c.b16 %v2421, %v2414
    %v3031 = vpack.c.b16 %v2422, %v2415
    %v3032 = vpack.c.b16 %v2423, %v2416
    %v3033 = vpack.c.b16 %v2424, %v2417
    %v3034 = vpack.c.b16 %v2432, %v2425
    %v3035 = vpack.c.b16 %v2433, %v2426
    %v3036 = vpack.c.b16 %v2434, %v2427
    %v3037 = vpack.c.b16 %v2435, %v2428
    %v3038 = vpack.c.b16 %v2436, %v2429
    %v3039 = vpack.c.b16 %v2437, %v2430
    %v3040 = vpack.c.b16 %v2438, %v2431
    %v3041 = vpack.c.b16 %v2446, %v2439
    %v3042 = vpack.c.b16 %v2447, %v2440
    %v3043 = vpack.c.b16 %v2448, %v2441
    %v3044 = vpack.c.b16 %v2449, %v2442
    %v3045 = vpack.c.b16 %v2450, %v2443
    %v3046 = vpack.c.b16 %v2451, %v2444
    %v3047 = vpack.c.b16 %v2452, %v2445
    %v3048 = vpack.c.b16 %v2460, %v2453
    %v3049 = vpack.c.b16 %v2461, %v2454
    %v3050 = vpack.c.b16 %v2462, %v2455
    %v3051 = vpack.c.b16 %v2463, %v2456
    %v3052 = vpack.c.b16 %v2464, %v2457
    %v3053 = vpack.c.b16 %v2465, %v2458
    %v3054 = vpack.c.b16 %v2466, %v2459
    %v3055 = vpack.c.b16 %v2474, %v2467
    %v3056 = vpack.c.b16 %v2475, %v2468
    %v3057 = vpack.c.b16 %v2476, %v2469
    %v3058 = vpack.c.b16 %v2477, %v2470
    %v3059 = vpack.c.b16 %v2478, %v2471
    %v3060 = vpack.c.b16 %v2479, %v2472
    %v3061 = vpack.c.b16 %v2480, %v2473
    %v3062 = vpack.c.b16 %v2488, %v2481
    %v3063 = vpack.c.b16 %v2489, %v2482
    %v3064 = vpack.c.b16 %v2490, %v2483
    %v3065 = vpack.c.b16 %v2491, %v2484
    %v3066 = vpack.c.b16 %v2492, %v2485
    %v3067 = vpack.c.b16 %v2493, %v2486
    %v3068 = vpack.c.b16 %v2494, %v2487
    %v3069 = vpack.c.b16 %v2502, %v2495
    %v3070 = vpack.c.b16 %v2503, %v2496
    %v3071 = vpack.c.b16 %v2504, %v2497
    %v3072 = vpack.c.b16 %v2505, %v2498
    %v3073 = vpack.c.b16 %v2506, %v2499
    %v3074 = vpack.c.b16 %v2507, %v2500
    %v3075 = vpack.c.b16 %v2508, %v2501
    %v3076 = vpack.c.b16 %v2516, %v2509
    %v3077 = vpack.c.b16 %v2517, %v2510
    %v3078 = vpack.c.b16 %v2518, %v2511
    %v3079 = vpack.c.b16 %v2519, %v2512
    %v3080 = vpack.c.b16 %v2520, %v2513
    %v3081 = vpack.c.b16 %v2521, %v2514
    %v3082 = vpack.c.b16 %v2522, %v2515
    %v3083 = vpack.c.b16 %v2530, %v2523
    %v3084 = vpack.c.b16 %v2531, %v2524
    %v3085 = vpack.c.b16 %v2532, %v2525
    %v3086 = vpack.c.b16 %v2533, %v2526
    %v3087 = vpack.c.b16 %v2534, %v2527
    %v3088 = vpack.c.b16 %v2535, %v2528
    %v3089 = vpack.c.b16 %v2536, %v2529
    %v3090 = vpack.c.b16 %v2544, %v2537
    %v3091 = vpack.c.b16 %v2545, %v2538
    %v3092 = vpack.c.b16 %v2546, %v2539
    %v3093 = vpack.c.b16 %v2547, %v2540
    %v3094 = vpack.c.b16 %v2548, %v2541
    %v3095 = vpack.c.b16 %v2549, %v2542
    %v3096 = vpack.c.b16 %v2550, %v2543
    %v3097 = vpack.c.b16 %v2558, %v2551
    %v3098 = vpack.c.b16 %v2559, %v2552
    %v3099 = vpack.c.b16 %v2560, %v2553
    %v3100 = vpack.c.b16 %v2561, %v2554
    %v3101 = vpack.c.b16 %v2562, %v2555
    %v3102 = vpack.c.b16 %v2563, %v2556
    %v3103 = vpack.c.b16 %v2564, %v2557
    %v3104 = vpack.c.b16 %v2572, %v2565
    %v3105 = vpack.c.b16 %v2573, %v2566
    %v3106 = vpack.c.b16 %v2574, %v2567
    %v3107 = vpack.c.b16 %v2575, %v2568
    %v3108 = vpack.c.b16 %v2576, %v2569
    %v3109 = vpack.c.b16 %v2577, %v2570
    %v3110 = vpack.c.b16 %v2578, %v2571
    %v3111 = vpack.c.b16 %v2586, %v2579
    %v3112 = vpack.c.b16 %v2587, %v2580
    %v3113 = vpack.c.b16 %v2588, %v2581
    %v3114 = vpack.c.b16 %v2589, %v2582
    %v3115 = vpack.c.b16 %v2590, %v2583
    %v3116 = vpack.c.b16 %v2591, %v2584
    %v3117 = vpack.c.b16 %v2592, %v2585
    %v3118 = vpack.c.b16 %v2600, %v2593
    %v3119 = vpack.c.b16 %v2601, %v2594
    %v3120 = vpack.c.b16 %v2602, %v2595
    %v3121 = vpack.c.b16 %v2603, %v2596
    %v3122 = vpack.c.b16 %v2604, %v2597
    %v3123 = vpack.c.b16 %v2605, %v2598
    %v3124 = vpack.c.b16 %v2606, %v2599
    %v3125 = vpack.c.b16 %v2614, %v2607
    %v3126 = vpack.c.b16 %v2615, %v2608
    %v3127 = vpack.c.b16 %v2616, %v2609
    %v3128 = vpack.c.b16 %v2617, %v2610
    %v3129 = vpack.c.b16 %v2618, %v2611
    %v3130 = vpack.c.b16 %v2619, %v2612
    %v3131 = vpack.c.b16 %v2620, %v2613
    %v3132 = vpack.c.b16 %v2628, %v2621
    %v3133 = vpack.c.b16 %v2629, %v2622
    %v3134 = vpack.c.b16 %v2630, %v2623
    %v3135 = vpack.c.b16 %v2631, %v2624
    %v3136 = vpack.c.b16 %v2632, %v2625
    %v3137 = vpack.c.b16 %v2633, %v2626
    %v3138 = vpack.c.b16 %v2634, %v2627
    %v3139 = vpack.c.b16 %v2642, %v2635
    %v3140 = vpack.c.b16 %v2643, %v2636
    %v3141 = vpack.c.b16 %v2644, %v2637
    %v3142 = vpack.c.b16 %v2645, %v2638
    %v3143 = vpack.c.b16 %v2646, %v2639
    %v3144 = vpack.c.b16 %v2647, %v2640
    %v3145 = vpack.c.b16 %v2648, %v2641
    %v3146 = vpack.c.b16 %v2656, %v2649
    %v3147 = vpack.c.b16 %v2657, %v2650
    %v3148 = vpack.c.b16 %v2658, %v2651
    %v3149 = vpack.c.b16 %v2659, %v2652
    %v3150 = vpack.c.b16 %v2660, %v2653
    %v3151 = vpack.c.b16 %v2661, %v2654
    %v3152 = vpack.c.b16 %v2662, %v2655
    %v3153 = vpack.c.b16 %v2670, %v2663
    %v3154 = vpack.c.b16 %v2671, %v2664
    %v3155 = vpack.c.b16 %v2672, %v2665
    %v3156 = vpack.c.b16 %v2673, %v2666
    %v3157 = vpack.c.b16 %v2674, %v2667
    %v3158 = vpack.c.b16 %v2675, %v2668
    %v3159 = vpack.c.b16 %v2676, %v2669
    %v3160 = vpack.c.b16 %v2684, %v2677
    %v3161 = vpack.c.b16 %v2685, %v2678
    %v3162 = vpack.c.b16 %v2686, %v2679
    %v3163 = vpack.c.b16 %v2687, %v2680
    %v3164 = vpack.c.b16 %v2688, %v2681
    %v3165 = vpack.c.b16 %v2689, %v2682
    %v3166 = vpack.c.b16 %v2690, %v2683
    %v3167 = vpack.c.b16 %v2698, %v2691
    %v3168 = vpack.c.b16 %v2699, %v2692
    %v3169 = vpack.c.b16 %v2700, %v2693
    %v3170 = vpack.c.b16 %v2701, %v2694
    %v3171 = vpack.c.b16 %v2702, %v2695
    %v3172 = vpack.c.b16 %v2703, %v2696
    %v3173 = vpack.c.b16 %v2704, %v2697
    %v3174 = vpack.c.b16 %v2712, %v2705
    %v3175 = vpack.c.b16 %v2713, %v2706
    %v3176 = vpack.c.b16 %v2714, %v2707
    %v3177 = vpack.c.b16 %v2715, %v2708
    %v3178 = vpack.c.b16 %v2716, %v2709
    %v3179 = vpack.c.b16 %v2717, %v2710
    %v3180 = vpack.c.b16 %v2718, %v2711
    %v3181 = vpack.c.b16 %v2726, %v2719
    %v3182 = vpack.c.b16 %v2727, %v2720
    %v3183 = vpack.c.b16 %v2728, %v2721
    %v3184 = vpack.c.b16 %v2729, %v2722
    %v3185 = vpack.c.b16 %v2730, %v2723
    %v3186 = vpack.c.b16 %v2731, %v2724
    %v3187 = vpack.c.b16 %v2732, %v2725
    %v3188 = vpack.c.b16 %v2740, %v2733
    %v3189 = vpack.c.b16 %v2741, %v2734
    %v3190 = vpack.c.b16 %v2742, %v2735
    %v3191 = vpack.c.b16 %v2743, %v2736
    %v3192 = vpack.c.b16 %v2744, %v2737
    %v3193 = vpack.c.b16 %v2745, %v2738
    %v3194 = vpack.c.b16 %v2746, %v2739
    %v3195 = vpack.c.b16 %v2754, %v2747
    %v3196 = vpack.c.b16 %v2755, %v2748
    %v3197 = vpack.c.b16 %v2756, %v2749
    %v3198 = vpack.c.b16 %v2757, %v2750
    %v3199 = vpack.c.b16 %v2758, %v2751
    %v3200 = vpack.c.b16 %v2759, %v2752
    %v3201 = vpack.c.b16 %v2760, %v2753
    %v3202 = vpack.c.b16 %v2761, %v2761
    %v3203 = vpack.c.b16 %v2762, %v2762
    %v3204 = vpack.c.b16 %v2763, %v2763
    %v3205 = vpack.c.b16 %v2764, %v2764
    %v3206 = vpack.c.b16 %v2765, %v2765
    %v3207 = vpack.c.b16 %v2766, %v2766
    %v3208 = vpack.c.b16 %v2767, %v2767
    %vm3643 = vcmask 850944
    %v3645 = vsel %vm3643, %v796, 0
    %v3648 = vsel %vm3643, %v804, 0
    %v3651 = vsel %vm3643, %v812, 0
    %v3654 = vsel %vm3643, %v820, 0
    %v3657 = vsel %vm3643, %v828, 0
    %v3660 = vsel %vm3643, %v836, 0
    %v3663 = vsel %vm3643, %v844, 0
    %v3666 = vsel %vm3643, %v852, 0
    %v3669 = vsel %vm3643, %v860, 0
    %v3672 = vsel %vm3643, %v868, 0
    %v3675 = vsel %vm3643, %v876, 0
    %v3678 = vsel %vm3643, %v884, 0
    %v3681 = vsel %vm3643, %v892, 0
    %vm3683 = vcmask 1043456
    %v3685 = vsel %vm3683, %v3202, 0
    %v3688 = vsel %vm3683, %v3203, 0
    %v3691 = vsel %vm3683, %v3204, 0
    %v3694 = vsel %vm3683, %v3205, 0
    %v3697 = vsel %vm3683, %v3206, 0
    %v3700 = vsel %vm3683, %v3207, 0
    %v3703 = vsel %vm3683, %v3208, 0
    %3705 = vmatprep.subr.bf16.mxu0 %v2769
    %3706 = vmatpush1.bf16.msra.mxu0 %v2768
    %3707 = vmatprep.subr.bf16.mxu0 %v2776
    %3708 = vmatpush1.bf16.msra.mxu0 %v2775
    %3709 = vmatprep.subr.bf16.mxu0 %v2783
    %3710 = vmatpush1.bf16.msra.mxu0 %v2782
    %3711 = vmatprep.subr.bf16.mxu0 %v2790
    %3712 = vmatpush1.bf16.msra.mxu0 %v2789
    %3713 = vmatprep.subr.bf16.mxu0 %v2797
    %3714 = vmatpush1.bf16.msra.mxu0 %v2796
    %3715 = vmatprep.subr.bf16.mxu0 %v2804
    %3716 = vmatpush1.bf16.msra.mxu0 %v2803
    %3717 = vmatprep.subr.bf16.mxu0 %v2811
    %3718 = vmatpush1.bf16.msra.mxu0 %v2810
    %3719 = vmatprep.subr.bf16.mxu0 %v2818
    %3720 = vmatpush1.bf16.msra.mxu0 %v2817
    %3721 = vmatprep.subr.bf16.mxu0 %v2825
    %3722 = vmatpush1.bf16.msra.mxu0 %v2824
    %3723 = vmatprep.subr.bf16.mxu0 %v2832
    %3724 = vmatpush1.bf16.msra.mxu0 %v2831
    %3725 = vmatprep.subr.bf16.mxu0 %v2839
    %3726 = vmatpush1.bf16.msra.mxu0 %v2838
    %3727 = vmatprep.subr.bf16.mxu0 %v2846
    %3728 = vmatpush1.bf16.msra.mxu0 %v2845
    %3729 = vmatprep.subr.bf16.mxu0 %v2853
    %3730 = vmatpush1.bf16.msra.mxu0 %v2852
    %3731 = vmatprep.subr.bf16.mxu0 %v2860
    %3732 = vmatpush1.bf16.msra.mxu0 %v2859
    %3733 = vmatprep.subr.bf16.mxu0 %v2867
    %3734 = vmatpush1.bf16.msra.mxu0 %v2866
    %3735 = vmatprep.subr.bf16.mxu0 %v2874
    %3736 = vmatpush1.bf16.msra.mxu0 %v2873
    %3737 = vmatprep.mubr.bf16.mxu0 %v790
    %3738 = vmatmul.mubr.bf16.gmra.mrb[0].mxu0 %v789
    %v3739 = vpop.f32.mrb[0].mxu0
    %v3740 = vadd.f32 0.0, %v3739
    %v3741 = vpop.f32.mrb[0].mxu0
    %v3742 = vadd.f32 0.0, %v3741
    %v3743 = vpop.f32.mrb[0].mxu0
    %v3744 = vadd.f32 0.0, %v3743
    %v3745 = vpop.f32.mrb[0].mxu0
    %v3746 = vadd.f32 0.0, %v3745
    %3747 = vmatprep.mubr.bf16.mxu0 %v798
    %3748 = vmatmul.mubr.bf16.gmra.mrb[0].mxu0 %v797
    %v3749 = vpop.f32.mrb[0].mxu0
    %v3750 = vadd.f32 0.0, %v3749
    %v3751 = vpop.f32.mrb[0].mxu0
    %v3752 = vadd.f32 0.0, %v3751
    %v3753 = vpop.f32.mrb[0].mxu0
    %v3754 = vadd.f32 0.0, %v3753
    %v3755 = vpop.f32.mrb[0].mxu0
    %v3756 = vadd.f32 0.0, %v3755
    %3757 = vmatprep.mubr.bf16.mxu0 %v806
    %3758 = vmatmul.mubr.bf16.gmra.mrb[0].mxu0 %v805
    %v3759 = vpop.f32.mrb[0].mxu0
    %v3760 = vadd.f32 0.0, %v3759
    %v3761 = vpop.f32.mrb[0].mxu0
    %v3762 = vadd.f32 0.0, %v3761
    %v3763 = vpop.f32.mrb[0].mxu0
    %v3764 = vadd.f32 0.0, %v3763
    %v3765 = vpop.f32.mrb[0].mxu0
    %v3766 = vadd.f32 0.0, %v3765
    %3767 = vmatprep.mubr.bf16.mxu0 %v814
    %3768 = vmatmul.mubr.bf16.gmra.mrb[0].mxu0 %v813
    %v3769 = vpop.f32.mrb[0].mxu0
    %v3770 = vadd.f32 0.0, %v3769
    %v3771 = vpop.f32.mrb[0].mxu0
    %v3772 = vadd.f32 0.0, %v3771
    %v3773 = vpop.f32.mrb[0].mxu0
    %v3774 = vadd.f32 0.0, %v3773
    %v3775 = vpop.f32.mrb[0].mxu0
    %v3776 = vadd.f32 0.0, %v3775
    %3777 = vmatprep.mubr.bf16.mxu0 %v822
    %3778 = vmatmul.mubr.bf16.gmra.mrb[0].mxu0 %v821
    %v3779 = vpop.f32.mrb[0].mxu0
    %v3780 = vadd.f32 0.0, %v3779
    %v3781 = vpop.f32.mrb[0].mxu0
    %v3782 = vadd.f32 0.0, %v3781
    %v3783 = vpop.f32.mrb[0].mxu0
    %v3784 = vadd.f32 0.0, %v3783
    %v3785 = vpop.f32.mrb[0].mxu0
    %v3786 = vadd.f32 0.0, %v3785
    %3787 = vmatprep.mubr.bf16.mxu0 %v830
    %3788 = vmatmul.mubr.bf16.gmra.mrb[0].mxu0 %v829
    %v3789 = vpop.f32.mrb[0].mxu0
    %v3790 = vadd.f32 0.0, %v3789
    %v3791 = vpop.f32.mrb[0].mxu0
    %v3792 = vadd.f32 0.0, %v3791
    %v3793 = vpop.f32.mrb[0].mxu0
    %v3794 = vadd.f32 0.0, %v3793
    %v3795 = vpop.f32.mrb[0].mxu0
    %v3796 = vadd.f32 0.0, %v3795
    %3797 = vmatprep.mubr.bf16.mxu0 %v838
    %3798 = vmatmul.mubr.bf16.gmra.mrb[0].mxu0 %v837
    %v3799 = vpop.f32.mrb[0].mxu0
    %v3800 = vpop.f32.mrb[0].mxu0
    %v3801 = vadd.f32 0.0, %v3800
    %v3802 = vpop.f32.mrb[0].mxu0
    %v3803 = vadd.f32 0.0, %v3802
    %v3804 = vpop.f32.mrb[0].mxu0
    %v3805 = vadd.f32 0.0, %v3804
    %3806 = vmatprep.mubr.bf16.mxu0 %v846
    %3807 = vmatmul.mubr.bf16.gmra.mrb[0].mxu0 %v845
    %v3808 = vpop.f32.mrb[0].mxu0
    %v3809 = vadd.f32 0.0, %v3808
    %v3810 = vpop.f32.mrb[0].mxu0
    %v3811 = vadd.f32 0.0, %v3810
    %v3812 = vpop.f32.mrb[0].mxu0
    %v3813 = vadd.f32 0.0, %v3812
    %v3814 = vpop.f32.mrb[0].mxu0
    %v3815 = vadd.f32 0.0, %v3814
    %3816 = vmatprep.mubr.bf16.mxu0 %v854
    %3817 = vmatmul.mubr.bf16.gmra.mrb[0].mxu0 %v853
    %v3818 = vpop.f32.mrb[0].mxu0
    %v3819 = vadd.f32 0.0, %v3818
    %v3820 = vpop.f32.mrb[0].mxu0
    %v3821 = vadd.f32 0.0, %v3820
    %v3822 = vpop.f32.mrb[0].mxu0
    %v3823 = vadd.f32 0.0, %v3822
    %v3824 = vpop.f32.mrb[0].mxu0
    %v3825 = vadd.f32 0.0, %v3824
    %3826 = vmatprep.mubr.bf16.mxu0 %v862
    %3827 = vmatmul.mubr.bf16.gmra.mrb[0].mxu0 %v861
    %v3828 = vpop.f32.mrb[0].mxu0
    %v3829 = vadd.f32 0.0, %v3828
    %v3830 = vpop.f32.mrb[0].mxu0
    %v3831 = vadd.f32 0.0, %v3830
    %v3832 = vpop.f32.mrb[0].mxu0
    %v3833 = vadd.f32 0.0, %v3832
    %v3834 = vpop.f32.mrb[0].mxu0
    %v3835 = vadd.f32 0.0, %v3834
    %3836 = vmatprep.mubr.bf16.mxu0 %v870
    %3837 = vmatmul.mubr.bf16.gmra.mrb[0].mxu0 %v869
    %v3838 = vpop.f32.mrb[0].mxu0
    %v3839 = vadd.f32 0.0, %v3838
    %v3840 = vpop.f32.mrb[0].mxu0
    %v3841 = vadd.f32 0.0, %v3840
    %v3842 = vpop.f32.mrb[0].mxu0
    %v3843 = vadd.f32 0.0, %v3842
    %v3844 = vpop.f32.mrb[0].mxu0
    %v3845 = vadd.f32 0.0, %v3844
    %3846 = vmatprep.mubr.bf16.mxu0 %v878
    %3847 = vmatmul.mubr.bf16.gmra.mrb[0].mxu0 %v877
    %v3848 = vpop.f32.mrb[0].mxu0
    %v3849 = vadd.f32 0.0, %v3848
    %v3850 = vpop.f32.mrb[0].mxu0
    %v3851 = vadd.f32 0.0, %v3850
    %v3852 = vpop.f32.mrb[0].mxu0
    %v3853 = vadd.f32 0.0, %v3852
    %v3854 = vpop.f32.mrb[0].mxu0
    %v3855 = vadd.f32 0.0, %v3854
    %3856 = vmatprep.mubr.bf16.mxu0 %v886
    %3857 = vmatmul.mubr.bf16.gmra.mrb[0].mxu0 %v885
    %v3858 = vpop.f32.mrb[0].mxu0
    %v3859 = vadd.f32 0.0, %v3858
    %v3860 = vpop.f32.mrb[0].mxu0
    %v3861 = vadd.f32 0.0, %v3860
    %v3862 = vpop.f32.mrb[0].mxu0
    %v3863 = vpop.f32.mrb[0].mxu0
    %v3864 = vadd.f32 0.0, %v3863
    %3865 = vdwg.mxu0
    %3866 = vmatprep.subr.bf16.mxu0 %v2881
    %3867 = vmatpush1.bf16.msra.mxu0 %v2880
    %3868 = vmatprep.subr.bf16.mxu0 %v2888
    %3869 = vmatpush1.bf16.msra.mxu0 %v2887
    %3870 = vmatprep.subr.bf16.mxu0 %v2895
    %3871 = vmatpush1.bf16.msra.mxu0 %v2894
    %3872 = vmatprep.subr.bf16.mxu0 %v2902
    %3873 = vmatpush1.bf16.msra.mxu0 %v2901
    %3874 = vmatprep.subr.bf16.mxu0 %v2909
    %3875 = vmatpush1.bf16.msra.mxu0 %v2908
    %3876 = vmatprep.subr.bf16.mxu0 %v2916
    %3877 = vmatpush1.bf16.msra.mxu0 %v2915
    %3878 = vmatprep.subr.bf16.mxu0 %v2923
    %3879 = vmatpush1.bf16.msra.mxu0 %v2922
    %3880 = vmatprep.subr.bf16.mxu0 %v2930
    %3881 = vmatpush1.bf16.msra.mxu0 %v2929
    %3882 = vmatprep.subr.bf16.mxu0 %v2937
    %3883 = vmatpush1.bf16.msra.mxu0 %v2936
    %3884 = vmatprep.subr.bf16.mxu0 %v2944
    %3885 = vmatpush1.bf16.msra.mxu0 %v2943
    %3886 = vmatprep.subr.bf16.mxu0 %v2951
    %3887 = vmatpush1.bf16.msra.mxu0 %v2950
    %3888 = vmatprep.subr.bf16.mxu0 %v2958
    %3889 = vmatpush1.bf16.msra.mxu0 %v2957
    %3890 = vmatprep.subr.bf16.mxu0 %v2965
    %3891 = vmatpush1.bf16.msra.mxu0 %v2964
    %3892 = vmatprep.subr.bf16.mxu0 %v2972
    %3893 = vmatpush1.bf16.msra.mxu0 %v2971
    %3894 = vmatprep.subr.bf16.mxu0 %v2979
    %3895 = vmatpush1.bf16.msra.mxu0 %v2978
    %3896 = vmatprep.subr.bf16.mxu0 %v2986
    %3897 = vmatpush1.bf16.msra.mxu0 %v2985
    %3898 = vmatprep.mubr.bf16.mxu0 %v792
    %3899 = vmatmul.mubr.bf16.gmra.mrb[0].mxu0 %v791
    %v3900 = vpop.f32.mrb[0].mxu0
    %v3901 = vadd.f32 %v3740, %v3900
    %v3902 = vpop.f32.mrb[0].mxu0
    %v3903 = vadd.f32 %v3742, %v3902
    %v3904 = vpop.f32.mrb[0].mxu0
    %v3905 = vadd.f32 %v3744, %v3904
    %v3906 = vpop.f32.mrb[0].mxu0
    %v3907 = vadd.f32 %v3746, %v3906
    %3908 = vmatprep.mubr.bf16.mxu0 %v800
    %3909 = vmatmul.mubr.bf16.gmra.mrb[0].mxu0 %v799
    %v3910 = vpop.f32.mrb[0].mxu0
    %v3911 = vadd.f32 %v3750, %v3910
    %v3912 = vpop.f32.mrb[0].mxu0
    %v3913 = vadd.f32 %v3752, %v3912
    %v3914 = vpop.f32.mrb[0].mxu0
    %v3915 = vadd.f32 %v3754, %v3914
    %v3916 = vpop.f32.mrb[0].mxu0
    %v3917 = vadd.f32 %v3756, %v3916
    %3918 = vmatprep.mubr.bf16.mxu0 %v808
    %3919 = vmatmul.mubr.bf16.gmra.mrb[0].mxu0 %v807
    %v3920 = vpop.f32.mrb[0].mxu0
    %v3921 = vadd.f32 %v3760, %v3920
    %v3922 = vpop.f32.mrb[0].mxu0
    %v3923 = vadd.f32 %v3762, %v3922
    %v3924 = vpop.f32.mrb[0].mxu0
    %v3925 = vadd.f32 %v3764, %v3924
    %v3926 = vpop.f32.mrb[0].mxu0
    %v3927 = vadd.f32 %v3766, %v3926
    %3928 = vmatprep.mubr.bf16.mxu0 %v816
    %3929 = vmatmul.mubr.bf16.gmra.mrb[0].mxu0 %v815
    %v3930 = vpop.f32.mrb[0].mxu0
    %v3931 = vadd.f32 %v3770, %v3930
    %v3932 = vpop.f32.mrb[0].mxu0
    %v3933 = vadd.f32 %v3772, %v3932
    %v3934 = vpop.f32.mrb[0].mxu0
    %v3935 = vadd.f32 %v3774, %v3934
    %v3936 = vpop.f32.mrb[0].mxu0
    %v3937 = vadd.f32 %v3776, %v3936
    %3938 = vmatprep.mubr.bf16.mxu0 %v824
    %3939 = vmatmul.mubr.bf16.gmra.mrb[0].mxu0 %v823
    %v3940 = vpop.f32.mrb[0].mxu0
    %v3941 = vadd.f32 %v3780, %v3940
    %v3942 = vpop.f32.mrb[0].mxu0
    %v3943 = vadd.f32 %v3782, %v3942
    %v3944 = vpop.f32.mrb[0].mxu0
    %v3945 = vadd.f32 %v3784, %v3944
    %v3946 = vpop.f32.mrb[0].mxu0
    %v3947 = vadd.f32 %v3786, %v3946
    %3948 = vmatprep.mubr.bf16.mxu0 %v832
    %3949 = vmatmul.mubr.bf16.gmra.mrb[0].mxu0 %v831
    %v3950 = vpop.f32.mrb[0].mxu0
    %v3951 = vadd.f32 %v3790, %v3950
    %v3952 = vpop.f32.mrb[0].mxu0
    %v3953 = vadd.f32 %v3792, %v3952
    %v3954 = vpop.f32.mrb[0].mxu0
    %v3955 = vadd.f32 %v3794, %v3954
    %v3956 = vpop.f32.mrb[0].mxu0
    %v3957 = vadd.f32 %v3796, %v3956
    %3958 = vmatprep.mubr.bf16.mxu0 %v840
    %3959 = vmatmul.mubr.bf16.gmra.mrb[0].mxu0 %v839
    %v3960 = vpop.f32.mrb[0].mxu0
    %v3961 = vpop.f32.mrb[0].mxu0
    %v3962 = vadd.f32 %v3801, %v3961
    %v3963 = vpop.f32.mrb[0].mxu0
    %v3964 = vadd.f32 %v3803, %v3963
    %v3965 = vpop.f32.mrb[0].mxu0
    %v3966 = vadd.f32 %v3805, %v3965
    %3967 = vmatprep.mubr.bf16.mxu0 %v848
    %3968 = vmatmul.mubr.bf16.gmra.mrb[0].mxu0 %v847
    %v3969 = vpop.f32.mrb[0].mxu0
    %v3970 = vadd.f32 %v3809, %v3969
    %v3971 = vpop.f32.mrb[0].mxu0
    %v3972 = vadd.f32 %v3811, %v3971
    %v3973 = vpop.f32.mrb[0].mxu0
    %v3974 = vadd.f32 %v3813, %v3973
    %v3975 = vpop.f32.mrb[0].mxu0
    %v3976 = vadd.f32 %v3815, %v3975
    %3977 = vmatprep.mubr.bf16.mxu0 %v856
    %3978 = vmatmul.mubr.bf16.gmra.mrb[0].mxu0 %v855
    %v3979 = vpop.f32.mrb[0].mxu0
    %v3980 = vadd.f32 %v3819, %v3979
    %v3981 = vpop.f32.mrb[0].mxu0
    %v3982 = vadd.f32 %v3821, %v3981
    %v3983 = vpop.f32.mrb[0].mxu0
    %v3984 = vadd.f32 %v3823, %v3983
    %v3985 = vpop.f32.mrb[0].mxu0
    %v3986 = vadd.f32 %v3825, %v3985
    %3987 = vmatprep.mubr.bf16.mxu0 %v864
    %3988 = vmatmul.mubr.bf16.gmra.mrb[0].mxu0 %v863
    %v3989 = vpop.f32.mrb[0].mxu0
    %v3990 = vadd.f32 %v3829, %v3989
    %v3991 = vpop.f32.mrb[0].mxu0
    %v3992 = vadd.f32 %v3831, %v3991
    %v3993 = vpop.f32.mrb[0].mxu0
    %v3994 = vadd.f32 %v3833, %v3993
    %v3995 = vpop.f32.mrb[0].mxu0
    %v3996 = vadd.f32 %v3835, %v3995
    %3997 = vmatprep.mubr.bf16.mxu0 %v872
    %3998 = vmatmul.mubr.bf16.gmra.mrb[0].mxu0 %v871
    %v3999 = vpop.f32.mrb[0].mxu0
    %v4000 = vadd.f32 %v3839, %v3999
    %v4001 = vpop.f32.mrb[0].mxu0
    %v4002 = vadd.f32 %v3841, %v4001
    %v4003 = vpop.f32.mrb[0].mxu0
    %v4004 = vadd.f32 %v3843, %v4003
    %v4005 = vpop.f32.mrb[0].mxu0
    %v4006 = vadd.f32 %v3845, %v4005
    %4007 = vmatprep.mubr.bf16.mxu0 %v880
    %4008 = vmatmul.mubr.bf16.gmra.mrb[0].mxu0 %v879
    %v4009 = vpop.f32.mrb[0].mxu0
    %v4010 = vadd.f32 %v3849, %v4009
    %v4011 = vpop.f32.mrb[0].mxu0
    %v4012 = vadd.f32 %v3851, %v4011
    %v4013 = vpop.f32.mrb[0].mxu0
    %v4014 = vadd.f32 %v3853, %v4013
    %v4015 = vpop.f32.mrb[0].mxu0
    %v4016 = vadd.f32 %v3855, %v4015
    %4017 = vmatprep.mubr.bf16.mxu0 %v888
    %4018 = vmatmul.mubr.bf16.gmra.mrb[0].mxu0 %v887
    %v4019 = vpop.f32.mrb[0].mxu0
    %v4020 = vadd.f32 %v3859, %v4019
    %v4021 = vpop.f32.mrb[0].mxu0
    %v4022 = vadd.f32 %v3861, %v4021
    %v4023 = vpop.f32.mrb[0].mxu0
    %v4024 = vpop.f32.mrb[0].mxu0
    %v4025 = vadd.f32 %v3864, %v4024
    %4026 = vdwg.mxu0
    %4027 = vmatprep.subr.bf16.mxu0 %v2993
    %4028 = vmatpush1.bf16.msra.mxu0 %v2992
    %4029 = vmatprep.subr.bf16.mxu0 %v3000
    %4030 = vmatpush1.bf16.msra.mxu0 %v2999
    %4031 = vmatprep.subr.bf16.mxu0 %v3007
    %4032 = vmatpush1.bf16.msra.mxu0 %v3006
    %4033 = vmatprep.subr.bf16.mxu0 %v3014
    %4034 = vmatpush1.bf16.msra.mxu0 %v3013
    %4035 = vmatprep.subr.bf16.mxu0 %v3021
    %4036 = vmatpush1.bf16.msra.mxu0 %v3020
    %4037 = vmatprep.subr.bf16.mxu0 %v3028
    %4038 = vmatpush1.bf16.msra.mxu0 %v3027
    %4039 = vmatprep.subr.bf16.mxu0 %v3035
    %4040 = vmatpush1.bf16.msra.mxu0 %v3034
    %4041 = vmatprep.subr.bf16.mxu0 %v3042
    %4042 = vmatpush1.bf16.msra.mxu0 %v3041
    %4043 = vmatprep.subr.bf16.mxu0 %v3049
    %4044 = vmatpush1.bf16.msra.mxu0 %v3048
    %4045 = vmatprep.subr.bf16.mxu0 %v3056
    %4046 = vmatpush1.bf16.msra.mxu0 %v3055
    %4047 = vmatprep.subr.bf16.mxu0 %v3063
    %4048 = vmatpush1.bf16.msra.mxu0 %v3062
    %4049 = vmatprep.subr.bf16.mxu0 %v3070
    %4050 = vmatpush1.bf16.msra.mxu0 %v3069
    %4051 = vmatprep.subr.bf16.mxu0 %v3077
    %4052 = vmatpush1.bf16.msra.mxu0 %v3076
    %4053 = vmatprep.subr.bf16.mxu0 %v3084
    %4054 = vmatpush1.bf16.msra.mxu0 %v3083
    %4055 = vmatprep.subr.bf16.mxu0 %v3091
    %4056 = vmatpush1.bf16.msra.mxu0 %v3090
    %4057 = vmatprep.subr.bf16.mxu0 %v3098
    %4058 = vmatpush1.bf16.msra.mxu0 %v3097
    %4059 = vmatprep.mubr.bf16.mxu0 %v794
    %4060 = vmatmul.mubr.bf16.gmra.mrb[0].mxu0 %v793
    %v4061 = vpop.f32.mrb[0].mxu0
    %v4062 = vadd.f32 %v3901, %v4061
    %v4063 = vpop.f32.mrb[0].mxu0
    %v4064 = vadd.f32 %v3903, %v4063
    %v4065 = vpop.f32.mrb[0].mxu0
    %v4066 = vadd.f32 %v3905, %v4065
    %v4067 = vpop.f32.mrb[0].mxu0
    %v4068 = vadd.f32 %v3907, %v4067
    %4069 = vmatprep.mubr.bf16.mxu0 %v802
    %4070 = vmatmul.mubr.bf16.gmra.mrb[0].mxu0 %v801
    %v4071 = vpop.f32.mrb[0].mxu0
    %v4072 = vadd.f32 %v3911, %v4071
    %v4073 = vpop.f32.mrb[0].mxu0
    %v4074 = vadd.f32 %v3913, %v4073
    %v4075 = vpop.f32.mrb[0].mxu0
    %v4076 = vadd.f32 %v3915, %v4075
    %v4077 = vpop.f32.mrb[0].mxu0
    %v4078 = vadd.f32 %v3917, %v4077
    %4079 = vmatprep.mubr.bf16.mxu0 %v810
    %4080 = vmatmul.mubr.bf16.gmra.mrb[0].mxu0 %v809
    %v4081 = vpop.f32.mrb[0].mxu0
    %v4082 = vadd.f32 %v3921, %v4081
    %v4083 = vpop.f32.mrb[0].mxu0
    %v4084 = vadd.f32 %v3923, %v4083
    %v4085 = vpop.f32.mrb[0].mxu0
    %v4086 = vadd.f32 %v3925, %v4085
    %v4087 = vpop.f32.mrb[0].mxu0
    %v4088 = vadd.f32 %v3927, %v4087
    %4089 = vmatprep.mubr.bf16.mxu0 %v818
    %4090 = vmatmul.mubr.bf16.gmra.mrb[0].mxu0 %v817
    %v4091 = vpop.f32.mrb[0].mxu0
    %v4092 = vadd.f32 %v3931, %v4091
    %v4093 = vpop.f32.mrb[0].mxu0
    %v4094 = vadd.f32 %v3933, %v4093
    %v4095 = vpop.f32.mrb[0].mxu0
    %v4096 = vadd.f32 %v3935, %v4095
    %v4097 = vpop.f32.mrb[0].mxu0
    %v4098 = vadd.f32 %v3937, %v4097
    %4099 = vmatprep.mubr.bf16.mxu0 %v826
    %4100 = vmatmul.mubr.bf16.gmra.mrb[0].mxu0 %v825
    %v4101 = vpop.f32.mrb[0].mxu0
    %v4102 = vadd.f32 %v3941, %v4101
    %v4103 = vpop.f32.mrb[0].mxu0
    %v4104 = vadd.f32 %v3943, %v4103
    %v4105 = vpop.f32.mrb[0].mxu0
    %v4106 = vadd.f32 %v3945, %v4105
    %v4107 = vpop.f32.mrb[0].mxu0
    %v4108 = vadd.f32 %v3947, %v4107
    %4109 = vmatprep.mubr.bf16.mxu0 %v834
    %4110 = vmatmul.mubr.bf16.gmra.mrb[0].mxu0 %v833
    %v4111 = vpop.f32.mrb[0].mxu0
    %v4112 = vadd.f32 %v3951, %v4111
    %v4113 = vpop.f32.mrb[0].mxu0
    %v4114 = vadd.f32 %v3953, %v4113
    %v4115 = vpop.f32.mrb[0].mxu0
    %v4116 = vadd.f32 %v3955, %v4115
    %v4117 = vpop.f32.mrb[0].mxu0
    %v4118 = vadd.f32 %v3957, %v4117
    %4119 = vmatprep.mubr.bf16.mxu0 %v842
    %4120 = vmatmul.mubr.bf16.gmra.mrb[0].mxu0 %v841
    %v4121 = vpop.f32.mrb[0].mxu0
    %v4122 = vpop.f32.mrb[0].mxu0
    %v4123 = vadd.f32 %v3962, %v4122
    %v4124 = vpop.f32.mrb[0].mxu0
    %v4125 = vadd.f32 %v3964, %v4124
    %v4126 = vpop.f32.mrb[0].mxu0
    %v4127 = vadd.f32 %v3966, %v4126
    %4128 = vmatprep.mubr.bf16.mxu0 %v850
    %4129 = vmatmul.mubr.bf16.gmra.mrb[0].mxu0 %v849
    %v4130 = vpop.f32.mrb[0].mxu0
    %v4131 = vadd.f32 %v3970, %v4130
    %v4132 = vpop.f32.mrb[0].mxu0
    %v4133 = vadd.f32 %v3972, %v4132
    %v4134 = vpop.f32.mrb[0].mxu0
    %v4135 = vadd.f32 %v3974, %v4134
    %v4136 = vpop.f32.mrb[0].mxu0
    %v4137 = vadd.f32 %v3976, %v4136
    %4138 = vmatprep.mubr.bf16.mxu0 %v858
    %4139 = vmatmul.mubr.bf16.gmra.mrb[0].mxu0 %v857
    %v4140 = vpop.f32.mrb[0].mxu0
    %v4141 = vadd.f32 %v3980, %v4140
    %v4142 = vpop.f32.mrb[0].mxu0
    %v4143 = vadd.f32 %v3982, %v4142
    %v4144 = vpop.f32.mrb[0].mxu0
    %v4145 = vadd.f32 %v3984, %v4144
    %v4146 = vpop.f32.mrb[0].mxu0
    %v4147 = vadd.f32 %v3986, %v4146
    %4148 = vmatprep.mubr.bf16.mxu0 %v866
    %4149 = vmatmul.mubr.bf16.gmra.mrb[0].mxu0 %v865
    %v4150 = vpop.f32.mrb[0].mxu0
    %v4151 = vadd.f32 %v3990, %v4150
    %v4152 = vpop.f32.mrb[0].mxu0
    %v4153 = vadd.f32 %v3992, %v4152
    %v4154 = vpop.f32.mrb[0].mxu0
    %v4155 = vadd.f32 %v3994, %v4154
    %v4156 = vpop.f32.mrb[0].mxu0
    %v4157 = vadd.f32 %v3996, %v4156
    %4158 = vmatprep.mubr.bf16.mxu0 %v874
    %4159 = vmatmul.mubr.bf16.gmra.mrb[0].mxu0 %v873
    %v4160 = vpop.f32.mrb[0].mxu0
    %v4161 = vadd.f32 %v4000, %v4160
    %v4162 = vpop.f32.mrb[0].mxu0
    %v4163 = vadd.f32 %v4002, %v4162
    %v4164 = vpop.f32.mrb[0].mxu0
    %v4165 = vadd.f32 %v4004, %v4164
    %v4166 = vpop.f32.mrb[0].mxu0
    %v4167 = vadd.f32 %v4006, %v4166
    %4168 = vmatprep.mubr.bf16.mxu0 %v882
    %4169 = vmatmul.mubr.bf16.gmra.mrb[0].mxu0 %v881
    %v4170 = vpop.f32.mrb[0].mxu0
    %v4171 = vadd.f32 %v4010, %v4170
    %v4172 = vpop.f32.mrb[0].mxu0
    %v4173 = vadd.f32 %v4012, %v4172
    %v4174 = vpop.f32.mrb[0].mxu0
    %v4175 = vadd.f32 %v4014, %v4174
    %v4176 = vpop.f32.mrb[0].mxu0
    %v4177 = vadd.f32 %v4016, %v4176
    %4178 = vmatprep.mubr.bf16.mxu0 %v890
    %4179 = vmatmul.mubr.bf16.gmra.mrb[0].mxu0 %v889
    %v4180 = vpop.f32.mrb[0].mxu0
    %v4181 = vadd.f32 %v4020, %v4180
    %v4182 = vpop.f32.mrb[0].mxu0
    %v4183 = vadd.f32 %v4022, %v4182
    %v4184 = vpop.f32.mrb[0].mxu0
    %v4185 = vpop.f32.mrb[0].mxu0
    %v4186 = vadd.f32 %v4025, %v4185
    %4187 = vdwg.mxu0
    %4188 = vmatprep.subr.bf16.mxu0 %v3105
    %4189 = vmatpush1.bf16.msra.mxu0 %v3104
    %4190 = vmatprep.subr.bf16.mxu0 %v3112
    %4191 = vmatpush1.bf16.msra.mxu0 %v3111
    %4192 = vmatprep.subr.bf16.mxu0 %v3119
    %4193 = vmatpush1.bf16.msra.mxu0 %v3118
    %4194 = vmatprep.subr.bf16.mxu0 %v3126
    %4195 = vmatpush1.bf16.msra.mxu0 %v3125
    %4196 = vmatprep.subr.bf16.mxu0 %v3133
    %4197 = vmatpush1.bf16.msra.mxu0 %v3132
    %4198 = vmatprep.subr.bf16.mxu0 %v3140
    %4199 = vmatpush1.bf16.msra.mxu0 %v3139
    %4200 = vmatprep.subr.bf16.mxu0 %v3147
    %4201 = vmatpush1.bf16.msra.mxu0 %v3146
    %4202 = vmatprep.subr.bf16.mxu0 %v3154
    %4203 = vmatpush1.bf16.msra.mxu0 %v3153
    %4204 = vmatprep.subr.bf16.mxu0 %v3161
    %4205 = vmatpush1.bf16.msra.mxu0 %v3160
    %4206 = vmatprep.subr.bf16.mxu0 %v3168
    %4207 = vmatpush1.bf16.msra.mxu0 %v3167
    %4208 = vmatprep.subr.bf16.mxu0 %v3175
    %4209 = vmatpush1.bf16.msra.mxu0 %v3174
    %4210 = vmatprep.subr.bf16.mxu0 %v3182
    %4211 = vmatpush1.bf16.msra.mxu0 %v3181
    %4212 = vmatprep.subr.bf16.mxu0 %v3189
    %4213 = vmatpush1.bf16.msra.mxu0 %v3188
    %4214 = vmatprep.subr.bf16.mxu0 %v3196
    %4215 = vmatpush1.bf16.msra.mxu0 %v3195
    %4216 = vmatprep.subr.bf16.mxu0 %v3688
    %4217 = vmatpush1.bf16.msra.mxu0 %v3685
    %4218 = vmatprep.subr.bf16.mxu0 0
    %4219 = vmatpush1.bf16.msra.mxu0 0
    %4220 = vmatprep.mubr.bf16.mxu0 %v3645
    %4221 = vmatmul.mubr.bf16.gmra.mrb[0].mxu0 %v795
    %v4222 = vpop.f32.mrb[0].mxu0
    %v4223 = vadd.f32 %v4062, %v4222
    %v4224 = vpop.f32.mrb[0].mxu0
    %v4225 = vadd.f32 %v4064, %v4224
    %v4226 = vpop.f32.mrb[0].mxu0
    %v4227 = vadd.f32 %v4066, %v4226
    %v4228 = vpop.f32.mrb[0].mxu0
    %v4229 = vadd.f32 %v4068, %v4228
    %4230 = vmatprep.mubr.bf16.mxu0 %v3648
    %4231 = vmatmul.mubr.bf16.gmra.mrb[0].mxu0 %v803
    %v4232 = vpop.f32.mrb[0].mxu0
    %v4233 = vadd.f32 %v4072, %v4232
    %v4234 = vpop.f32.mrb[0].mxu0
    %v4235 = vadd.f32 %v4074, %v4234
    %v4236 = vpop.f32.mrb[0].mxu0
    %v4237 = vadd.f32 %v4076, %v4236
    %v4238 = vpop.f32.mrb[0].mxu0
    %v4239 = vadd.f32 %v4078, %v4238
    %4240 = vmatprep.mubr.bf16.mxu0 %v3651
    %4241 = vmatmul.mubr.bf16.gmra.mrb[0].mxu0 %v811
    %v4242 = vpop.f32.mrb[0].mxu0
    %v4243 = vadd.f32 %v4082, %v4242
    %v4244 = vpop.f32.mrb[0].mxu0
    %v4245 = vadd.f32 %v4084, %v4244
    %v4246 = vpop.f32.mrb[0].mxu0
    %v4247 = vadd.f32 %v4086, %v4246
    %v4248 = vpop.f32.mrb[0].mxu0
    %v4249 = vadd.f32 %v4088, %v4248
    %4250 = vmatprep.mubr.bf16.mxu0 %v3654
    %4251 = vmatmul.mubr.bf16.gmra.mrb[0].mxu0 %v819
    %v4252 = vpop.f32.mrb[0].mxu0
    %v4253 = vadd.f32 %v4092, %v4252
    %v4254 = vpop.f32.mrb[0].mxu0
    %v4255 = vadd.f32 %v4094, %v4254
    %v4256 = vpop.f32.mrb[0].mxu0
    %v4257 = vadd.f32 %v4096, %v4256
    %v4258 = vpop.f32.mrb[0].mxu0
    %v4259 = vadd.f32 %v4098, %v4258
    %4260 = vmatprep.mubr.bf16.mxu0 %v3657
    %4261 = vmatmul.mubr.bf16.gmra.mrb[0].mxu0 %v827
    %v4262 = vpop.f32.mrb[0].mxu0
    %v4263 = vadd.f32 %v4102, %v4262
    %v4264 = vpop.f32.mrb[0].mxu0
    %v4265 = vadd.f32 %v4104, %v4264
    %v4266 = vpop.f32.mrb[0].mxu0
    %v4267 = vadd.f32 %v4106, %v4266
    %v4268 = vpop.f32.mrb[0].mxu0
    %v4269 = vadd.f32 %v4108, %v4268
    %4270 = vmatprep.mubr.bf16.mxu0 %v3660
    %4271 = vmatmul.mubr.bf16.gmra.mrb[0].mxu0 %v835
    %v4272 = vpop.f32.mrb[0].mxu0
    %v4273 = vadd.f32 %v4112, %v4272
    %v4274 = vpop.f32.mrb[0].mxu0
    %v4275 = vadd.f32 %v4114, %v4274
    %v4276 = vpop.f32.mrb[0].mxu0
    %v4277 = vadd.f32 %v4116, %v4276
    %v4278 = vpop.f32.mrb[0].mxu0
    %v4279 = vadd.f32 %v4118, %v4278
    %4280 = vmatprep.mubr.bf16.mxu0 %v3663
    %4281 = vmatmul.mubr.bf16.gmra.mrb[0].mxu0 %v843
    %v4282 = vpop.f32.mrb[0].mxu0
    %v4283 = vpop.f32.mrb[0].mxu0
    %v4284 = vadd.f32 %v4123, %v4283
    %v4285 = vpop.f32.mrb[0].mxu0
    %v4286 = vadd.f32 %v4125, %v4285
    %v4287 = vpop.f32.mrb[0].mxu0
    %v4288 = vadd.f32 %v4127, %v4287
    %4289 = vmatprep.mubr.bf16.mxu0 %v3666
    %4290 = vmatmul.mubr.bf16.gmra.mrb[0].mxu0 %v851
    %v4291 = vpop.f32.mrb[0].mxu0
    %v4292 = vadd.f32 %v4131, %v4291
    %v4293 = vpop.f32.mrb[0].mxu0
    %v4294 = vadd.f32 %v4133, %v4293
    %v4295 = vpop.f32.mrb[0].mxu0
    %v4296 = vadd.f32 %v4135, %v4295
    %v4297 = vpop.f32.mrb[0].mxu0
    %v4298 = vadd.f32 %v4137, %v4297
    %4299 = vmatprep.mubr.bf16.mxu0 %v3669
    %4300 = vmatmul.mubr.bf16.gmra.mrb[0].mxu0 %v859
    %v4301 = vpop.f32.mrb[0].mxu0
    %v4302 = vadd.f32 %v4141, %v4301
    %v4303 = vpop.f32.mrb[0].mxu0
    %v4304 = vadd.f32 %v4143, %v4303
    %v4305 = vpop.f32.mrb[0].mxu0
    %v4306 = vadd.f32 %v4145, %v4305
    %v4307 = vpop.f32.mrb[0].mxu0
    %v4308 = vadd.f32 %v4147, %v4307
    %4309 = vmatprep.mubr.bf16.mxu0 %v3672
    %4310 = vmatmul.mubr.bf16.gmra.mrb[0].mxu0 %v867
    %v4311 = vpop.f32.mrb[0].mxu0
    %v4312 = vadd.f32 %v4151, %v4311
    %v4313 = vpop.f32.mrb[0].mxu0
    %v4314 = vadd.f32 %v4153, %v4313
    %v4315 = vpop.f32.mrb[0].mxu0
    %v4316 = vadd.f32 %v4155, %v4315
    %v4317 = vpop.f32.mrb[0].mxu0
    %v4318 = vadd.f32 %v4157, %v4317
    %4319 = vmatprep.mubr.bf16.mxu0 %v3675
    %4320 = vmatmul.mubr.bf16.gmra.mrb[0].mxu0 %v875
    %v4321 = vpop.f32.mrb[0].mxu0
    %v4322 = vadd.f32 %v4161, %v4321
    %v4323 = vpop.f32.mrb[0].mxu0
    %v4324 = vadd.f32 %v4163, %v4323
    %v4325 = vpop.f32.mrb[0].mxu0
    %v4326 = vadd.f32 %v4165, %v4325
    %v4327 = vpop.f32.mrb[0].mxu0
    %v4328 = vadd.f32 %v4167, %v4327
    %4329 = vmatprep.mubr.bf16.mxu0 %v3678
    %4330 = vmatmul.mubr.bf16.gmra.mrb[0].mxu0 %v883
    %v4331 = vpop.f32.mrb[0].mxu0
    %v4332 = vadd.f32 %v4171, %v4331
    %v4333 = vpop.f32.mrb[0].mxu0
    %v4334 = vadd.f32 %v4173, %v4333
    %v4335 = vpop.f32.mrb[0].mxu0
    %v4336 = vadd.f32 %v4175, %v4335
    %v4337 = vpop.f32.mrb[0].mxu0
    %v4338 = vadd.f32 %v4177, %v4337
    %4339 = vmatprep.mubr.bf16.mxu0 %v3681
    %4340 = vmatmul.mubr.bf16.gmra.mrb[0].mxu0 %v891
    %v4341 = vpop.f32.mrb[0].mxu0
    %v4342 = vadd.f32 %v4181, %v4341
    %v4343 = vpop.f32.mrb[0].mxu0
    %v4344 = vadd.f32 %v4183, %v4343
    %v4345 = vpop.f32.mrb[0].mxu0
    %v4346 = vpop.f32.mrb[0].mxu0
    %v4347 = vadd.f32 %v4186, %v4346
    %4348 = vdwg.mxu0
    %4349 = vmatprep.subr.bf16.mxu0 %v2771
    %4350 = vmatpush1.bf16.msra.mxu0 %v2770
    %4351 = vmatprep.subr.bf16.mxu0 %v2778
    %4352 = vmatpush1.bf16.msra.mxu0 %v2777
    %4353 = vmatprep.subr.bf16.mxu0 %v2785
    %4354 = vmatpush1.bf16.msra.mxu0 %v2784
    %4355 = vmatprep.subr.bf16.mxu0 %v2792
    %4356 = vmatpush1.bf16.msra.mxu0 %v2791
    %4357 = vmatprep.subr.bf16.mxu0 %v2799
    %4358 = vmatpush1.bf16.msra.mxu0 %v2798
    %4359 = vmatprep.subr.bf16.mxu0 %v2806
    %4360 = vmatpush1.bf16.msra.mxu0 %v2805
    %4361 = vmatprep.subr.bf16.mxu0 %v2813
    %4362 = vmatpush1.bf16.msra.mxu0 %v2812
    %4363 = vmatprep.subr.bf16.mxu0 %v2820
    %4364 = vmatpush1.bf16.msra.mxu0 %v2819
    %4365 = vmatprep.subr.bf16.mxu0 %v2827
    %4366 = vmatpush1.bf16.msra.mxu0 %v2826
    %4367 = vmatprep.subr.bf16.mxu0 %v2834
    %4368 = vmatpush1.bf16.msra.mxu0 %v2833
    %4369 = vmatprep.subr.bf16.mxu0 %v2841
    %4370 = vmatpush1.bf16.msra.mxu0 %v2840
    %4371 = vmatprep.subr.bf16.mxu0 %v2848
    %4372 = vmatpush1.bf16.msra.mxu0 %v2847
    %4373 = vmatprep.subr.bf16.mxu0 %v2855
    %4374 = vmatpush1.bf16.msra.mxu0 %v2854
    %4375 = vmatprep.subr.bf16.mxu0 %v2862
    %4376 = vmatpush1.bf16.msra.mxu0 %v2861
    %4377 = vmatprep.subr.bf16.mxu0 %v2869
    %4378 = vmatpush1.bf16.msra.mxu0 %v2868
    %4379 = vmatprep.subr.bf16.mxu0 %v2876
    %4380 = vmatpush1.bf16.msra.mxu0 %v2875
    %4381 = vmatprep.mubr.bf16.mxu0 %v790
    %4382 = vmatmul.mubr.bf16.gmra.mrb[0].mxu0 %v789
    %v4383 = vpop.f32.mrb[0].mxu0
    %v4384 = vadd.f32 0.0, %v4383
    %v4385 = vpop.f32.mrb[0].mxu0
    %v4386 = vadd.f32 0.0, %v4385
    %v4387 = vpop.f32.mrb[0].mxu0
    %v4388 = vadd.f32 0.0, %v4387
    %v4389 = vpop.f32.mrb[0].mxu0
    %v4390 = vadd.f32 0.0, %v4389
    %4391 = vmatprep.mubr.bf16.mxu0 %v798
    %4392 = vmatmul.mubr.bf16.gmra.mrb[0].mxu0 %v797
    %v4393 = vpop.f32.mrb[0].mxu0
    %v4394 = vadd.f32 0.0, %v4393
    %v4395 = vpop.f32.mrb[0].mxu0
    %v4396 = vadd.f32 0.0, %v4395
    %v4397 = vpop.f32.mrb[0].mxu0
    %v4398 = vadd.f32 0.0, %v4397
    %v4399 = vpop.f32.mrb[0].mxu0
    %v4400 = vadd.f32 0.0, %v4399
    %4401 = vmatprep.mubr.bf16.mxu0 %v806
    %4402 = vmatmul.mubr.bf16.gmra.mrb[0].mxu0 %v805
    %v4403 = vpop.f32.mrb[0].mxu0
    %v4404 = vadd.f32 0.0, %v4403
    %v4405 = vpop.f32.mrb[0].mxu0
    %v4406 = vadd.f32 0.0, %v4405
    %v4407 = vpop.f32.mrb[0].mxu0
    %v4408 = vadd.f32 0.0, %v4407
    %v4409 = vpop.f32.mrb[0].mxu0
    %v4410 = vadd.f32 0.0, %v4409
    %4411 = vmatprep.mubr.bf16.mxu0 %v814
    %4412 = vmatmul.mubr.bf16.gmra.mrb[0].mxu0 %v813
    %v4413 = vpop.f32.mrb[0].mxu0
    %v4414 = vadd.f32 0.0, %v4413
    %v4415 = vpop.f32.mrb[0].mxu0
    %v4416 = vadd.f32 0.0, %v4415
    %v4417 = vpop.f32.mrb[0].mxu0
    %v4418 = vadd.f32 0.0, %v4417
    %v4419 = vpop.f32.mrb[0].mxu0
    %v4420 = vadd.f32 0.0, %v4419
    %4421 = vmatprep.mubr.bf16.mxu0 %v822
    %4422 = vmatmul.mubr.bf16.gmra.mrb[0].mxu0 %v821
    %v4423 = vpop.f32.mrb[0].mxu0
    %v4424 = vadd.f32 0.0, %v4423
    %v4425 = vpop.f32.mrb[0].mxu0
    %v4426 = vadd.f32 0.0, %v4425
    %v4427 = vpop.f32.mrb[0].mxu0
    %v4428 = vadd.f32 0.0, %v4427
    %v4429 = vpop.f32.mrb[0].mxu0
    %v4430 = vadd.f32 0.0, %v4429
    %4431 = vmatprep.mubr.bf16.mxu0 %v830
    %4432 = vmatmul.mubr.bf16.gmra.mrb[0].mxu0 %v829
    %v4433 = vpop.f32.mrb[0].mxu0
    %v4434 = vadd.f32 0.0, %v4433
    %v4435 = vpop.f32.mrb[0].mxu0
    %v4436 = vadd.f32 0.0, %v4435
    %v4437 = vpop.f32.mrb[0].mxu0
    %v4438 = vadd.f32 0.0, %v4437
    %v4439 = vpop.f32.mrb[0].mxu0
    %v4440 = vadd.f32 0.0, %v4439
    %4441 = vmatprep.mubr.bf16.mxu0 %v838
    %4442 = vmatmul.mubr.bf16.gmra.mrb[0].mxu0 %v837
    %v4443 = vpop.f32.mrb[0].mxu0
    %v4444 = vadd.f32 0.0, %v4443
    %v4445 = vpop.f32.mrb[0].mxu0
    %v4446 = vadd.f32 0.0, %v4445
    %v4447 = vpop.f32.mrb[0].mxu0
    %v4448 = vadd.f32 0.0, %v4447
    %v4449 = vpop.f32.mrb[0].mxu0
    %v4450 = vadd.f32 0.0, %v4449
    %4451 = vmatprep.mubr.bf16.mxu0 %v846
    %4452 = vmatmul.mubr.bf16.gmra.mrb[0].mxu0 %v845
    %v4453 = vpop.f32.mrb[0].mxu0
    %v4454 = vadd.f32 0.0, %v4453
    %v4455 = vpop.f32.mrb[0].mxu0
    %v4456 = vadd.f32 0.0, %v4455
    %v4457 = vpop.f32.mrb[0].mxu0
    %v4458 = vadd.f32 0.0, %v4457
    %v4459 = vpop.f32.mrb[0].mxu0
    %v4460 = vadd.f32 0.0, %v4459
    %4461 = vmatprep.mubr.bf16.mxu0 %v854
    %4462 = vmatmul.mubr.bf16.gmra.mrb[0].mxu0 %v853
    %v4463 = vpop.f32.mrb[0].mxu0
    %v4464 = vadd.f32 0.0, %v4463
    %v4465 = vpop.f32.mrb[0].mxu0
    %v4466 = vadd.f32 0.0, %v4465
    %v4467 = vpop.f32.mrb[0].mxu0
    %v4468 = vadd.f32 0.0, %v4467
    %v4469 = vpop.f32.mrb[0].mxu0
    %v4470 = vadd.f32 0.0, %v4469
    %4471 = vmatprep.mubr.bf16.mxu0 %v862
    %4472 = vmatmul.mubr.bf16.gmra.mrb[0].mxu0 %v861
    %v4473 = vpop.f32.mrb[0].mxu0
    %v4474 = vadd.f32 0.0, %v4473
    %v4475 = vpop.f32.mrb[0].mxu0
    %v4476 = vadd.f32 0.0, %v4475
    %v4477 = vpop.f32.mrb[0].mxu0
    %v4478 = vadd.f32 0.0, %v4477
    %v4479 = vpop.f32.mrb[0].mxu0
    %v4480 = vadd.f32 0.0, %v4479
    %4481 = vmatprep.mubr.bf16.mxu0 %v870
    %4482 = vmatmul.mubr.bf16.gmra.mrb[0].mxu0 %v869
    %v4483 = vpop.f32.mrb[0].mxu0
    %v4484 = vadd.f32 0.0, %v4483
    %v4485 = vpop.f32.mrb[0].mxu0
    %v4486 = vadd.f32 0.0, %v4485
    %v4487 = vpop.f32.mrb[0].mxu0
    %v4488 = vadd.f32 0.0, %v4487
    %v4489 = vpop.f32.mrb[0].mxu0
    %v4490 = vadd.f32 0.0, %v4489
    %4491 = vmatprep.mubr.bf16.mxu0 %v878
    %4492 = vmatmul.mubr.bf16.gmra.mrb[0].mxu0 %v877
    %v4493 = vpop.f32.mrb[0].mxu0
    %v4494 = vadd.f32 0.0, %v4493
    %v4495 = vpop.f32.mrb[0].mxu0
    %v4496 = vadd.f32 0.0, %v4495
    %v4497 = vpop.f32.mrb[0].mxu0
    %v4498 = vadd.f32 0.0, %v4497
    %v4499 = vpop.f32.mrb[0].mxu0
    %v4500 = vadd.f32 0.0, %v4499
    %4501 = vmatprep.mubr.bf16.mxu0 %v886
    %4502 = vmatmul.mubr.bf16.gmra.mrb[0].mxu0 %v885
    %v4503 = vpop.f32.mrb[0].mxu0
    %v4504 = vadd.f32 0.0, %v4503
    %v4505 = vpop.f32.mrb[0].mxu0
    %v4506 = vadd.f32 0.0, %v4505
    %v4507 = vpop.f32.mrb[0].mxu0
    %v4508 = vadd.f32 0.0, %v4507
    %v4509 = vpop.f32.mrb[0].mxu0
    %v4510 = vadd.f32 0.0, %v4509
    %4511 = vdwg.mxu0
    %4512 = vmatprep.subr.bf16.mxu0 %v2883
    %4513 = vmatpush1.bf16.msra.mxu0 %v2882
    %4514 = vmatprep.subr.bf16.mxu0 %v2890
    %4515 = vmatpush1.bf16.msra.mxu0 %v2889
    %4516 = vmatprep.subr.bf16.mxu0 %v2897
    %4517 = vmatpush1.bf16.msra.mxu0 %v2896
    %4518 = vmatprep.subr.bf16.mxu0 %v2904
    %4519 = vmatpush1.bf16.msra.mxu0 %v2903
    %4520 = vmatprep.subr.bf16.mxu0 %v2911
    %4521 = vmatpush1.bf16.msra.mxu0 %v2910
    %4522 = vmatprep.subr.bf16.mxu0 %v2918
    %4523 = vmatpush1.bf16.msra.mxu0 %v2917
    %4524 = vmatprep.subr.bf16.mxu0 %v2925
    %4525 = vmatpush1.bf16.msra.mxu0 %v2924
    %4526 = vmatprep.subr.bf16.mxu0 %v2932
    %4527 = vmatpush1.bf16.msra.mxu0 %v2931
    %4528 = vmatprep.subr.bf16.mxu0 %v2939
    %4529 = vmatpush1.bf16.msra.mxu0 %v2938
    %4530 = vmatprep.subr.bf16.mxu0 %v2946
    %4531 = vmatpush1.bf16.msra.mxu0 %v2945
    %4532 = vmatprep.subr.bf16.mxu0 %v2953
    %4533 = vmatpush1.bf16.msra.mxu0 %v2952
    %4534 = vmatprep.subr.bf16.mxu0 %v2960
    %4535 = vmatpush1.bf16.msra.mxu0 %v2959
    %4536 = vmatprep.subr.bf16.mxu0 %v2967
    %4537 = vmatpush1.bf16.msra.mxu0 %v2966
    %4538 = vmatprep.subr.bf16.mxu0 %v2974
    %4539 = vmatpush1.bf16.msra.mxu0 %v2973
    %4540 = vmatprep.subr.bf16.mxu0 %v2981
    %4541 = vmatpush1.bf16.msra.mxu0 %v2980
    %4542 = vmatprep.subr.bf16.mxu0 %v2988
    %4543 = vmatpush1.bf16.msra.mxu0 %v2987
    %4544 = vmatprep.mubr.bf16.mxu0 %v792
    %4545 = vmatmul.mubr.bf16.gmra.mrb[0].mxu0 %v791
    %v4546 = vpop.f32.mrb[0].mxu0
    %v4547 = vadd.f32 %v4384, %v4546
    %v4548 = vpop.f32.mrb[0].mxu0
    %v4549 = vadd.f32 %v4386, %v4548
    %v4550 = vpop.f32.mrb[0].mxu0
    %v4551 = vadd.f32 %v4388, %v4550
    %v4552 = vpop.f32.mrb[0].mxu0
    %v4553 = vadd.f32 %v4390, %v4552
    %4554 = vmatprep.mubr.bf16.mxu0 %v800
    %4555 = vmatmul.mubr.bf16.gmra.mrb[0].mxu0 %v799
    %v4556 = vpop.f32.mrb[0].mxu0
    %v4557 = vadd.f32 %v4394, %v4556
    %v4558 = vpop.f32.mrb[0].mxu0
    %v4559 = vadd.f32 %v4396, %v4558
    %v4560 = vpop.f32.mrb[0].mxu0
    %v4561 = vadd.f32 %v4398, %v4560
    %v4562 = vpop.f32.mrb[0].mxu0
    %v4563 = vadd.f32 %v4400, %v4562
    %4564 = vmatprep.mubr.bf16.mxu0 %v808
    %4565 = vmatmul.mubr.bf16.gmra.mrb[0].mxu0 %v807
    %v4566 = vpop.f32.mrb[0].mxu0
    %v4567 = vadd.f32 %v4404, %v4566
    %v4568 = vpop.f32.mrb[0].mxu0
    %v4569 = vadd.f32 %v4406, %v4568
    %v4570 = vpop.f32.mrb[0].mxu0
    %v4571 = vadd.f32 %v4408, %v4570
    %v4572 = vpop.f32.mrb[0].mxu0
    %v4573 = vadd.f32 %v4410, %v4572
    %4574 = vmatprep.mubr.bf16.mxu0 %v816
    %4575 = vmatmul.mubr.bf16.gmra.mrb[0].mxu0 %v815
    %v4576 = vpop.f32.mrb[0].mxu0
    %v4577 = vadd.f32 %v4414, %v4576
    %v4578 = vpop.f32.mrb[0].mxu0
    %v4579 = vadd.f32 %v4416, %v4578
    %v4580 = vpop.f32.mrb[0].mxu0
    %v4581 = vadd.f32 %v4418, %v4580
    %v4582 = vpop.f32.mrb[0].mxu0
    %v4583 = vadd.f32 %v4420, %v4582
    %4584 = vmatprep.mubr.bf16.mxu0 %v824
    %4585 = vmatmul.mubr.bf16.gmra.mrb[0].mxu0 %v823
    %v4586 = vpop.f32.mrb[0].mxu0
    %v4587 = vadd.f32 %v4424, %v4586
    %v4588 = vpop.f32.mrb[0].mxu0
    %v4589 = vadd.f32 %v4426, %v4588
    %v4590 = vpop.f32.mrb[0].mxu0
    %v4591 = vadd.f32 %v4428, %v4590
    %v4592 = vpop.f32.mrb[0].mxu0
    %v4593 = vadd.f32 %v4430, %v4592
    %4594 = vmatprep.mubr.bf16.mxu0 %v832
    %4595 = vmatmul.mubr.bf16.gmra.mrb[0].mxu0 %v831
    %v4596 = vpop.f32.mrb[0].mxu0
    %v4597 = vadd.f32 %v4434, %v4596
    %v4598 = vpop.f32.mrb[0].mxu0
    %v4599 = vadd.f32 %v4436, %v4598
    %v4600 = vpop.f32.mrb[0].mxu0
    %v4601 = vadd.f32 %v4438, %v4600
    %v4602 = vpop.f32.mrb[0].mxu0
    %v4603 = vadd.f32 %v4440, %v4602
    %4604 = vmatprep.mubr.bf16.mxu0 %v840
    %4605 = vmatmul.mubr.bf16.gmra.mrb[0].mxu0 %v839
    %v4606 = vpop.f32.mrb[0].mxu0
    %v4607 = vadd.f32 %v4444, %v4606
    %v4608 = vpop.f32.mrb[0].mxu0
    %v4609 = vadd.f32 %v4446, %v4608
    %v4610 = vpop.f32.mrb[0].mxu0
    %v4611 = vadd.f32 %v4448, %v4610
    %v4612 = vpop.f32.mrb[0].mxu0
    %v4613 = vadd.f32 %v4450, %v4612
    %4614 = vmatprep.mubr.bf16.mxu0 %v848
    %4615 = vmatmul.mubr.bf16.gmra.mrb[0].mxu0 %v847
    %v4616 = vpop.f32.mrb[0].mxu0
    %v4617 = vadd.f32 %v4454, %v4616
    %v4618 = vpop.f32.mrb[0].mxu0
    %v4619 = vadd.f32 %v4456, %v4618
    %v4620 = vpop.f32.mrb[0].mxu0
    %v4621 = vadd.f32 %v4458, %v4620
    %v4622 = vpop.f32.mrb[0].mxu0
    %v4623 = vadd.f32 %v4460, %v4622
    %4624 = vmatprep.mubr.bf16.mxu0 %v856
    %4625 = vmatmul.mubr.bf16.gmra.mrb[0].mxu0 %v855
    %v4626 = vpop.f32.mrb[0].mxu0
    %v4627 = vadd.f32 %v4464, %v4626
    %v4628 = vpop.f32.mrb[0].mxu0
    %v4629 = vadd.f32 %v4466, %v4628
    %v4630 = vpop.f32.mrb[0].mxu0
    %v4631 = vadd.f32 %v4468, %v4630
    %v4632 = vpop.f32.mrb[0].mxu0
    %v4633 = vadd.f32 %v4470, %v4632
    %4634 = vmatprep.mubr.bf16.mxu0 %v864
    %4635 = vmatmul.mubr.bf16.gmra.mrb[0].mxu0 %v863
    %v4636 = vpop.f32.mrb[0].mxu0
    %v4637 = vadd.f32 %v4474, %v4636
    %v4638 = vpop.f32.mrb[0].mxu0
    %v4639 = vadd.f32 %v4476, %v4638
    %v4640 = vpop.f32.mrb[0].mxu0
    %v4641 = vadd.f32 %v4478, %v4640
    %v4642 = vpop.f32.mrb[0].mxu0
    %v4643 = vadd.f32 %v4480, %v4642
    %4644 = vmatprep.mubr.bf16.mxu0 %v872
    %4645 = vmatmul.mubr.bf16.gmra.mrb[0].mxu0 %v871
    %v4646 = vpop.f32.mrb[0].mxu0
    %v4647 = vadd.f32 %v4484, %v4646
    %v4648 = vpop.f32.mrb[0].mxu0
    %v4649 = vadd.f32 %v4486, %v4648
    %v4650 = vpop.f32.mrb[0].mxu0
    %v4651 = vadd.f32 %v4488, %v4650
    %v4652 = vpop.f32.mrb[0].mxu0
    %v4653 = vadd.f32 %v4490, %v4652
    %4654 = vmatprep.mubr.bf16.mxu0 %v880
    %4655 = vmatmul.mubr.bf16.gmra.mrb[0].mxu0 %v879
    %v4656 = vpop.f32.mrb[0].mxu0
    %v4657 = vadd.f32 %v4494, %v4656
    %v4658 = vpop.f32.mrb[0].mxu0
    %v4659 = vadd.f32 %v4496, %v4658
    %v4660 = vpop.f32.mrb[0].mxu0
    %v4661 = vadd.f32 %v4498, %v4660
    %v4662 = vpop.f32.mrb[0].mxu0
    %v4663 = vadd.f32 %v4500, %v4662
    %4664 = vmatprep.mubr.bf16.mxu0 %v888
    %4665 = vmatmul.mubr.bf16.gmra.mrb[0].mxu0 %v887
    %v4666 = vpop.f32.mrb[0].mxu0
    %v4667 = vadd.f32 %v4504, %v4666
    %v4668 = vpop.f32.mrb[0].mxu0
    %v4669 = vadd.f32 %v4506, %v4668
    %v4670 = vpop.f32.mrb[0].mxu0
    %v4671 = vadd.f32 %v4508, %v4670
    %v4672 = vpop.f32.mrb[0].mxu0
    %v4673 = vadd.f32 %v4510, %v4672
    %4674 = vdwg.mxu0
    %4675 = vmatprep.subr.bf16.mxu0 %v2995
    %4676 = vmatpush1.bf16.msra.mxu0 %v2994
    %4677 = vmatprep.subr.bf16.mxu0 %v3002
    %4678 = vmatpush1.bf16.msra.mxu0 %v3001
    %4679 = vmatprep.subr.bf16.mxu0 %v3009
    %4680 = vmatpush1.bf16.msra.mxu0 %v3008
    %4681 = vmatprep.subr.bf16.mxu0 %v3016
    %4682 = vmatpush1.bf16.msra.mxu0 %v3015
    %4683 = vmatprep.subr.bf16.mxu0 %v3023
    %4684 = vmatpush1.bf16.msra.mxu0 %v3022
    %4685 = vmatprep.subr.bf16.mxu0 %v3030
    %4686 = vmatpush1.bf16.msra.mxu0 %v3029
    %4687 = vmatprep.subr.bf16.mxu0 %v3037
    %4688 = vmatpush1.bf16.msra.mxu0 %v3036
    %4689 = vmatprep.subr.bf16.mxu0 %v3044
    %4690 = vmatpush1.bf16.msra.mxu0 %v3043
    %4691 = vmatprep.subr.bf16.mxu0 %v3051
    %4692 = vmatpush1.bf16.msra.mxu0 %v3050
    %4693 = vmatprep.subr.bf16.mxu0 %v3058
    %4694 = vmatpush1.bf16.msra.mxu0 %v3057
    %4695 = vmatprep.subr.bf16.mxu0 %v3065
    %4696 = vmatpush1.bf16.msra.mxu0 %v3064
    %4697 = vmatprep.subr.bf16.mxu0 %v3072
    %4698 = vmatpush1.bf16.msra.mxu0 %v3071
    %4699 = vmatprep.subr.bf16.mxu0 %v3079
    %4700 = vmatpush1.bf16.msra.mxu0 %v3078
    %4701 = vmatprep.subr.bf16.mxu0 %v3086
    %4702 = vmatpush1.bf16.msra.mxu0 %v3085
    %4703 = vmatprep.subr.bf16.mxu0 %v3093
    %4704 = vmatpush1.bf16.msra.mxu0 %v3092
    %4705 = vmatprep.subr.bf16.mxu0 %v3100
    %4706 = vmatpush1.bf16.msra.mxu0 %v3099
    %4707 = vmatprep.mubr.bf16.mxu0 %v794
    %4708 = vmatmul.mubr.bf16.gmra.mrb[0].mxu0 %v793
    %v4709 = vpop.f32.mrb[0].mxu0
    %v4710 = vadd.f32 %v4547, %v4709
    %v4711 = vpop.f32.mrb[0].mxu0
    %v4712 = vadd.f32 %v4549, %v4711
    %v4713 = vpop.f32.mrb[0].mxu0
    %v4714 = vadd.f32 %v4551, %v4713
    %v4715 = vpop.f32.mrb[0].mxu0
    %v4716 = vadd.f32 %v4553, %v4715
    %4717 = vmatprep.mubr.bf16.mxu0 %v802
    %4718 = vmatmul.mubr.bf16.gmra.mrb[0].mxu0 %v801
    %v4719 = vpop.f32.mrb[0].mxu0
    %v4720 = vadd.f32 %v4557, %v4719
    %v4721 = vpop.f32.mrb[0].mxu0
    %v4722 = vadd.f32 %v4559, %v4721
    %v4723 = vpop.f32.mrb[0].mxu0
    %v4724 = vadd.f32 %v4561, %v4723
    %v4725 = vpop.f32.mrb[0].mxu0
    %v4726 = vadd.f32 %v4563, %v4725
    %4727 = vmatprep.mubr.bf16.mxu0 %v810
    %4728 = vmatmul.mubr.bf16.gmra.mrb[0].mxu0 %v809
    %v4729 = vpop.f32.mrb[0].mxu0
    %v4730 = vadd.f32 %v4567, %v4729
    %v4731 = vpop.f32.mrb[0].mxu0
    %v4732 = vadd.f32 %v4569, %v4731
    %v4733 = vpop.f32.mrb[0].mxu0
    %v4734 = vadd.f32 %v4571, %v4733
    %v4735 = vpop.f32.mrb[0].mxu0
    %v4736 = vadd.f32 %v4573, %v4735
    %4737 = vmatprep.mubr.bf16.mxu0 %v818
    %4738 = vmatmul.mubr.bf16.gmra.mrb[0].mxu0 %v817
    %v4739 = vpop.f32.mrb[0].mxu0
    %v4740 = vadd.f32 %v4577, %v4739
    %v4741 = vpop.f32.mrb[0].mxu0
    %v4742 = vadd.f32 %v4579, %v4741
    %v4743 = vpop.f32.mrb[0].mxu0
    %v4744 = vadd.f32 %v4581, %v4743
    %v4745 = vpop.f32.mrb[0].mxu0
    %v4746 = vadd.f32 %v4583, %v4745
    %4747 = vmatprep.mubr.bf16.mxu0 %v826
    %4748 = vmatmul.mubr.bf16.gmra.mrb[0].mxu0 %v825
    %v4749 = vpop.f32.mrb[0].mxu0
    %v4750 = vadd.f32 %v4587, %v4749
    %v4751 = vpop.f32.mrb[0].mxu0
    %v4752 = vadd.f32 %v4589, %v4751
    %v4753 = vpop.f32.mrb[0].mxu0
    %v4754 = vadd.f32 %v4591, %v4753
    %v4755 = vpop.f32.mrb[0].mxu0
    %v4756 = vadd.f32 %v4593, %v4755
    %4757 = vmatprep.mubr.bf16.mxu0 %v834
    %4758 = vmatmul.mubr.bf16.gmra.mrb[0].mxu0 %v833
    %v4759 = vpop.f32.mrb[0].mxu0
    %v4760 = vadd.f32 %v4597, %v4759
    %v4761 = vpop.f32.mrb[0].mxu0
    %v4762 = vadd.f32 %v4599, %v4761
    %v4763 = vpop.f32.mrb[0].mxu0
    %v4764 = vadd.f32 %v4601, %v4763
    %v4765 = vpop.f32.mrb[0].mxu0
    %v4766 = vadd.f32 %v4603, %v4765
    %4767 = vmatprep.mubr.bf16.mxu0 %v842
    %4768 = vmatmul.mubr.bf16.gmra.mrb[0].mxu0 %v841
    %v4769 = vpop.f32.mrb[0].mxu0
    %v4770 = vadd.f32 %v4607, %v4769
    %v4771 = vpop.f32.mrb[0].mxu0
    %v4772 = vadd.f32 %v4609, %v4771
    %v4773 = vpop.f32.mrb[0].mxu0
    %v4774 = vadd.f32 %v4611, %v4773
    %v4775 = vpop.f32.mrb[0].mxu0
    %v4776 = vadd.f32 %v4613, %v4775
    %4777 = vmatprep.mubr.bf16.mxu0 %v850
    %4778 = vmatmul.mubr.bf16.gmra.mrb[0].mxu0 %v849
    %v4779 = vpop.f32.mrb[0].mxu0
    %v4780 = vadd.f32 %v4617, %v4779
    %v4781 = vpop.f32.mrb[0].mxu0
    %v4782 = vadd.f32 %v4619, %v4781
    %v4783 = vpop.f32.mrb[0].mxu0
    %v4784 = vadd.f32 %v4621, %v4783
    %v4785 = vpop.f32.mrb[0].mxu0
    %v4786 = vadd.f32 %v4623, %v4785
    %4787 = vmatprep.mubr.bf16.mxu0 %v858
    %4788 = vmatmul.mubr.bf16.gmra.mrb[0].mxu0 %v857
    %v4789 = vpop.f32.mrb[0].mxu0
    %v4790 = vadd.f32 %v4627, %v4789
    %v4791 = vpop.f32.mrb[0].mxu0
    %v4792 = vadd.f32 %v4629, %v4791
    %v4793 = vpop.f32.mrb[0].mxu0
    %v4794 = vadd.f32 %v4631, %v4793
    %v4795 = vpop.f32.mrb[0].mxu0
    %v4796 = vadd.f32 %v4633, %v4795
    %4797 = vmatprep.mubr.bf16.mxu0 %v866
    %4798 = vmatmul.mubr.bf16.gmra.mrb[0].mxu0 %v865
    %v4799 = vpop.f32.mrb[0].mxu0
    %v4800 = vadd.f32 %v4637, %v4799
    %v4801 = vpop.f32.mrb[0].mxu0
    %v4802 = vadd.f32 %v4639, %v4801
    %v4803 = vpop.f32.mrb[0].mxu0
    %v4804 = vadd.f32 %v4641, %v4803
    %v4805 = vpop.f32.mrb[0].mxu0
    %v4806 = vadd.f32 %v4643, %v4805
    %4807 = vmatprep.mubr.bf16.mxu0 %v874
    %4808 = vmatmul.mubr.bf16.gmra.mrb[0].mxu0 %v873
    %v4809 = vpop.f32.mrb[0].mxu0
    %v4810 = vadd.f32 %v4647, %v4809
    %v4811 = vpop.f32.mrb[0].mxu0
    %v4812 = vadd.f32 %v4649, %v4811
    %v4813 = vpop.f32.mrb[0].mxu0
    %v4814 = vadd.f32 %v4651, %v4813
    %v4815 = vpop.f32.mrb[0].mxu0
    %v4816 = vadd.f32 %v4653, %v4815
    %4817 = vmatprep.mubr.bf16.mxu0 %v882
    %4818 = vmatmul.mubr.bf16.gmra.mrb[0].mxu0 %v881
    %v4819 = vpop.f32.mrb[0].mxu0
    %v4820 = vadd.f32 %v4657, %v4819
    %v4821 = vpop.f32.mrb[0].mxu0
    %v4822 = vadd.f32 %v4659, %v4821
    %v4823 = vpop.f32.mrb[0].mxu0
    %v4824 = vadd.f32 %v4661, %v4823
    %v4825 = vpop.f32.mrb[0].mxu0
    %v4826 = vadd.f32 %v4663, %v4825
    %4827 = vmatprep.mubr.bf16.mxu0 %v890
    %4828 = vmatmul.mubr.bf16.gmra.mrb[0].mxu0 %v889
    %v4829 = vpop.f32.mrb[0].mxu0
    %v4830 = vadd.f32 %v4667, %v4829
    %v4831 = vpop.f32.mrb[0].mxu0
    %v4832 = vadd.f32 %v4669, %v4831
    %v4833 = vpop.f32.mrb[0].mxu0
    %v4834 = vadd.f32 %v4671, %v4833
    %v4835 = vpop.f32.mrb[0].mxu0
    %v4836 = vadd.f32 %v4673, %v4835
    %4837 = vdwg.mxu0
    %4838 = vmatprep.subr.bf16.mxu0 %v3107
    %4839 = vmatpush1.bf16.msra.mxu0 %v3106
    %4840 = vmatprep.subr.bf16.mxu0 %v3114
    %4841 = vmatpush1.bf16.msra.mxu0 %v3113
    %4842 = vmatprep.subr.bf16.mxu0 %v3121
    %4843 = vmatpush1.bf16.msra.mxu0 %v3120
    %4844 = vmatprep.subr.bf16.mxu0 %v3128
    %4845 = vmatpush1.bf16.msra.mxu0 %v3127
    %4846 = vmatprep.subr.bf16.mxu0 %v3135
    %4847 = vmatpush1.bf16.msra.mxu0 %v3134
    %4848 = vmatprep.subr.bf16.mxu0 %v3142
    %4849 = vmatpush1.bf16.msra.mxu0 %v3141
    %4850 = vmatprep.subr.bf16.mxu0 %v3149
    %4851 = vmatpush1.bf16.msra.mxu0 %v3148
    %4852 = vmatprep.subr.bf16.mxu0 %v3156
    %4853 = vmatpush1.bf16.msra.mxu0 %v3155
    %4854 = vmatprep.subr.bf16.mxu0 %v3163
    %4855 = vmatpush1.bf16.msra.mxu0 %v3162
    %4856 = vmatprep.subr.bf16.mxu0 %v3170
    %4857 = vmatpush1.bf16.msra.mxu0 %v3169
    %4858 = vmatprep.subr.bf16.mxu0 %v3177
    %4859 = vmatpush1.bf16.msra.mxu0 %v3176
    %4860 = vmatprep.subr.bf16.mxu0 %v3184
    %4861 = vmatpush1.bf16.msra.mxu0 %v3183
    %4862 = vmatprep.subr.bf16.mxu0 %v3191
    %4863 = vmatpush1.bf16.msra.mxu0 %v3190
    %4864 = vmatprep.subr.bf16.mxu0 %v3198
    %4865 = vmatpush1.bf16.msra.mxu0 %v3197
    %4866 = vmatprep.subr.bf16.mxu0 %v3694
    %4867 = vmatpush1.bf16.msra.mxu0 %v3691
    %4868 = vmatprep.subr.bf16.mxu0 0
    %4869 = vmatpush1.bf16.msra.mxu0 0
    %4870 = vmatprep.mubr.bf16.mxu0 %v3645
    %4871 = vmatmul.mubr.bf16.gmra.mrb[0].mxu0 %v795
    %v4872 = vpop.f32.mrb[0].mxu0
    %v4873 = vadd.f32 %v4710, %v4872
    %v4874 = vpop.f32.mrb[0].mxu0
    %v4875 = vadd.f32 %v4712, %v4874
    %v4876 = vpop.f32.mrb[0].mxu0
    %v4877 = vadd.f32 %v4714, %v4876
    %v4878 = vpop.f32.mrb[0].mxu0
    %v4879 = vadd.f32 %v4716, %v4878
    %4880 = vmatprep.mubr.bf16.mxu0 %v3648
    %4881 = vmatmul.mubr.bf16.gmra.mrb[0].mxu0 %v803
    %v4882 = vpop.f32.mrb[0].mxu0
    %v4883 = vadd.f32 %v4720, %v4882
    %v4884 = vpop.f32.mrb[0].mxu0
    %v4885 = vadd.f32 %v4722, %v4884
    %v4886 = vpop.f32.mrb[0].mxu0
    %v4887 = vadd.f32 %v4724, %v4886
    %v4888 = vpop.f32.mrb[0].mxu0
    %v4889 = vadd.f32 %v4726, %v4888
    %4890 = vmatprep.mubr.bf16.mxu0 %v3651
    %4891 = vmatmul.mubr.bf16.gmra.mrb[0].mxu0 %v811
    %v4892 = vpop.f32.mrb[0].mxu0
    %v4893 = vadd.f32 %v4730, %v4892
    %v4894 = vpop.f32.mrb[0].mxu0
    %v4895 = vadd.f32 %v4732, %v4894
    %v4896 = vpop.f32.mrb[0].mxu0
    %v4897 = vadd.f32 %v4734, %v4896
    %v4898 = vpop.f32.mrb[0].mxu0
    %v4899 = vadd.f32 %v4736, %v4898
    %4900 = vmatprep.mubr.bf16.mxu0 %v3654
    %4901 = vmatmul.mubr.bf16.gmra.mrb[0].mxu0 %v819
    %v4902 = vpop.f32.mrb[0].mxu0
    %v4903 = vadd.f32 %v4740, %v4902
    %v4904 = vpop.f32.mrb[0].mxu0
    %v4905 = vadd.f32 %v4742, %v4904
    %v4906 = vpop.f32.mrb[0].mxu0
    %v4907 = vadd.f32 %v4744, %v4906
    %v4908 = vpop.f32.mrb[0].mxu0
    %v4909 = vadd.f32 %v4746, %v4908
    %4910 = vmatprep.mubr.bf16.mxu0 %v3657
    %4911 = vmatmul.mubr.bf16.gmra.mrb[0].mxu0 %v827
    %v4912 = vpop.f32.mrb[0].mxu0
    %v4913 = vadd.f32 %v4750, %v4912
    %v4914 = vpop.f32.mrb[0].mxu0
    %v4915 = vadd.f32 %v4752, %v4914
    %v4916 = vpop.f32.mrb[0].mxu0
    %v4917 = vadd.f32 %v4754, %v4916
    %v4918 = vpop.f32.mrb[0].mxu0
    %v4919 = vadd.f32 %v4756, %v4918
    %4920 = vmatprep.mubr.bf16.mxu0 %v3660
    %4921 = vmatmul.mubr.bf16.gmra.mrb[0].mxu0 %v835
    %v4922 = vpop.f32.mrb[0].mxu0
    %v4923 = vadd.f32 %v4760, %v4922
    %v4924 = vpop.f32.mrb[0].mxu0
    %v4925 = vadd.f32 %v4762, %v4924
    %v4926 = vpop.f32.mrb[0].mxu0
    %v4927 = vadd.f32 %v4764, %v4926
    %v4928 = vpop.f32.mrb[0].mxu0
    %v4929 = vadd.f32 %v4766, %v4928
    %4930 = vmatprep.mubr.bf16.mxu0 %v3663
    %4931 = vmatmul.mubr.bf16.gmra.mrb[0].mxu0 %v843
    %v4932 = vpop.f32.mrb[0].mxu0
    %v4933 = vadd.f32 %v4770, %v4932
    %v4934 = vpop.f32.mrb[0].mxu0
    %v4935 = vadd.f32 %v4772, %v4934
    %v4936 = vpop.f32.mrb[0].mxu0
    %v4937 = vadd.f32 %v4774, %v4936
    %v4938 = vpop.f32.mrb[0].mxu0
    %v4939 = vadd.f32 %v4776, %v4938
    %4940 = vmatprep.mubr.bf16.mxu0 %v3666
    %4941 = vmatmul.mubr.bf16.gmra.mrb[0].mxu0 %v851
    %v4942 = vpop.f32.mrb[0].mxu0
    %v4943 = vadd.f32 %v4780, %v4942
    %v4944 = vpop.f32.mrb[0].mxu0
    %v4945 = vadd.f32 %v4782, %v4944
    %v4946 = vpop.f32.mrb[0].mxu0
    %v4947 = vadd.f32 %v4784, %v4946
    %v4948 = vpop.f32.mrb[0].mxu0
    %v4949 = vadd.f32 %v4786, %v4948
    %4950 = vmatprep.mubr.bf16.mxu0 %v3669
    %4951 = vmatmul.mubr.bf16.gmra.mrb[0].mxu0 %v859
    %v4952 = vpop.f32.mrb[0].mxu0
    %v4953 = vadd.f32 %v4790, %v4952
    %v4954 = vpop.f32.mrb[0].mxu0
    %v4955 = vadd.f32 %v4792, %v4954
    %v4956 = vpop.f32.mrb[0].mxu0
    %v4957 = vadd.f32 %v4794, %v4956
    %v4958 = vpop.f32.mrb[0].mxu0
    %v4959 = vadd.f32 %v4796, %v4958
    %4960 = vmatprep.mubr.bf16.mxu0 %v3672
    %4961 = vmatmul.mubr.bf16.gmra.mrb[0].mxu0 %v867
    %v4962 = vpop.f32.mrb[0].mxu0
    %v4963 = vadd.f32 %v4800, %v4962
    %v4964 = vpop.f32.mrb[0].mxu0
    %v4965 = vadd.f32 %v4802, %v4964
    %v4966 = vpop.f32.mrb[0].mxu0
    %v4967 = vadd.f32 %v4804, %v4966
    %v4968 = vpop.f32.mrb[0].mxu0
    %v4969 = vadd.f32 %v4806, %v4968
    %4970 = vmatprep.mubr.bf16.mxu0 %v3675
    %4971 = vmatmul.mubr.bf16.gmra.mrb[0].mxu0 %v875
    %v4972 = vpop.f32.mrb[0].mxu0
    %v4973 = vadd.f32 %v4810, %v4972
    %v4974 = vpop.f32.mrb[0].mxu0
    %v4975 = vadd.f32 %v4812, %v4974
    %v4976 = vpop.f32.mrb[0].mxu0
    %v4977 = vadd.f32 %v4814, %v4976
    %v4978 = vpop.f32.mrb[0].mxu0
    %v4979 = vadd.f32 %v4816, %v4978
    %4980 = vmatprep.mubr.bf16.mxu0 %v3678
    %4981 = vmatmul.mubr.bf16.gmra.mrb[0].mxu0 %v883
    %v4982 = vpop.f32.mrb[0].mxu0
    %v4983 = vadd.f32 %v4820, %v4982
    %v4984 = vpop.f32.mrb[0].mxu0
    %v4985 = vadd.f32 %v4822, %v4984
    %v4986 = vpop.f32.mrb[0].mxu0
    %v4987 = vadd.f32 %v4824, %v4986
    %v4988 = vpop.f32.mrb[0].mxu0
    %v4989 = vadd.f32 %v4826, %v4988
    %4990 = vmatprep.mubr.bf16.mxu0 %v3681
    %4991 = vmatmul.mubr.bf16.gmra.mrb[0].mxu0 %v891
    %v4992 = vpop.f32.mrb[0].mxu0
    %v4993 = vadd.f32 %v4830, %v4992
    %v4994 = vpop.f32.mrb[0].mxu0
    %v4995 = vadd.f32 %v4832, %v4994
    %v4996 = vpop.f32.mrb[0].mxu0
    %v4997 = vadd.f32 %v4834, %v4996
    %v4998 = vpop.f32.mrb[0].mxu0
    %v4999 = vadd.f32 %v4836, %v4998
    %5000 = vdwg.mxu0
    %5001 = vmatprep.subr.bf16.mxu0 %v2773
    %5002 = vmatpush1.bf16.msra.mxu0 %v2772
    %5003 = vmatprep.subr.bf16.mxu0 %v2780
    %5004 = vmatpush1.bf16.msra.mxu0 %v2779
    %5005 = vmatprep.subr.bf16.mxu0 %v2787
    %5006 = vmatpush1.bf16.msra.mxu0 %v2786
    %5007 = vmatprep.subr.bf16.mxu0 %v2794
    %5008 = vmatpush1.bf16.msra.mxu0 %v2793
    %5009 = vmatprep.subr.bf16.mxu0 %v2801
    %5010 = vmatpush1.bf16.msra.mxu0 %v2800
    %5011 = vmatprep.subr.bf16.mxu0 %v2808
    %5012 = vmatpush1.bf16.msra.mxu0 %v2807
    %5013 = vmatprep.subr.bf16.mxu0 %v2815
    %5014 = vmatpush1.bf16.msra.mxu0 %v2814
    %5015 = vmatprep.subr.bf16.mxu0 %v2822
    %5016 = vmatpush1.bf16.msra.mxu0 %v2821
    %5017 = vmatprep.subr.bf16.mxu0 %v2829
    %5018 = vmatpush1.bf16.msra.mxu0 %v2828
    %5019 = vmatprep.subr.bf16.mxu0 %v2836
    %5020 = vmatpush1.bf16.msra.mxu0 %v2835
    %5021 = vmatprep.subr.bf16.mxu0 %v2843
    %5022 = vmatpush1.bf16.msra.mxu0 %v2842
    %5023 = vmatprep.subr.bf16.mxu0 %v2850
    %5024 = vmatpush1.bf16.msra.mxu0 %v2849
    %5025 = vmatprep.subr.bf16.mxu0 %v2857
    %5026 = vmatpush1.bf16.msra.mxu0 %v2856
    %5027 = vmatprep.subr.bf16.mxu0 %v2864
    %5028 = vmatpush1.bf16.msra.mxu0 %v2863
    %5029 = vmatprep.subr.bf16.mxu0 %v2871
    %5030 = vmatpush1.bf16.msra.mxu0 %v2870
    %5031 = vmatprep.subr.bf16.mxu0 %v2878
    %5032 = vmatpush1.bf16.msra.mxu0 %v2877
    %5033 = vmatprep.mubr.bf16.mxu0 %v790
    %5034 = vmatmul.mubr.bf16.gmra.mrb[0].mxu0 %v789
    %v5035 = vpop.f32.mrb[0].mxu0
    %v5036 = vadd.f32 0.0, %v5035
    %v5037 = vpop.f32.mrb[0].mxu0
    %v5038 = vadd.f32 0.0, %v5037
    %v5039 = vpop.f32.mrb[0].mxu0
    %v5040 = vadd.f32 0.0, %v5039
    %v5041 = vpop.f32.mrb[0].mxu0
    %v5042 = vadd.f32 0.0, %v5041
    %5043 = vmatprep.mubr.bf16.mxu0 %v798
    %5044 = vmatmul.mubr.bf16.gmra.mrb[0].mxu0 %v797
    %v5045 = vpop.f32.mrb[0].mxu0
    %v5046 = vadd.f32 0.0, %v5045
    %v5047 = vpop.f32.mrb[0].mxu0
    %v5048 = vadd.f32 0.0, %v5047
    %v5049 = vpop.f32.mrb[0].mxu0
    %v5050 = vadd.f32 0.0, %v5049
    %v5051 = vpop.f32.mrb[0].mxu0
    %v5052 = vadd.f32 0.0, %v5051
    %5053 = vmatprep.mubr.bf16.mxu0 %v806
    %5054 = vmatmul.mubr.bf16.gmra.mrb[0].mxu0 %v805
    %v5055 = vpop.f32.mrb[0].mxu0
    %v5056 = vadd.f32 0.0, %v5055
    %v5057 = vpop.f32.mrb[0].mxu0
    %v5058 = vadd.f32 0.0, %v5057
    %v5059 = vpop.f32.mrb[0].mxu0
    %v5060 = vadd.f32 0.0, %v5059
    %v5061 = vpop.f32.mrb[0].mxu0
    %v5062 = vadd.f32 0.0, %v5061
    %5063 = vmatprep.mubr.bf16.mxu0 %v814
    %5064 = vmatmul.mubr.bf16.gmra.mrb[0].mxu0 %v813
    %v5065 = vpop.f32.mrb[0].mxu0
    %v5066 = vadd.f32 0.0, %v5065
    %v5067 = vpop.f32.mrb[0].mxu0
    %v5068 = vadd.f32 0.0, %v5067
    %v5069 = vpop.f32.mrb[0].mxu0
    %v5070 = vadd.f32 0.0, %v5069
    %v5071 = vpop.f32.mrb[0].mxu0
    %v5072 = vadd.f32 0.0, %v5071
    %5073 = vmatprep.mubr.bf16.mxu0 %v822
    %5074 = vmatmul.mubr.bf16.gmra.mrb[0].mxu0 %v821
    %v5075 = vpop.f32.mrb[0].mxu0
    %v5076 = vadd.f32 0.0, %v5075
    %v5077 = vpop.f32.mrb[0].mxu0
    %v5078 = vadd.f32 0.0, %v5077
    %v5079 = vpop.f32.mrb[0].mxu0
    %v5080 = vadd.f32 0.0, %v5079
    %v5081 = vpop.f32.mrb[0].mxu0
    %v5082 = vadd.f32 0.0, %v5081
    %5083 = vmatprep.mubr.bf16.mxu0 %v830
    %5084 = vmatmul.mubr.bf16.gmra.mrb[0].mxu0 %v829
    %v5085 = vpop.f32.mrb[0].mxu0
    %v5086 = vadd.f32 0.0, %v5085
    %v5087 = vpop.f32.mrb[0].mxu0
    %v5088 = vadd.f32 0.0, %v5087
    %v5089 = vpop.f32.mrb[0].mxu0
    %v5090 = vadd.f32 0.0, %v5089
    %v5091 = vpop.f32.mrb[0].mxu0
    %v5092 = vadd.f32 0.0, %v5091
    %5093 = vmatprep.mubr.bf16.mxu0 %v838
    %5094 = vmatmul.mubr.bf16.gmra.mrb[0].mxu0 %v837
    %v5095 = vpop.f32.mrb[0].mxu0
    %v5096 = vadd.f32 0.0, %v5095
    %v5097 = vpop.f32.mrb[0].mxu0
    %v5098 = vadd.f32 0.0, %v5097
    %v5099 = vpop.f32.mrb[0].mxu0
    %v5100 = vadd.f32 0.0, %v5099
    %v5101 = vpop.f32.mrb[0].mxu0
    %v5102 = vadd.f32 0.0, %v5101
    %5103 = vmatprep.mubr.bf16.mxu0 %v846
    %5104 = vmatmul.mubr.bf16.gmra.mrb[0].mxu0 %v845
    %v5105 = vpop.f32.mrb[0].mxu0
    %v5106 = vadd.f32 0.0, %v5105
    %v5107 = vpop.f32.mrb[0].mxu0
    %v5108 = vadd.f32 0.0, %v5107
    %v5109 = vpop.f32.mrb[0].mxu0
    %v5110 = vadd.f32 0.0, %v5109
    %v5111 = vpop.f32.mrb[0].mxu0
    %v5112 = vadd.f32 0.0, %v5111
    %5113 = vmatprep.mubr.bf16.mxu0 %v854
    %5114 = vmatmul.mubr.bf16.gmra.mrb[0].mxu0 %v853
    %v5115 = vpop.f32.mrb[0].mxu0
    %v5116 = vadd.f32 0.0, %v5115
    %v5117 = vpop.f32.mrb[0].mxu0
    %v5118 = vadd.f32 0.0, %v5117
    %v5119 = vpop.f32.mrb[0].mxu0
    %v5120 = vadd.f32 0.0, %v5119
    %v5121 = vpop.f32.mrb[0].mxu0
    %v5122 = vadd.f32 0.0, %v5121
    %5123 = vmatprep.mubr.bf16.mxu0 %v862
    %5124 = vmatmul.mubr.bf16.gmra.mrb[0].mxu0 %v861
    %v5125 = vpop.f32.mrb[0].mxu0
    %v5126 = vadd.f32 0.0, %v5125
    %v5127 = vpop.f32.mrb[0].mxu0
    %v5128 = vadd.f32 0.0, %v5127
    %v5129 = vpop.f32.mrb[0].mxu0
    %v5130 = vadd.f32 0.0, %v5129
    %v5131 = vpop.f32.mrb[0].mxu0
    %v5132 = vadd.f32 0.0, %v5131
    %5133 = vmatprep.mubr.bf16.mxu0 %v870
    %5134 = vmatmul.mubr.bf16.gmra.mrb[0].mxu0 %v869
    %v5135 = vpop.f32.mrb[0].mxu0
    %v5136 = vadd.f32 0.0, %v5135
    %v5137 = vpop.f32.mrb[0].mxu0
    %v5138 = vadd.f32 0.0, %v5137
    %v5139 = vpop.f32.mrb[0].mxu0
    %v5140 = vadd.f32 0.0, %v5139
    %v5141 = vpop.f32.mrb[0].mxu0
    %v5142 = vadd.f32 0.0, %v5141
    %5143 = vmatprep.mubr.bf16.mxu0 %v878
    %5144 = vmatmul.mubr.bf16.gmra.mrb[0].mxu0 %v877
    %v5145 = vpop.f32.mrb[0].mxu0
    %v5146 = vadd.f32 0.0, %v5145
    %v5147 = vpop.f32.mrb[0].mxu0
    %v5148 = vadd.f32 0.0, %v5147
    %v5149 = vpop.f32.mrb[0].mxu0
    %v5150 = vadd.f32 0.0, %v5149
    %v5151 = vpop.f32.mrb[0].mxu0
    %v5152 = vadd.f32 0.0, %v5151
    %5153 = vmatprep.mubr.bf16.mxu0 %v886
    %5154 = vmatmul.mubr.bf16.gmra.mrb[0].mxu0 %v885
    %v5155 = vpop.f32.mrb[0].mxu0
    %v5156 = vadd.f32 0.0, %v5155
    %v5157 = vpop.f32.mrb[0].mxu0
    %v5158 = vadd.f32 0.0, %v5157
    %v5159 = vpop.f32.mrb[0].mxu0
    %v5160 = vadd.f32 0.0, %v5159
    %v5161 = vpop.f32.mrb[0].mxu0
    %v5162 = vadd.f32 0.0, %v5161
    %5163 = vdwg.mxu0
    %5164 = vmatprep.subr.bf16.mxu0 %v2885
    %5165 = vmatpush1.bf16.msra.mxu0 %v2884
    %5166 = vmatprep.subr.bf16.mxu0 %v2892
    %5167 = vmatpush1.bf16.msra.mxu0 %v2891
    %5168 = vmatprep.subr.bf16.mxu0 %v2899
    %5169 = vmatpush1.bf16.msra.mxu0 %v2898
    %5170 = vmatprep.subr.bf16.mxu0 %v2906
    %5171 = vmatpush1.bf16.msra.mxu0 %v2905
    %5172 = vmatprep.subr.bf16.mxu0 %v2913
    %5173 = vmatpush1.bf16.msra.mxu0 %v2912
    %5174 = vmatprep.subr.bf16.mxu0 %v2920
    %5175 = vmatpush1.bf16.msra.mxu0 %v2919
    %5176 = vmatprep.subr.bf16.mxu0 %v2927
    %5177 = vmatpush1.bf16.msra.mxu0 %v2926
    %5178 = vmatprep.subr.bf16.mxu0 %v2934
    %5179 = vmatpush1.bf16.msra.mxu0 %v2933
    %5180 = vmatprep.subr.bf16.mxu0 %v2941
    %5181 = vmatpush1.bf16.msra.mxu0 %v2940
    %5182 = vmatprep.subr.bf16.mxu0 %v2948
    %5183 = vmatpush1.bf16.msra.mxu0 %v2947
    %5184 = vmatprep.subr.bf16.mxu0 %v2955
    %5185 = vmatpush1.bf16.msra.mxu0 %v2954
    %5186 = vmatprep.subr.bf16.mxu0 %v2962
    %5187 = vmatpush1.bf16.msra.mxu0 %v2961
    %5188 = vmatprep.subr.bf16.mxu0 %v2969
    %5189 = vmatpush1.bf16.msra.mxu0 %v2968
    %5190 = vmatprep.subr.bf16.mxu0 %v2976
    %5191 = vmatpush1.bf16.msra.mxu0 %v2975
    %5192 = vmatprep.subr.bf16.mxu0 %v2983
    %5193 = vmatpush1.bf16.msra.mxu0 %v2982
    %5194 = vmatprep.subr.bf16.mxu0 %v2990
    %5195 = vmatpush1.bf16.msra.mxu0 %v2989
    %5196 = vmatprep.mubr.bf16.mxu0 %v792
    %5197 = vmatmul.mubr.bf16.gmra.mrb[0].mxu0 %v791
    %v5198 = vpop.f32.mrb[0].mxu0
    %v5199 = vadd.f32 %v5036, %v5198
    %v5200 = vpop.f32.mrb[0].mxu0
    %v5201 = vadd.f32 %v5038, %v5200
    %v5202 = vpop.f32.mrb[0].mxu0
    %v5203 = vadd.f32 %v5040, %v5202
    %v5204 = vpop.f32.mrb[0].mxu0
    %v5205 = vadd.f32 %v5042, %v5204
    %5206 = vmatprep.mubr.bf16.mxu0 %v800
    %5207 = vmatmul.mubr.bf16.gmra.mrb[0].mxu0 %v799
    %v5208 = vpop.f32.mrb[0].mxu0
    %v5209 = vadd.f32 %v5046, %v5208
    %v5210 = vpop.f32.mrb[0].mxu0
    %v5211 = vadd.f32 %v5048, %v5210
    %v5212 = vpop.f32.mrb[0].mxu0
    %v5213 = vadd.f32 %v5050, %v5212
    %v5214 = vpop.f32.mrb[0].mxu0
    %v5215 = vadd.f32 %v5052, %v5214
    %5216 = vmatprep.mubr.bf16.mxu0 %v808
    %5217 = vmatmul.mubr.bf16.gmra.mrb[0].mxu0 %v807
    %v5218 = vpop.f32.mrb[0].mxu0
    %v5219 = vadd.f32 %v5056, %v5218
    %v5220 = vpop.f32.mrb[0].mxu0
    %v5221 = vadd.f32 %v5058, %v5220
    %v5222 = vpop.f32.mrb[0].mxu0
    %v5223 = vadd.f32 %v5060, %v5222
    %v5224 = vpop.f32.mrb[0].mxu0
    %v5225 = vadd.f32 %v5062, %v5224
    %5226 = vmatprep.mubr.bf16.mxu0 %v816
    %5227 = vmatmul.mubr.bf16.gmra.mrb[0].mxu0 %v815
    %v5228 = vpop.f32.mrb[0].mxu0
    %v5229 = vadd.f32 %v5066, %v5228
    %v5230 = vpop.f32.mrb[0].mxu0
    %v5231 = vadd.f32 %v5068, %v5230
    %v5232 = vpop.f32.mrb[0].mxu0
    %v5233 = vadd.f32 %v5070, %v5232
    %v5234 = vpop.f32.mrb[0].mxu0
    %v5235 = vadd.f32 %v5072, %v5234
    %5236 = vmatprep.mubr.bf16.mxu0 %v824
    %5237 = vmatmul.mubr.bf16.gmra.mrb[0].mxu0 %v823
    %v5238 = vpop.f32.mrb[0].mxu0
    %v5239 = vadd.f32 %v5076, %v5238
    %v5240 = vpop.f32.mrb[0].mxu0
    %v5241 = vadd.f32 %v5078, %v5240
    %v5242 = vpop.f32.mrb[0].mxu0
    %v5243 = vadd.f32 %v5080, %v5242
    %v5244 = vpop.f32.mrb[0].mxu0
    %v5245 = vadd.f32 %v5082, %v5244
    %5246 = vmatprep.mubr.bf16.mxu0 %v832
    %5247 = vmatmul.mubr.bf16.gmra.mrb[0].mxu0 %v831
    %v5248 = vpop.f32.mrb[0].mxu0
    %v5249 = vadd.f32 %v5086, %v5248
    %v5250 = vpop.f32.mrb[0].mxu0
    %v5251 = vadd.f32 %v5088, %v5250
    %v5252 = vpop.f32.mrb[0].mxu0
    %v5253 = vadd.f32 %v5090, %v5252
    %v5254 = vpop.f32.mrb[0].mxu0
    %v5255 = vadd.f32 %v5092, %v5254
    %5256 = vmatprep.mubr.bf16.mxu0 %v840
    %5257 = vmatmul.mubr.bf16.gmra.mrb[0].mxu0 %v839
    %v5258 = vpop.f32.mrb[0].mxu0
    %v5259 = vadd.f32 %v5096, %v5258
    %v5260 = vpop.f32.mrb[0].mxu0
    %v5261 = vadd.f32 %v5098, %v5260
    %v5262 = vpop.f32.mrb[0].mxu0
    %v5263 = vadd.f32 %v5100, %v5262
    %v5264 = vpop.f32.mrb[0].mxu0
    %v5265 = vadd.f32 %v5102, %v5264
    %5266 = vmatprep.mubr.bf16.mxu0 %v848
    %5267 = vmatmul.mubr.bf16.gmra.mrb[0].mxu0 %v847
    %v5268 = vpop.f32.mrb[0].mxu0
    %v5269 = vadd.f32 %v5106, %v5268
    %v5270 = vpop.f32.mrb[0].mxu0
    %v5271 = vadd.f32 %v5108, %v5270
    %v5272 = vpop.f32.mrb[0].mxu0
    %v5273 = vadd.f32 %v5110, %v5272
    %v5274 = vpop.f32.mrb[0].mxu0
    %v5275 = vadd.f32 %v5112, %v5274
    %5276 = vmatprep.mubr.bf16.mxu0 %v856
    %5277 = vmatmul.mubr.bf16.gmra.mrb[0].mxu0 %v855
    %v5278 = vpop.f32.mrb[0].mxu0
    %v5279 = vadd.f32 %v5116, %v5278
    %v5280 = vpop.f32.mrb[0].mxu0
    %v5281 = vadd.f32 %v5118, %v5280
    %v5282 = vpop.f32.mrb[0].mxu0
    %v5283 = vadd.f32 %v5120, %v5282
    %v5284 = vpop.f32.mrb[0].mxu0
    %v5285 = vadd.f32 %v5122, %v5284
    %5286 = vmatprep.mubr.bf16.mxu0 %v864
    %5287 = vmatmul.mubr.bf16.gmra.mrb[0].mxu0 %v863
    %v5288 = vpop.f32.mrb[0].mxu0
    %v5289 = vadd.f32 %v5126, %v5288
    %v5290 = vpop.f32.mrb[0].mxu0
    %v5291 = vadd.f32 %v5128, %v5290
    %v5292 = vpop.f32.mrb[0].mxu0
    %v5293 = vadd.f32 %v5130, %v5292
    %v5294 = vpop.f32.mrb[0].mxu0
    %v5295 = vadd.f32 %v5132, %v5294
    %5296 = vmatprep.mubr.bf16.mxu0 %v872
    %5297 = vmatmul.mubr.bf16.gmra.mrb[0].mxu0 %v871
    %v5298 = vpop.f32.mrb[0].mxu0
    %v5299 = vadd.f32 %v5136, %v5298
    %v5300 = vpop.f32.mrb[0].mxu0
    %v5301 = vadd.f32 %v5138, %v5300
    %v5302 = vpop.f32.mrb[0].mxu0
    %v5303 = vadd.f32 %v5140, %v5302
    %v5304 = vpop.f32.mrb[0].mxu0
    %v5305 = vadd.f32 %v5142, %v5304
    %5306 = vmatprep.mubr.bf16.mxu0 %v880
    %5307 = vmatmul.mubr.bf16.gmra.mrb[0].mxu0 %v879
    %v5308 = vpop.f32.mrb[0].mxu0
    %v5309 = vadd.f32 %v5146, %v5308
    %v5310 = vpop.f32.mrb[0].mxu0
    %v5311 = vadd.f32 %v5148, %v5310
    %v5312 = vpop.f32.mrb[0].mxu0
    %v5313 = vadd.f32 %v5150, %v5312
    %v5314 = vpop.f32.mrb[0].mxu0
    %v5315 = vadd.f32 %v5152, %v5314
    %5316 = vmatprep.mubr.bf16.mxu0 %v888
    %5317 = vmatmul.mubr.bf16.gmra.mrb[0].mxu0 %v887
    %v5318 = vpop.f32.mrb[0].mxu0
    %v5319 = vadd.f32 %v5156, %v5318
    %v5320 = vpop.f32.mrb[0].mxu0
    %v5321 = vadd.f32 %v5158, %v5320
    %v5322 = vpop.f32.mrb[0].mxu0
    %v5323 = vadd.f32 %v5160, %v5322
    %v5324 = vpop.f32.mrb[0].mxu0
    %v5325 = vadd.f32 %v5162, %v5324
    %5326 = vdwg.mxu0
    %5327 = vmatprep.subr.bf16.mxu0 %v2997
    %5328 = vmatpush1.bf16.msra.mxu0 %v2996
    %5329 = vmatprep.subr.bf16.mxu0 %v3004
    %5330 = vmatpush1.bf16.msra.mxu0 %v3003
    %5331 = vmatprep.subr.bf16.mxu0 %v3011
    %5332 = vmatpush1.bf16.msra.mxu0 %v3010
    %5333 = vmatprep.subr.bf16.mxu0 %v3018
    %5334 = vmatpush1.bf16.msra.mxu0 %v3017
    %5335 = vmatprep.subr.bf16.mxu0 %v3025
    %5336 = vmatpush1.bf16.msra.mxu0 %v3024
    %5337 = vmatprep.subr.bf16.mxu0 %v3032
    %5338 = vmatpush1.bf16.msra.mxu0 %v3031
    %5339 = vmatprep.subr.bf16.mxu0 %v3039
    %5340 = vmatpush1.bf16.msra.mxu0 %v3038
    %5341 = vmatprep.subr.bf16.mxu0 %v3046
    %5342 = vmatpush1.bf16.msra.mxu0 %v3045
    %5343 = vmatprep.subr.bf16.mxu0 %v3053
    %5344 = vmatpush1.bf16.msra.mxu0 %v3052
    %5345 = vmatprep.subr.bf16.mxu0 %v3060
    %5346 = vmatpush1.bf16.msra.mxu0 %v3059
    %5347 = vmatprep.subr.bf16.mxu0 %v3067
    %5348 = vmatpush1.bf16.msra.mxu0 %v3066
    %5349 = vmatprep.subr.bf16.mxu0 %v3074
    %5350 = vmatpush1.bf16.msra.mxu0 %v3073
    %5351 = vmatprep.subr.bf16.mxu0 %v3081
    %5352 = vmatpush1.bf16.msra.mxu0 %v3080
    %5353 = vmatprep.subr.bf16.mxu0 %v3088
    %5354 = vmatpush1.bf16.msra.mxu0 %v3087
    %5355 = vmatprep.subr.bf16.mxu0 %v3095
    %5356 = vmatpush1.bf16.msra.mxu0 %v3094
    %5357 = vmatprep.subr.bf16.mxu0 %v3102
    %5358 = vmatpush1.bf16.msra.mxu0 %v3101
    %5359 = vmatprep.mubr.bf16.mxu0 %v794
    %5360 = vmatmul.mubr.bf16.gmra.mrb[0].mxu0 %v793
    %v5361 = vpop.f32.mrb[0].mxu0
    %v5362 = vadd.f32 %v5199, %v5361
    %v5363 = vpop.f32.mrb[0].mxu0
    %v5364 = vadd.f32 %v5201, %v5363
    %v5365 = vpop.f32.mrb[0].mxu0
    %v5366 = vadd.f32 %v5203, %v5365
    %v5367 = vpop.f32.mrb[0].mxu0
    %v5368 = vadd.f32 %v5205, %v5367
    %5369 = vmatprep.mubr.bf16.mxu0 %v802
    %5370 = vmatmul.mubr.bf16.gmra.mrb[0].mxu0 %v801
    %v5371 = vpop.f32.mrb[0].mxu0
    %v5372 = vadd.f32 %v5209, %v5371
    %v5373 = vpop.f32.mrb[0].mxu0
    %v5374 = vadd.f32 %v5211, %v5373
    %v5375 = vpop.f32.mrb[0].mxu0
    %v5376 = vadd.f32 %v5213, %v5375
    %v5377 = vpop.f32.mrb[0].mxu0
    %v5378 = vadd.f32 %v5215, %v5377
    %5379 = vmatprep.mubr.bf16.mxu0 %v810
    %5380 = vmatmul.mubr.bf16.gmra.mrb[0].mxu0 %v809
    %v5381 = vpop.f32.mrb[0].mxu0
    %v5382 = vadd.f32 %v5219, %v5381
    %v5383 = vpop.f32.mrb[0].mxu0
    %v5384 = vadd.f32 %v5221, %v5383
    %v5385 = vpop.f32.mrb[0].mxu0
    %v5386 = vadd.f32 %v5223, %v5385
    %v5387 = vpop.f32.mrb[0].mxu0
    %v5388 = vadd.f32 %v5225, %v5387
    %5389 = vmatprep.mubr.bf16.mxu0 %v818
    %5390 = vmatmul.mubr.bf16.gmra.mrb[0].mxu0 %v817
    %v5391 = vpop.f32.mrb[0].mxu0
    %v5392 = vadd.f32 %v5229, %v5391
    %v5393 = vpop.f32.mrb[0].mxu0
    %v5394 = vadd.f32 %v5231, %v5393
    %v5395 = vpop.f32.mrb[0].mxu0
    %v5396 = vadd.f32 %v5233, %v5395
    %v5397 = vpop.f32.mrb[0].mxu0
    %v5398 = vadd.f32 %v5235, %v5397
    %5399 = vmatprep.mubr.bf16.mxu0 %v826
    %5400 = vmatmul.mubr.bf16.gmra.mrb[0].mxu0 %v825
    %v5401 = vpop.f32.mrb[0].mxu0
    %v5402 = vadd.f32 %v5239, %v5401
    %v5403 = vpop.f32.mrb[0].mxu0
    %v5404 = vadd.f32 %v5241, %v5403
    %v5405 = vpop.f32.mrb[0].mxu0
    %v5406 = vadd.f32 %v5243, %v5405
    %v5407 = vpop.f32.mrb[0].mxu0
    %v5408 = vadd.f32 %v5245, %v5407
    %5409 = vmatprep.mubr.bf16.mxu0 %v834
    %5410 = vmatmul.mubr.bf16.gmra.mrb[0].mxu0 %v833
    %v5411 = vpop.f32.mrb[0].mxu0
    %v5412 = vadd.f32 %v5249, %v5411
    %v5413 = vpop.f32.mrb[0].mxu0
    %v5414 = vadd.f32 %v5251, %v5413
    %v5415 = vpop.f32.mrb[0].mxu0
    %v5416 = vadd.f32 %v5253, %v5415
    %v5417 = vpop.f32.mrb[0].mxu0
    %v5418 = vadd.f32 %v5255, %v5417
    %5419 = vmatprep.mubr.bf16.mxu0 %v842
    %5420 = vmatmul.mubr.bf16.gmra.mrb[0].mxu0 %v841
    %v5421 = vpop.f32.mrb[0].mxu0
    %v5422 = vadd.f32 %v5259, %v5421
    %v5423 = vpop.f32.mrb[0].mxu0
    %v5424 = vadd.f32 %v5261, %v5423
    %v5425 = vpop.f32.mrb[0].mxu0
    %v5426 = vadd.f32 %v5263, %v5425
    %v5427 = vpop.f32.mrb[0].mxu0
    %v5428 = vadd.f32 %v5265, %v5427
    %5429 = vmatprep.mubr.bf16.mxu0 %v850
    %5430 = vmatmul.mubr.bf16.gmra.mrb[0].mxu0 %v849
    %v5431 = vpop.f32.mrb[0].mxu0
    %v5432 = vadd.f32 %v5269, %v5431
    %v5433 = vpop.f32.mrb[0].mxu0
    %v5434 = vadd.f32 %v5271, %v5433
    %v5435 = vpop.f32.mrb[0].mxu0
    %v5436 = vadd.f32 %v5273, %v5435
    %v5437 = vpop.f32.mrb[0].mxu0
    %v5438 = vadd.f32 %v5275, %v5437
    %5439 = vmatprep.mubr.bf16.mxu0 %v858
    %5440 = vmatmul.mubr.bf16.gmra.mrb[0].mxu0 %v857
    %v5441 = vpop.f32.mrb[0].mxu0
    %v5442 = vadd.f32 %v5279, %v5441
    %v5443 = vpop.f32.mrb[0].mxu0
    %v5444 = vadd.f32 %v5281, %v5443
    %v5445 = vpop.f32.mrb[0].mxu0
    %v5446 = vadd.f32 %v5283, %v5445
    %v5447 = vpop.f32.mrb[0].mxu0
    %v5448 = vadd.f32 %v5285, %v5447
    %5449 = vmatprep.mubr.bf16.mxu0 %v866
    %5450 = vmatmul.mubr.bf16.gmra.mrb[0].mxu0 %v865
    %v5451 = vpop.f32.mrb[0].mxu0
    %v5452 = vadd.f32 %v5289, %v5451
    %v5453 = vpop.f32.mrb[0].mxu0
    %v5454 = vadd.f32 %v5291, %v5453
    %v5455 = vpop.f32.mrb[0].mxu0
    %v5456 = vadd.f32 %v5293, %v5455
    %v5457 = vpop.f32.mrb[0].mxu0
    %v5458 = vadd.f32 %v5295, %v5457
    %5459 = vmatprep.mubr.bf16.mxu0 %v874
    %5460 = vmatmul.mubr.bf16.gmra.mrb[0].mxu0 %v873
    %v5461 = vpop.f32.mrb[0].mxu0
    %v5462 = vadd.f32 %v5299, %v5461
    %v5463 = vpop.f32.mrb[0].mxu0
    %v5464 = vadd.f32 %v5301, %v5463
    %v5465 = vpop.f32.mrb[0].mxu0
    %v5466 = vadd.f32 %v5303, %v5465
    %v5467 = vpop.f32.mrb[0].mxu0
    %v5468 = vadd.f32 %v5305, %v5467
    %5469 = vmatprep.mubr.bf16.mxu0 %v882
    %5470 = vmatmul.mubr.bf16.gmra.mrb[0].mxu0 %v881
    %v5471 = vpop.f32.mrb[0].mxu0
    %v5472 = vadd.f32 %v5309, %v5471
    %v5473 = vpop.f32.mrb[0].mxu0
    %v5474 = vadd.f32 %v5311, %v5473
    %v5475 = vpop.f32.mrb[0].mxu0
    %v5476 = vadd.f32 %v5313, %v5475
    %v5477 = vpop.f32.mrb[0].mxu0
    %v5478 = vadd.f32 %v5315, %v5477
    %5479 = vmatprep.mubr.bf16.mxu0 %v890
    %5480 = vmatmul.mubr.bf16.gmra.mrb[0].mxu0 %v889
    %v5481 = vpop.f32.mrb[0].mxu0
    %v5482 = vadd.f32 %v5319, %v5481
    %v5483 = vpop.f32.mrb[0].mxu0
    %v5484 = vadd.f32 %v5321, %v5483
    %v5485 = vpop.f32.mrb[0].mxu0
    %v5486 = vadd.f32 %v5323, %v5485
    %v5487 = vpop.f32.mrb[0].mxu0
    %v5488 = vadd.f32 %v5325, %v5487
    %5489 = vdwg.mxu0
    %5490 = vmatprep.subr.bf16.mxu0 %v3109
    %5491 = vmatpush1.bf16.msra.mxu0 %v3108
    %5492 = vmatprep.subr.bf16.mxu0 %v3116
    %5493 = vmatpush1.bf16.msra.mxu0 %v3115
    %5494 = vmatprep.subr.bf16.mxu0 %v3123
    %5495 = vmatpush1.bf16.msra.mxu0 %v3122
    %5496 = vmatprep.subr.bf16.mxu0 %v3130
    %5497 = vmatpush1.bf16.msra.mxu0 %v3129
    %5498 = vmatprep.subr.bf16.mxu0 %v3137
    %5499 = vmatpush1.bf16.msra.mxu0 %v3136
    %5500 = vmatprep.subr.bf16.mxu0 %v3144
    %5501 = vmatpush1.bf16.msra.mxu0 %v3143
    %5502 = vmatprep.subr.bf16.mxu0 %v3151
    %5503 = vmatpush1.bf16.msra.mxu0 %v3150
    %5504 = vmatprep.subr.bf16.mxu0 %v3158
    %5505 = vmatpush1.bf16.msra.mxu0 %v3157
    %5506 = vmatprep.subr.bf16.mxu0 %v3165
    %5507 = vmatpush1.bf16.msra.mxu0 %v3164
    %5508 = vmatprep.subr.bf16.mxu0 %v3172
    %5509 = vmatpush1.bf16.msra.mxu0 %v3171
    %5510 = vmatprep.subr.bf16.mxu0 %v3179
    %5511 = vmatpush1.bf16.msra.mxu0 %v3178
    %5512 = vmatprep.subr.bf16.mxu0 %v3186
    %5513 = vmatpush1.bf16.msra.mxu0 %v3185
    %5514 = vmatprep.subr.bf16.mxu0 %v3193
    %5515 = vmatpush1.bf16.msra.mxu0 %v3192
    %5516 = vmatprep.subr.bf16.mxu0 %v3200
    %5517 = vmatpush1.bf16.msra.mxu0 %v3199
    %5518 = vmatprep.subr.bf16.mxu0 %v3700
    %5519 = vmatpush1.bf16.msra.mxu0 %v3697
    %5520 = vmatprep.subr.bf16.mxu0 0
    %5521 = vmatpush1.bf16.msra.mxu0 0
    %5522 = vmatprep.mubr.bf16.mxu0 %v3645
    %5523 = vmatmul.mubr.bf16.gmra.mrb[0].mxu0 %v795
    %v5524 = vpop.f32.mrb[0].mxu0
    %v5525 = vadd.f32 %v5362, %v5524
    %v5526 = vpop.f32.mrb[0].mxu0
    %v5527 = vadd.f32 %v5364, %v5526
    %v5528 = vpop.f32.mrb[0].mxu0
    %v5529 = vadd.f32 %v5366, %v5528
    %v5530 = vpop.f32.mrb[0].mxu0
    %v5531 = vadd.f32 %v5368, %v5530
    %5532 = vmatprep.mubr.bf16.mxu0 %v3648
    %5533 = vmatmul.mubr.bf16.gmra.mrb[0].mxu0 %v803
    %v5534 = vpop.f32.mrb[0].mxu0
    %v5535 = vadd.f32 %v5372, %v5534
    %v5536 = vpop.f32.mrb[0].mxu0
    %v5537 = vadd.f32 %v5374, %v5536
    %v5538 = vpop.f32.mrb[0].mxu0
    %v5539 = vadd.f32 %v5376, %v5538
    %v5540 = vpop.f32.mrb[0].mxu0
    %v5541 = vadd.f32 %v5378, %v5540
    %5542 = vmatprep.mubr.bf16.mxu0 %v3651
    %5543 = vmatmul.mubr.bf16.gmra.mrb[0].mxu0 %v811
    %v5544 = vpop.f32.mrb[0].mxu0
    %v5545 = vadd.f32 %v5382, %v5544
    %v5546 = vpop.f32.mrb[0].mxu0
    %v5547 = vadd.f32 %v5384, %v5546
    %v5548 = vpop.f32.mrb[0].mxu0
    %v5549 = vadd.f32 %v5386, %v5548
    %v5550 = vpop.f32.mrb[0].mxu0
    %v5551 = vadd.f32 %v5388, %v5550
    %5552 = vmatprep.mubr.bf16.mxu0 %v3654
    %5553 = vmatmul.mubr.bf16.gmra.mrb[0].mxu0 %v819
    %v5554 = vpop.f32.mrb[0].mxu0
    %v5555 = vadd.f32 %v5392, %v5554
    %v5556 = vpop.f32.mrb[0].mxu0
    %v5557 = vadd.f32 %v5394, %v5556
    %v5558 = vpop.f32.mrb[0].mxu0
    %v5559 = vadd.f32 %v5396, %v5558
    %v5560 = vpop.f32.mrb[0].mxu0
    %v5561 = vadd.f32 %v5398, %v5560
    %5562 = vmatprep.mubr.bf16.mxu0 %v3657
    %5563 = vmatmul.mubr.bf16.gmra.mrb[0].mxu0 %v827
    %v5564 = vpop.f32.mrb[0].mxu0
    %v5565 = vadd.f32 %v5402, %v5564
    %v5566 = vpop.f32.mrb[0].mxu0
    %v5567 = vadd.f32 %v5404, %v5566
    %v5568 = vpop.f32.mrb[0].mxu0
    %v5569 = vadd.f32 %v5406, %v5568
    %v5570 = vpop.f32.mrb[0].mxu0
    %v5571 = vadd.f32 %v5408, %v5570
    %5572 = vmatprep.mubr.bf16.mxu0 %v3660
    %5573 = vmatmul.mubr.bf16.gmra.mrb[0].mxu0 %v835
    %v5574 = vpop.f32.mrb[0].mxu0
    %v5575 = vadd.f32 %v5412, %v5574
    %v5576 = vpop.f32.mrb[0].mxu0
    %v5577 = vadd.f32 %v5414, %v5576
    %v5578 = vpop.f32.mrb[0].mxu0
    %v5579 = vadd.f32 %v5416, %v5578
    %v5580 = vpop.f32.mrb[0].mxu0
    %v5581 = vadd.f32 %v5418, %v5580
    %5582 = vmatprep.mubr.bf16.mxu0 %v3663
    %5583 = vmatmul.mubr.bf16.gmra.mrb[0].mxu0 %v843
    %v5584 = vpop.f32.mrb[0].mxu0
    %v5585 = vadd.f32 %v5422, %v5584
    %v5586 = vpop.f32.mrb[0].mxu0
    %v5587 = vadd.f32 %v5424, %v5586
    %v5588 = vpop.f32.mrb[0].mxu0
    %v5589 = vadd.f32 %v5426, %v5588
    %v5590 = vpop.f32.mrb[0].mxu0
    %v5591 = vadd.f32 %v5428, %v5590
    %5592 = vmatprep.mubr.bf16.mxu0 %v3666
    %5593 = vmatmul.mubr.bf16.gmra.mrb[0].mxu0 %v851
    %v5594 = vpop.f32.mrb[0].mxu0
    %v5595 = vadd.f32 %v5432, %v5594
    %v5596 = vpop.f32.mrb[0].mxu0
    %v5597 = vadd.f32 %v5434, %v5596
    %v5598 = vpop.f32.mrb[0].mxu0
    %v5599 = vadd.f32 %v5436, %v5598
    %v5600 = vpop.f32.mrb[0].mxu0
    %v5601 = vadd.f32 %v5438, %v5600
    %5602 = vmatprep.mubr.bf16.mxu0 %v3669
    %5603 = vmatmul.mubr.bf16.gmra.mrb[0].mxu0 %v859
    %v5604 = vpop.f32.mrb[0].mxu0
    %v5605 = vadd.f32 %v5442, %v5604
    %v5606 = vpop.f32.mrb[0].mxu0
    %v5607 = vadd.f32 %v5444, %v5606
    %v5608 = vpop.f32.mrb[0].mxu0
    %v5609 = vadd.f32 %v5446, %v5608
    %v5610 = vpop.f32.mrb[0].mxu0
    %v5611 = vadd.f32 %v5448, %v5610
    %5612 = vmatprep.mubr.bf16.mxu0 %v3672
    %5613 = vmatmul.mubr.bf16.gmra.mrb[0].mxu0 %v867
    %v5614 = vpop.f32.mrb[0].mxu0
    %v5615 = vadd.f32 %v5452, %v5614
    %v5616 = vpop.f32.mrb[0].mxu0
    %v5617 = vadd.f32 %v5454, %v5616
    %v5618 = vpop.f32.mrb[0].mxu0
    %v5619 = vadd.f32 %v5456, %v5618
    %v5620 = vpop.f32.mrb[0].mxu0
    %v5621 = vadd.f32 %v5458, %v5620
    %5622 = vmatprep.mubr.bf16.mxu0 %v3675
    %5623 = vmatmul.mubr.bf16.gmra.mrb[0].mxu0 %v875
    %v5624 = vpop.f32.mrb[0].mxu0
    %v5625 = vadd.f32 %v5462, %v5624
    %v5626 = vpop.f32.mrb[0].mxu0
    %v5627 = vadd.f32 %v5464, %v5626
    %v5628 = vpop.f32.mrb[0].mxu0
    %v5629 = vadd.f32 %v5466, %v5628
    %v5630 = vpop.f32.mrb[0].mxu0
    %v5631 = vadd.f32 %v5468, %v5630
    %5632 = vmatprep.mubr.bf16.mxu0 %v3678
    %5633 = vmatmul.mubr.bf16.gmra.mrb[0].mxu0 %v883
    %v5634 = vpop.f32.mrb[0].mxu0
    %v5635 = vadd.f32 %v5472, %v5634
    %v5636 = vpop.f32.mrb[0].mxu0
    %v5637 = vadd.f32 %v5474, %v5636
    %v5638 = vpop.f32.mrb[0].mxu0
    %v5639 = vadd.f32 %v5476, %v5638
    %v5640 = vpop.f32.mrb[0].mxu0
    %v5641 = vadd.f32 %v5478, %v5640
    %5642 = vmatprep.mubr.bf16.mxu0 %v3681
    %5643 = vmatmul.mubr.bf16.gmra.mrb[0].mxu0 %v891
    %v5644 = vpop.f32.mrb[0].mxu0
    %v5645 = vadd.f32 %v5482, %v5644
    %v5646 = vpop.f32.mrb[0].mxu0
    %v5647 = vadd.f32 %v5484, %v5646
    %v5648 = vpop.f32.mrb[0].mxu0
    %v5649 = vadd.f32 %v5486, %v5648
    %v5650 = vpop.f32.mrb[0].mxu0
    %v5651 = vadd.f32 %v5488, %v5650
    %5652 = vdwg.mxu0
    %5653 = vmatprep.subr.bf16.mxu0 0
    %5654 = vmatpush1.bf16.msra.mxu0 %v2774
    %5655 = vmatprep.subr.bf16.mxu0 0
    %5656 = vmatpush1.bf16.msra.mxu0 %v2781
    %5657 = vmatprep.subr.bf16.mxu0 0
    %5658 = vmatpush1.bf16.msra.mxu0 %v2788
    %5659 = vmatprep.subr.bf16.mxu0 0
    %5660 = vmatpush1.bf16.msra.mxu0 %v2795
    %5661 = vmatprep.subr.bf16.mxu0 0
    %5662 = vmatpush1.bf16.msra.mxu0 %v2802
    %5663 = vmatprep.subr.bf16.mxu0 0
    %5664 = vmatpush1.bf16.msra.mxu0 %v2809
    %5665 = vmatprep.subr.bf16.mxu0 0
    %5666 = vmatpush1.bf16.msra.mxu0 %v2816
    %5667 = vmatprep.subr.bf16.mxu0 0
    %5668 = vmatpush1.bf16.msra.mxu0 %v2823
    %5669 = vmatprep.subr.bf16.mxu0 0
    %5670 = vmatpush1.bf16.msra.mxu0 %v2830
    %5671 = vmatprep.subr.bf16.mxu0 0
    %5672 = vmatpush1.bf16.msra.mxu0 %v2837
    %5673 = vmatprep.subr.bf16.mxu0 0
    %5674 = vmatpush1.bf16.msra.mxu0 %v2844
    %5675 = vmatprep.subr.bf16.mxu0 0
    %5676 = vmatpush1.bf16.msra.mxu0 %v2851
    %5677 = vmatprep.subr.bf16.mxu0 0
    %5678 = vmatpush1.bf16.msra.mxu0 %v2858
    %5679 = vmatprep.subr.bf16.mxu0 0
    %5680 = vmatpush1.bf16.msra.mxu0 %v2865
    %5681 = vmatprep.subr.bf16.mxu0 0
    %5682 = vmatpush1.bf16.msra.mxu0 %v2872
    %5683 = vmatprep.subr.bf16.mxu0 0
    %5684 = vmatpush1.bf16.msra.mxu0 %v2879
    %5685 = vmatprep.mubr.bf16.mxu0 %v790
    %5686 = vmatmul.mubr.bf16.gmra.mrb[0].mxu0 %v789
    %v5687 = vpop.f32.mrb[0].mxu0
    %v5688 = vadd.f32 0.0, %v5687
    %v5689 = vpop.f32.mrb[0].mxu0
    %v5690 = vpop.f32.mrb[0].mxu0
    %v5691 = vadd.f32 0.0, %v5690
    %v5692 = vpop.f32.mrb[0].mxu0
    %5693 = vmatprep.mubr.bf16.mxu0 %v798
    %5694 = vmatmul.mubr.bf16.gmra.mrb[0].mxu0 %v797
    %v5695 = vpop.f32.mrb[0].mxu0
    %v5696 = vadd.f32 0.0, %v5695
    %v5697 = vpop.f32.mrb[0].mxu0
    %v5698 = vpop.f32.mrb[0].mxu0
    %v5699 = vadd.f32 0.0, %v5698
    %v5700 = vpop.f32.mrb[0].mxu0
    %5701 = vmatprep.mubr.bf16.mxu0 %v806
    %5702 = vmatmul.mubr.bf16.gmra.mrb[0].mxu0 %v805
    %v5703 = vpop.f32.mrb[0].mxu0
    %v5704 = vadd.f32 0.0, %v5703
    %v5705 = vpop.f32.mrb[0].mxu0
    %v5706 = vpop.f32.mrb[0].mxu0
    %v5707 = vadd.f32 0.0, %v5706
    %v5708 = vpop.f32.mrb[0].mxu0
    %5709 = vmatprep.mubr.bf16.mxu0 %v814
    %5710 = vmatmul.mubr.bf16.gmra.mrb[0].mxu0 %v813
    %v5711 = vpop.f32.mrb[0].mxu0
    %v5712 = vadd.f32 0.0, %v5711
    %v5713 = vpop.f32.mrb[0].mxu0
    %v5714 = vpop.f32.mrb[0].mxu0
    %v5715 = vadd.f32 0.0, %v5714
    %v5716 = vpop.f32.mrb[0].mxu0
    %5717 = vmatprep.mubr.bf16.mxu0 %v822
    %5718 = vmatmul.mubr.bf16.gmra.mrb[0].mxu0 %v821
    %v5719 = vpop.f32.mrb[0].mxu0
    %v5720 = vadd.f32 0.0, %v5719
    %v5721 = vpop.f32.mrb[0].mxu0
    %v5722 = vpop.f32.mrb[0].mxu0
    %v5723 = vadd.f32 0.0, %v5722
    %v5724 = vpop.f32.mrb[0].mxu0
    %5725 = vmatprep.mubr.bf16.mxu0 %v830
    %5726 = vmatmul.mubr.bf16.gmra.mrb[0].mxu0 %v829
    %v5727 = vpop.f32.mrb[0].mxu0
    %v5728 = vadd.f32 0.0, %v5727
    %v5729 = vpop.f32.mrb[0].mxu0
    %v5730 = vpop.f32.mrb[0].mxu0
    %v5731 = vadd.f32 0.0, %v5730
    %v5732 = vpop.f32.mrb[0].mxu0
    %5733 = vmatprep.mubr.bf16.mxu0 %v838
    %5734 = vmatmul.mubr.bf16.gmra.mrb[0].mxu0 %v837
    %v5735 = vpop.f32.mrb[0].mxu0
    %v5736 = vadd.f32 0.0, %v5735
    %v5737 = vpop.f32.mrb[0].mxu0
    %v5738 = vpop.f32.mrb[0].mxu0
    %v5739 = vadd.f32 0.0, %v5738
    %v5740 = vpop.f32.mrb[0].mxu0
    %5741 = vmatprep.mubr.bf16.mxu0 %v846
    %5742 = vmatmul.mubr.bf16.gmra.mrb[0].mxu0 %v845
    %v5743 = vpop.f32.mrb[0].mxu0
    %v5744 = vadd.f32 0.0, %v5743
    %v5745 = vpop.f32.mrb[0].mxu0
    %v5746 = vpop.f32.mrb[0].mxu0
    %v5747 = vadd.f32 0.0, %v5746
    %v5748 = vpop.f32.mrb[0].mxu0
    %5749 = vmatprep.mubr.bf16.mxu0 %v854
    %5750 = vmatmul.mubr.bf16.gmra.mrb[0].mxu0 %v853
    %v5751 = vpop.f32.mrb[0].mxu0
    %v5752 = vadd.f32 0.0, %v5751
    %v5753 = vpop.f32.mrb[0].mxu0
    %v5754 = vpop.f32.mrb[0].mxu0
    %v5755 = vadd.f32 0.0, %v5754
    %v5756 = vpop.f32.mrb[0].mxu0
    %5757 = vmatprep.mubr.bf16.mxu0 %v862
    %5758 = vmatmul.mubr.bf16.gmra.mrb[0].mxu0 %v861
    %v5759 = vpop.f32.mrb[0].mxu0
    %v5760 = vadd.f32 0.0, %v5759
    %v5761 = vpop.f32.mrb[0].mxu0
    %v5762 = vpop.f32.mrb[0].mxu0
    %v5763 = vadd.f32 0.0, %v5762
    %v5764 = vpop.f32.mrb[0].mxu0
    %5765 = vmatprep.mubr.bf16.mxu0 %v870
    %5766 = vmatmul.mubr.bf16.gmra.mrb[0].mxu0 %v869
    %v5767 = vpop.f32.mrb[0].mxu0
    %v5768 = vadd.f32 0.0, %v5767
    %v5769 = vpop.f32.mrb[0].mxu0
    %v5770 = vpop.f32.mrb[0].mxu0
    %v5771 = vadd.f32 0.0, %v5770
    %v5772 = vpop.f32.mrb[0].mxu0
    %5773 = vmatprep.mubr.bf16.mxu0 %v878
    %5774 = vmatmul.mubr.bf16.gmra.mrb[0].mxu0 %v877
    %v5775 = vpop.f32.mrb[0].mxu0
    %v5776 = vadd.f32 0.0, %v5775
    %v5777 = vpop.f32.mrb[0].mxu0
    %v5778 = vpop.f32.mrb[0].mxu0
    %v5779 = vadd.f32 0.0, %v5778
    %v5780 = vpop.f32.mrb[0].mxu0
    %5781 = vmatprep.mubr.bf16.mxu0 %v886
    %5782 = vmatmul.mubr.bf16.gmra.mrb[0].mxu0 %v885
    %v5783 = vpop.f32.mrb[0].mxu0
    %v5784 = vadd.f32 0.0, %v5783
    %v5785 = vpop.f32.mrb[0].mxu0
    %v5786 = vpop.f32.mrb[0].mxu0
    %v5787 = vadd.f32 0.0, %v5786
    %v5788 = vpop.f32.mrb[0].mxu0
    %5789 = vdwg.mxu0
    %5790 = vmatprep.subr.bf16.mxu0 0
    %5791 = vmatpush1.bf16.msra.mxu0 %v2886
    %5792 = vmatprep.subr.bf16.mxu0 0
    %5793 = vmatpush1.bf16.msra.mxu0 %v2893
    %5794 = vmatprep.subr.bf16.mxu0 0
    %5795 = vmatpush1.bf16.msra.mxu0 %v2900
    %5796 = vmatprep.subr.bf16.mxu0 0
    %5797 = vmatpush1.bf16.msra.mxu0 %v2907
    %5798 = vmatprep.subr.bf16.mxu0 0
    %5799 = vmatpush1.bf16.msra.mxu0 %v2914
    %5800 = vmatprep.subr.bf16.mxu0 0
    %5801 = vmatpush1.bf16.msra.mxu0 %v2921
    %5802 = vmatprep.subr.bf16.mxu0 0
    %5803 = vmatpush1.bf16.msra.mxu0 %v2928
    %5804 = vmatprep.subr.bf16.mxu0 0
    %5805 = vmatpush1.bf16.msra.mxu0 %v2935
    %5806 = vmatprep.subr.bf16.mxu0 0
    %5807 = vmatpush1.bf16.msra.mxu0 %v2942
    %5808 = vmatprep.subr.bf16.mxu0 0
    %5809 = vmatpush1.bf16.msra.mxu0 %v2949
    %5810 = vmatprep.subr.bf16.mxu0 0
    %5811 = vmatpush1.bf16.msra.mxu0 %v2956
    %5812 = vmatprep.subr.bf16.mxu0 0
    %5813 = vmatpush1.bf16.msra.mxu0 %v2963
    %5814 = vmatprep.subr.bf16.mxu0 0
    %5815 = vmatpush1.bf16.msra.mxu0 %v2970
    %5816 = vmatprep.subr.bf16.mxu0 0
    %5817 = vmatpush1.bf16.msra.mxu0 %v2977
    %5818 = vmatprep.subr.bf16.mxu0 0
    %5819 = vmatpush1.bf16.msra.mxu0 %v2984
    %5820 = vmatprep.subr.bf16.mxu0 0
    %5821 = vmatpush1.bf16.msra.mxu0 %v2991
    %5822 = vmatprep.mubr.bf16.mxu0 %v792
    %5823 = vmatmul.mubr.bf16.gmra.mrb[0].mxu0 %v791
    %v5824 = vpop.f32.mrb[0].mxu0
    %v5825 = vadd.f32 %v5688, %v5824
    %v5826 = vpop.f32.mrb[0].mxu0
    %v5827 = vpop.f32.mrb[0].mxu0
    %v5828 = vadd.f32 %v5691, %v5827
    %v5829 = vpop.f32.mrb[0].mxu0
    %5830 = vmatprep.mubr.bf16.mxu0 %v800
    %5831 = vmatmul.mubr.bf16.gmra.mrb[0].mxu0 %v799
    %v5832 = vpop.f32.mrb[0].mxu0
    %v5833 = vadd.f32 %v5696, %v5832
    %v5834 = vpop.f32.mrb[0].mxu0
    %v5835 = vpop.f32.mrb[0].mxu0
    %v5836 = vadd.f32 %v5699, %v5835
    %v5837 = vpop.f32.mrb[0].mxu0
    %5838 = vmatprep.mubr.bf16.mxu0 %v808
    %5839 = vmatmul.mubr.bf16.gmra.mrb[0].mxu0 %v807
    %v5840 = vpop.f32.mrb[0].mxu0
    %v5841 = vadd.f32 %v5704, %v5840
    %v5842 = vpop.f32.mrb[0].mxu0
    %v5843 = vpop.f32.mrb[0].mxu0
    %v5844 = vadd.f32 %v5707, %v5843
    %v5845 = vpop.f32.mrb[0].mxu0
    %5846 = vmatprep.mubr.bf16.mxu0 %v816
    %5847 = vmatmul.mubr.bf16.gmra.mrb[0].mxu0 %v815
    %v5848 = vpop.f32.mrb[0].mxu0
    %v5849 = vadd.f32 %v5712, %v5848
    %v5850 = vpop.f32.mrb[0].mxu0
    %v5851 = vpop.f32.mrb[0].mxu0
    %v5852 = vadd.f32 %v5715, %v5851
    %v5853 = vpop.f32.mrb[0].mxu0
    %5854 = vmatprep.mubr.bf16.mxu0 %v824
    %5855 = vmatmul.mubr.bf16.gmra.mrb[0].mxu0 %v823
    %v5856 = vpop.f32.mrb[0].mxu0
    %v5857 = vadd.f32 %v5720, %v5856
    %v5858 = vpop.f32.mrb[0].mxu0
    %v5859 = vpop.f32.mrb[0].mxu0
    %v5860 = vadd.f32 %v5723, %v5859
    %v5861 = vpop.f32.mrb[0].mxu0
    %5862 = vmatprep.mubr.bf16.mxu0 %v832
    %5863 = vmatmul.mubr.bf16.gmra.mrb[0].mxu0 %v831
    %v5864 = vpop.f32.mrb[0].mxu0
    %v5865 = vadd.f32 %v5728, %v5864
    %v5866 = vpop.f32.mrb[0].mxu0
    %v5867 = vpop.f32.mrb[0].mxu0
    %v5868 = vadd.f32 %v5731, %v5867
    %v5869 = vpop.f32.mrb[0].mxu0
    %5870 = vmatprep.mubr.bf16.mxu0 %v840
    %5871 = vmatmul.mubr.bf16.gmra.mrb[0].mxu0 %v839
    %v5872 = vpop.f32.mrb[0].mxu0
    %v5873 = vadd.f32 %v5736, %v5872
    %v5874 = vpop.f32.mrb[0].mxu0
    %v5875 = vpop.f32.mrb[0].mxu0
    %v5876 = vadd.f32 %v5739, %v5875
    %v5877 = vpop.f32.mrb[0].mxu0
    %5878 = vmatprep.mubr.bf16.mxu0 %v848
    %5879 = vmatmul.mubr.bf16.gmra.mrb[0].mxu0 %v847
    %v5880 = vpop.f32.mrb[0].mxu0
    %v5881 = vadd.f32 %v5744, %v5880
    %v5882 = vpop.f32.mrb[0].mxu0
    %v5883 = vpop.f32.mrb[0].mxu0
    %v5884 = vadd.f32 %v5747, %v5883
    %v5885 = vpop.f32.mrb[0].mxu0
    %5886 = vmatprep.mubr.bf16.mxu0 %v856
    %5887 = vmatmul.mubr.bf16.gmra.mrb[0].mxu0 %v855
    %v5888 = vpop.f32.mrb[0].mxu0
    %v5889 = vadd.f32 %v5752, %v5888
    %v5890 = vpop.f32.mrb[0].mxu0
    %v5891 = vpop.f32.mrb[0].mxu0
    %v5892 = vadd.f32 %v5755, %v5891
    %v5893 = vpop.f32.mrb[0].mxu0
    %5894 = vmatprep.mubr.bf16.mxu0 %v864
    %5895 = vmatmul.mubr.bf16.gmra.mrb[0].mxu0 %v863
    %v5896 = vpop.f32.mrb[0].mxu0
    %v5897 = vadd.f32 %v5760, %v5896
    %v5898 = vpop.f32.mrb[0].mxu0
    %v5899 = vpop.f32.mrb[0].mxu0
    %v5900 = vadd.f32 %v5763, %v5899
    %v5901 = vpop.f32.mrb[0].mxu0
    %5902 = vmatprep.mubr.bf16.mxu0 %v872
    %5903 = vmatmul.mubr.bf16.gmra.mrb[0].mxu0 %v871
    %v5904 = vpop.f32.mrb[0].mxu0
    %v5905 = vadd.f32 %v5768, %v5904
    %v5906 = vpop.f32.mrb[0].mxu0
    %v5907 = vpop.f32.mrb[0].mxu0
    %v5908 = vadd.f32 %v5771, %v5907
    %v5909 = vpop.f32.mrb[0].mxu0
    %5910 = vmatprep.mubr.bf16.mxu0 %v880
    %5911 = vmatmul.mubr.bf16.gmra.mrb[0].mxu0 %v879
    %v5912 = vpop.f32.mrb[0].mxu0
    %v5913 = vadd.f32 %v5776, %v5912
    %v5914 = vpop.f32.mrb[0].mxu0
    %v5915 = vpop.f32.mrb[0].mxu0
    %v5916 = vadd.f32 %v5779, %v5915
    %v5917 = vpop.f32.mrb[0].mxu0
    %5918 = vmatprep.mubr.bf16.mxu0 %v888
    %5919 = vmatmul.mubr.bf16.gmra.mrb[0].mxu0 %v887
    %v5920 = vpop.f32.mrb[0].mxu0
    %v5921 = vadd.f32 %v5784, %v5920
    %v5922 = vpop.f32.mrb[0].mxu0
    %v5923 = vpop.f32.mrb[0].mxu0
    %v5924 = vadd.f32 %v5787, %v5923
    %v5925 = vpop.f32.mrb[0].mxu0
    %5926 = vdwg.mxu0
    %5927 = vmatprep.subr.bf16.mxu0 0
    %5928 = vmatpush1.bf16.msra.mxu0 %v2998
    %5929 = vmatprep.subr.bf16.mxu0 0
    %5930 = vmatpush1.bf16.msra.mxu0 %v3005
    %5931 = vmatprep.subr.bf16.mxu0 0
    %5932 = vmatpush1.bf16.msra.mxu0 %v3012
    %5933 = vmatprep.subr.bf16.mxu0 0
    %5934 = vmatpush1.bf16.msra.mxu0 %v3019
    %5935 = vmatprep.subr.bf16.mxu0 0
    %5936 = vmatpush1.bf16.msra.mxu0 %v3026
    %5937 = vmatprep.subr.bf16.mxu0 0
    %5938 = vmatpush1.bf16.msra.mxu0 %v3033
    %5939 = vmatprep.subr.bf16.mxu0 0
    %5940 = vmatpush1.bf16.msra.mxu0 %v3040
    %5941 = vmatprep.subr.bf16.mxu0 0
    %5942 = vmatpush1.bf16.msra.mxu0 %v3047
    %5943 = vmatprep.subr.bf16.mxu0 0
    %5944 = vmatpush1.bf16.msra.mxu0 %v3054
    %5945 = vmatprep.subr.bf16.mxu0 0
    %5946 = vmatpush1.bf16.msra.mxu0 %v3061
    %5947 = vmatprep.subr.bf16.mxu0 0
    %5948 = vmatpush1.bf16.msra.mxu0 %v3068
    %5949 = vmatprep.subr.bf16.mxu0 0
    %5950 = vmatpush1.bf16.msra.mxu0 %v3075
    %5951 = vmatprep.subr.bf16.mxu0 0
    %5952 = vmatpush1.bf16.msra.mxu0 %v3082
    %5953 = vmatprep.subr.bf16.mxu0 0
    %5954 = vmatpush1.bf16.msra.mxu0 %v3089
    %5955 = vmatprep.subr.bf16.mxu0 0
    %5956 = vmatpush1.bf16.msra.mxu0 %v3096
    %5957 = vmatprep.subr.bf16.mxu0 0
    %5958 = vmatpush1.bf16.msra.mxu0 %v3103
    %5959 = vmatprep.mubr.bf16.mxu0 %v794
    %5960 = vmatmul.mubr.bf16.gmra.mrb[0].mxu0 %v793
    %v5961 = vpop.f32.mrb[0].mxu0
    %v5962 = vadd.f32 %v5825, %v5961
    %v5963 = vpop.f32.mrb[0].mxu0
    %v5964 = vpop.f32.mrb[0].mxu0
    %v5965 = vadd.f32 %v5828, %v5964
    %v5966 = vpop.f32.mrb[0].mxu0
    %5967 = vmatprep.mubr.bf16.mxu0 %v802
    %5968 = vmatmul.mubr.bf16.gmra.mrb[0].mxu0 %v801
    %v5969 = vpop.f32.mrb[0].mxu0
    %v5970 = vadd.f32 %v5833, %v5969
    %v5971 = vpop.f32.mrb[0].mxu0
    %v5972 = vpop.f32.mrb[0].mxu0
    %v5973 = vadd.f32 %v5836, %v5972
    %v5974 = vpop.f32.mrb[0].mxu0
    %5975 = vmatprep.mubr.bf16.mxu0 %v810
    %5976 = vmatmul.mubr.bf16.gmra.mrb[0].mxu0 %v809
    %v5977 = vpop.f32.mrb[0].mxu0
    %v5978 = vadd.f32 %v5841, %v5977
    %v5979 = vpop.f32.mrb[0].mxu0
    %v5980 = vpop.f32.mrb[0].mxu0
    %v5981 = vadd.f32 %v5844, %v5980
    %v5982 = vpop.f32.mrb[0].mxu0
    %5983 = vmatprep.mubr.bf16.mxu0 %v818
    %5984 = vmatmul.mubr.bf16.gmra.mrb[0].mxu0 %v817
    %v5985 = vpop.f32.mrb[0].mxu0
    %v5986 = vadd.f32 %v5849, %v5985
    %v5987 = vpop.f32.mrb[0].mxu0
    %v5988 = vpop.f32.mrb[0].mxu0
    %v5989 = vadd.f32 %v5852, %v5988
    %v5990 = vpop.f32.mrb[0].mxu0
    %5991 = vmatprep.mubr.bf16.mxu0 %v826
    %5992 = vmatmul.mubr.bf16.gmra.mrb[0].mxu0 %v825
    %v5993 = vpop.f32.mrb[0].mxu0
    %v5994 = vadd.f32 %v5857, %v5993
    %v5995 = vpop.f32.mrb[0].mxu0
    %v5996 = vpop.f32.mrb[0].mxu0
    %v5997 = vadd.f32 %v5860, %v5996
    %v5998 = vpop.f32.mrb[0].mxu0
    %5999 = vmatprep.mubr.bf16.mxu0 %v834
    %6000 = vmatmul.mubr.bf16.gmra.mrb[0].mxu0 %v833
    %v6001 = vpop.f32.mrb[0].mxu0
    %v6002 = vadd.f32 %v5865, %v6001
    %v6003 = vpop.f32.mrb[0].mxu0
    %v6004 = vpop.f32.mrb[0].mxu0
    %v6005 = vadd.f32 %v5868, %v6004
    %v6006 = vpop.f32.mrb[0].mxu0
    %6007 = vmatprep.mubr.bf16.mxu0 %v842
    %6008 = vmatmul.mubr.bf16.gmra.mrb[0].mxu0 %v841
    %v6009 = vpop.f32.mrb[0].mxu0
    %v6010 = vadd.f32 %v5873, %v6009
    %v6011 = vpop.f32.mrb[0].mxu0
    %v6012 = vpop.f32.mrb[0].mxu0
    %v6013 = vadd.f32 %v5876, %v6012
    %v6014 = vpop.f32.mrb[0].mxu0
    %6015 = vmatprep.mubr.bf16.mxu0 %v850
    %6016 = vmatmul.mubr.bf16.gmra.mrb[0].mxu0 %v849
    %v6017 = vpop.f32.mrb[0].mxu0
    %v6018 = vadd.f32 %v5881, %v6017
    %v6019 = vpop.f32.mrb[0].mxu0
    %v6020 = vpop.f32.mrb[0].mxu0
    %v6021 = vadd.f32 %v5884, %v6020
    %v6022 = vpop.f32.mrb[0].mxu0
    %6023 = vmatprep.mubr.bf16.mxu0 %v858
    %6024 = vmatmul.mubr.bf16.gmra.mrb[0].mxu0 %v857
    %v6025 = vpop.f32.mrb[0].mxu0
    %v6026 = vadd.f32 %v5889, %v6025
    %v6027 = vpop.f32.mrb[0].mxu0
    %v6028 = vpop.f32.mrb[0].mxu0
    %v6029 = vadd.f32 %v5892, %v6028
    %v6030 = vpop.f32.mrb[0].mxu0
    %6031 = vmatprep.mubr.bf16.mxu0 %v866
    %6032 = vmatmul.mubr.bf16.gmra.mrb[0].mxu0 %v865
    %v6033 = vpop.f32.mrb[0].mxu0
    %v6034 = vadd.f32 %v5897, %v6033
    %v6035 = vpop.f32.mrb[0].mxu0
    %v6036 = vpop.f32.mrb[0].mxu0
    %v6037 = vadd.f32 %v5900, %v6036
    %v6038 = vpop.f32.mrb[0].mxu0
    %6039 = vmatprep.mubr.bf16.mxu0 %v874
    %6040 = vmatmul.mubr.bf16.gmra.mrb[0].mxu0 %v873
    %v6041 = vpop.f32.mrb[0].mxu0
    %v6042 = vadd.f32 %v5905, %v6041
    %v6043 = vpop.f32.mrb[0].mxu0
    %v6044 = vpop.f32.mrb[0].mxu0
    %v6045 = vadd.f32 %v5908, %v6044
    %v6046 = vpop.f32.mrb[0].mxu0
    %6047 = vmatprep.mubr.bf16.mxu0 %v882
    %6048 = vmatmul.mubr.bf16.gmra.mrb[0].mxu0 %v881
    %v6049 = vpop.f32.mrb[0].mxu0
    %v6050 = vadd.f32 %v5913, %v6049
    %v6051 = vpop.f32.mrb[0].mxu0
    %v6052 = vpop.f32.mrb[0].mxu0
    %v6053 = vadd.f32 %v5916, %v6052
    %v6054 = vpop.f32.mrb[0].mxu0
    %6055 = vmatprep.mubr.bf16.mxu0 %v890
    %6056 = vmatmul.mubr.bf16.gmra.mrb[0].mxu0 %v889
    %v6057 = vpop.f32.mrb[0].mxu0
    %v6058 = vadd.f32 %v5921, %v6057
    %v6059 = vpop.f32.mrb[0].mxu0
    %v6060 = vpop.f32.mrb[0].mxu0
    %v6061 = vadd.f32 %v5924, %v6060
    %v6062 = vpop.f32.mrb[0].mxu0
    %6063 = vdwg.mxu0
    %6064 = vmatprep.subr.bf16.mxu0 0
    %6065 = vmatpush1.bf16.msra.mxu0 %v3110
    %6066 = vmatprep.subr.bf16.mxu0 0
    %6067 = vmatpush1.bf16.msra.mxu0 %v3117
    %6068 = vmatprep.subr.bf16.mxu0 0
    %6069 = vmatpush1.bf16.msra.mxu0 %v3124
    %6070 = vmatprep.subr.bf16.mxu0 0
    %6071 = vmatpush1.bf16.msra.mxu0 %v3131
    %6072 = vmatprep.subr.bf16.mxu0 0
    %6073 = vmatpush1.bf16.msra.mxu0 %v3138
    %6074 = vmatprep.subr.bf16.mxu0 0
    %6075 = vmatpush1.bf16.msra.mxu0 %v3145
    %6076 = vmatprep.subr.bf16.mxu0 0
    %6077 = vmatpush1.bf16.msra.mxu0 %v3152
    %6078 = vmatprep.subr.bf16.mxu0 0
    %6079 = vmatpush1.bf16.msra.mxu0 %v3159
    %6080 = vmatprep.subr.bf16.mxu0 0
    %6081 = vmatpush1.bf16.msra.mxu0 %v3166
    %6082 = vmatprep.subr.bf16.mxu0 0
    %6083 = vmatpush1.bf16.msra.mxu0 %v3173
    %6084 = vmatprep.subr.bf16.mxu0 0
    %6085 = vmatpush1.bf16.msra.mxu0 %v3180
    %6086 = vmatprep.subr.bf16.mxu0 0
    %6087 = vmatpush1.bf16.msra.mxu0 %v3187
    %6088 = vmatprep.subr.bf16.mxu0 0
    %6089 = vmatpush1.bf16.msra.mxu0 %v3194
    %6090 = vmatprep.subr.bf16.mxu0 0
    %6091 = vmatpush1.bf16.msra.mxu0 %v3201
    %6092 = vmatprep.subr.bf16.mxu0 0
    %6093 = vmatpush1.bf16.msra.mxu0 %v3703
    %6094 = vmatprep.subr.bf16.mxu0 0
    %6095 = vmatpush1.bf16.msra.mxu0 0
    %6096 = vmatprep.mubr.bf16.mxu0 %v3645
    %6097 = vmatmul.mubr.bf16.gmra.mrb[0].mxu0 %v795
    %v6098 = vpop.f32.mrb[0].mxu0
    %v6099 = vadd.f32 %v5962, %v6098
    %v6100 = vpop.f32.mrb[0].mxu0
    %v6101 = vpop.f32.mrb[0].mxu0
    %v6102 = vadd.f32 %v5965, %v6101
    %v6103 = vpop.f32.mrb[0].mxu0
    %6104 = vmatprep.mubr.bf16.mxu0 %v3648
    %6105 = vmatmul.mubr.bf16.gmra.mrb[0].mxu0 %v803
    %v6106 = vpop.f32.mrb[0].mxu0
    %v6107 = vadd.f32 %v5970, %v6106
    %v6108 = vpop.f32.mrb[0].mxu0
    %v6109 = vpop.f32.mrb[0].mxu0
    %v6110 = vadd.f32 %v5973, %v6109
    %v6111 = vpop.f32.mrb[0].mxu0
    %6112 = vmatprep.mubr.bf16.mxu0 %v3651
    %6113 = vmatmul.mubr.bf16.gmra.mrb[0].mxu0 %v811
    %v6114 = vpop.f32.mrb[0].mxu0
    %v6115 = vadd.f32 %v5978, %v6114
    %v6116 = vpop.f32.mrb[0].mxu0
    %v6117 = vpop.f32.mrb[0].mxu0
    %v6118 = vadd.f32 %v5981, %v6117
    %v6119 = vpop.f32.mrb[0].mxu0
    %6120 = vmatprep.mubr.bf16.mxu0 %v3654
    %6121 = vmatmul.mubr.bf16.gmra.mrb[0].mxu0 %v819
    %v6122 = vpop.f32.mrb[0].mxu0
    %v6123 = vadd.f32 %v5986, %v6122
    %v6124 = vpop.f32.mrb[0].mxu0
    %v6125 = vpop.f32.mrb[0].mxu0
    %v6126 = vadd.f32 %v5989, %v6125
    %v6127 = vpop.f32.mrb[0].mxu0
    %6128 = vmatprep.mubr.bf16.mxu0 %v3657
    %6129 = vmatmul.mubr.bf16.gmra.mrb[0].mxu0 %v827
    %v6130 = vpop.f32.mrb[0].mxu0
    %v6131 = vadd.f32 %v5994, %v6130
    %v6132 = vpop.f32.mrb[0].mxu0
    %v6133 = vpop.f32.mrb[0].mxu0
    %v6134 = vadd.f32 %v5997, %v6133
    %v6135 = vpop.f32.mrb[0].mxu0
    %6136 = vmatprep.mubr.bf16.mxu0 %v3660
    %6137 = vmatmul.mubr.bf16.gmra.mrb[0].mxu0 %v835
    %v6138 = vpop.f32.mrb[0].mxu0
    %v6139 = vadd.f32 %v6002, %v6138
    %v6140 = vpop.f32.mrb[0].mxu0
    %v6141 = vpop.f32.mrb[0].mxu0
    %v6142 = vadd.f32 %v6005, %v6141
    %v6143 = vpop.f32.mrb[0].mxu0
    %6144 = vmatprep.mubr.bf16.mxu0 %v3663
    %6145 = vmatmul.mubr.bf16.gmra.mrb[0].mxu0 %v843
    %v6146 = vpop.f32.mrb[0].mxu0
    %v6147 = vadd.f32 %v6010, %v6146
    %v6148 = vpop.f32.mrb[0].mxu0
    %v6149 = vpop.f32.mrb[0].mxu0
    %v6150 = vadd.f32 %v6013, %v6149
    %v6151 = vpop.f32.mrb[0].mxu0
    %6152 = vmatprep.mubr.bf16.mxu0 %v3666
    %6153 = vmatmul.mubr.bf16.gmra.mrb[0].mxu0 %v851
    %v6154 = vpop.f32.mrb[0].mxu0
    %v6155 = vadd.f32 %v6018, %v6154
    %v6156 = vpop.f32.mrb[0].mxu0
    %v6157 = vpop.f32.mrb[0].mxu0
    %v6158 = vadd.f32 %v6021, %v6157
    %v6159 = vpop.f32.mrb[0].mxu0
    %6160 = vmatprep.mubr.bf16.mxu0 %v3669
    %6161 = vmatmul.mubr.bf16.gmra.mrb[0].mxu0 %v859
    %v6162 = vpop.f32.mrb[0].mxu0
    %v6163 = vadd.f32 %v6026, %v6162
    %v6164 = vpop.f32.mrb[0].mxu0
    %v6165 = vpop.f32.mrb[0].mxu0
    %v6166 = vadd.f32 %v6029, %v6165
    %v6167 = vpop.f32.mrb[0].mxu0
    %6168 = vmatprep.mubr.bf16.mxu0 %v3672
    %6169 = vmatmul.mubr.bf16.gmra.mrb[0].mxu0 %v867
    %v6170 = vpop.f32.mrb[0].mxu0
    %v6171 = vadd.f32 %v6034, %v6170
    %v6172 = vpop.f32.mrb[0].mxu0
    %v6173 = vpop.f32.mrb[0].mxu0
    %v6174 = vadd.f32 %v6037, %v6173
    %v6175 = vpop.f32.mrb[0].mxu0
    %6176 = vmatprep.mubr.bf16.mxu0 %v3675
    %6177 = vmatmul.mubr.bf16.gmra.mrb[0].mxu0 %v875
    %v6178 = vpop.f32.mrb[0].mxu0
    %v6179 = vadd.f32 %v6042, %v6178
    %v6180 = vpop.f32.mrb[0].mxu0
    %v6181 = vpop.f32.mrb[0].mxu0
    %v6182 = vadd.f32 %v6045, %v6181
    %v6183 = vpop.f32.mrb[0].mxu0
    %6184 = vmatprep.mubr.bf16.mxu0 %v3678
    %6185 = vmatmul.mubr.bf16.gmra.mrb[0].mxu0 %v883
    %v6186 = vpop.f32.mrb[0].mxu0
    %v6187 = vadd.f32 %v6050, %v6186
    %v6188 = vpop.f32.mrb[0].mxu0
    %v6189 = vpop.f32.mrb[0].mxu0
    %v6190 = vadd.f32 %v6053, %v6189
    %v6191 = vpop.f32.mrb[0].mxu0
    %6192 = vmatprep.mubr.bf16.mxu0 %v3681
    %6193 = vmatmul.mubr.bf16.gmra.mrb[0].mxu0 %v891
    %v6194 = vpop.f32.mrb[0].mxu0
    %v6195 = vadd.f32 %v6058, %v6194
    %v6196 = vpop.f32.mrb[0].mxu0
    %v6197 = vpop.f32.mrb[0].mxu0
    %v6198 = vadd.f32 %v6061, %v6197
    %v6199 = vpop.f32.mrb[0].mxu0
    %6200 = vdwg.mxu0
    %vm6227 = vcmask 1046528
    %v6228 = vrot.slane %v4225, 1
    %v6229 = vrot.slane %v4229, 1
    %v6230 = vsel %vm6227, %v6228, %v6229
    %v6231 = vrot.slane %v4235, 1
    %v6232 = vsel %vm6227, %v6229, %v6231
    %v6233 = vrot.slane %v4239, 1
    %v6234 = vsel %vm6227, %v6231, %v6233
    %v6235 = vrot.slane %v4245, 1
    %v6236 = vsel %vm6227, %v6233, %v6235
    %v6237 = vrot.slane %v4249, 1
    %v6238 = vsel %vm6227, %v6235, %v6237
    %v6239 = vrot.slane %v4255, 1
    %v6240 = vsel %vm6227, %v6237, %v6239
    %v6241 = vrot.slane %v4259, 1
    %v6242 = vsel %vm6227, %v6239, %v6241
    %v6243 = vrot.slane %v4265, 1
    %v6244 = vsel %vm6227, %v6241, %v6243
    %v6245 = vrot.slane %v4269, 1
    %v6246 = vsel %vm6227, %v6243, %v6245
    %v6247 = vrot.slane %v4275, 1
    %v6248 = vsel %vm6227, %v6245, %v6247
    %v6249 = vrot.slane %v4279, 1
    %v6250 = vsel %vm6227, %v6247, %v6249
    %v6251 = vrot.slane %v4284, 1
    %v6252 = vsel %vm6227, %v6249, %v6251
    %v6253 = vrot.slane %v4288, 1
    %v6254 = vrot.slane %v4294, 1
    %v6255 = vsel %vm6227, %v6253, %v6254
    %v6256 = vrot.slane %v4298, 1
    %v6257 = vsel %vm6227, %v6254, %v6256
    %v6258 = vrot.slane %v4304, 1
    %v6259 = vsel %vm6227, %v6256, %v6258
    %v6260 = vrot.slane %v4308, 1
    %v6261 = vsel %vm6227, %v6258, %v6260
    %v6262 = vrot.slane %v4314, 1
    %v6263 = vsel %vm6227, %v6260, %v6262
    %v6264 = vrot.slane %v4318, 1
    %v6265 = vsel %vm6227, %v6262, %v6264
    %v6266 = vrot.slane %v4324, 1
    %v6267 = vsel %vm6227, %v6264, %v6266
    %v6268 = vrot.slane %v4328, 1
    %v6269 = vsel %vm6227, %v6266, %v6268
    %v6270 = vrot.slane %v4334, 1
    %v6271 = vsel %vm6227, %v6268, %v6270
    %v6272 = vrot.slane %v4338, 1
    %v6273 = vsel %vm6227, %v6270, %v6272
    %v6274 = vrot.slane %v4344, 1
    %v6275 = vsel %vm6227, %v6272, %v6274
    %v6276 = vrot.slane %v4347, 1
    %v6277 = vsel %vm6227, %v6274, %v6276
    %v6302 = vadd.f32 %v4223, %v6230
    %v6303 = vadd.f32 %v4227, %v6232
    %v6304 = vadd.f32 %v4233, %v6234
    %v6305 = vadd.f32 %v4237, %v6236
    %v6306 = vadd.f32 %v4243, %v6238
    %v6307 = vadd.f32 %v4247, %v6240
    %v6308 = vadd.f32 %v4253, %v6242
    %v6309 = vadd.f32 %v4257, %v6244
    %v6310 = vadd.f32 %v4263, %v6246
    %v6311 = vadd.f32 %v4267, %v6248
    %v6312 = vadd.f32 %v4273, %v6250
    %v6313 = vadd.f32 %v4277, %v6252
    %v6314 = vadd.f32 %v4286, %v6255
    %v6315 = vadd.f32 %v4292, %v6257
    %v6316 = vadd.f32 %v4296, %v6259
    %v6317 = vadd.f32 %v4302, %v6261
    %v6318 = vadd.f32 %v4306, %v6263
    %v6319 = vadd.f32 %v4312, %v6265
    %v6320 = vadd.f32 %v4316, %v6267
    %v6321 = vadd.f32 %v4322, %v6269
    %v6322 = vadd.f32 %v4326, %v6271
    %v6323 = vadd.f32 %v4332, %v6273
    %v6324 = vadd.f32 %v4336, %v6275
    %v6325 = vadd.f32 %v4342, %v6277
    %vm6352 = vcmask 1045504
    %v6353 = vrot.slane %v4873, 2
    %v6354 = vrot.slane %v4877, 2
    %v6355 = vsel %vm6352, %v6353, %v6354
    %v6356 = vrot.slane %v4883, 2
    %v6357 = vsel %vm6352, %v6354, %v6356
    %v6358 = vrot.slane %v4887, 2
    %v6359 = vsel %vm6352, %v6356, %v6358
    %v6360 = vrot.slane %v4893, 2
    %v6361 = vsel %vm6352, %v6358, %v6360
    %v6362 = vrot.slane %v4897, 2
    %v6363 = vsel %vm6352, %v6360, %v6362
    %v6364 = vrot.slane %v4903, 2
    %v6365 = vsel %vm6352, %v6362, %v6364
    %v6366 = vrot.slane %v4907, 2
    %v6367 = vsel %vm6352, %v6364, %v6366
    %v6368 = vrot.slane %v4913, 2
    %v6369 = vsel %vm6352, %v6366, %v6368
    %v6370 = vrot.slane %v4917, 2
    %v6371 = vsel %vm6352, %v6368, %v6370
    %v6372 = vrot.slane %v4923, 2
    %v6373 = vsel %vm6352, %v6370, %v6372
    %v6374 = vrot.slane %v4927, 2
    %v6375 = vsel %vm6352, %v6372, %v6374
    %v6376 = vrot.slane %v4933, 2
    %v6377 = vsel %vm6352, %v6374, %v6376
    %v6378 = vrot.slane %v4937, 2
    %v6379 = vrot.slane %v4943, 2
    %v6380 = vsel %vm6352, %v6378, %v6379
    %v6381 = vrot.slane %v4947, 2
    %v6382 = vsel %vm6352, %v6379, %v6381
    %v6383 = vrot.slane %v4953, 2
    %v6384 = vsel %vm6352, %v6381, %v6383
    %v6385 = vrot.slane %v4957, 2
    %v6386 = vsel %vm6352, %v6383, %v6385
    %v6387 = vrot.slane %v4963, 2
    %v6388 = vsel %vm6352, %v6385, %v6387
    %v6389 = vrot.slane %v4967, 2
    %v6390 = vsel %vm6352, %v6387, %v6389
    %v6391 = vrot.slane %v4973, 2
    %v6392 = vsel %vm6352, %v6389, %v6391
    %v6393 = vrot.slane %v4977, 2
    %v6394 = vsel %vm6352, %v6391, %v6393
    %v6395 = vrot.slane %v4983, 2
    %v6396 = vsel %vm6352, %v6393, %v6395
    %v6397 = vrot.slane %v4987, 2
    %v6398 = vsel %vm6352, %v6395, %v6397
    %v6399 = vrot.slane %v4993, 2
    %v6400 = vsel %vm6352, %v6397, %v6399
    %v6401 = vrot.slane %v4997, 2
    %v6402 = vsel %vm6352, %v6399, %v6401
    %v6427 = vadd.f32 %v6302, %v6355
    %v6428 = vadd.f32 %v6303, %v6357
    %v6429 = vadd.f32 %v6304, %v6359
    %v6430 = vadd.f32 %v6305, %v6361
    %v6431 = vadd.f32 %v6306, %v6363
    %v6432 = vadd.f32 %v6307, %v6365
    %v6433 = vadd.f32 %v6308, %v6367
    %v6434 = vadd.f32 %v6309, %v6369
    %v6435 = vadd.f32 %v6310, %v6371
    %v6436 = vadd.f32 %v6311, %v6373
    %v6437 = vadd.f32 %v6312, %v6375
    %v6438 = vadd.f32 %v6313, %v6377
    %v6439 = vadd.f32 %v6314, %v6380
    %v6440 = vadd.f32 %v6315, %v6382
    %v6441 = vadd.f32 %v6316, %v6384
    %v6442 = vadd.f32 %v6317, %v6386
    %v6443 = vadd.f32 %v6318, %v6388
    %v6444 = vadd.f32 %v6319, %v6390
    %v6445 = vadd.f32 %v6320, %v6392
    %v6446 = vadd.f32 %v6321, %v6394
    %v6447 = vadd.f32 %v6322, %v6396
    %v6448 = vadd.f32 %v6323, %v6398
    %v6449 = vadd.f32 %v6324, %v6400
    %v6450 = vadd.f32 %v6325, %v6402
    %vm6477 = vcmask 1044480
    %v6478 = vrot.slane %v4875, 3
    %v6479 = vrot.slane %v4879, 3
    %v6480 = vsel %vm6477, %v6478, %v6479
    %v6481 = vrot.slane %v4885, 3
    %v6482 = vsel %vm6477, %v6479, %v6481
    %v6483 = vrot.slane %v4889, 3
    %v6484 = vsel %vm6477, %v6481, %v6483
    %v6485 = vrot.slane %v4895, 3
    %v6486 = vsel %vm6477, %v6483, %v6485
    %v6487 = vrot.slane %v4899, 3
    %v6488 = vsel %vm6477, %v6485, %v6487
    %v6489 = vrot.slane %v4905, 3
    %v6490 = vsel %vm6477, %v6487, %v6489
    %v6491 = vrot.slane %v4909, 3
    %v6492 = vsel %vm6477, %v6489, %v6491
    %v6493 = vrot.slane %v4915, 3
    %v6494 = vsel %vm6477, %v6491, %v6493
    %v6495 = vrot.slane %v4919, 3
    %v6496 = vsel %vm6477, %v6493, %v6495
    %v6497 = vrot.slane %v4925, 3
    %v6498 = vsel %vm6477, %v6495, %v6497
    %v6499 = vrot.slane %v4929, 3
    %v6500 = vsel %vm6477, %v6497, %v6499
    %v6501 = vrot.slane %v4935, 3
    %v6502 = vsel %vm6477, %v6499, %v6501
    %v6503 = vrot.slane %v4939, 3
    %v6504 = vrot.slane %v4945, 3
    %v6505 = vsel %vm6477, %v6503, %v6504
    %v6506 = vrot.slane %v4949, 3
    %v6507 = vsel %vm6477, %v6504, %v6506
    %v6508 = vrot.slane %v4955, 3
    %v6509 = vsel %vm6477, %v6506, %v6508
    %v6510 = vrot.slane %v4959, 3
    %v6511 = vsel %vm6477, %v6508, %v6510
    %v6512 = vrot.slane %v4965, 3
    %v6513 = vsel %vm6477, %v6510, %v6512
    %v6514 = vrot.slane %v4969, 3
    %v6515 = vsel %vm6477, %v6512, %v6514
    %v6516 = vrot.slane %v4975, 3
    %v6517 = vsel %vm6477, %v6514, %v6516
    %v6518 = vrot.slane %v4979, 3
    %v6519 = vsel %vm6477, %v6516, %v6518
    %v6520 = vrot.slane %v4985, 3
    %v6521 = vsel %vm6477, %v6518, %v6520
    %v6522 = vrot.slane %v4989, 3
    %v6523 = vsel %vm6477, %v6520, %v6522
    %v6524 = vrot.slane %v4995, 3
    %v6525 = vsel %vm6477, %v6522, %v6524
    %v6526 = vrot.slane %v4999, 3
    %v6527 = vsel %vm6477, %v6524, %v6526
    %v6552 = vadd.f32 %v6427, %v6480
    %v6553 = vadd.f32 %v6428, %v6482
    %v6554 = vadd.f32 %v6429, %v6484
    %v6555 = vadd.f32 %v6430, %v6486
    %v6556 = vadd.f32 %v6431, %v6488
    %v6557 = vadd.f32 %v6432, %v6490
    %v6558 = vadd.f32 %v6433, %v6492
    %v6559 = vadd.f32 %v6434, %v6494
    %v6560 = vadd.f32 %v6435, %v6496
    %v6561 = vadd.f32 %v6436, %v6498
    %v6562 = vadd.f32 %v6437, %v6500
    %v6563 = vadd.f32 %v6438, %v6502
    %v6564 = vadd.f32 %v6439, %v6505
    %v6565 = vadd.f32 %v6440, %v6507
    %v6566 = vadd.f32 %v6441, %v6509
    %v6567 = vadd.f32 %v6442, %v6511
    %v6568 = vadd.f32 %v6443, %v6513
    %v6569 = vadd.f32 %v6444, %v6515
    %v6570 = vadd.f32 %v6445, %v6517
    %v6571 = vadd.f32 %v6446, %v6519
    %v6572 = vadd.f32 %v6447, %v6521
    %v6573 = vadd.f32 %v6448, %v6523
    %v6574 = vadd.f32 %v6449, %v6525
    %v6575 = vadd.f32 %v6450, %v6527
    %v6602 = vrot.slane %v5525, 4
    %v6603 = vrot.slane %v5529, 4
    %v6604 = vsel %vm3683, %v6602, %v6603
    %v6605 = vrot.slane %v5535, 4
    %v6606 = vsel %vm3683, %v6603, %v6605
    %v6607 = vrot.slane %v5539, 4
    %v6608 = vsel %vm3683, %v6605, %v6607
    %v6609 = vrot.slane %v5545, 4
    %v6610 = vsel %vm3683, %v6607, %v6609
    %v6611 = vrot.slane %v5549, 4
    %v6612 = vsel %vm3683, %v6609, %v6611
    %v6613 = vrot.slane %v5555, 4
    %v6614 = vsel %vm3683, %v6611, %v6613
    %v6615 = vrot.slane %v5559, 4
    %v6616 = vsel %vm3683, %v6613, %v6615
    %v6617 = vrot.slane %v5565, 4
    %v6618 = vsel %vm3683, %v6615, %v6617
    %v6619 = vrot.slane %v5569, 4
    %v6620 = vsel %vm3683, %v6617, %v6619
    %v6621 = vrot.slane %v5575, 4
    %v6622 = vsel %vm3683, %v6619, %v6621
    %v6623 = vrot.slane %v5579, 4
    %v6624 = vsel %vm3683, %v6621, %v6623
    %v6625 = vrot.slane %v5585, 4
    %v6626 = vsel %vm3683, %v6623, %v6625
    %v6627 = vrot.slane %v5589, 4
    %v6628 = vrot.slane %v5595, 4
    %v6629 = vsel %vm3683, %v6627, %v6628
    %v6630 = vrot.slane %v5599, 4
    %v6631 = vsel %vm3683, %v6628, %v6630
    %v6632 = vrot.slane %v5605, 4
    %v6633 = vsel %vm3683, %v6630, %v6632
    %v6634 = vrot.slane %v5609, 4
    %v6635 = vsel %vm3683, %v6632, %v6634
    %v6636 = vrot.slane %v5615, 4
    %v6637 = vsel %vm3683, %v6634, %v6636
    %v6638 = vrot.slane %v5619, 4
    %v6639 = vsel %vm3683, %v6636, %v6638
    %v6640 = vrot.slane %v5625, 4
    %v6641 = vsel %vm3683, %v6638, %v6640
    %v6642 = vrot.slane %v5629, 4
    %v6643 = vsel %vm3683, %v6640, %v6642
    %v6644 = vrot.slane %v5635, 4
    %v6645 = vsel %vm3683, %v6642, %v6644
    %v6646 = vrot.slane %v5639, 4
    %v6647 = vsel %vm3683, %v6644, %v6646
    %v6648 = vrot.slane %v5645, 4
    %v6649 = vsel %vm3683, %v6646, %v6648
    %v6650 = vrot.slane %v5649, 4
    %v6651 = vsel %vm3683, %v6648, %v6650
    %v6676 = vadd.f32 %v6552, %v6604
    %v6677 = vadd.f32 %v6553, %v6606
    %v6678 = vadd.f32 %v6554, %v6608
    %v6679 = vadd.f32 %v6555, %v6610
    %v6680 = vadd.f32 %v6556, %v6612
    %v6681 = vadd.f32 %v6557, %v6614
    %v6682 = vadd.f32 %v6558, %v6616
    %v6683 = vadd.f32 %v6559, %v6618
    %v6684 = vadd.f32 %v6560, %v6620
    %v6685 = vadd.f32 %v6561, %v6622
    %v6686 = vadd.f32 %v6562, %v6624
    %v6687 = vadd.f32 %v6563, %v6626
    %v6688 = vadd.f32 %v6564, %v6629
    %v6689 = vadd.f32 %v6565, %v6631
    %v6690 = vadd.f32 %v6566, %v6633
    %v6691 = vadd.f32 %v6567, %v6635
    %v6692 = vadd.f32 %v6568, %v6637
    %v6693 = vadd.f32 %v6569, %v6639
    %v6694 = vadd.f32 %v6570, %v6641
    %v6695 = vadd.f32 %v6571, %v6643
    %v6696 = vadd.f32 %v6572, %v6645
    %v6697 = vadd.f32 %v6573, %v6647
    %v6698 = vadd.f32 %v6574, %v6649
    %v6699 = vadd.f32 %v6575, %v6651
    %vm6726 = vcmask 1042432
    %v6727 = vrot.slane %v5527, 5
    %v6728 = vrot.slane %v5531, 5
    %v6729 = vsel %vm6726, %v6727, %v6728
    %v6730 = vrot.slane %v5537, 5
    %v6731 = vsel %vm6726, %v6728, %v6730
    %v6732 = vrot.slane %v5541, 5
    %v6733 = vsel %vm6726, %v6730, %v6732
    %v6734 = vrot.slane %v5547, 5
    %v6735 = vsel %vm6726, %v6732, %v6734
    %v6736 = vrot.slane %v5551, 5
    %v6737 = vsel %vm6726, %v6734, %v6736
    %v6738 = vrot.slane %v5557, 5
    %v6739 = vsel %vm6726, %v6736, %v6738
    %v6740 = vrot.slane %v5561, 5
    %v6741 = vsel %vm6726, %v6738, %v6740
    %v6742 = vrot.slane %v5567, 5
    %v6743 = vsel %vm6726, %v6740, %v6742
    %v6744 = vrot.slane %v5571, 5
    %v6745 = vsel %vm6726, %v6742, %v6744
    %v6746 = vrot.slane %v5577, 5
    %v6747 = vsel %vm6726, %v6744, %v6746
    %v6748 = vrot.slane %v5581, 5
    %v6749 = vsel %vm6726, %v6746, %v6748
    %v6750 = vrot.slane %v5587, 5
    %v6751 = vsel %vm6726, %v6748, %v6750
    %v6752 = vrot.slane %v5591, 5
    %v6753 = vrot.slane %v5597, 5
    %v6754 = vsel %vm6726, %v6752, %v6753
    %v6755 = vrot.slane %v5601, 5
    %v6756 = vsel %vm6726, %v6753, %v6755
    %v6757 = vrot.slane %v5607, 5
    %v6758 = vsel %vm6726, %v6755, %v6757
    %v6759 = vrot.slane %v5611, 5
    %v6760 = vsel %vm6726, %v6757, %v6759
    %v6761 = vrot.slane %v5617, 5
    %v6762 = vsel %vm6726, %v6759, %v6761
    %v6763 = vrot.slane %v5621, 5
    %v6764 = vsel %vm6726, %v6761, %v6763
    %v6765 = vrot.slane %v5627, 5
    %v6766 = vsel %vm6726, %v6763, %v6765
    %v6767 = vrot.slane %v5631, 5
    %v6768 = vsel %vm6726, %v6765, %v6767
    %v6769 = vrot.slane %v5637, 5
    %v6770 = vsel %vm6726, %v6767, %v6769
    %v6771 = vrot.slane %v5641, 5
    %v6772 = vsel %vm6726, %v6769, %v6771
    %v6773 = vrot.slane %v5647, 5
    %v6774 = vsel %vm6726, %v6771, %v6773
    %v6775 = vrot.slane %v5651, 5
    %v6776 = vsel %vm6726, %v6773, %v6775
    %v6801 = vadd.f32 %v6676, %v6729
    %v6802 = vadd.f32 %v6677, %v6731
    %v6803 = vadd.f32 %v6678, %v6733
    %v6804 = vadd.f32 %v6679, %v6735
    %v6805 = vadd.f32 %v6680, %v6737
    %v6806 = vadd.f32 %v6681, %v6739
    %v6807 = vadd.f32 %v6682, %v6741
    %v6808 = vadd.f32 %v6683, %v6743
    %v6809 = vadd.f32 %v6684, %v6745
    %v6810 = vadd.f32 %v6685, %v6747
    %v6811 = vadd.f32 %v6686, %v6749
    %v6812 = vadd.f32 %v6687, %v6751
    %v6813 = vadd.f32 %v6688, %v6754
    %v6814 = vadd.f32 %v6689, %v6756
    %v6815 = vadd.f32 %v6690, %v6758
    %v6816 = vadd.f32 %v6691, %v6760
    %v6817 = vadd.f32 %v6692, %v6762
    %v6818 = vadd.f32 %v6693, %v6764
    %v6819 = vadd.f32 %v6694, %v6766
    %v6820 = vadd.f32 %v6695, %v6768
    %v6821 = vadd.f32 %v6696, %v6770
    %v6822 = vadd.f32 %v6697, %v6772
    %v6823 = vadd.f32 %v6698, %v6774
    %v6824 = vadd.f32 %v6699, %v6776
    %vm6851 = vcmask 1041408
    %v6852 = vrot.slane %v6099, 6
    %v6853 = vrot.slane %v6102, 6
    %v6854 = vsel %vm6851, %v6852, %v6853
    %v6855 = vrot.slane %v6107, 6
    %v6856 = vsel %vm6851, %v6853, %v6855
    %v6857 = vrot.slane %v6110, 6
    %v6858 = vsel %vm6851, %v6855, %v6857
    %v6859 = vrot.slane %v6115, 6
    %v6860 = vsel %vm6851, %v6857, %v6859
    %v6861 = vrot.slane %v6118, 6
    %v6862 = vsel %vm6851, %v6859, %v6861
    %v6863 = vrot.slane %v6123, 6
    %v6864 = vsel %vm6851, %v6861, %v6863
    %v6865 = vrot.slane %v6126, 6
    %v6866 = vsel %vm6851, %v6863, %v6865
    %v6867 = vrot.slane %v6131, 6
    %v6868 = vsel %vm6851, %v6865, %v6867
    %v6869 = vrot.slane %v6134, 6
    %v6870 = vsel %vm6851, %v6867, %v6869
    %v6871 = vrot.slane %v6139, 6
    %v6872 = vsel %vm6851, %v6869, %v6871
    %v6873 = vrot.slane %v6142, 6
    %v6874 = vsel %vm6851, %v6871, %v6873
    %v6875 = vrot.slane %v6147, 6
    %v6876 = vsel %vm6851, %v6873, %v6875
    %v6877 = vrot.slane %v6150, 6
    %v6878 = vrot.slane %v6155, 6
    %v6879 = vsel %vm6851, %v6877, %v6878
    %v6880 = vrot.slane %v6158, 6
    %v6881 = vsel %vm6851, %v6878, %v6880
    %v6882 = vrot.slane %v6163, 6
    %v6883 = vsel %vm6851, %v6880, %v6882
    %v6884 = vrot.slane %v6166, 6
    %v6885 = vsel %vm6851, %v6882, %v6884
    %v6886 = vrot.slane %v6171, 6
    %v6887 = vsel %vm6851, %v6884, %v6886
    %v6888 = vrot.slane %v6174, 6
    %v6889 = vsel %vm6851, %v6886, %v6888
    %v6890 = vrot.slane %v6179, 6
    %v6891 = vsel %vm6851, %v6888, %v6890
    %v6892 = vrot.slane %v6182, 6
    %v6893 = vsel %vm6851, %v6890, %v6892
    %v6894 = vrot.slane %v6187, 6
    %v6895 = vsel %vm6851, %v6892, %v6894
    %v6896 = vrot.slane %v6190, 6
    %v6897 = vsel %vm6851, %v6894, %v6896
    %v6898 = vrot.slane %v6195, 6
    %v6899 = vsel %vm6851, %v6896, %v6898
    %v6900 = vrot.slane %v6198, 6
    %v6901 = vsel %vm6851, %v6898, %v6900
    %v6926 = vadd.f32 %v6801, %v6854
    %v6927 = vadd.f32 %v6802, %v6856
    %v6928 = vadd.f32 %v6803, %v6858
    %v6929 = vadd.f32 %v6804, %v6860
    %v6930 = vadd.f32 %v6805, %v6862
    %v6931 = vadd.f32 %v6806, %v6864
    %v6932 = vadd.f32 %v6807, %v6866
    %v6933 = vadd.f32 %v6808, %v6868
    %v6934 = vadd.f32 %v6809, %v6870
    %v6935 = vadd.f32 %v6810, %v6872
    %v6936 = vadd.f32 %v6811, %v6874
    %v6937 = vadd.f32 %v6812, %v6876
    %v6938 = vadd.f32 %v6813, %v6879
    %v6939 = vadd.f32 %v6814, %v6881
    %v6940 = vadd.f32 %v6815, %v6883
    %v6941 = vadd.f32 %v6816, %v6885
    %v6942 = vadd.f32 %v6817, %v6887
    %v6943 = vadd.f32 %v6818, %v6889
    %v6944 = vadd.f32 %v6819, %v6891
    %v6945 = vadd.f32 %v6820, %v6893
    %v6946 = vadd.f32 %v6821, %v6895
    %v6947 = vadd.f32 %v6822, %v6897
    %v6948 = vadd.f32 %v6823, %v6899
    %v6949 = vadd.f32 %v6824, %v6901
    %v6950 = vld [vmem:[#allocation5] sm:$0x1]
    %v6952 = vlaneseq
    %v6953 = vshrl.u32 %v6952, 7
    %v6954 = vsub.s32 0, %v6953
    %v6955 = vrot.slane %v6950, %v6954
    %v6957 = vadd.f32 %v6926, %v6955
    %v6958 = vadd.f32 %v6927, %v6955
    %v6959 = vadd.f32 %v6928, %v6955
    %v6960 = vadd.f32 %v6929, %v6955
    %v6961 = vadd.f32 %v6930, %v6955
    %v6962 = vadd.f32 %v6931, %v6955
    %v6963 = vadd.f32 %v6932, %v6955
    %v6964 = vadd.f32 %v6933, %v6955
    %v6965 = vadd.f32 %v6934, %v6955
    %v6966 = vadd.f32 %v6935, %v6955
    %v6967 = vadd.f32 %v6936, %v6955
    %v6968 = vadd.f32 %v6937, %v6955
    %v6969 = vadd.f32 %v6938, %v6955
    %v6970 = vadd.f32 %v6939, %v6955
    %v6971 = vadd.f32 %v6940, %v6955
    %v6972 = vadd.f32 %v6941, %v6955
    %v6973 = vadd.f32 %v6942, %v6955
    %v6974 = vadd.f32 %v6943, %v6955
    %v6975 = vadd.f32 %v6944, %v6955
    %v6976 = vadd.f32 %v6945, %v6955
    %v6977 = vadd.f32 %v6946, %v6955
    %v6978 = vadd.f32 %v6947, %v6955
    %v6979 = vadd.f32 %v6948, %v6955
    %v6980 = vadd.f32 %v6949, %v6955
    %v6981 = vmax.f32 %v6957, 0.0
    %v6982 = vmax.f32 %v6958, 0.0
    %v6983 = vmax.f32 %v6959, 0.0
    %v6984 = vmax.f32 %v6960, 0.0
    %v6985 = vmax.f32 %v6961, 0.0
    %v6986 = vmax.f32 %v6962, 0.0
    %v6987 = vmax.f32 %v6963, 0.0
    %v6988 = vmax.f32 %v6964, 0.0
    %v6989 = vmax.f32 %v6965, 0.0
    %v6990 = vmax.f32 %v6966, 0.0
    %v6991 = vmax.f32 %v6967, 0.0
    %v6992 = vmax.f32 %v6968, 0.0
    %v6993 = vmax.f32 %v6969, 0.0
    %v6994 = vmax.f32 %v6970, 0.0
    %v6995 = vmax.f32 %v6971, 0.0
    %v6996 = vmax.f32 %v6972, 0.0
    %v6997 = vmax.f32 %v6973, 0.0
    %v6998 = vmax.f32 %v6974, 0.0
    %v6999 = vmax.f32 %v6975, 0.0
    %v7000 = vmax.f32 %v6976, 0.0
    %v7001 = vmax.f32 %v6977, 0.0
    %v7002 = vmax.f32 %v6978, 0.0
    %v7003 = vmax.f32 %v6979, 0.0
    %v7004 = vmax.f32 %v6980, 0.0
    %v7005 = vld [vmem:[%s3] sm:$0xff]
    %v7006 = vld [vmem:[%s3 + $0x8] sm:$0xff]
    %v7007 = vld [vmem:[%s3 + $0x10] sm:$0xff]
    %v7008 = vld [vmem:[%s3 + $0x18] sm:$0xff]
    %v7009 = vld [vmem:[%s3 + $0x20] sm:$0xff]
    %v7010 = vld [vmem:[%s3 + $0x28] sm:$0xff]
    %v7011 = vld [vmem:[%s3 + $0x30] sm:$0xff]
    %v7012 = vld [vmem:[%s3 + $0x38] sm:$0xff]
    %v7013 = vld [vmem:[%s3 + $0x40] sm:$0xff]
    %v7014 = vld [vmem:[%s3 + $0x48] sm:$0xff]
    %v7015 = vld [vmem:[%s3 + $0x50] sm:$0xff]
    %v7016 = vld [vmem:[%s3 + $0x58] sm:$0x7]
    %v7017 = vld [vmem:[%s4] sm:$0xff]
    %v7018 = vld [vmem:[%s4 + $0x8] sm:$0xff]
    %v7019 = vld [vmem:[%s4 + $0x10] sm:$0xff]
    %v7020 = vld [vmem:[%s4 + $0x18] sm:$0xff]
    %v7021 = vld [vmem:[%s4 + $0x20] sm:$0xff]
    %v7022 = vld [vmem:[%s4 + $0x28] sm:$0xff]
    %v7023 = vld [vmem:[%s4 + $0x30] sm:$0xff]
    %v7024 = vld [vmem:[%s4 + $0x38] sm:$0xff]
    %v7025 = vld [vmem:[%s4 + $0x40] sm:$0xff]
    %v7026 = vld [vmem:[%s4 + $0x48] sm:$0xff]
    %v7027 = vld [vmem:[%s4 + $0x50] sm:$0x1f]
    %v7028 = vld [vmem:[#allocation2] sm:$0x1]
    %v7041 = vrot.slane %v6981, 1
    %v7042 = vrot.slane %v6982, 1
    %v7043 = vsel %vm6227, %v7041, %v7042
    %v7044 = vrot.slane %v6983, 1
    %v7045 = vsel %vm6227, %v7042, %v7044
    %v7046 = vrot.slane %v6984, 1
    %v7047 = vsel %vm6227, %v7044, %v7046
    %v7048 = vrot.slane %v6985, 1
    %v7049 = vsel %vm6227, %v7046, %v7048
    %v7050 = vrot.slane %v6986, 1
    %v7051 = vsel %vm6227, %v7048, %v7050
    %v7052 = vrot.slane %v6987, 1
    %v7053 = vsel %vm6227, %v7050, %v7052
    %v7054 = vrot.slane %v6988, 1
    %v7055 = vsel %vm6227, %v7052, %v7054
    %v7056 = vrot.slane %v6989, 1
    %v7057 = vsel %vm6227, %v7054, %v7056
    %v7058 = vrot.slane %v6990, 1
    %v7059 = vsel %vm6227, %v7056, %v7058
    %v7060 = vrot.slane %v6991, 1
    %v7061 = vsel %vm6227, %v7058, %v7060
    %v7062 = vrot.slane %v6992, 1
    %v7063 = vsel %vm6227, %v7060, %v7062
    %v7076 = vmax.f32 %v6981, %v7043
    %v7077 = vmax.f32 %v6982, %v7045
    %v7078 = vmax.f32 %v6983, %v7047
    %v7079 = vmax.f32 %v6984, %v7049
    %v7080 = vmax.f32 %v6985, %v7051
    %v7081 = vmax.f32 %v6986, %v7053
    %v7082 = vmax.f32 %v6987, %v7055
    %v7083 = vmax.f32 %v6988, %v7057
    %v7084 = vmax.f32 %v6989, %v7059
    %v7085 = vmax.f32 %v6990, %v7061
    %v7086 = vmax.f32 %v6991, %v7063
    %v7087 = vmax.f32 %v6992, %v7062
    %v7088 = vrot.slane %v6981, 2
    %v7089 = vrot.slane %v6982, 2
    %v7090 = vsel %vm6352, %v7088, %v7089
    %v7091 = vrot.slane %v6983, 2
    %v7092 = vsel %vm6352, %v7089, %v7091
    %v7093 = vrot.slane %v6984, 2
    %v7094 = vsel %vm6352, %v7091, %v7093
    %v7095 = vrot.slane %v6985, 2
    %v7096 = vsel %vm6352, %v7093, %v7095
    %v7097 = vrot.slane %v6986, 2
    %v7098 = vsel %vm6352, %v7095, %v7097
    %v7099 = vrot.slane %v6987, 2
    %v7100 = vsel %vm6352, %v7097, %v7099
    %v7101 = vrot.slane %v6988, 2
    %v7102 = vsel %vm6352, %v7099, %v7101
    %v7103 = vrot.slane %v6989, 2
    %v7104 = vsel %vm6352, %v7101, %v7103
    %v7105 = vrot.slane %v6990, 2
    %v7106 = vsel %vm6352, %v7103, %v7105
    %v7107 = vrot.slane %v6991, 2
    %v7108 = vsel %vm6352, %v7105, %v7107
    %v7109 = vrot.slane %v6992, 2
    %v7110 = vsel %vm6352, %v7107, %v7109
    %v7123 = vmax.f32 %v7076, %v7090
    %v7124 = vmax.f32 %v7077, %v7092
    %v7125 = vmax.f32 %v7078, %v7094
    %v7126 = vmax.f32 %v7079, %v7096
    %v7127 = vmax.f32 %v7080, %v7098
    %v7128 = vmax.f32 %v7081, %v7100
    %v7129 = vmax.f32 %v7082, %v7102
    %v7130 = vmax.f32 %v7083, %v7104
    %v7131 = vmax.f32 %v7084, %v7106
    %v7132 = vmax.f32 %v7085, %v7108
    %v7133 = vmax.f32 %v7086, %v7110
    %v7134 = vmax.f32 %v7087, %v7109
    %v7135 = vrot.slane %v6981, 3
    %v7136 = vrot.slane %v6982, 3
    %v7137 = vsel %vm6477, %v7135, %v7136
    %v7138 = vrot.slane %v6983, 3
    %v7139 = vsel %vm6477, %v7136, %v7138
    %v7140 = vrot.slane %v6984, 3
    %v7141 = vsel %vm6477, %v7138, %v7140
    %v7142 = vrot.slane %v6985, 3
    %v7143 = vsel %vm6477, %v7140, %v7142
    %v7144 = vrot.slane %v6986, 3
    %v7145 = vsel %vm6477, %v7142, %v7144
    %v7146 = vrot.slane %v6987, 3
    %v7147 = vsel %vm6477, %v7144, %v7146
    %v7148 = vrot.slane %v6988, 3
    %v7149 = vsel %vm6477, %v7146, %v7148
    %v7150 = vrot.slane %v6989, 3
    %v7151 = vsel %vm6477, %v7148, %v7150
    %v7152 = vrot.slane %v6990, 3
    %v7153 = vsel %vm6477, %v7150, %v7152
    %v7154 = vrot.slane %v6991, 3
    %v7155 = vsel %vm6477, %v7152, %v7154
    %v7156 = vrot.slane %v6992, 3
    %v7157 = vsel %vm6477, %v7154, %v7156
    %v7170 = vmax.f32 %v7123, %v7137
    %v7171 = vmax.f32 %v7124, %v7139
    %v7172 = vmax.f32 %v7125, %v7141
    %v7173 = vmax.f32 %v7126, %v7143
    %v7174 = vmax.f32 %v7127, %v7145
    %v7175 = vmax.f32 %v7128, %v7147
    %v7176 = vmax.f32 %v7129, %v7149
    %v7177 = vmax.f32 %v7130, %v7151
    %v7178 = vmax.f32 %v7131, %v7153
    %v7179 = vmax.f32 %v7132, %v7155
    %v7180 = vmax.f32 %v7133, %v7157
    %v7181 = vmax.f32 %v7134, %v7156
    %v7182 = vrot.slane %v6981, 4
    %v7183 = vrot.slane %v6982, 4
    %v7184 = vsel %vm3683, %v7182, %v7183
    %v7185 = vrot.slane %v6983, 4
    %v7186 = vsel %vm3683, %v7183, %v7185
    %v7187 = vrot.slane %v6984, 4
    %v7188 = vsel %vm3683, %v7185, %v7187
    %v7189 = vrot.slane %v6985, 4
    %v7190 = vsel %vm3683, %v7187, %v7189
    %v7191 = vrot.slane %v6986, 4
    %v7192 = vsel %vm3683, %v7189, %v7191
    %v7193 = vrot.slane %v6987, 4
    %v7194 = vsel %vm3683, %v7191, %v7193
    %v7195 = vrot.slane %v6988, 4
    %v7196 = vsel %vm3683, %v7193, %v7195
    %v7197 = vrot.slane %v6989, 4
    %v7198 = vsel %vm3683, %v7195, %v7197
    %v7199 = vrot.slane %v6990, 4
    %v7200 = vsel %vm3683, %v7197, %v7199
    %v7201 = vrot.slane %v6991, 4
    %v7202 = vsel %vm3683, %v7199, %v7201
    %v7203 = vrot.slane %v6992, 4
    %v7204 = vsel %vm3683, %v7201, %v7203
    %v7217 = vmax.f32 %v7170, %v7184
    %v7218 = vmax.f32 %v7171, %v7186
    %v7219 = vmax.f32 %v7172, %v7188
    %v7220 = vmax.f32 %v7173, %v7190
    %v7221 = vmax.f32 %v7174, %v7192
    %v7222 = vmax.f32 %v7175, %v7194
    %v7223 = vmax.f32 %v7176, %v7196
    %v7224 = vmax.f32 %v7177, %v7198
    %v7225 = vmax.f32 %v7178, %v7200
    %v7226 = vmax.f32 %v7179, %v7202
    %v7227 = vmax.f32 %v7180, %v7204
    %v7228 = vmax.f32 %v7181, %v7203
    %v7230 = vmax.f32 %v6991, %v7060
    %v7232 = vmax.f32 %v7230, %v7107
    %v7234 = vmax.f32 %v7232, %v7154
    %v7235 = vmax.f32 %v7234, %v7204
    %v7236 = vrot.slane %v6981, 5
    %v7237 = vrot.slane %v6982, 5
    %v7238 = vsel %vm6726, %v7236, %v7237
    %v7239 = vrot.slane %v6983, 5
    %v7240 = vsel %vm6726, %v7237, %v7239
    %v7241 = vrot.slane %v6984, 5
    %v7242 = vsel %vm6726, %v7239, %v7241
    %v7243 = vrot.slane %v6985, 5
    %v7244 = vsel %vm6726, %v7241, %v7243
    %v7245 = vrot.slane %v6986, 5
    %v7246 = vsel %vm6726, %v7243, %v7245
    %v7247 = vrot.slane %v6987, 5
    %v7248 = vsel %vm6726, %v7245, %v7247
    %v7249 = vrot.slane %v6988, 5
    %v7250 = vsel %vm6726, %v7247, %v7249
    %v7251 = vrot.slane %v6989, 5
    %v7252 = vsel %vm6726, %v7249, %v7251
    %v7253 = vrot.slane %v6990, 5
    %v7254 = vsel %vm6726, %v7251, %v7253
    %v7255 = vrot.slane %v6991, 5
    %v7256 = vsel %vm6726, %v7253, %v7255
    %v7257 = vrot.slane %v6992, 5
    %v7258 = vsel %vm6726, %v7255, %v7257
    %v7270 = vmax.f32 %v7217, %v7238
    %v7271 = vmax.f32 %v7218, %v7240
    %v7272 = vmax.f32 %v7219, %v7242
    %v7273 = vmax.f32 %v7220, %v7244
    %v7274 = vmax.f32 %v7221, %v7246
    %v7275 = vmax.f32 %v7222, %v7248
    %v7276 = vmax.f32 %v7223, %v7250
    %v7277 = vmax.f32 %v7224, %v7252
    %v7278 = vmax.f32 %v7225, %v7254
    %v7279 = vmax.f32 %v7226, %v7256
    %v7280 = vmax.f32 %v7235, %v7258
    %v7281 = vrot.slane %v6981, 6
    %v7282 = vrot.slane %v6982, 6
    %v7283 = vsel %vm6851, %v7281, %v7282
    %v7284 = vrot.slane %v6983, 6
    %v7285 = vsel %vm6851, %v7282, %v7284
    %v7286 = vrot.slane %v6984, 6
    %v7287 = vsel %vm6851, %v7284, %v7286
    %v7288 = vrot.slane %v6985, 6
    %v7289 = vsel %vm6851, %v7286, %v7288
    %v7290 = vrot.slane %v6986, 6
    %v7291 = vsel %vm6851, %v7288, %v7290
    %v7292 = vrot.slane %v6987, 6
    %v7293 = vsel %vm6851, %v7290, %v7292
    %v7294 = vrot.slane %v6988, 6
    %v7295 = vsel %vm6851, %v7292, %v7294
    %v7296 = vrot.slane %v6989, 6
    %v7297 = vsel %vm6851, %v7294, %v7296
    %v7298 = vrot.slane %v6990, 6
    %v7299 = vsel %vm6851, %v7296, %v7298
    %v7300 = vrot.slane %v6991, 6
    %v7301 = vsel %vm6851, %v7298, %v7300
    %v7302 = vrot.slane %v6992, 6
    %v7303 = vsel %vm6851, %v7300, %v7302
    %v7315 = vmax.f32 %v7270, %v7283
    %v7316 = vmax.f32 %v7271, %v7285
    %v7317 = vmax.f32 %v7272, %v7287
    %v7318 = vmax.f32 %v7273, %v7289
    %v7319 = vmax.f32 %v7274, %v7291
    %v7320 = vmax.f32 %v7275, %v7293
    %v7321 = vmax.f32 %v7276, %v7295
    %v7322 = vmax.f32 %v7277, %v7297
    %v7323 = vmax.f32 %v7278, %v7299
    %v7324 = vmax.f32 %v7279, %v7301
    %v7325 = vmax.f32 %v7280, %v7303
    %v7326 = vmul.f32 %v7217, %v7005
    %v7327 = vmul.f32 %v7218, %v7006
    %v7328 = vmul.f32 %v7219, %v7007
    %v7329 = vmul.f32 %v7220, %v7008
    %v7330 = vmul.f32 %v7221, %v7009
    %v7331 = vmul.f32 %v7222, %v7010
    %v7332 = vmul.f32 %v7223, %v7011
    %v7333 = vmul.f32 %v7224, %v7012
    %v7334 = vmul.f32 %v7225, %v7013
    %v7335 = vmul.f32 %v7226, %v7014
    %v7336 = vmul.f32 %v7227, %v7015
    %v7337 = vmul.f32 %v7228, %v7016
    %vm7338 = vcmask 523264
    %v7339 = vsel %vm7338, %v7326, 0.0
    %7340 = vadd.xlane.f32.xlu0 %v7339
    %v7341 = vpop.xlane.xlu0 %7340
    %v7342 = vsel %vm7338, %v7327, 0.0
    %7343 = vadd.xlane.f32.xlu0 %v7342
    %v7344 = vpop.xlane.xlu0 %7343
    %v7345 = vsel %vm7338, %v7328, 0.0
    %7346 = vadd.xlane.f32.xlu0 %v7345
    %v7347 = vpop.xlane.xlu0 %7346
    %v7348 = vsel %vm7338, %v7329, 0.0
    %7349 = vadd.xlane.f32.xlu0 %v7348
    %v7350 = vpop.xlane.xlu0 %7349
    %v7351 = vsel %vm7338, %v7330, 0.0
    %7352 = vadd.xlane.f32.xlu0 %v7351
    %v7353 = vpop.xlane.xlu0 %7352
    %v7354 = vsel %vm7338, %v7331, 0.0
    %7355 = vadd.xlane.f32.xlu0 %v7354
    %v7356 = vpop.xlane.xlu0 %7355
    %v7357 = vsel %vm7338, %v7332, 0.0
    %7358 = vadd.xlane.f32.xlu0 %v7357
    %v7359 = vpop.xlane.xlu0 %7358
    %v7360 = vsel %vm7338, %v7333, 0.0
    %7361 = vadd.xlane.f32.xlu0 %v7360
    %v7362 = vpop.xlane.xlu0 %7361
    %v7363 = vsel %vm7338, %v7334, 0.0
    %7364 = vadd.xlane.f32.xlu0 %v7363
    %v7365 = vpop.xlane.xlu0 %7364
    %v7366 = vsel %vm7338, %v7335, 0.0
    %7367 = vadd.xlane.f32.xlu0 %v7366
    %v7368 = vpop.xlane.xlu0 %7367
    %v7369 = vsel %vm7338, %v7336, 0.0
    %7370 = vadd.xlane.f32.xlu0 %v7369
    %v7371 = vpop.xlane.xlu0 %7370
    %vm7372 = vcmask 518144
    %v7373 = vsel %vm7372, %v7337, 0.0
    %7374 = vadd.xlane.f32.xlu0 %v7373
    %v7375 = vpop.xlane.xlu0 %7374
    %v7376 = vadd.f32 %v7341, %v7344
    %v7377 = vadd.f32 %v7376, %v7347
    %v7378 = vadd.f32 %v7377, %v7350
    %v7379 = vadd.f32 %v7378, %v7353
    %v7380 = vadd.f32 %v7379, %v7356
    %v7381 = vadd.f32 %v7380, %v7359
    %v7382 = vadd.f32 %v7381, %v7362
    %v7383 = vadd.f32 %v7382, %v7365
    %v7384 = vadd.f32 %v7383, %v7368
    %v7385 = vadd.f32 %v7384, %v7371
    %v7386 = vsel %vm6726, %v7375, 0.0
    %v7387 = vadd.f32 %v7385, %v7386
    %v7388 = vrot.slane %v7387, 4
    %v7389 = vadd.f32 %v7387, %v7388
    %v7390 = vrot.slane %v7389, 2
    %v7391 = vadd.f32 %v7389, %v7390
    %v7392 = vrot.slane %v7391, 1
    %v7393 = vadd.f32 %v7391, %v7392
    %7405 = vrot.lane.b32.xlu0 %v7017, 64
    %v7406 = vpop.permute.xlu0 %7405
    %7407 = vrot.lane.b32.xlu0 %v7018, 64
    %v7408 = vpop.permute.xlu0 %7407
    %7409 = vrot.lane.b32.xlu0 %v7019, 64
    %v7410 = vpop.permute.xlu0 %7409
    %7411 = vrot.lane.b32.xlu0 %v7020, 64
    %v7412 = vpop.permute.xlu0 %7411
    %7413 = vrot.lane.b32.xlu0 %v7021, 64
    %v7414 = vpop.permute.xlu0 %7413
    %7415 = vrot.lane.b32.xlu0 %v7022, 64
    %v7416 = vpop.permute.xlu0 %7415
    %7417 = vrot.lane.b32.xlu0 %v7023, 64
    %v7418 = vpop.permute.xlu0 %7417
    %7419 = vrot.lane.b32.xlu0 %v7024, 64
    %v7420 = vpop.permute.xlu0 %7419
    %7421 = vrot.lane.b32.xlu0 %v7025, 64
    %v7422 = vpop.permute.xlu0 %7421
    %7423 = vrot.lane.b32.xlu0 %v7026, 64
    %v7424 = vpop.permute.xlu0 %7423
    %7425 = vrot.lane.b32.xlu0 %v7027, 64
    %v7426 = vpop.permute.xlu0 %7425
    %v7438 = vmul.f32 %v7315, %v7406
    %v7439 = vmul.f32 %v7316, %v7408
    %v7440 = vmul.f32 %v7317, %v7410
    %v7441 = vmul.f32 %v7318, %v7412
    %v7442 = vmul.f32 %v7319, %v7414
    %v7443 = vmul.f32 %v7320, %v7416
    %v7444 = vmul.f32 %v7321, %v7418
    %v7445 = vmul.f32 %v7322, %v7420
    %v7446 = vmul.f32 %v7323, %v7422
    %v7447 = vmul.f32 %v7324, %v7424
    %v7448 = vmul.f32 %v7325, %v7426
    %7460 = vrot.lane.b32.xlu0 %v7438, 64
    %v7461 = vpop.permute.xlu0 %7460
    %7462 = vrot.lane.b32.xlu0 %v7439, 64
    %v7463 = vpop.permute.xlu0 %7462
    %7464 = vrot.lane.b32.xlu0 %v7440, 64
    %v7465 = vpop.permute.xlu0 %7464
    %7466 = vrot.lane.b32.xlu0 %v7441, 64
    %v7467 = vpop.permute.xlu0 %7466
    %7468 = vrot.lane.b32.xlu0 %v7442, 64
    %v7469 = vpop.permute.xlu0 %7468
    %7470 = vrot.lane.b32.xlu0 %v7443, 64
    %v7471 = vpop.permute.xlu0 %7470
    %7472 = vrot.lane.b32.xlu0 %v7444, 64
    %v7473 = vpop.permute.xlu0 %7472
    %7474 = vrot.lane.b32.xlu0 %v7445, 64
    %v7475 = vpop.permute.xlu0 %7474
    %7476 = vrot.lane.b32.xlu0 %v7446, 64
    %v7477 = vpop.permute.xlu0 %7476
    %7478 = vrot.lane.b32.xlu0 %v7447, 64
    %v7479 = vpop.permute.xlu0 %7478
    %7480 = vrot.lane.b32.xlu0 %v7448, 64
    %v7481 = vpop.permute.xlu0 %7480
    %v7493 = vsel %vm7338, %v7461, 0.0
    %7494 = vadd.xlane.f32.xlu0 %v7493
    %v7495 = vpop.xlane.xlu0 %7494
    %v7496 = vsel %vm7338, %v7463, 0.0
    %7497 = vadd.xlane.f32.xlu0 %v7496
    %v7498 = vpop.xlane.xlu0 %7497
    %v7499 = vsel %vm7338, %v7465, 0.0
    %7500 = vadd.xlane.f32.xlu0 %v7499
    %v7501 = vpop.xlane.xlu0 %7500
    %v7502 = vsel %vm7338, %v7467, 0.0
    %7503 = vadd.xlane.f32.xlu0 %v7502
    %v7504 = vpop.xlane.xlu0 %7503
    %v7505 = vsel %vm7338, %v7469, 0.0
    %7506 = vadd.xlane.f32.xlu0 %v7505
    %v7507 = vpop.xlane.xlu0 %7506
    %v7508 = vsel %vm7338, %v7471, 0.0
    %7509 = vadd.xlane.f32.xlu0 %v7508
    %v7510 = vpop.xlane.xlu0 %7509
    %v7511 = vsel %vm7338, %v7473, 0.0
    %7512 = vadd.xlane.f32.xlu0 %v7511
    %v7513 = vpop.xlane.xlu0 %7512
    %v7514 = vsel %vm7338, %v7475, 0.0
    %7515 = vadd.xlane.f32.xlu0 %v7514
    %v7516 = vpop.xlane.xlu0 %7515
    %v7517 = vsel %vm7338, %v7477, 0.0
    %7518 = vadd.xlane.f32.xlu0 %v7517
    %v7519 = vpop.xlane.xlu0 %7518
    %v7520 = vsel %vm7338, %v7479, 0.0
    %7521 = vadd.xlane.f32.xlu0 %v7520
    %v7522 = vpop.xlane.xlu0 %7521
    %vm7523 = vcmask 520192
    %v7524 = vsel %vm7523, %v7481, 0.0
    %7525 = vadd.xlane.f32.xlu0 %v7524
    %v7526 = vpop.xlane.xlu0 %7525
    %v7527 = vadd.f32 %v7495, %v7498
    %v7528 = vadd.f32 %v7527, %v7501
    %v7529 = vadd.f32 %v7528, %v7504
    %v7530 = vadd.f32 %v7529, %v7507
    %v7531 = vadd.f32 %v7530, %v7510
    %v7532 = vadd.f32 %v7531, %v7513
    %v7533 = vadd.f32 %v7532, %v7516
    %v7534 = vadd.f32 %v7533, %v7519
    %v7535 = vadd.f32 %v7534, %v7522
    %v7536 = vsel %vm6477, %v7526, 0.0
    %v7537 = vadd.f32 %v7535, %v7536
    %v7538 = vrot.slane %v7537, 4
    %v7539 = vadd.f32 %v7537, %v7538
    %v7540 = vrot.slane %v7539, 2
    %v7541 = vadd.f32 %v7539, %v7540
    %v7542 = vrot.slane %v7541, 1
    %v7543 = vadd.f32 %v7541, %v7542
    %v7544 = vadd.f32 %v7393, %v7543
    %v7545 = vadd.f32 %v7544, %v7028
    %v7558 = vrot.slane %v6993, 1
    %v7559 = vrot.slane %v6994, 1
    %v7560 = vsel %vm6227, %v7558, %v7559
    %v7561 = vrot.slane %v6995, 1
    %v7562 = vsel %vm6227, %v7559, %v7561
    %v7563 = vrot.slane %v6996, 1
    %v7564 = vsel %vm6227, %v7561, %v7563
    %v7565 = vrot.slane %v6997, 1
    %v7566 = vsel %vm6227, %v7563, %v7565
    %v7567 = vrot.slane %v6998, 1
    %v7568 = vsel %vm6227, %v7565, %v7567
    %v7569 = vrot.slane %v6999, 1
    %v7570 = vsel %vm6227, %v7567, %v7569
    %v7571 = vrot.slane %v7000, 1
    %v7572 = vsel %vm6227, %v7569, %v7571
    %v7573 = vrot.slane %v7001, 1
    %v7574 = vsel %vm6227, %v7571, %v7573
    %v7575 = vrot.slane %v7002, 1
    %v7576 = vsel %vm6227, %v7573, %v7575
    %v7577 = vrot.slane %v7003, 1
    %v7578 = vsel %vm6227, %v7575, %v7577
    %v7579 = vrot.slane %v7004, 1
    %v7580 = vsel %vm6227, %v7577, %v7579
    %v7593 = vmax.f32 %v6993, %v7560
    %v7594 = vmax.f32 %v6994, %v7562
    %v7595 = vmax.f32 %v6995, %v7564
    %v7596 = vmax.f32 %v6996, %v7566
    %v7597 = vmax.f32 %v6997, %v7568
    %v7598 = vmax.f32 %v6998, %v7570
    %v7599 = vmax.f32 %v6999, %v7572
    %v7600 = vmax.f32 %v7000, %v7574
    %v7601 = vmax.f32 %v7001, %v7576
    %v7602 = vmax.f32 %v7002, %v7578
    %v7603 = vmax.f32 %v7003, %v7580
    %v7604 = vmax.f32 %v7004, %v7579
    %v7605 = vrot.slane %v6993, 2
    %v7606 = vrot.slane %v6994, 2
    %v7607 = vsel %vm6352, %v7605, %v7606
    %v7608 = vrot.slane %v6995, 2
    %v7609 = vsel %vm6352, %v7606, %v7608
    %v7610 = vrot.slane %v6996, 2
    %v7611 = vsel %vm6352, %v7608, %v7610
    %v7612 = vrot.slane %v6997, 2
    %v7613 = vsel %vm6352, %v7610, %v7612
    %v7614 = vrot.slane %v6998, 2
    %v7615 = vsel %vm6352, %v7612, %v7614
    %v7616 = vrot.slane %v6999, 2
    %v7617 = vsel %vm6352, %v7614, %v7616
    %v7618 = vrot.slane %v7000, 2
    %v7619 = vsel %vm6352, %v7616, %v7618
    %v7620 = vrot.slane %v7001, 2
    %v7621 = vsel %vm6352, %v7618, %v7620
    %v7622 = vrot.slane %v7002, 2
    %v7623 = vsel %vm6352, %v7620, %v7622
    %v7624 = vrot.slane %v7003, 2
    %v7625 = vsel %vm6352, %v7622, %v7624
    %v7626 = vrot.slane %v7004, 2
    %v7627 = vsel %vm6352, %v7624, %v7626
    %v7640 = vmax.f32 %v7593, %v7607
    %v7641 = vmax.f32 %v7594, %v7609
    %v7642 = vmax.f32 %v7595, %v7611
    %v7643 = vmax.f32 %v7596, %v7613
    %v7644 = vmax.f32 %v7597, %v7615
    %v7645 = vmax.f32 %v7598, %v7617
    %v7646 = vmax.f32 %v7599, %v7619
    %v7647 = vmax.f32 %v7600, %v7621
    %v7648 = vmax.f32 %v7601, %v7623
    %v7649 = vmax.f32 %v7602, %v7625
    %v7650 = vmax.f32 %v7603, %v7627
    %v7651 = vmax.f32 %v7604, %v7626
    %v7652 = vrot.slane %v6993, 3
    %v7653 = vrot.slane %v6994, 3
    %v7654 = vsel %vm6477, %v7652, %v7653
    %v7655 = vrot.slane %v6995, 3
    %v7656 = vsel %vm6477, %v7653, %v7655
    %v7657 = vrot.slane %v6996, 3
    %v7658 = vsel %vm6477, %v7655, %v7657
    %v7659 = vrot.slane %v6997, 3
    %v7660 = vsel %vm6477, %v7657, %v7659
    %v7661 = vrot.slane %v6998, 3
    %v7662 = vsel %vm6477, %v7659, %v7661
    %v7663 = vrot.slane %v6999, 3
    %v7664 = vsel %vm6477, %v7661, %v7663
    %v7665 = vrot.slane %v7000, 3
    %v7666 = vsel %vm6477, %v7663, %v7665
    %v7667 = vrot.slane %v7001, 3
    %v7668 = vsel %vm6477, %v7665, %v7667
    %v7669 = vrot.slane %v7002, 3
    %v7670 = vsel %vm6477, %v7667, %v7669
    %v7671 = vrot.slane %v7003, 3
    %v7672 = vsel %vm6477, %v7669, %v7671
    %v7673 = vrot.slane %v7004, 3
    %v7674 = vsel %vm6477, %v7671, %v7673
    %v7687 = vmax.f32 %v7640, %v7654
    %v7688 = vmax.f32 %v7641, %v7656
    %v7689 = vmax.f32 %v7642, %v7658
    %v7690 = vmax.f32 %v7643, %v7660
    %v7691 = vmax.f32 %v7644, %v7662
    %v7692 = vmax.f32 %v7645, %v7664
    %v7693 = vmax.f32 %v7646, %v7666
    %v7694 = vmax.f32 %v7647, %v7668
    %v7695 = vmax.f32 %v7648, %v7670
    %v7696 = vmax.f32 %v7649, %v7672
    %v7697 = vmax.f32 %v7650, %v7674
    %v7698 = vmax.f32 %v7651, %v7673
    %v7699 = vrot.slane %v6993, 4
    %v7700 = vrot.slane %v6994, 4
    %v7701 = vsel %vm3683, %v7699, %v7700
    %v7702 = vrot.slane %v6995, 4
    %v7703 = vsel %vm3683, %v7700, %v7702
    %v7704 = vrot.slane %v6996, 4
    %v7705 = vsel %vm3683, %v7702, %v7704
    %v7706 = vrot.slane %v6997, 4
    %v7707 = vsel %vm3683, %v7704, %v7706
    %v7708 = vrot.slane %v6998, 4
    %v7709 = vsel %vm3683, %v7706, %v7708
    %v7710 = vrot.slane %v6999, 4
    %v7711 = vsel %vm3683, %v7708, %v7710
    %v7712 = vrot.slane %v7000, 4
    %v7713 = vsel %vm3683, %v7710, %v7712
    %v7714 = vrot.slane %v7001, 4
    %v7715 = vsel %vm3683, %v7712, %v7714
    %v7716 = vrot.slane %v7002, 4
    %v7717 = vsel %vm3683, %v7714, %v7716
    %v7718 = vrot.slane %v7003, 4
    %v7719 = vsel %vm3683, %v7716, %v7718
    %v7720 = vrot.slane %v7004, 4
    %v7721 = vsel %vm3683, %v7718, %v7720
    %v7734 = vmax.f32 %v7687, %v7701
    %v7735 = vmax.f32 %v7688, %v7703
    %v7736 = vmax.f32 %v7689, %v7705
    %v7737 = vmax.f32 %v7690, %v7707
    %v7738 = vmax.f32 %v7691, %v7709
    %v7739 = vmax.f32 %v7692, %v7711
    %v7740 = vmax.f32 %v7693, %v7713
    %v7741 = vmax.f32 %v7694, %v7715
    %v7742 = vmax.f32 %v7695, %v7717
    %v7743 = vmax.f32 %v7696, %v7719
    %v7744 = vmax.f32 %v7697, %v7721
    %v7745 = vmax.f32 %v7698, %v7720
    %v7747 = vmax.f32 %v7003, %v7577
    %v7749 = vmax.f32 %v7747, %v7624
    %v7751 = vmax.f32 %v7749, %v7671
    %v7752 = vmax.f32 %v7751, %v7721
    %v7753 = vrot.slane %v6993, 5
    %v7754 = vrot.slane %v6994, 5
    %v7755 = vsel %vm6726, %v7753, %v7754
    %v7756 = vrot.slane %v6995, 5
    %v7757 = vsel %vm6726, %v7754, %v7756
    %v7758 = vrot.slane %v6996, 5
    %v7759 = vsel %vm6726, %v7756, %v7758
    %v7760 = vrot.slane %v6997, 5
    %v7761 = vsel %vm6726, %v7758, %v7760
    %v7762 = vrot.slane %v6998, 5
    %v7763 = vsel %vm6726, %v7760, %v7762
    %v7764 = vrot.slane %v6999, 5
    %v7765 = vsel %vm6726, %v7762, %v7764
    %v7766 = vrot.slane %v7000, 5
    %v7767 = vsel %vm6726, %v7764, %v7766
    %v7768 = vrot.slane %v7001, 5
    %v7769 = vsel %vm6726, %v7766, %v7768
    %v7770 = vrot.slane %v7002, 5
    %v7771 = vsel %vm6726, %v7768, %v7770
    %v7772 = vrot.slane %v7003, 5
    %v7773 = vsel %vm6726, %v7770, %v7772
    %v7774 = vrot.slane %v7004, 5
    %v7775 = vsel %vm6726, %v7772, %v7774
    %v7787 = vmax.f32 %v7734, %v7755
    %v7788 = vmax.f32 %v7735, %v7757
    %v7789 = vmax.f32 %v7736, %v7759
    %v7790 = vmax.f32 %v7737, %v7761
    %v7791 = vmax.f32 %v7738, %v7763
    %v7792 = vmax.f32 %v7739, %v7765
    %v7793 = vmax.f32 %v7740, %v7767
    %v7794 = vmax.f32 %v7741, %v7769
    %v7795 = vmax.f32 %v7742, %v7771
    %v7796 = vmax.f32 %v7743, %v7773
    %v7797 = vmax.f32 %v7752, %v7775
    %v7798 = vrot.slane %v6993, 6
    %v7799 = vrot.slane %v6994, 6
    %v7800 = vsel %vm6851, %v7798, %v7799
    %v7801 = vrot.slane %v6995, 6
    %v7802 = vsel %vm6851, %v7799, %v7801
    %v7803 = vrot.slane %v6996, 6
    %v7804 = vsel %vm6851, %v7801, %v7803
    %v7805 = vrot.slane %v6997, 6
    %v7806 = vsel %vm6851, %v7803, %v7805
    %v7807 = vrot.slane %v6998, 6
    %v7808 = vsel %vm6851, %v7805, %v7807
    %v7809 = vrot.slane %v6999, 6
    %v7810 = vsel %vm6851, %v7807, %v7809
    %v7811 = vrot.slane %v7000, 6
    %v7812 = vsel %vm6851, %v7809, %v7811
    %v7813 = vrot.slane %v7001, 6
    %v7814 = vsel %vm6851, %v7811, %v7813
    %v7815 = vrot.slane %v7002, 6
    %v7816 = vsel %vm6851, %v7813, %v7815
    %v7817 = vrot.slane %v7003, 6
    %v7818 = vsel %vm6851, %v7815, %v7817
    %v7819 = vrot.slane %v7004, 6
    %v7820 = vsel %vm6851, %v7817, %v7819
    %v7832 = vmax.f32 %v7787, %v7800
    %v7833 = vmax.f32 %v7788, %v7802
    %v7834 = vmax.f32 %v7789, %v7804
    %v7835 = vmax.f32 %v7790, %v7806
    %v7836 = vmax.f32 %v7791, %v7808
    %v7837 = vmax.f32 %v7792, %v7810
    %v7838 = vmax.f32 %v7793, %v7812
    %v7839 = vmax.f32 %v7794, %v7814
    %v7840 = vmax.f32 %v7795, %v7816
    %v7841 = vmax.f32 %v7796, %v7818
    %v7842 = vmax.f32 %v7797, %v7820
    %v7843 = vmul.f32 %v7734, %v7005
    %v7844 = vmul.f32 %v7735, %v7006
    %v7845 = vmul.f32 %v7736, %v7007
    %v7846 = vmul.f32 %v7737, %v7008
    %v7847 = vmul.f32 %v7738, %v7009
    %v7848 = vmul.f32 %v7739, %v7010
    %v7849 = vmul.f32 %v7740, %v7011
    %v7850 = vmul.f32 %v7741, %v7012
    %v7851 = vmul.f32 %v7742, %v7013
    %v7852 = vmul.f32 %v7743, %v7014
    %v7853 = vmul.f32 %v7744, %v7015
    %v7854 = vmul.f32 %v7745, %v7016
    %v7855 = vsel %vm7338, %v7843, 0.0
    %7856 = vadd.xlane.f32.xlu0 %v7855
    %v7857 = vpop.xlane.xlu0 %7856
    %v7858 = vsel %vm7338, %v7844, 0.0
    %7859 = vadd.xlane.f32.xlu0 %v7858
    %v7860 = vpop.xlane.xlu0 %7859
    %v7861 = vsel %vm7338, %v7845, 0.0
    %7862 = vadd.xlane.f32.xlu0 %v7861
    %v7863 = vpop.xlane.xlu0 %7862
    %v7864 = vsel %vm7338, %v7846, 0.0
    %7865 = vadd.xlane.f32.xlu0 %v7864
    %v7866 = vpop.xlane.xlu0 %7865
    %v7867 = vsel %vm7338, %v7847, 0.0
    %7868 = vadd.xlane.f32.xlu0 %v7867
    %v7869 = vpop.xlane.xlu0 %7868
    %v7870 = vsel %vm7338, %v7848, 0.0
    %7871 = vadd.xlane.f32.xlu0 %v7870
    %v7872 = vpop.xlane.xlu0 %7871
    %v7873 = vsel %vm7338, %v7849, 0.0
    %7874 = vadd.xlane.f32.xlu0 %v7873
    %v7875 = vpop.xlane.xlu0 %7874
    %v7876 = vsel %vm7338, %v7850, 0.0
    %7877 = vadd.xlane.f32.xlu0 %v7876
    %v7878 = vpop.xlane.xlu0 %7877
    %v7879 = vsel %vm7338, %v7851, 0.0
    %7880 = vadd.xlane.f32.xlu0 %v7879
    %v7881 = vpop.xlane.xlu0 %7880
    %v7882 = vsel %vm7338, %v7852, 0.0
    %7883 = vadd.xlane.f32.xlu0 %v7882
    %v7884 = vpop.xlane.xlu0 %7883
    %v7885 = vsel %vm7338, %v7853, 0.0
    %7886 = vadd.xlane.f32.xlu0 %v7885
    %v7887 = vpop.xlane.xlu0 %7886
    %v7888 = vsel %vm7372, %v7854, 0.0
    %7889 = vadd.xlane.f32.xlu0 %v7888
    %v7890 = vpop.xlane.xlu0 %7889
    %v7891 = vadd.f32 %v7857, %v7860
    %v7892 = vadd.f32 %v7891, %v7863
    %v7893 = vadd.f32 %v7892, %v7866
    %v7894 = vadd.f32 %v7893, %v7869
    %v7895 = vadd.f32 %v7894, %v7872
    %v7896 = vadd.f32 %v7895, %v7875
    %v7897 = vadd.f32 %v7896, %v7878
    %v7898 = vadd.f32 %v7897, %v7881
    %v7899 = vadd.f32 %v7898, %v7884
    %v7900 = vadd.f32 %v7899, %v7887
    %v7901 = vsel %vm6726, %v7890, 0.0
    %v7902 = vadd.f32 %v7900, %v7901
    %v7903 = vrot.slane %v7902, 4
    %v7904 = vadd.f32 %v7902, %v7903
    %v7905 = vrot.slane %v7904, 2
    %v7906 = vadd.f32 %v7904, %v7905
    %v7907 = vrot.slane %v7906, 1
    %v7908 = vadd.f32 %v7906, %v7907
    %v7909 = vmul.f32 %v7832, %v7406
    %v7910 = vmul.f32 %v7833, %v7408
    %v7911 = vmul.f32 %v7834, %v7410
    %v7912 = vmul.f32 %v7835, %v7412
    %v7913 = vmul.f32 %v7836, %v7414
    %v7914 = vmul.f32 %v7837, %v7416
    %v7915 = vmul.f32 %v7838, %v7418
    %v7916 = vmul.f32 %v7839, %v7420
    %v7917 = vmul.f32 %v7840, %v7422
    %v7918 = vmul.f32 %v7841, %v7424
    %v7919 = vmul.f32 %v7842, %v7426
    %7931 = vrot.lane.b32.xlu0 %v7909, 64
    %v7932 = vpop.permute.xlu0 %7931
    %7933 = vrot.lane.b32.xlu0 %v7910, 64
    %v7934 = vpop.permute.xlu0 %7933
    %7935 = vrot.lane.b32.xlu0 %v7911, 64
    %v7936 = vpop.permute.xlu0 %7935
    %7937 = vrot.lane.b32.xlu0 %v7912, 64
    %v7938 = vpop.permute.xlu0 %7937
    %7939 = vrot.lane.b32.xlu0 %v7913, 64
    %v7940 = vpop.permute.xlu0 %7939
    %7941 = vrot.lane.b32.xlu0 %v7914, 64
    %v7942 = vpop.permute.xlu0 %7941
    %7943 = vrot.lane.b32.xlu0 %v7915, 64
    %v7944 = vpop.permute.xlu0 %7943
    %7945 = vrot.lane.b32.xlu0 %v7916, 64
    %v7946 = vpop.permute.xlu0 %7945
    %7947 = vrot.lane.b32.xlu0 %v7917, 64
    %v7948 = vpop.permute.xlu0 %7947
    %7949 = vrot.lane.b32.xlu0 %v7918, 64
    %v7950 = vpop.permute.xlu0 %7949
    %7951 = vrot.lane.b32.xlu0 %v7919, 64
    %v7952 = vpop.permute.xlu0 %7951
    %v7964 = vsel %vm7338, %v7932, 0.0
    %7965 = vadd.xlane.f32.xlu0 %v7964
    %v7966 = vpop.xlane.xlu0 %7965
    %v7967 = vsel %vm7338, %v7934, 0.0
    %7968 = vadd.xlane.f32.xlu0 %v7967
    %v7969 = vpop.xlane.xlu0 %7968
    %v7970 = vsel %vm7338, %v7936, 0.0
    %7971 = vadd.xlane.f32.xlu0 %v7970
    %v7972 = vpop.xlane.xlu0 %7971
    %v7973 = vsel %vm7338, %v7938, 0.0
    %7974 = vadd.xlane.f32.xlu0 %v7973
    %v7975 = vpop.xlane.xlu0 %7974
    %v7976 = vsel %vm7338, %v7940, 0.0
    %7977 = vadd.xlane.f32.xlu0 %v7976
    %v7978 = vpop.xlane.xlu0 %7977
    %v7979 = vsel %vm7338, %v7942, 0.0
    %7980 = vadd.xlane.f32.xlu0 %v7979
    %v7981 = vpop.xlane.xlu0 %7980
    %v7982 = vsel %vm7338, %v7944, 0.0
    %7983 = vadd.xlane.f32.xlu0 %v7982
    %v7984 = vpop.xlane.xlu0 %7983
    %v7985 = vsel %vm7338, %v7946, 0.0
    %7986 = vadd.xlane.f32.xlu0 %v7985
    %v7987 = vpop.xlane.xlu0 %7986
    %v7988 = vsel %vm7338, %v7948, 0.0
    %7989 = vadd.xlane.f32.xlu0 %v7988
    %v7990 = vpop.xlane.xlu0 %7989
    %v7991 = vsel %vm7338, %v7950, 0.0
    %7992 = vadd.xlane.f32.xlu0 %v7991
    %v7993 = vpop.xlane.xlu0 %7992
    %v7994 = vsel %vm7523, %v7952, 0.0
    %7995 = vadd.xlane.f32.xlu0 %v7994
    %v7996 = vpop.xlane.xlu0 %7995
    %v7997 = vadd.f32 %v7966, %v7969
    %v7998 = vadd.f32 %v7997, %v7972
    %v7999 = vadd.f32 %v7998, %v7975
    %v8000 = vadd.f32 %v7999, %v7978
    %v8001 = vadd.f32 %v8000, %v7981
    %v8002 = vadd.f32 %v8001, %v7984
    %v8003 = vadd.f32 %v8002, %v7987
    %v8004 = vadd.f32 %v8003, %v7990
    %v8005 = vadd.f32 %v8004, %v7993
    %v8006 = vsel %vm6477, %v7996, 0.0
    %v8007 = vadd.f32 %v8005, %v8006
    %v8008 = vrot.slane %v8007, 4
    %v8009 = vadd.f32 %v8007, %v8008
    %v8010 = vrot.slane %v8009, 2
    %v8011 = vadd.f32 %v8009, %v8010
    %v8012 = vrot.slane %v8011, 1
    %v8013 = vadd.f32 %v8011, %v8012
    %v8014 = vadd.f32 %v7908, %v8013
    %v8015 = vadd.f32 %v8014, %v7028
    %v8017 = vlaneseq
    %v8018 = vshrl.u32 %v8017, 7
    %v8019 = vsub.s32 0, %v8018
    %v8020 = vrot.slane %v8015, %v8019
    %vm8022 = vcmask 1040384
    %v8023 = vsel %vm8022, %v7545, %v8020
    %v8024 = vsub.f32 0.0, %v8023
    %v8025 = vmul.f32 %v8024, 1.442695
    %v8026 = vpow.pop %v8025
    %v8027 = vadd.f32 %v8026, 1.0
    %v8028 = vrcp.pop %v8027
    %v8029 = vmul.f32 1.0, %v8028
    %vm8030 = vcmask 1024
    %8031 = vst.msk [vmem:[%s6] sm:$0x3] %vm8030, %v8029
    // Predicated region
    $region34: #{tpu_custom_call.1} parent=1 // pred_check
      _
    $region35: #{tpu_custom_call.1} parent=1 // pred_check_branch
      %8033 = sbr.rel (0) target = $region37
    $region36: #{tpu_custom_call.1} parent=1 // pred_region
      _
    $region37: #{tpu_custom_call.1} parent=1 // pred_fallthru
      _
    // Predicated region
    $region38: #{tpu_custom_call.1} parent=1 // pred_check
      _
    $region39: #{tpu_custom_call.1} parent=1 // pred_check_branch
      %8035 = sbr.rel (0) target = $region41
    $region40: #{tpu_custom_call.1} parent=1 // pred_region
      _
    $region41: #{tpu_custom_call.1} parent=1 // pred_fallthru
      _
    %8036 = vsyncpa [#allocation4], 1
    %8037 = vsyncpa [#allocation6], 1

</llo_original>
